<compile_context>
chip_gen: v7x
topology: tpu7x:2x2x1
jax: 0.10.0
libtpu: 0.0.40
codegen_flags: <defaults>
</compile_context>

<pallas_src>
import functools

import jax
import jax.numpy as jnp
import numpy as np
from jax import lax
from jax.experimental import pallas as pl
from jax.experimental.pallas import tpu as pltpu

_MiB = 1024 * 1024


def _round_up(x, m):
    return ((x + m - 1) // m) * m


def _vmem_capacity_bytes():
    """Per-core VMEM capacity; conservative (v7x) fallback if the query fails."""
    try:
        info = pltpu.get_tpu_info()
        for attr in ("vmem_capacity_bytes", "vmem_bytes", "vmem_size_bytes"):
            v = getattr(info, attr, None)
            if v:
                return int(v)
    except Exception:
        pass
    return 64 * _MiB


def compsae_kernel(x_ref, w_enc_ref, b_enc_ref, w_vo_ref, b_vo_ref,
                   ln_g_ref, ln_b_ref, w1_ref, b1_ref, b_dec_ref,
                   w_gate_ref, b_gate_ref, w2_ref, b2_ref, w_dec_ref,
                   out_ref, lhs_ref, *, d_feature_true, d_feature_pad):
    f32 = jnp.float32
    bf16 = jnp.bfloat16

    def dotf(a_f32, w_ref):
        # bf16 MXU inputs, f32 accumulation.
        return jnp.dot(a_f32.astype(bf16), w_ref[...], preferred_element_type=f32)

    # ---- once per row tile (first d_sae block): encoder / attention / LN / MLP1 ----
    @pl.when(pl.program_id(1) == 0)
    def _():
        x = x_ref[...]                                            # (tile_n, d_in_p) bf16
        feats = jnp.dot(x, w_enc_ref[...], preferred_element_type=f32) + b_enc_ref[...]
        feats = jnp.maximum(feats, 0.0)
        # TODO(synk): nn.Dropout is identity here (eval-mode semantics); no masking.

        # Seq-len-1 multihead attention == out_proj(v_proj(feats)); fused dense.
        feats = feats + dotf(feats, w_vo_ref) + b_vo_ref[...]

        # LayerNorm over the TRUE d_feature width.  Padded lanes are exact zeros,
        # so sum-based mean / E[x^2] statistics stay exact; ln_g/ln_b padded with
        # zeros keep the padded lanes at zero afterwards.  eps = 1e-5 (torch default).
        inv_df = 1.0 / d_feature_true
        mean = jnp.sum(feats, axis=-1, keepdims=True) * inv_df
        ex2 = jnp.sum(feats * feats, axis=-1, keepdims=True) * inv_df
        var = ex2 - mean * mean
        feats = (feats - mean) * lax.rsqrt(var + 1e-5) * ln_g_ref[...] + ln_b_ref[...]

        # compose_linear1 + ReLU (d_compose is small -> resident weight).
        mlp_pre = jnp.maximum(dotf(feats, w1_ref) + b1_ref[...], 0.0)

        # Stash [feats | mlp_pre] in bf16 — consumed only by matmuls below.
        lhs_ref[:, :d_feature_pad] = feats.astype(bf16)
        lhs_ref[:, d_feature_pad:] = mlp_pre.astype(bf16)

        # Initialise the decoder accumulator (resident output block) with b_dec.
        out_ref[...] = jnp.broadcast_to(b_dec_ref[...], out_ref.shape)

    # ---- every d_sae block: gate, composed, decoder contribution ----
    lhs = lhs_ref[...]                                            # (tile_n, d_f+d_c) bf16
    # gate pre-act for this block: feats @ Wg_f[:, j] + mlp_pre @ (W2 @ Wg_c)[:, j] + b
    gate_pre = jnp.dot(lhs, w_gate_ref[...], preferred_element_type=f32) + b_gate_ref[...]
    composed = jnp.dot(lhs_ref[:, d_feature_pad:], w2_ref[...],
                       preferred_element_type=f32) + b2_ref[...]
    acts = composed * jax.nn.sigmoid(gate_pre)                    # (tile_n, tile_s) f32
    out_ref[...] += jnp.dot(acts.astype(bf16), w_dec_ref[...],
                            preferred_element_type=f32)


def prepare_kernel_params(p, d_in):
    """Fold / fuse / pad logical f32 params into kernel operands.

    All fusions are exact algebra done in f32; matrices are then cast to bf16 for
    the MXU.  Biases / LayerNorm params stay f32.  Every padded entry is zero.
    """
    bf16 = jnp.bfloat16
    d_feature = p["W_enc"].shape[1]
    d_compose = p["W1"].shape[1]
    d_sae = p["W2"].shape[1]
    d_in_p = _round_up(d_in, 128)
    d_feature_p = _round_up(d_feature, 128)
    d_compose_p = _round_up(d_compose, 128)
    d_sae_p = _round_up(d_sae, 128)

    def pad2(a, r, c):
        return jnp.pad(a, ((0, r - a.shape[0]), (0, c - a.shape[1])))

    # (x - b_dec) @ W = x @ W + (b_enc - b_dec @ W_enc)
    b_enc = p["b_enc"] - p["b_dec"] @ p["W_enc"]
    # seq-len-1 attention: out_proj(v_proj(.)) -> one dense
    w_vo = p["W_v"] @ p["W_o"]
    b_vo = p["b_v"] @ p["W_o"] + p["b_o"]
    # composed @ Wg_c == mlp_pre @ (W2 @ Wg_c) + b2 @ Wg_c  (kills the d_sae^2 matrix)
    w2g = p["W2"] @ p["Wg_c"]
    b_gate = p["b_g"] + p["b2"] @ p["Wg_c"]
    # gate LHS is [feats | mlp_pre]; stack the matching RHS rows.
    w_gate = jnp.concatenate([pad2(p["Wg_f"], d_feature_p, d_sae_p),
                              pad2(w2g, d_compose_p, d_sae_p)], axis=0)

    return {
        "W_enc": pad2(p["W_enc"], d_in_p, d_feature_p).astype(bf16),
        "b_enc": pad2(b_enc, 1, d_feature_p),
        "W_vo":  pad2(w_vo, d_feature_p, d_feature_p).astype(bf16),
        "b_vo":  pad2(b_vo, 1, d_feature_p),
        "ln_g":  pad2(p["ln_g"], 1, d_feature_p),
        "ln_b":  pad2(p["ln_b"], 1, d_feature_p),
        "W1":    pad2(p["W1"], d_feature_p, d_compose_p).astype(bf16),
        "b1":    pad2(p["b1"], 1, d_compose_p),
        "b_dec": pad2(p["b_dec"], 1, d_in_p),
        "W_gate": w_gate.astype(bf16),
        "b_gate": pad2(b_gate, 1, d_sae_p),
        "W2":    pad2(p["W2"], d_compose_p, d_sae_p).astype(bf16),
        "b2":    pad2(p["b2"], 1, d_sae_p),
        "W_dec": pad2(p["W_dec"], d_sae_p, d_in_p).astype(bf16),
        "d_feature": int(d_feature),
        "d_in": int(d_in),
    }


def compsae_forward(x, kp, *, tile_n=None, tile_s=None):
    """x: (N, d_in) f32.  kp: output of prepare_kernel_params.  Returns (N, d_in) f32."""
    N, d_in = x.shape
    d_in_p, d_feature_p = kp["W_enc"].shape
    d_compose_p = kp["W1"].shape[1]
    d_sae_p = kp["W2"].shape[1]
    d_fc_p = d_feature_p + d_compose_p
    d_feature = kp["d_feature"]

    # --- generation-aware VMEM budget (leave headroom below physical capacity) ---
    vmem_cap = _vmem_capacity_bytes()
    budget = int(0.8 * vmem_cap)              # ~51 MiB on v7x, ~102 MiB on v5e/v6e

    # --- d_sae block: as wide as divides the padded width, capped at 512 lanes ---
    if tile_s is None:
        tile_s = 512
    tile_s = min(tile_s, d_sae_p)
    while d_sae_p % tile_s:
        tile_s -= 128
    tile_s = max(tile_s, 128)

    # --- row tile: bigger on v5e/v6e; never over-pad tiny batches ---
    if tile_n is None:
        tile_n = 512 if vmem_cap >= 96 * _MiB else 256
    tile_n = max(8, min(tile_n, _round_up(N, 8)))
    if _round_up(N, tile_n) == tile_n and N > 8:
        # guarantee >= 2 row steps so ("parallel", ...) can feed both v7x TensorCores
        tile_n = max(8, _round_up((tile_n + 1) // 2, 8))

    def need_bytes(tn, ts):
        resident = 2 * ((d_in_p + d_feature_p + d_compose_p) * d_feature_p * 2
                        + (4 * d_feature_p + d_compose_p + d_in_p) * 4)
        streamed = 2 * ((d_fc_p + d_compose_p) * ts * 2 + ts * d_in_p * 2 + 2 * ts * 4)
        io = 2 * tn * d_in_p * (2 + 4)                    # x bf16 + out f32, dbl-buffered
        scratch = tn * d_fc_p * 2                         # [feats|mlp_pre] bf16 scratch
        live = (tn * (3 * d_feature_p + 2 * d_compose_p) * 4     # encoder-phase f32
                + 5 * tn * ts * 4                                # gate/composed/acts f32
                + tn * d_in_p * 4)                               # decoder partial f32
        return resident + streamed + io + scratch + live

    while need_bytes(tile_n, tile_s) > budget and tile_n > 64:
        tile_n = max(64, _round_up(tile_n // 2, 8))
    while need_bytes(tile_n, tile_s) > budget and tile_s > 128:
        tile_s = max(128, (tile_s // 2 // 128) * 128)
        while d_sae_p % tile_s:
            tile_s -= 128

    vmem_limit = int(min(max(int(1.3 * need_bytes(tile_n, tile_s)), 32 * _MiB), budget))

    n_pad = _round_up(N, tile_n)
    x_p = jnp.pad(x, ((0, n_pad - N), (0, d_in_p - d_in))).astype(jnp.bfloat16)

    resident_names = ["W_enc", "b_enc", "W_vo", "b_vo", "ln_g", "ln_b", "W1", "b1", "b_dec"]
    residents = [kp[k] for k in resident_names]
    streamed = [kp[k] for k in ["W_gate", "b_gate", "W2", "b2", "W_dec"]]

    grid = (n_pad // tile_n, d_sae_p // tile_s)
    kernel = functools.partial(compsae_kernel,
                               d_feature_true=d_feature, d_feature_pad=d_feature_p)

    def run(single_buffer_weights):
        def res_spec(shape):
            # Constant block index -> DMA never re-issued; single-buffer when allowed.
            if single_buffer_weights:
                return pl.BlockSpec(shape, lambda i, j: (0, 0),
                                    pipeline_mode=pl.Buffered(1))
            return pl.BlockSpec(shape, lambda i, j: (0, 0))

        in_specs = (
            [pl.BlockSpec((tile_n, d_in_p), lambda i, j: (i, 0))]          # x (bf16)
            + [res_spec(w.shape) for w in residents]
            + [pl.BlockSpec((d_fc_p, tile_s), lambda i, j: (0, j)),        # W_gate
               pl.BlockSpec((1, tile_s), lambda i, j: (0, j)),             # b_gate
               pl.BlockSpec((d_compose_p, tile_s), lambda i, j: (0, j)),   # W2
               pl.BlockSpec((1, tile_s), lambda i, j: (0, j)),             # b2
               pl.BlockSpec((tile_s, d_in_p), lambda i, j: (j, 0))])       # W_dec

        out = pl.pallas_call(
            kernel,
            out_shape=jax.ShapeDtypeStruct((n_pad, d_in_p), jnp.float32),
            grid=grid,
            in_specs=in_specs,
            out_specs=pl.BlockSpec((tile_n, d_in_p), lambda i, j: (i, 0)),
            scratch_shapes=[pltpu.VMEM((tile_n, d_fc_p), jnp.bfloat16)],
            compiler_params=pltpu.CompilerParams(
                dimension_semantics=("parallel", "arbitrary"),
                vmem_limit_bytes=vmem_limit),
        )(x_p, *residents, *streamed)
        return jax.block_until_ready(out)

    try:
        out = run(True)
    except Exception:           # pipeline_mode / Buffered(1) unsupported -> default buffering
        out = run(False)
    return out[:N, :d_in]


def init_params(key, d_in, d_sae, d_feature, d_compose):
    """Deterministic synthetic f32 parameters matching CustomSAE.__init__ shapes.

    PyTorch Linear weights (out, in) are stored pre-transposed as (in, out);
    biases as (1, dim) rows.  The gate Linear weight (d_sae, d_feature + d_sae)
    is kept split into its feature / composed halves (exact).
    """
    ks = jax.random.split(key, 16)
    s = 0.02
    n = lambda k, shape: (s * jax.random.normal(k, shape)).astype(jnp.float32)
    return {
        "W_enc": n(ks[0], (d_in, d_feature)),
        "b_enc": n(ks[1], (1, d_feature)),
        "W_v":   n(ks[2], (d_feature, d_feature)),
        "b_v":   n(ks[3], (1, d_feature)),
        "W_o":   n(ks[4], (d_feature, d_feature)),
        "b_o":   n(ks[5], (1, d_feature)),
        "ln_g":  jnp.ones((1, d_feature), jnp.float32),
        "ln_b":  jnp.zeros((1, d_feature), jnp.float32),
        "W1":    n(ks[6], (d_feature, d_compose)),
        "b1":    n(ks[7], (1, d_compose)),
        "W2":    n(ks[8], (d_compose, d_sae)),
        "b2":    n(ks[9], (1, d_sae)),
        "Wg_f":  n(ks[10], (d_feature, d_sae)),
        "Wg_c":  n(ks[11], (d_sae, d_sae)),
        "b_g":   n(ks[12], (1, d_sae)),
        "W_dec": n(ks[13], (d_sae, d_in)),
        "b_dec": n(ks[14], (1, d_in)),
    }


def reference_mirror(x, kp):
    """Pure-JAX reference using the SAME prepared operands / precision policy."""
    f32, bf16 = jnp.float32, jnp.bfloat16
    d_in, d_feature = kp["d_in"], kp["d_feature"]
    d_in_p, d_feature_p = kp["W_enc"].shape
    dot = lambda a, w: jnp.dot(a.astype(bf16), w, preferred_element_type=f32)
    x_p = jnp.pad(x, ((0, 0), (0, d_in_p - d_in))).astype(bf16)
    feats = jnp.maximum(jnp.dot(x_p, kp["W_enc"], preferred_element_type=f32)
                        + kp["b_enc"], 0.0)
    feats = feats + dot(feats, kp["W_vo"]) + kp["b_vo"]
    inv_df = 1.0 / d_feature
    mean = jnp.sum(feats, -1, keepdims=True) * inv_df
    var = jnp.sum(feats * feats, -1, keepdims=True) * inv_df - mean * mean
    feats = (feats - mean) * lax.rsqrt(var + 1e-5) * kp["ln_g"] + kp["ln_b"]
    mlp_pre = jnp.maximum(dot(feats, kp["W1"]) + kp["b1"], 0.0)
    lhs = jnp.concatenate([feats, mlp_pre], axis=-1).astype(bf16)
    gate_pre = jnp.dot(lhs, kp["W_gate"], preferred_element_type=f32) + kp["b_gate"]
    composed = jnp.dot(lhs[:, d_feature_p:], kp["W2"], preferred_element_type=f32) + kp["b2"]
    acts = composed * jax.nn.sigmoid(gate_pre)
    out = jnp.dot(acts.astype(bf16), kp["W_dec"], preferred_element_type=f32) + kp["b_dec"]
    return out[:, :d_in]


def reference_f32(x, p):
    """Original-layout f32 reference (unfused) — validates the exact-algebra fusions."""
    feats = jnp.maximum((x - p["b_dec"]) @ p["W_enc"] + p["b_enc"], 0.0)
    attended = (feats @ p["W_v"] + p["b_v"]) @ p["W_o"] + p["b_o"]
    feats = feats + attended
    mean = jnp.mean(feats, -1, keepdims=True)
    var = jnp.mean((feats - mean) ** 2, -1, keepdims=True)
    feats = (feats - mean) * lax.rsqrt(var + 1e-5) * p["ln_g"] + p["ln_b"]
    composed = jnp.maximum(feats @ p["W1"] + p["b1"], 0.0) @ p["W2"] + p["b2"]
    gate = jax.nn.sigmoid(feats @ p["Wg_f"] + composed @ p["Wg_c"] + p["b_g"])
    return (composed * gate) @ p["W_dec"] + p["b_dec"]


if __name__ == "__main__":
    # Small shapes consistent with the module's constructor defaults.
    # N=500 exercises N-padding and the >=2-row-step rule; d_in=64 exercises lane padding.
    N, d_in, d_sae = 500, 64, 128
    d_feature, d_compose = 256, 128

    key = jax.random.PRNGKey(0)
    k_x, k_p = jax.random.split(key)
    x = jax.random.normal(k_x, (N, d_in), dtype=jnp.float32)

    raw = init_params(k_p, d_in, d_sae, d_feature, d_compose)
    kp = prepare_kernel_params(raw, d_in)

    decoded = jax.block_until_ready(compsae_forward(x, kp))

    # 1) Exact-mirror check (same fused operands, same bf16-at-matmul policy).
    ref_m = jax.block_until_ready(reference_mirror(x, kp))
    np.testing.assert_allclose(np.asarray(decoded), np.asarray(ref_m),
                               rtol=2e-3, atol=2e-3)

    # 2) Semantics check vs the original unfused f32 math; tolerance accounts for
    #    bf16 matmul inputs (the fusions themselves are exact algebra).
    ref_f = jax.block_until_ready(reference_f32(x, raw))
    np.testing.assert_allclose(np.asarray(decoded), np.asarray(ref_f),
                               rtol=5e-2, atol=1e-2)

    print("KERNEL_OK")
</pallas_src>

<mosaic_0001>
module attributes {stable_mosaic.version = 11 : i64} {
  func.func @compsae_kernel(%arg0: i32, %arg1: i32, %arg2: memref<256x128xbf16, #tpu.memory_space<vmem>>, %arg3: memref<128x256xbf16, #tpu.memory_space<vmem>>, %arg4: memref<1x256xf32, #tpu.memory_space<vmem>>, %arg5: memref<256x256xbf16, #tpu.memory_space<vmem>>, %arg6: memref<1x256xf32, #tpu.memory_space<vmem>>, %arg7: memref<1x256xf32, #tpu.memory_space<vmem>>, %arg8: memref<1x256xf32, #tpu.memory_space<vmem>>, %arg9: memref<256x128xbf16, #tpu.memory_space<vmem>>, %arg10: memref<1x128xf32, #tpu.memory_space<vmem>>, %arg11: memref<1x128xf32, #tpu.memory_space<vmem>>, %arg12: memref<384x128xbf16, #tpu.memory_space<vmem>>, %arg13: memref<1x128xf32, #tpu.memory_space<vmem>>, %arg14: memref<128x128xbf16, #tpu.memory_space<vmem>>, %arg15: memref<1x128xf32, #tpu.memory_space<vmem>>, %arg16: memref<128x128xbf16, #tpu.memory_space<vmem>>, %arg17: memref<256x128xf32, #tpu.memory_space<vmem>>, %arg18: memref<256x384xbf16, #tpu.memory_space<vmem>>) attributes {dimension_semantics = [#tpu.dimension_semantics<parallel>, #tpu.dimension_semantics<arbitrary>], iteration_bounds = array<i64: 2, 1>, scalar_prefetch = 0 : i64, scratch_operands = 1 : i64, tpu.core_type = #tpu.core_type<tc>, window_params = [{transform_indices = @transform_0, window_bounds = array<i64: 256, 128>}, {pipeline_mode = #tpu.pipeline_mode<synchronous>, transform_indices = @transform_1, window_bounds = array<i64: 128, 256>}, {pipeline_mode = #tpu.pipeline_mode<synchronous>, transform_indices = @transform_2, window_bounds = array<i64: 1, 256>}, {pipeline_mode = #tpu.pipeline_mode<synchronous>, transform_indices = @transform_3, window_bounds = array<i64: 256, 256>}, {pipeline_mode = #tpu.pipeline_mode<synchronous>, transform_indices = @transform_4, window_bounds = array<i64: 1, 256>}, {pipeline_mode = #tpu.pipeline_mode<synchronous>, transform_indices = @transform_5, window_bounds = array<i64: 1, 256>}, {pipeline_mode = #tpu.pipeline_mode<synchronous>, transform_indices = @transform_6, window_bounds = array<i64: 1, 256>}, {pipeline_mode = #tpu.pipeline_mode<synchronous>, transform_indices = @transform_7, window_bounds = array<i64: 256, 128>}, {pipeline_mode = #tpu.pipeline_mode<synchronous>, transform_indices = @transform_8, window_bounds = array<i64: 1, 128>}, {pipeline_mode = #tpu.pipeline_mode<synchronous>, transform_indices = @transform_9, window_bounds = array<i64: 1, 128>}, {transform_indices = @transform_10, window_bounds = array<i64: 384, 128>}, {transform_indices = @transform_11, window_bounds = array<i64: 1, 128>}, {transform_indices = @transform_12, window_bounds = array<i64: 128, 128>}, {transform_indices = @transform_13, window_bounds = array<i64: 1, 128>}, {transform_indices = @transform_14, window_bounds = array<i64: 128, 128>}, {transform_indices = @transform_15, window_bounds = array<i64: 256, 128>}]} {
    %c0_i32 = arith.constant 0 : i32
    %0 = arith.cmpi eq, %arg1, %c0_i32 : i32
    %1 = arith.extui %0 : i1 to i32
    %c0_i32_0 = arith.constant 0 : i32
    %2 = arith.cmpi ne, %1, %c0_i32_0 : i32
    scf.if %2 {
      %c0_20 = arith.constant 0 : index
      %c0_21 = arith.constant 0 : index
      %27 = vector.load %arg2[%c0_20, %c0_21] : memref<256x128xbf16, #tpu.memory_space<vmem>>, vector<256x128xbf16>
      %c0_22 = arith.constant 0 : index
      %c0_23 = arith.constant 0 : index
      %28 = vector.load %arg3[%c0_22, %c0_23] : memref<128x256xbf16, #tpu.memory_space<vmem>>, vector<128x256xbf16>
      %cst_24 = arith.constant dense<0.000000e+00> : vector<256x256xf32>
      %29 = tpu.matmul %27, %28, %cst_24 {dimension_numbers = #tpu.dot_dimension_numbers<[1], [0], [0], [1], [0, 0, 1, 1], [], []>} : vector<256x128xbf16>, vector<128x256xbf16>, vector<256x256xf32> -> vector<256x256xf32>
      %c0_25 = arith.constant 0 : index
      %c0_26 = arith.constant 0 : index
      %30 = vector.load %arg4[%c0_25, %c0_26] : memref<1x256xf32, #tpu.memory_space<vmem>>, vector<1x256xf32>
      %31 = vector.broadcast %30 : vector<1x256xf32> to vector<256x256xf32>
      %32 = arith.addf %29, %31 : vector<256x256xf32>
      %cst_27 = arith.constant 0.000000e+00 : f32
      %33 = vector.broadcast %cst_27 : f32 to vector<256x256xf32>
      %34 = arith.maximumf %32, %33 : vector<256x256xf32>
      %35 = arith.truncf %34 : vector<256x256xf32> to vector<256x256xbf16>
      %c0_28 = arith.constant 0 : index
      %c0_29 = arith.constant 0 : index
      %36 = vector.load %arg5[%c0_28, %c0_29] : memref<256x256xbf16, #tpu.memory_space<vmem>>, vector<256x256xbf16>
      %cst_30 = arith.constant dense<0.000000e+00> : vector<256x256xf32>
      %37 = tpu.matmul %35, %36, %cst_30 {dimension_numbers = #tpu.dot_dimension_numbers<[1], [0], [0], [1], [0, 0, 1, 1], [], []>} : vector<256x256xbf16>, vector<256x256xbf16>, vector<256x256xf32> -> vector<256x256xf32>
      %38 = arith.addf %34, %37 : vector<256x256xf32>
      %c0_31 = arith.constant 0 : index
      %c0_32 = arith.constant 0 : index
      %39 = vector.load %arg6[%c0_31, %c0_32] : memref<1x256xf32, #tpu.memory_space<vmem>>, vector<1x256xf32>
      %40 = vector.broadcast %39 : vector<1x256xf32> to vector<256x256xf32>
      %41 = arith.addf %38, %40 : vector<256x256xf32>
      %cst_33 = arith.constant dense<0.000000e+00> : vector<256xf32>
      %42 = vector.multi_reduction <add>, %41, %cst_33 [1] : vector<256x256xf32> to vector<256xf32>
      %43 = vector.shape_cast %42 : vector<256xf32> to vector<256x1xf32>
      %cst_34 = arith.constant 3.906250e-03 : f32
      %44 = vector.broadcast %cst_34 : f32 to vector<256x1xf32>
      %45 = arith.mulf %43, %44 : vector<256x1xf32>
      %46 = arith.mulf %41, %41 : vector<256x256xf32>
      %cst_35 = arith.constant dense<0.000000e+00> : vector<256xf32>
      %47 = vector.multi_reduction <add>, %46, %cst_35 [1] : vector<256x256xf32> to vector<256xf32>
      %48 = vector.shape_cast %47 : vector<256xf32> to vector<256x1xf32>
      %cst_36 = arith.constant 3.906250e-03 : f32
      %49 = vector.broadcast %cst_36 : f32 to vector<256x1xf32>
      %50 = arith.mulf %48, %49 : vector<256x1xf32>
      %51 = arith.mulf %45, %45 : vector<256x1xf32>
      %52 = arith.subf %50, %51 : vector<256x1xf32>
      %53 = vector.broadcast %45 : vector<256x1xf32> to vector<256x256xf32>
      %54 = arith.subf %41, %53 : vector<256x256xf32>
      %cst_37 = arith.constant 9.99999974E-6 : f32
      %55 = vector.broadcast %cst_37 : f32 to vector<256x1xf32>
      %56 = arith.addf %52, %55 : vector<256x1xf32>
      %57 = math.rsqrt %56 : vector<256x1xf32>
      %58 = vector.broadcast %57 : vector<256x1xf32> to vector<256x256xf32>
      %59 = arith.mulf %54, %58 : vector<256x256xf32>
      %c0_38 = arith.constant 0 : index
      %c0_39 = arith.constant 0 : index
      %60 = vector.load %arg7[%c0_38, %c0_39] : memref<1x256xf32, #tpu.memory_space<vmem>>, vector<1x256xf32>
      %61 = vector.broadcast %60 : vector<1x256xf32> to vector<256x256xf32>
      %62 = arith.mulf %59, %61 : vector<256x256xf32>
      %c0_40 = arith.constant 0 : index
      %c0_41 = arith.constant 0 : index
      %63 = vector.load %arg8[%c0_40, %c0_41] : memref<1x256xf32, #tpu.memory_space<vmem>>, vector<1x256xf32>
      %64 = vector.broadcast %63 : vector<1x256xf32> to vector<256x256xf32>
      %65 = arith.addf %62, %64 : vector<256x256xf32>
      %66 = arith.truncf %65 : vector<256x256xf32> to vector<256x256xbf16>
      %c0_42 = arith.constant 0 : index
      %c0_43 = arith.constant 0 : index
      %67 = vector.load %arg9[%c0_42, %c0_43] : memref<256x128xbf16, #tpu.memory_space<vmem>>, vector<256x128xbf16>
      %cst_44 = arith.constant dense<0.000000e+00> : vector<256x128xf32>
      %68 = tpu.matmul %66, %67, %cst_44 {dimension_numbers = #tpu.dot_dimension_numbers<[1], [0], [0], [1], [0, 0, 1, 1], [], []>} : vector<256x256xbf16>, vector<256x128xbf16>, vector<256x128xf32> -> vector<256x128xf32>
      %c0_45 = arith.constant 0 : index
      %c0_46 = arith.constant 0 : index
      %69 = vector.load %arg10[%c0_45, %c0_46] : memref<1x128xf32, #tpu.memory_space<vmem>>, vector<1x128xf32>
      %70 = vector.broadcast %69 : vector<1x128xf32> to vector<256x128xf32>
      %71 = arith.addf %68, %70 : vector<256x128xf32>
      %cst_47 = arith.constant 0.000000e+00 : f32
      %72 = vector.broadcast %cst_47 : f32 to vector<256x128xf32>
      %73 = arith.maximumf %71, %72 : vector<256x128xf32>
      %74 = arith.truncf %65 : vector<256x256xf32> to vector<256x256xbf16>
      %c0_48 = arith.constant 0 : index
      %c0_49 = arith.constant 0 : index
      %75 = vector.load %arg18[%c0_48, %c0_49] : memref<256x384xbf16, #tpu.memory_space<vmem>>, vector<256x256xbf16>
      tpu.vector_store %arg18[%c0_48, %c0_49], %74 {strides = array<i32>} : memref<256x384xbf16, #tpu.memory_space<vmem>>, vector<256x256xbf16>,
      %76 = arith.truncf %73 : vector<256x128xf32> to vector<256x128xbf16>
      %c0_50 = arith.constant 0 : index
      %c256_51 = arith.constant 256 : index
      %77 = vector.load %arg18[%c0_50, %c256_51] : memref<256x384xbf16, #tpu.memory_space<vmem>>, vector<256x128xbf16>
      tpu.vector_store %arg18[%c0_50, %c256_51], %76 {strides = array<i32>} : memref<256x384xbf16, #tpu.memory_space<vmem>>, vector<256x128xbf16>,
      %c0_52 = arith.constant 0 : index
      %c0_53 = arith.constant 0 : index
      %78 = vector.load %arg11[%c0_52, %c0_53] : memref<1x128xf32, #tpu.memory_space<vmem>>, vector<1x128xf32>
      %79 = vector.shape_cast %78 : vector<1x128xf32> to vector<1x128xf32>
      %80 = vector.broadcast %79 : vector<1x128xf32> to vector<256x128xf32>
      %c0_54 = arith.constant 0 : index
      %c0_55 = arith.constant 0 : index
      %81 = vector.load %arg17[%c0_54, %c0_55] : memref<256x128xf32, #tpu.memory_space<vmem>>, vector<256x128xf32>
      tpu.vector_store %arg17[%c0_54, %c0_55], %80 {strides = array<i32>} : memref<256x128xf32, #tpu.memory_space<vmem>>, vector<256x128xf32>,
    } else {
    }
    %c0 = arith.constant 0 : index
    %c0_1 = arith.constant 0 : index
    %3 = vector.load %arg18[%c0, %c0_1] : memref<256x384xbf16, #tpu.memory_space<vmem>>, vector<256x384xbf16>
    %c0_2 = arith.constant 0 : index
    %c0_3 = arith.constant 0 : index
    %4 = vector.load %arg12[%c0_2, %c0_3] : memref<384x128xbf16, #tpu.memory_space<vmem>>, vector<384x128xbf16>
    %cst = arith.constant dense<0.000000e+00> : vector<256x128xf32>
    %5 = tpu.matmul %3, %4, %cst {dimension_numbers = #tpu.dot_dimension_numbers<[1], [0], [0], [1], [0, 0, 1, 1], [], []>} : vector<256x384xbf16>, vector<384x128xbf16>, vector<256x128xf32> -> vector<256x128xf32>
    %c0_4 = arith.constant 0 : index
    %c0_5 = arith.constant 0 : index
    %6 = vector.load %arg13[%c0_4, %c0_5] : memref<1x128xf32, #tpu.memory_space<vmem>>, vector<1x128xf32>
    %7 = vector.broadcast %6 : vector<1x128xf32> to vector<256x128xf32>
    %8 = arith.addf %5, %7 : vector<256x128xf32>
    %c0_6 = arith.constant 0 : index
    %c256 = arith.constant 256 : index
    %9 = vector.load %arg18[%c0_6, %c256] : memref<256x384xbf16, #tpu.memory_space<vmem>>, vector<256x128xbf16>
    %c0_7 = arith.constant 0 : index
    %c0_8 = arith.constant 0 : index
    %10 = vector.load %arg14[%c0_7, %c0_8] : memref<128x128xbf16, #tpu.memory_space<vmem>>, vector<128x128xbf16>
    %cst_9 = arith.constant dense<0.000000e+00> : vector<256x128xf32>
    %11 = tpu.matmul %9, %10, %cst_9 {dimension_numbers = #tpu.dot_dimension_numbers<[1], [0], [0], [1], [0, 0, 1, 1], [], []>} : vector<256x128xbf16>, vector<128x128xbf16>, vector<256x128xf32> -> vector<256x128xf32>
    %c0_10 = arith.constant 0 : index
    %c0_11 = arith.constant 0 : index
    %12 = vector.load %arg15[%c0_10, %c0_11] : memref<1x128xf32, #tpu.memory_space<vmem>>, vector<1x128xf32>
    %13 = vector.broadcast %12 : vector<1x128xf32> to vector<256x128xf32>
    %14 = arith.addf %11, %13 : vector<256x128xf32>
    %15 = arith.negf %8 : vector<256x128xf32>
    %16 = math.exp %15 : vector<256x128xf32>
    %cst_12 = arith.constant 1.000000e+00 : f32
    %17 = vector.broadcast %cst_12 : f32 to vector<256x128xf32>
    %18 = arith.addf %17, %16 : vector<256x128xf32>
    %19 = arith.divf %17, %18 : vector<256x128xf32>
    %20 = arith.mulf %14, %19 : vector<256x128xf32>
    %c0_13 = arith.constant 0 : index
    %c0_14 = arith.constant 0 : index
    %21 = vector.load %arg17[%c0_13, %c0_14] : memref<256x128xf32, #tpu.memory_space<vmem>>, vector<256x128xf32>
    %22 = arith.truncf %20 : vector<256x128xf32> to vector<256x128xbf16>
    %c0_15 = arith.constant 0 : index
    %c0_16 = arith.constant 0 : index
    %23 = vector.load %arg16[%c0_15, %c0_16] : memref<128x128xbf16, #tpu.memory_space<vmem>>, vector<128x128xbf16>
    %cst_17 = arith.constant dense<0.000000e+00> : vector<256x128xf32>
    %24 = tpu.matmul %22, %23, %cst_17 {dimension_numbers = #tpu.dot_dimension_numbers<[1], [0], [0], [1], [0, 0, 1, 1], [], []>} : vector<256x128xbf16>, vector<128x128xbf16>, vector<256x128xf32> -> vector<256x128xf32>
    %25 = arith.addf %21, %24 : vector<256x128xf32>
    %c0_18 = arith.constant 0 : index
    %c0_19 = arith.constant 0 : index
    %26 = vector.load %arg17[%c0_18, %c0_19] : memref<256x128xf32, #tpu.memory_space<vmem>>, vector<256x128xf32>
    tpu.vector_store %arg17[%c0_18, %c0_19], %25 {strides = array<i32>} : memref<256x128xf32, #tpu.memory_space<vmem>>, vector<256x128xf32>,
    return
  }
  func.func @transform_0(%arg0: i32, %arg1: i32) -> (i32, i32) {
    %c0_i32 = arith.constant 0 : i32
    %c0_i32_0 = arith.constant 0 : i32
    return %arg0, %c0_i32 : i32, i32
  }
  func.func @transform_1(%arg0: i32, %arg1: i32) -> (i32, i32) {
    %c0_i32 = arith.constant 0 : i32
    %c0_i32_0 = arith.constant 0 : i32
    %c0_i32_1 = arith.constant 0 : i32
    return %c0_i32, %c0_i32_0 : i32, i32
  }
  func.func @transform_2(%arg0: i32, %arg1: i32) -> (i32, i32) {
    %c0_i32 = arith.constant 0 : i32
    %c0_i32_0 = arith.constant 0 : i32
    %c0_i32_1 = arith.constant 0 : i32
    return %c0_i32, %c0_i32_0 : i32, i32
  }
  func.func @transform_3(%arg0: i32, %arg1: i32) -> (i32, i32) {
    %c0_i32 = arith.constant 0 : i32
    %c0_i32_0 = arith.constant 0 : i32
    %c0_i32_1 = arith.constant 0 : i32
    return %c0_i32, %c0_i32_0 : i32, i32
  }
  func.func @transform_4(%arg0: i32, %arg1: i32) -> (i32, i32) {
    %c0_i32 = arith.constant 0 : i32
    %c0_i32_0 = arith.constant 0 : i32
    %c0_i32_1 = arith.constant 0 : i32
    return %c0_i32, %c0_i32_0 : i32, i32
  }
  func.func @transform_5(%arg0: i32, %arg1: i32) -> (i32, i32) {
    %c0_i32 = arith.constant 0 : i32
    %c0_i32_0 = arith.constant 0 : i32
    %c0_i32_1 = arith.constant 0 : i32
    return %c0_i32, %c0_i32_0 : i32, i32
  }
  func.func @transform_6(%arg0: i32, %arg1: i32) -> (i32, i32) {
    %c0_i32 = arith.constant 0 : i32
    %c0_i32_0 = arith.constant 0 : i32
    %c0_i32_1 = arith.constant 0 : i32
    return %c0_i32, %c0_i32_0 : i32, i32
  }
  func.func @transform_7(%arg0: i32, %arg1: i32) -> (i32, i32) {
    %c0_i32 = arith.constant 0 : i32
    %c0_i32_0 = arith.constant 0 : i32
    %c0_i32_1 = arith.constant 0 : i32
    return %c0_i32, %c0_i32_0 : i32, i32
  }
  func.func @transform_8(%arg0: i32, %arg1: i32) -> (i32, i32) {
    %c0_i32 = arith.constant 0 : i32
    %c0_i32_0 = arith.constant 0 : i32
    %c0_i32_1 = arith.constant 0 : i32
    return %c0_i32, %c0_i32_0 : i32, i32
  }
  func.func @transform_9(%arg0: i32, %arg1: i32) -> (i32, i32) {
    %c0_i32 = arith.constant 0 : i32
    %c0_i32_0 = arith.constant 0 : i32
    %c0_i32_1 = arith.constant 0 : i32
    return %c0_i32, %c0_i32_0 : i32, i32
  }
  func.func @transform_10(%arg0: i32, %arg1: i32) -> (i32, i32) {
    %c0_i32 = arith.constant 0 : i32
    %c0_i32_0 = arith.constant 0 : i32
    return %c0_i32, %arg1 : i32, i32
  }
  func.func @transform_11(%arg0: i32, %arg1: i32) -> (i32, i32) {
    %c0_i32 = arith.constant 0 : i32
    %c0_i32_0 = arith.constant 0 : i32
    return %c0_i32, %arg1 : i32, i32
  }
  func.func @transform_12(%arg0: i32, %arg1: i32) -> (i32, i32) {
    %c0_i32 = arith.constant 0 : i32
    %c0_i32_0 = arith.constant 0 : i32
    return %c0_i32, %arg1 : i32, i32
  }
  func.func @transform_13(%arg0: i32, %arg1: i32) -> (i32, i32) {
    %c0_i32 = arith.constant 0 : i32
    %c0_i32_0 = arith.constant 0 : i32
    return %c0_i32, %arg1 : i32, i32
  }
  func.func @transform_14(%arg0: i32, %arg1: i32) -> (i32, i32) {
    %c0_i32 = arith.constant 0 : i32
    %c0_i32_0 = arith.constant 0 : i32
    return %arg1, %c0_i32 : i32, i32
  }
  func.func @transform_15(%arg0: i32, %arg1: i32) -> (i32, i32) {
    %c0_i32 = arith.constant 0 : i32
    %c0_i32_0 = arith.constant 0 : i32
    return %arg0, %c0_i32 : i32, i32
  }
}

module attributes {stable_mosaic.version = 11 : i64} {
  func.func @compsae_kernel(%arg0: i32, %arg1: i32, %arg2: memref<256x128xbf16, #tpu.memory_space<vmem>>, %arg3: memref<128x256xbf16, #tpu.memory_space<vmem>>, %arg4: memref<1x256xf32, #tpu.memory_space<vmem>>, %arg5: memref<256x256xbf16, #tpu.memory_space<vmem>>, %arg6: memref<1x256xf32, #tpu.memory_space<vmem>>, %arg7: memref<1x256xf32, #tpu.memory_space<vmem>>, %arg8: memref<1x256xf32, #tpu.memory_space<vmem>>, %arg9: memref<256x128xbf16, #tpu.memory_space<vmem>>, %arg10: memref<1x128xf32, #tpu.memory_space<vmem>>, %arg11: memref<1x128xf32, #tpu.memory_space<vmem>>, %arg12: memref<384x128xbf16, #tpu.memory_space<vmem>>, %arg13: memref<1x128xf32, #tpu.memory_space<vmem>>, %arg14: memref<128x128xbf16, #tpu.memory_space<vmem>>, %arg15: memref<1x128xf32, #tpu.memory_space<vmem>>, %arg16: memref<128x128xbf16, #tpu.memory_space<vmem>>, %arg17: memref<256x128xf32, #tpu.memory_space<vmem>>, %arg18: memref<256x384xbf16, #tpu.memory_space<vmem>>) attributes {dimension_semantics = [#tpu.dimension_semantics<parallel>, #tpu.dimension_semantics<arbitrary>], iteration_bounds = array<i64: 2, 1>, scalar_prefetch = 0 : i64, scratch_operands = 1 : i64, tpu.core_type = #tpu.core_type<tc>, window_params = [{transform_indices = @transform_0, window_bounds = array<i64: 256, 128>}, {pipeline_mode = #tpu.pipeline_mode<synchronous>, transform_indices = @transform_1, window_bounds = array<i64: 128, 256>}, {pipeline_mode = #tpu.pipeline_mode<synchronous>, transform_indices = @transform_2, window_bounds = array<i64: 1, 256>}, {pipeline_mode = #tpu.pipeline_mode<synchronous>, transform_indices = @transform_3, window_bounds = array<i64: 256, 256>}, {pipeline_mode = #tpu.pipeline_mode<synchronous>, transform_indices = @transform_4, window_bounds = array<i64: 1, 256>}, {pipeline_mode = #tpu.pipeline_mode<synchronous>, transform_indices = @transform_5, window_bounds = array<i64: 1, 256>}, {pipeline_mode = #tpu.pipeline_mode<synchronous>, transform_indices = @transform_6, window_bounds = array<i64: 1, 256>}, {pipeline_mode = #tpu.pipeline_mode<synchronous>, transform_indices = @transform_7, window_bounds = array<i64: 256, 128>}, {pipeline_mode = #tpu.pipeline_mode<synchronous>, transform_indices = @transform_8, window_bounds = array<i64: 1, 128>}, {pipeline_mode = #tpu.pipeline_mode<synchronous>, transform_indices = @transform_9, window_bounds = array<i64: 1, 128>}, {transform_indices = @transform_10, window_bounds = array<i64: 384, 128>}, {transform_indices = @transform_11, window_bounds = array<i64: 1, 128>}, {transform_indices = @transform_12, window_bounds = array<i64: 128, 128>}, {transform_indices = @transform_13, window_bounds = array<i64: 1, 128>}, {transform_indices = @transform_14, window_bounds = array<i64: 128, 128>}, {transform_indices = @transform_15, window_bounds = array<i64: 256, 128>}]} {
    %c0_i32 = arith.constant 0 : i32
    %0 = arith.cmpi eq, %arg1, %c0_i32 : i32
    %1 = arith.extui %0 : i1 to i32
    %c0_i32_0 = arith.constant 0 : i32
    %2 = arith.cmpi ne, %1, %c0_i32_0 : i32
    scf.if %2 {
      %c0_20 = arith.constant 0 : index
      %c0_21 = arith.constant 0 : index
      %27 = vector.load %arg2[%c0_20, %c0_21] : memref<256x128xbf16, #tpu.memory_space<vmem>>, vector<256x128xbf16>
      %c0_22 = arith.constant 0 : index
      %c0_23 = arith.constant 0 : index
      %28 = vector.load %arg3[%c0_22, %c0_23] : memref<128x256xbf16, #tpu.memory_space<vmem>>, vector<128x256xbf16>
      %cst_24 = arith.constant dense<0.000000e+00> : vector<256x256xf32>
      %29 = tpu.matmul %27, %28, %cst_24 {dimension_numbers = #tpu.dot_dimension_numbers<[1], [0], [0], [1], [0, 0, 1, 1], [], []>} : vector<256x128xbf16>, vector<128x256xbf16>, vector<256x256xf32> -> vector<256x256xf32>
      %c0_25 = arith.constant 0 : index
      %c0_26 = arith.constant 0 : index
      %30 = vector.load %arg4[%c0_25, %c0_26] : memref<1x256xf32, #tpu.memory_space<vmem>>, vector<1x256xf32>
      %31 = vector.broadcast %30 : vector<1x256xf32> to vector<256x256xf32>
      %32 = arith.addf %29, %31 : vector<256x256xf32>
      %cst_27 = arith.constant 0.000000e+00 : f32
      %33 = vector.broadcast %cst_27 : f32 to vector<256x256xf32>
      %34 = arith.maximumf %32, %33 : vector<256x256xf32>
      %35 = arith.truncf %34 : vector<256x256xf32> to vector<256x256xbf16>
      %c0_28 = arith.constant 0 : index
      %c0_29 = arith.constant 0 : index
      %36 = vector.load %arg5[%c0_28, %c0_29] : memref<256x256xbf16, #tpu.memory_space<vmem>>, vector<256x256xbf16>
      %cst_30 = arith.constant dense<0.000000e+00> : vector<256x256xf32>
      %37 = tpu.matmul %35, %36, %cst_30 {dimension_numbers = #tpu.dot_dimension_numbers<[1], [0], [0], [1], [0, 0, 1, 1], [], []>} : vector<256x256xbf16>, vector<256x256xbf16>, vector<256x256xf32> -> vector<256x256xf32>
      %38 = arith.addf %34, %37 : vector<256x256xf32>
      %c0_31 = arith.constant 0 : index
      %c0_32 = arith.constant 0 : index
      %39 = vector.load %arg6[%c0_31, %c0_32] : memref<1x256xf32, #tpu.memory_space<vmem>>, vector<1x256xf32>
      %40 = vector.broadcast %39 : vector<1x256xf32> to vector<256x256xf32>
      %41 = arith.addf %38, %40 : vector<256x256xf32>
      %cst_33 = arith.constant dense<0.000000e+00> : vector<256xf32>
      %42 = vector.multi_reduction <add>, %41, %cst_33 [1] : vector<256x256xf32> to vector<256xf32>
      %43 = vector.shape_cast %42 : vector<256xf32> to vector<256x1xf32>
      %cst_34 = arith.constant 3.906250e-03 : f32
      %44 = vector.broadcast %cst_34 : f32 to vector<256x1xf32>
      %45 = arith.mulf %43, %44 : vector<256x1xf32>
      %46 = arith.mulf %41, %41 : vector<256x256xf32>
      %cst_35 = arith.constant dense<0.000000e+00> : vector<256xf32>
      %47 = vector.multi_reduction <add>, %46, %cst_35 [1] : vector<256x256xf32> to vector<256xf32>
      %48 = vector.shape_cast %47 : vector<256xf32> to vector<256x1xf32>
      %cst_36 = arith.constant 3.906250e-03 : f32
      %49 = vector.broadcast %cst_36 : f32 to vector<256x1xf32>
      %50 = arith.mulf %48, %49 : vector<256x1xf32>
      %51 = arith.mulf %45, %45 : vector<256x1xf32>
      %52 = arith.subf %50, %51 : vector<256x1xf32>
      %53 = vector.broadcast %45 : vector<256x1xf32> to vector<256x256xf32>
      %54 = arith.subf %41, %53 : vector<256x256xf32>
      %cst_37 = arith.constant 9.99999974E-6 : f32
      %55 = vector.broadcast %cst_37 : f32 to vector<256x1xf32>
      %56 = arith.addf %52, %55 : vector<256x1xf32>
      %57 = math.rsqrt %56 : vector<256x1xf32>
      %58 = vector.broadcast %57 : vector<256x1xf32> to vector<256x256xf32>
      %59 = arith.mulf %54, %58 : vector<256x256xf32>
      %c0_38 = arith.constant 0 : index
      %c0_39 = arith.constant 0 : index
      %60 = vector.load %arg7[%c0_38, %c0_39] : memref<1x256xf32, #tpu.memory_space<vmem>>, vector<1x256xf32>
      %61 = vector.broadcast %60 : vector<1x256xf32> to vector<256x256xf32>
      %62 = arith.mulf %59, %61 : vector<256x256xf32>
      %c0_40 = arith.constant 0 : index
      %c0_41 = arith.constant 0 : index
      %63 = vector.load %arg8[%c0_40, %c0_41] : memref<1x256xf32, #tpu.memory_space<vmem>>, vector<1x256xf32>
      %64 = vector.broadcast %63 : vector<1x256xf32> to vector<256x256xf32>
      %65 = arith.addf %62, %64 : vector<256x256xf32>
      %66 = arith.truncf %65 : vector<256x256xf32> to vector<256x256xbf16>
      %c0_42 = arith.constant 0 : index
      %c0_43 = arith.constant 0 : index
      %67 = vector.load %arg9[%c0_42, %c0_43] : memref<256x128xbf16, #tpu.memory_space<vmem>>, vector<256x128xbf16>
      %cst_44 = arith.constant dense<0.000000e+00> : vector<256x128xf32>
      %68 = tpu.matmul %66, %67, %cst_44 {dimension_numbers = #tpu.dot_dimension_numbers<[1], [0], [0], [1], [0, 0, 1, 1], [], []>} : vector<256x256xbf16>, vector<256x128xbf16>, vector<256x128xf32> -> vector<256x128xf32>
      %c0_45 = arith.constant 0 : index
      %c0_46 = arith.constant 0 : index
      %69 = vector.load %arg10[%c0_45, %c0_46] : memref<1x128xf32, #tpu.memory_space<vmem>>, vector<1x128xf32>
      %70 = vector.broadcast %69 : vector<1x128xf32> to vector<256x128xf32>
      %71 = arith.addf %68, %70 : vector<256x128xf32>
      %cst_47 = arith.constant 0.000000e+00 : f32
      %72 = vector.broadcast %cst_47 : f32 to vector<256x128xf32>
      %73 = arith.maximumf %71, %72 : vector<256x128xf32>
      %74 = arith.truncf %65 : vector<256x256xf32> to vector<256x256xbf16>
      %c0_48 = arith.constant 0 : index
      %c0_49 = arith.constant 0 : index
      %75 = vector.load %arg18[%c0_48, %c0_49] : memref<256x384xbf16, #tpu.memory_space<vmem>>, vector<256x256xbf16>
      tpu.vector_store %arg18[%c0_48, %c0_49], %74 {strides = array<i32>} : memref<256x384xbf16, #tpu.memory_space<vmem>>, vector<256x256xbf16>,
      %76 = arith.truncf %73 : vector<256x128xf32> to vector<256x128xbf16>
      %c0_50 = arith.constant 0 : index
      %c256_51 = arith.constant 256 : index
      %77 = vector.load %arg18[%c0_50, %c256_51] : memref<256x384xbf16, #tpu.memory_space<vmem>>, vector<256x128xbf16>
      tpu.vector_store %arg18[%c0_50, %c256_51], %76 {strides = array<i32>} : memref<256x384xbf16, #tpu.memory_space<vmem>>, vector<256x128xbf16>,
      %c0_52 = arith.constant 0 : index
      %c0_53 = arith.constant 0 : index
      %78 = vector.load %arg11[%c0_52, %c0_53] : memref<1x128xf32, #tpu.memory_space<vmem>>, vector<1x128xf32>
      %79 = vector.shape_cast %78 : vector<1x128xf32> to vector<1x128xf32>
      %80 = vector.broadcast %79 : vector<1x128xf32> to vector<256x128xf32>
      %c0_54 = arith.constant 0 : index
      %c0_55 = arith.constant 0 : index
      %81 = vector.load %arg17[%c0_54, %c0_55] : memref<256x128xf32, #tpu.memory_space<vmem>>, vector<256x128xf32>
      tpu.vector_store %arg17[%c0_54, %c0_55], %80 {strides = array<i32>} : memref<256x128xf32, #tpu.memory_space<vmem>>, vector<256x128xf32>,
    } else {
    }
    %c0 = arith.constant 0 : index
    %c0_1 = arith.constant 0 : index
    %3 = vector.load %arg18[%c0, %c0_1] : memref<256x384xbf16, #tpu.memory_space<vmem>>, vector<256x384xbf16>
    %c0_2 = arith.constant 0 : index
    %c0_3 = arith.constant 0 : index
    %4 = vector.load %arg12[%c0_2, %c0_3] : memref<384x128xbf16, #tpu.memory_space<vmem>>, vector<384x128xbf16>
    %cst = arith.constant dense<0.000000e+00> : vector<256x128xf32>
    %5 = tpu.matmul %3, %4, %cst {dimension_numbers = #tpu.dot_dimension_numbers<[1], [0], [0], [1], [0, 0, 1, 1], [], []>} : vector<256x384xbf16>, vector<384x128xbf16>, vector<256x128xf32> -> vector<256x128xf32>
    %c0_4 = arith.constant 0 : index
    %c0_5 = arith.constant 0 : index
    %6 = vector.load %arg13[%c0_4, %c0_5] : memref<1x128xf32, #tpu.memory_space<vmem>>, vector<1x128xf32>
    %7 = vector.broadcast %6 : vector<1x128xf32> to vector<256x128xf32>
    %8 = arith.addf %5, %7 : vector<256x128xf32>
    %c0_6 = arith.constant 0 : index
    %c256 = arith.constant 256 : index
    %9 = vector.load %arg18[%c0_6, %c256] : memref<256x384xbf16, #tpu.memory_space<vmem>>, vector<256x128xbf16>
    %c0_7 = arith.constant 0 : index
    %c0_8 = arith.constant 0 : index
    %10 = vector.load %arg14[%c0_7, %c0_8] : memref<128x128xbf16, #tpu.memory_space<vmem>>, vector<128x128xbf16>
    %cst_9 = arith.constant dense<0.000000e+00> : vector<256x128xf32>
    %11 = tpu.matmul %9, %10, %cst_9 {dimension_numbers = #tpu.dot_dimension_numbers<[1], [0], [0], [1], [0, 0, 1, 1], [], []>} : vector<256x128xbf16>, vector<128x128xbf16>, vector<256x128xf32> -> vector<256x128xf32>
    %c0_10 = arith.constant 0 : index
    %c0_11 = arith.constant 0 : index
    %12 = vector.load %arg15[%c0_10, %c0_11] : memref<1x128xf32, #tpu.memory_space<vmem>>, vector<1x128xf32>
    %13 = vector.broadcast %12 : vector<1x128xf32> to vector<256x128xf32>
    %14 = arith.addf %11, %13 : vector<256x128xf32>
    %15 = arith.negf %8 : vector<256x128xf32>
    %16 = math.exp %15 : vector<256x128xf32>
    %cst_12 = arith.constant 1.000000e+00 : f32
    %17 = vector.broadcast %cst_12 : f32 to vector<256x128xf32>
    %18 = arith.addf %17, %16 : vector<256x128xf32>
    %19 = arith.divf %17, %18 : vector<256x128xf32>
    %20 = arith.mulf %14, %19 : vector<256x128xf32>
    %c0_13 = arith.constant 0 : index
    %c0_14 = arith.constant 0 : index
    %21 = vector.load %arg17[%c0_13, %c0_14] : memref<256x128xf32, #tpu.memory_space<vmem>>, vector<256x128xf32>
    %22 = arith.truncf %20 : vector<256x128xf32> to vector<256x128xbf16>
    %c0_15 = arith.constant 0 : index
    %c0_16 = arith.constant 0 : index
    %23 = vector.load %arg16[%c0_15, %c0_16] : memref<128x128xbf16, #tpu.memory_space<vmem>>, vector<128x128xbf16>
    %cst_17 = arith.constant dense<0.000000e+00> : vector<256x128xf32>
    %24 = tpu.matmul %22, %23, %cst_17 {dimension_numbers = #tpu.dot_dimension_numbers<[1], [0], [0], [1], [0, 0, 1, 1], [], []>} : vector<256x128xbf16>, vector<128x128xbf16>, vector<256x128xf32> -> vector<256x128xf32>
    %25 = arith.addf %21, %24 : vector<256x128xf32>
    %c0_18 = arith.constant 0 : index
    %c0_19 = arith.constant 0 : index
    %26 = vector.load %arg17[%c0_18, %c0_19] : memref<256x128xf32, #tpu.memory_space<vmem>>, vector<256x128xf32>
    tpu.vector_store %arg17[%c0_18, %c0_19], %25 {strides = array<i32>} : memref<256x128xf32, #tpu.memory_space<vmem>>, vector<256x128xf32>,
    return
  }
  func.func @transform_0(%arg0: i32, %arg1: i32) -> (i32, i32) {
    %c0_i32 = arith.constant 0 : i32
    %c0_i32_0 = arith.constant 0 : i32
    return %arg0, %c0_i32 : i32, i32
  }
  func.func @transform_1(%arg0: i32, %arg1: i32) -> (i32, i32) {
    %c0_i32 = arith.constant 0 : i32
    %c0_i32_0 = arith.constant 0 : i32
    %c0_i32_1 = arith.constant 0 : i32
    return %c0_i32, %c0_i32_0 : i32, i32
  }
  func.func @transform_2(%arg0: i32, %arg1: i32) -> (i32, i32) {
    %c0_i32 = arith.constant 0 : i32
    %c0_i32_0 = arith.constant 0 : i32
    %c0_i32_1 = arith.constant 0 : i32
    return %c0_i32, %c0_i32_0 : i32, i32
  }
  func.func @transform_3(%arg0: i32, %arg1: i32) -> (i32, i32) {
    %c0_i32 = arith.constant 0 : i32
    %c0_i32_0 = arith.constant 0 : i32
    %c0_i32_1 = arith.constant 0 : i32
    return %c0_i32, %c0_i32_0 : i32, i32
  }
  func.func @transform_4(%arg0: i32, %arg1: i32) -> (i32, i32) {
    %c0_i32 = arith.constant 0 : i32
    %c0_i32_0 = arith.constant 0 : i32
    %c0_i32_1 = arith.constant 0 : i32
    return %c0_i32, %c0_i32_0 : i32, i32
  }
  func.func @transform_5(%arg0: i32, %arg1: i32) -> (i32, i32) {
    %c0_i32 = arith.constant 0 : i32
    %c0_i32_0 = arith.constant 0 : i32
    %c0_i32_1 = arith.constant 0 : i32
    return %c0_i32, %c0_i32_0 : i32, i32
  }
  func.func @transform_6(%arg0: i32, %arg1: i32) -> (i32, i32) {
    %c0_i32 = arith.constant 0 : i32
    %c0_i32_0 = arith.constant 0 : i32
    %c0_i32_1 = arith.constant 0 : i32
    return %c0_i32, %c0_i32_0 : i32, i32
  }
  func.func @transform_7(%arg0: i32, %arg1: i32) -> (i32, i32) {
    %c0_i32 = arith.constant 0 : i32
    %c0_i32_0 = arith.constant 0 : i32
    %c0_i32_1 = arith.constant 0 : i32
    return %c0_i32, %c0_i32_0 : i32, i32
  }
  func.func @transform_8(%arg0: i32, %arg1: i32) -> (i32, i32) {
    %c0_i32 = arith.constant 0 : i32
    %c0_i32_0 = arith.constant 0 : i32
    %c0_i32_1 = arith.constant 0 : i32
    return %c0_i32, %c0_i32_0 : i32, i32
  }
  func.func @transform_9(%arg0: i32, %arg1: i32) -> (i32, i32) {
    %c0_i32 = arith.constant 0 : i32
    %c0_i32_0 = arith.constant 0 : i32
    %c0_i32_1 = arith.constant 0 : i32
    return %c0_i32, %c0_i32_0 : i32, i32
  }
  func.func @transform_10(%arg0: i32, %arg1: i32) -> (i32, i32) {
    %c0_i32 = arith.constant 0 : i32
    %c0_i32_0 = arith.constant 0 : i32
    return %c0_i32, %arg1 : i32, i32
  }
  func.func @transform_11(%arg0: i32, %arg1: i32) -> (i32, i32) {
    %c0_i32 = arith.constant 0 : i32
    %c0_i32_0 = arith.constant 0 : i32
    return %c0_i32, %arg1 : i32, i32
  }
  func.func @transform_12(%arg0: i32, %arg1: i32) -> (i32, i32) {
    %c0_i32 = arith.constant 0 : i32
    %c0_i32_0 = arith.constant 0 : i32
    return %c0_i32, %arg1 : i32, i32
  }
  func.func @transform_13(%arg0: i32, %arg1: i32) -> (i32, i32) {
    %c0_i32 = arith.constant 0 : i32
    %c0_i32_0 = arith.constant 0 : i32
    return %c0_i32, %arg1 : i32, i32
  }
  func.func @transform_14(%arg0: i32, %arg1: i32) -> (i32, i32) {
    %c0_i32 = arith.constant 0 : i32
    %c0_i32_0 = arith.constant 0 : i32
    return %arg1, %c0_i32 : i32, i32
  }
  func.func @transform_15(%arg0: i32, %arg1: i32) -> (i32, i32) {
    %c0_i32 = arith.constant 0 : i32
    %c0_i32_0 = arith.constant 0 : i32
    return %arg0, %c0_i32 : i32, i32
  }
}

</mosaic_0001>

<llo_original>
// kernel: tpu_custom_call.1
$region0: #{tpu_custom_call.1}
  #allocation0 [shape = 'u32[]', space=smem, size = 0x4, offset = 0x4, fixed_abs, tag = 'smem constant byte address 0x4 - core index']
  #allocation1 [shape = 'u32[144,128]{1,0:T(1,128)}', space=vmem, size = 0x12000, scoped, tag = 'internal scratch']
  #allocation2 [shape = 'bf16[256,384]{1,0:T(16,128)(2,1)}', space=vmem, size = 0x30000, scoped, tag = 'scratch operand']
  %s0 = inlined_call_operand.hbm [shape: bf16[512,128], index: 0, kind: input, shape index: {}]
  %s1 = inlined_call_operand.hbm [shape: bf16[128,256], index: 1, kind: input, shape index: {}]
  %s2 = inlined_call_operand.vmem [shape: f32[1,256], index: 2, kind: input, shape index: {}]
  %s3 = inlined_call_operand.hbm [shape: bf16[256,256], index: 3, kind: input, shape index: {}]
  %s4 = inlined_call_operand.vmem [shape: f32[1,256], index: 4, kind: input, shape index: {}]
  %s5 = inlined_call_operand.vmem [shape: f32[1,256], index: 5, kind: input, shape index: {}]
  %s6 = inlined_call_operand.vmem [shape: f32[1,256], index: 6, kind: input, shape index: {}]
  %s7 = inlined_call_operand.hbm [shape: bf16[256,128], index: 7, kind: input, shape index: {}]
  %s8 = inlined_call_operand.vmem [shape: f32[1,128], index: 8, kind: input, shape index: {}]
  %s9 = inlined_call_operand.vmem [shape: f32[1,128], index: 9, kind: input, shape index: {}]
  %s10 = inlined_call_operand.hbm [shape: bf16[384,128], index: 10, kind: input, shape index: {}]
  %s11 = inlined_call_operand.vmem [shape: f32[1,128], index: 11, kind: input, shape index: {}]
  %s12 = inlined_call_operand.hbm [shape: bf16[128,128], index: 12, kind: input, shape index: {}]
  %s13 = inlined_call_operand.vmem [shape: f32[1,128], index: 13, kind: input, shape index: {}]
  %s14 = inlined_call_operand.hbm [shape: bf16[128,128], index: 14, kind: input, shape index: {}]
  %s15 = inlined_call_operand.hbm [shape: f32[512,128], index: 15, kind: output, shape index: {}]
  %s16 = sld [smem:[#allocation0]]
  $region125: #{tpu_custom_call.1} parent=0
    _
  %s18 = ssub.s32 1, %s16
  %s19 = scalar_select 0, %s18, %s16
  $region1: #{tpu_custom_call.1} parent=0
    #allocation3 [shape = 'u8[131072]{0}', space=vmem, size = 0x20000, scoped, tag = 'input window, operand 0']
    #allocation4 [shape = 's32[2]{0}', space=sflag, size = 0x8, scoped, tag = 'scoped memory for tpu_custom_call.1']
    #allocation5 [shape = 's32[2]{0}', space=sflag, size = 0x8, scoped, tag = 'scoped memory for tpu_custom_call.1']
    #allocation6 [shape = 'u8[65536]{0}', space=vmem, size = 0x10000, scoped, tag = 'input window, operand 1, single buffered']
    #allocation7 [shape = 's32[1]{0}', space=sflag, size = 0x4, scoped, tag = 'scoped memory for tpu_custom_call.1']
    #allocation8 [shape = 'u8[131072]{0}', space=vmem, size = 0x20000, scoped, tag = 'input window, operand 3, single buffered']
    #allocation9 [shape = 'u8[65536]{0}', space=vmem, size = 0x10000, scoped, tag = 'input window, operand 7, single buffered']
    #allocation10 [shape = 's32[1]{0}', space=sflag, size = 0x4, scoped, tag = 'scoped memory for tpu_custom_call.1']
    #allocation11 [shape = 'u8[98304]{0}', space=vmem, size = 0x18000, scoped, tag = 'input window, operand 10, single buffered']
    #allocation12 [shape = 'u8[32768]{0}', space=vmem, size = 0x8000, scoped, tag = 'input window, operand 12, single buffered']
    #allocation13 [shape = 's32[1]{0}', space=sflag, size = 0x4, scoped, tag = 'scoped memory for tpu_custom_call.1']
    #allocation14 [shape = 'u8[32768]{0}', space=vmem, size = 0x8000, scoped, tag = 'input window, operand 14, single buffered']
    #allocation15 [shape = 'u8[262144]{0}', space=vmem, size = 0x40000, scoped, tag = 'output window, operand 0']
    %20 = vsyncpa [#allocation4], 0
    %s21 = scalar_lea.sflag [#allocation4], 1
    %22 = vsyncpa %s21, 0
    %23 = vsyncpa [#allocation7], 0
    %24 = vsyncpa [#allocation10], 0
    %25 = vsyncpa [#allocation13], 0
    %26 = vsyncpa [#allocation5], 0
    %s27 = scalar_lea.sflag [#allocation5], 1
    %28 = vsyncpa %s27, 0
    loop: start=0, step=1, limit=4
    $region2: #{tpu_custom_call.1} parent=1 // loop_pre_header
      _
    $region3: #{tpu_custom_call.1} parent=1 // loop_header
      %s30 = sphi 0, %s34
      %p31 = scmp.ge.s32.totalorder %s30, 4
      %s37 = sphi 0, %s49
      %s38 = sphi 0, %s45
      %s39 = sphi 0, %s37
      %s40 = sphi 0, %s38
      %s41 = sphi 0, %s39
      %s42 = sphi 0, %s40
      %s52 = sphi 0, %s54
      %s55 = sphi 0, %s52
      %s56 = sphi 0, %s55
      %s72 = sphi 0, %s56
      %s76 = sphi 0, %s76
      %s78 = sphi 0, %s76
      %s79 = sphi 0, %s78
      %s93 = sphi 0, %s79
      %s97 = sphi 0, %s97
      %s99 = sphi 0, %s97
      %s100 = sphi 0, %s99
      %s114 = sphi 0, %s100
      %s118 = sphi 0, %s118
      %s120 = sphi 0, %s118
      %s121 = sphi 0, %s120
      %s135 = sphi 0, %s121
      %s139 = sphi 0, %s139
      %s141 = sphi 0, %s139
      %s142 = sphi 0, %s141
      %s156 = sphi 0, %s142
      %s160 = sphi 0, %s160
      %s162 = sphi 0, %s160
      %s163 = sphi 0, %s162
      %s177 = sphi 0, %s163
      %s181 = sphi 0, %s181
      %s183 = sphi 0, %s181
      %s184 = sphi 0, %s183
      %s198 = sphi 0, %s184
      %s202 = sphi 0, %s202
      %s204 = sphi 0, %s202
      %s205 = sphi 0, %s204
      %s219 = sphi 0, %s205
      %s223 = sphi 0, %s223
      %s225 = sphi 0, %s223
      %s226 = sphi 0, %s225
      %s240 = sphi 0, %s226
      %s244 = sphi 0, %s244
      %s246 = sphi 0, %s244
      %s247 = sphi 0, %s246
      %s261 = sphi 0, %s247
      %s267 = sphi 0, %s269
      %s270 = sphi 0, %s267
      %s271 = sphi 0, %s270
      %s287 = sphi 0, %s271
      %s293 = sphi 0, %s295
      %s296 = sphi 0, %s293
      %s297 = sphi 0, %s296
      %s313 = sphi 0, %s297
      %s319 = sphi 0, %s321
      %s322 = sphi 0, %s319
      %s323 = sphi 0, %s322
      %s339 = sphi 0, %s323
      %s345 = sphi 0, %s347
      %s348 = sphi 0, %s345
      %s349 = sphi 0, %s348
      %s365 = sphi 0, %s349
      %s371 = sphi 0, %s373
      %s374 = sphi 0, %s371
      %s375 = sphi 0, %s374
      %s391 = sphi 0, %s375
      %s397 = sphi 0, %s399
      %s400 = sphi 0, %s397
      %s401 = sphi 0, %s400
      %s417 = sphi 0, %s401
    $region4: #{tpu_custom_call.1} parent=1 // loop_header_branch
      %33 = sbr.rel (%p31) target = $region8
    $region5: #{tpu_custom_call.1} parent=1 // loop_body
      %s35 = ssub.s32 %s30, 1
      %s36 = ssub.s32 %s30, 2
      %s43 = sadd.s32 1, %s38
      %p44 = scmp.ge.s32.totalorder %s43, 1
      %s45 = scalar_select %p44, 0, %s43
      %s46 = sadd.s32 1, %s37
      %s47 = scalar_select %p44, %s46, %s37
      %p48 = scmp.ge.s32.totalorder %s47, 2
      %s49 = scalar_select %p48, 0, %s47
      %s50 = ssub.s32 %s37, %s49
      %p51 = scmp.eq.s32.totalorder %s50, 0
      %s53 = sadd.s32 %s52, 1
      %s54 = scalar_select %p51, %s52, %s53
      %p57 = pneg %p51
      %p58 = scmp.eq.s32.totalorder %s30, 1
      %p59 = por %p57, %p58
      %p60 = scmp.ne.s32.totalorder %s52, %s55
      %p61 = scmp.eq.s32.totalorder %s30, 0
      %p62 = por %p60, %p61
      %p63 = scmp.ne.s32.totalorder %s52, %s55
      %p64 = scmp.eq.s32.totalorder %s35, 1
      %p65 = por %p63, %p64
      %p66 = scmp.ne.s32.totalorder %s55, %s56
      %p67 = scmp.eq.s32.totalorder %s35, 0
      %p68 = por %p66, %p67
      %p69 = scmp.ne.s32.totalorder %s55, %s56
      %p70 = scmp.eq.s32.totalorder %s36, 1
      %p71 = por %p69, %p70
      %p73 = scmp.ne.s32.totalorder %s56, %s72
      %p74 = scmp.eq.s32.totalorder %s36, 0
      %p75 = por %p73, %p74
      %s77 = sadd.s32 %s76, 1
      %p80 = scmp.eq.s32.totalorder %s30, 1
      %p81 = scmp.ne.s32.totalorder %s76, %s78
      %p82 = scmp.eq.s32.totalorder %s30, 0
      %p83 = por %p81, %p82
      %p84 = scmp.ne.s32.totalorder %s76, %s78
      %p85 = scmp.eq.s32.totalorder %s35, 1
      %p86 = por %p84, %p85
      %p87 = scmp.ne.s32.totalorder %s78, %s79
      %p88 = scmp.eq.s32.totalorder %s35, 0
      %p89 = por %p87, %p88
      %p90 = scmp.ne.s32.totalorder %s78, %s79
      %p91 = scmp.eq.s32.totalorder %s36, 1
      %p92 = por %p90, %p91
      %p94 = scmp.ne.s32.totalorder %s79, %s93
      %p95 = scmp.eq.s32.totalorder %s36, 0
      %p96 = por %p94, %p95
      %s98 = sadd.s32 %s97, 1
      %p101 = scmp.eq.s32.totalorder %s30, 1
      %p102 = scmp.ne.s32.totalorder %s97, %s99
      %p103 = scmp.eq.s32.totalorder %s30, 0
      %p104 = por %p102, %p103
      %p105 = scmp.ne.s32.totalorder %s97, %s99
      %p106 = scmp.eq.s32.totalorder %s35, 1
      %p107 = por %p105, %p106
      %p108 = scmp.ne.s32.totalorder %s99, %s100
      %p109 = scmp.eq.s32.totalorder %s35, 0
      %p110 = por %p108, %p109
      %p111 = scmp.ne.s32.totalorder %s99, %s100
      %p112 = scmp.eq.s32.totalorder %s36, 1
      %p113 = por %p111, %p112
      %p115 = scmp.ne.s32.totalorder %s100, %s114
      %p116 = scmp.eq.s32.totalorder %s36, 0
      %p117 = por %p115, %p116
      %s119 = sadd.s32 %s118, 1
      %p122 = scmp.eq.s32.totalorder %s30, 1
      %p123 = scmp.ne.s32.totalorder %s118, %s120
      %p124 = scmp.eq.s32.totalorder %s30, 0
      %p125 = por %p123, %p124
      %p126 = scmp.ne.s32.totalorder %s118, %s120
      %p127 = scmp.eq.s32.totalorder %s35, 1
      %p128 = por %p126, %p127
      %p129 = scmp.ne.s32.totalorder %s120, %s121
      %p130 = scmp.eq.s32.totalorder %s35, 0
      %p131 = por %p129, %p130
      %p132 = scmp.ne.s32.totalorder %s120, %s121
      %p133 = scmp.eq.s32.totalorder %s36, 1
      %p134 = por %p132, %p133
      %p136 = scmp.ne.s32.totalorder %s121, %s135
      %p137 = scmp.eq.s32.totalorder %s36, 0
      %p138 = por %p136, %p137
      %s140 = sadd.s32 %s139, 1
      %p143 = scmp.eq.s32.totalorder %s30, 1
      %p144 = scmp.ne.s32.totalorder %s139, %s141
      %p145 = scmp.eq.s32.totalorder %s30, 0
      %p146 = por %p144, %p145
      %p147 = scmp.ne.s32.totalorder %s139, %s141
      %p148 = scmp.eq.s32.totalorder %s35, 1
      %p149 = por %p147, %p148
      %p150 = scmp.ne.s32.totalorder %s141, %s142
      %p151 = scmp.eq.s32.totalorder %s35, 0
      %p152 = por %p150, %p151
      %p153 = scmp.ne.s32.totalorder %s141, %s142
      %p154 = scmp.eq.s32.totalorder %s36, 1
      %p155 = por %p153, %p154
      %p157 = scmp.ne.s32.totalorder %s142, %s156
      %p158 = scmp.eq.s32.totalorder %s36, 0
      %p159 = por %p157, %p158
      %s161 = sadd.s32 %s160, 1
      %p164 = scmp.eq.s32.totalorder %s30, 1
      %p165 = scmp.ne.s32.totalorder %s160, %s162
      %p166 = scmp.eq.s32.totalorder %s30, 0
      %p167 = por %p165, %p166
      %p168 = scmp.ne.s32.totalorder %s160, %s162
      %p169 = scmp.eq.s32.totalorder %s35, 1
      %p170 = por %p168, %p169
      %p171 = scmp.ne.s32.totalorder %s162, %s163
      %p172 = scmp.eq.s32.totalorder %s35, 0
      %p173 = por %p171, %p172
      %p174 = scmp.ne.s32.totalorder %s162, %s163
      %p175 = scmp.eq.s32.totalorder %s36, 1
      %p176 = por %p174, %p175
      %p178 = scmp.ne.s32.totalorder %s163, %s177
      %p179 = scmp.eq.s32.totalorder %s36, 0
      %p180 = por %p178, %p179
      %s182 = sadd.s32 %s181, 1
      %p185 = scmp.eq.s32.totalorder %s30, 1
      %p186 = scmp.ne.s32.totalorder %s181, %s183
      %p187 = scmp.eq.s32.totalorder %s30, 0
      %p188 = por %p186, %p187
      %p189 = scmp.ne.s32.totalorder %s181, %s183
      %p190 = scmp.eq.s32.totalorder %s35, 1
      %p191 = por %p189, %p190
      %p192 = scmp.ne.s32.totalorder %s183, %s184
      %p193 = scmp.eq.s32.totalorder %s35, 0
      %p194 = por %p192, %p193
      %p195 = scmp.ne.s32.totalorder %s183, %s184
      %p196 = scmp.eq.s32.totalorder %s36, 1
      %p197 = por %p195, %p196
      %p199 = scmp.ne.s32.totalorder %s184, %s198
      %p200 = scmp.eq.s32.totalorder %s36, 0
      %p201 = por %p199, %p200
      %s203 = sadd.s32 %s202, 1
      %p206 = scmp.eq.s32.totalorder %s30, 1
      %p207 = scmp.ne.s32.totalorder %s202, %s204
      %p208 = scmp.eq.s32.totalorder %s30, 0
      %p209 = por %p207, %p208
      %p210 = scmp.ne.s32.totalorder %s202, %s204
      %p211 = scmp.eq.s32.totalorder %s35, 1
      %p212 = por %p210, %p211
      %p213 = scmp.ne.s32.totalorder %s204, %s205
      %p214 = scmp.eq.s32.totalorder %s35, 0
      %p215 = por %p213, %p214
      %p216 = scmp.ne.s32.totalorder %s204, %s205
      %p217 = scmp.eq.s32.totalorder %s36, 1
      %p218 = por %p216, %p217
      %p220 = scmp.ne.s32.totalorder %s205, %s219
      %p221 = scmp.eq.s32.totalorder %s36, 0
      %p222 = por %p220, %p221
      %s224 = sadd.s32 %s223, 1
      %p227 = scmp.eq.s32.totalorder %s30, 1
      %p228 = scmp.ne.s32.totalorder %s223, %s225
      %p229 = scmp.eq.s32.totalorder %s30, 0
      %p230 = por %p228, %p229
      %p231 = scmp.ne.s32.totalorder %s223, %s225
      %p232 = scmp.eq.s32.totalorder %s35, 1
      %p233 = por %p231, %p232
      %p234 = scmp.ne.s32.totalorder %s225, %s226
      %p235 = scmp.eq.s32.totalorder %s35, 0
      %p236 = por %p234, %p235
      %p237 = scmp.ne.s32.totalorder %s225, %s226
      %p238 = scmp.eq.s32.totalorder %s36, 1
      %p239 = por %p237, %p238
      %p241 = scmp.ne.s32.totalorder %s226, %s240
      %p242 = scmp.eq.s32.totalorder %s36, 0
      %p243 = por %p241, %p242
      %s245 = sadd.s32 %s244, 1
      %p248 = scmp.eq.s32.totalorder %s30, 1
      %p249 = scmp.ne.s32.totalorder %s244, %s246
      %p250 = scmp.eq.s32.totalorder %s30, 0
      %p251 = por %p249, %p250
      %p252 = scmp.ne.s32.totalorder %s244, %s246
      %p253 = scmp.eq.s32.totalorder %s35, 1
      %p254 = por %p252, %p253
      %p255 = scmp.ne.s32.totalorder %s246, %s247
      %p256 = scmp.eq.s32.totalorder %s35, 0
      %p257 = por %p255, %p256
      %p258 = scmp.ne.s32.totalorder %s246, %s247
      %p259 = scmp.eq.s32.totalorder %s36, 1
      %p260 = por %p258, %p259
      %p262 = scmp.ne.s32.totalorder %s247, %s261
      %p263 = scmp.eq.s32.totalorder %s36, 0
      %p264 = por %p262, %p263
      %s265 = ssub.s32 %s38, %s45
      %p266 = scmp.eq.s32.totalorder %s265, 0
      %s268 = sadd.s32 %s267, 1
      %s269 = scalar_select %p266, %s267, %s268
      %p272 = pneg %p266
      %p273 = scmp.eq.s32.totalorder %s30, 1
      %p274 = por %p272, %p273
      %p275 = scmp.ne.s32.totalorder %s267, %s270
      %p276 = scmp.eq.s32.totalorder %s30, 0
      %p277 = por %p275, %p276
      %p278 = scmp.ne.s32.totalorder %s267, %s270
      %p279 = scmp.eq.s32.totalorder %s35, 1
      %p280 = por %p278, %p279
      %p281 = scmp.ne.s32.totalorder %s270, %s271
      %p282 = scmp.eq.s32.totalorder %s35, 0
      %p283 = por %p281, %p282
      %p284 = scmp.ne.s32.totalorder %s270, %s271
      %p285 = scmp.eq.s32.totalorder %s36, 1
      %p286 = por %p284, %p285
      %p288 = scmp.ne.s32.totalorder %s271, %s287
      %p289 = scmp.eq.s32.totalorder %s36, 0
      %p290 = por %p288, %p289
      %s291 = ssub.s32 %s38, %s45
      %p292 = scmp.eq.s32.totalorder %s291, 0
      %s294 = sadd.s32 %s293, 1
      %s295 = scalar_select %p292, %s293, %s294
      %p298 = pneg %p292
      %p299 = scmp.eq.s32.totalorder %s30, 1
      %p300 = por %p298, %p299
      %p301 = scmp.ne.s32.totalorder %s293, %s296
      %p302 = scmp.eq.s32.totalorder %s30, 0
      %p303 = por %p301, %p302
      %p304 = scmp.ne.s32.totalorder %s293, %s296
      %p305 = scmp.eq.s32.totalorder %s35, 1
      %p306 = por %p304, %p305
      %p307 = scmp.ne.s32.totalorder %s296, %s297
      %p308 = scmp.eq.s32.totalorder %s35, 0
      %p309 = por %p307, %p308
      %p310 = scmp.ne.s32.totalorder %s296, %s297
      %p311 = scmp.eq.s32.totalorder %s36, 1
      %p312 = por %p310, %p311
      %p314 = scmp.ne.s32.totalorder %s297, %s313
      %p315 = scmp.eq.s32.totalorder %s36, 0
      %p316 = por %p314, %p315
      %s317 = ssub.s32 %s38, %s45
      %p318 = scmp.eq.s32.totalorder %s317, 0
      %s320 = sadd.s32 %s319, 1
      %s321 = scalar_select %p318, %s319, %s320
      %p324 = pneg %p318
      %p325 = scmp.eq.s32.totalorder %s30, 1
      %p326 = por %p324, %p325
      %p327 = scmp.ne.s32.totalorder %s319, %s322
      %p328 = scmp.eq.s32.totalorder %s30, 0
      %p329 = por %p327, %p328
      %p330 = scmp.ne.s32.totalorder %s319, %s322
      %p331 = scmp.eq.s32.totalorder %s35, 1
      %p332 = por %p330, %p331
      %p333 = scmp.ne.s32.totalorder %s322, %s323
      %p334 = scmp.eq.s32.totalorder %s35, 0
      %p335 = por %p333, %p334
      %p336 = scmp.ne.s32.totalorder %s322, %s323
      %p337 = scmp.eq.s32.totalorder %s36, 1
      %p338 = por %p336, %p337
      %p340 = scmp.ne.s32.totalorder %s323, %s339
      %p341 = scmp.eq.s32.totalorder %s36, 0
      %p342 = por %p340, %p341
      %s343 = ssub.s32 %s38, %s45
      %p344 = scmp.eq.s32.totalorder %s343, 0
      %s346 = sadd.s32 %s345, 1
      %s347 = scalar_select %p344, %s345, %s346
      %p350 = pneg %p344
      %p351 = scmp.eq.s32.totalorder %s30, 1
      %p352 = por %p350, %p351
      %p353 = scmp.ne.s32.totalorder %s345, %s348
      %p354 = scmp.eq.s32.totalorder %s30, 0
      %p355 = por %p353, %p354
      %p356 = scmp.ne.s32.totalorder %s345, %s348
      %p357 = scmp.eq.s32.totalorder %s35, 1
      %p358 = por %p356, %p357
      %p359 = scmp.ne.s32.totalorder %s348, %s349
      %p360 = scmp.eq.s32.totalorder %s35, 0
      %p361 = por %p359, %p360
      %p362 = scmp.ne.s32.totalorder %s348, %s349
      %p363 = scmp.eq.s32.totalorder %s36, 1
      %p364 = por %p362, %p363
      %p366 = scmp.ne.s32.totalorder %s349, %s365
      %p367 = scmp.eq.s32.totalorder %s36, 0
      %p368 = por %p366, %p367
      %s369 = ssub.s32 %s38, %s45
      %p370 = scmp.eq.s32.totalorder %s369, 0
      %s372 = sadd.s32 %s371, 1
      %s373 = scalar_select %p370, %s371, %s372
      %p376 = pneg %p370
      %p377 = scmp.eq.s32.totalorder %s30, 1
      %p378 = por %p376, %p377
      %p379 = scmp.ne.s32.totalorder %s371, %s374
      %p380 = scmp.eq.s32.totalorder %s30, 0
      %p381 = por %p379, %p380
      %p382 = scmp.ne.s32.totalorder %s371, %s374
      %p383 = scmp.eq.s32.totalorder %s35, 1
      %p384 = por %p382, %p383
      %p385 = scmp.ne.s32.totalorder %s374, %s375
      %p386 = scmp.eq.s32.totalorder %s35, 0
      %p387 = por %p385, %p386
      %p388 = scmp.ne.s32.totalorder %s374, %s375
      %p389 = scmp.eq.s32.totalorder %s36, 1
      %p390 = por %p388, %p389
      %p392 = scmp.ne.s32.totalorder %s375, %s391
      %p393 = scmp.eq.s32.totalorder %s36, 0
      %p394 = por %p392, %p393
      %s395 = ssub.s32 %s37, %s49
      %p396 = scmp.eq.s32.totalorder %s395, 0
      %s398 = sadd.s32 %s397, 1
      %s399 = scalar_select %p396, %s397, %s398
      %p402 = pneg %p396
      %p403 = scmp.eq.s32.totalorder %s30, 1
      %p404 = por %p402, %p403
      %p405 = scmp.ne.s32.totalorder %s397, %s400
      %p406 = scmp.eq.s32.totalorder %s30, 0
      %p407 = por %p405, %p406
      %p408 = scmp.ne.s32.totalorder %s397, %s400
      %p409 = scmp.eq.s32.totalorder %s35, 1
      %p410 = por %p408, %p409
      %p411 = scmp.ne.s32.totalorder %s400, %s401
      %p412 = scmp.eq.s32.totalorder %s35, 0
      %p413 = por %p411, %p412
      %p414 = scmp.ne.s32.totalorder %s400, %s401
      %p415 = scmp.eq.s32.totalorder %s36, 1
      %p416 = por %p414, %p415
      %p418 = scmp.ne.s32.totalorder %s401, %s417
      %p419 = scmp.eq.s32.totalorder %s36, 0
      %p420 = por %p418, %p419
      %p421 = scmp.le.s32.totalorder 1, %s30
      %p422 = scmp.lt.s32.totalorder %s30, 3
      %p423 = pnand %p421, %p422
      %p424 = pneg %p423
      // Predicated region
      $region9: #{tpu_custom_call.1} parent=5 // pred_check
        _
      $region10: #{tpu_custom_call.1} parent=5 // pred_check_branch
        %426 = sbr.rel (%p423) target = $region12
      $region11: #{tpu_custom_call.1} parent=5 // pred_region
        %s427 = ssub.s32 %s30, 1
        // Predicated region
        $region13: #{tpu_custom_call.1} parent=11 // pred_check
          %p428 = pneg %p89
        $region14: #{tpu_custom_call.1} parent=11 // pred_check_branch
          %430 = sbr.rel (%p428) target = $region16
        $region15: #{tpu_custom_call.1} parent=11 // pred_region
          %s432 = ssub.s32 2048, 2048
          %433 = vsyncadd [#allocation7], %s432
          %s434 = sshll.u32 [#allocation6], 4
          %s435 = int_to_ptr.vmem [resolvable:$true] %s434
          %440 = dma.hbm_to_vmem [thread:$0]  %s1, 2048, %s435, [#allocation7], 128, 128, 8
        $region16: #{tpu_custom_call.1} parent=11 // pred_fallthru
          _
        // Predicated region
        $region17: #{tpu_custom_call.1} parent=11 // pred_check
          %p441 = pneg %p110
        $region18: #{tpu_custom_call.1} parent=11 // pred_check_branch
          %443 = sbr.rel (%p441) target = $region20
        $region19: #{tpu_custom_call.1} parent=11 // pred_region
          _
        $region20: #{tpu_custom_call.1} parent=11 // pred_fallthru
          _
        // Predicated region
        $region21: #{tpu_custom_call.1} parent=11 // pred_check
          %p444 = pneg %p131
        $region22: #{tpu_custom_call.1} parent=11 // pred_check_branch
          %446 = sbr.rel (%p444) target = $region24
        $region23: #{tpu_custom_call.1} parent=11 // pred_region
          %s448 = ssub.s32 4096, 4096
          %449 = vsyncadd [#allocation7], %s448
          %s450 = sshll.u32 [#allocation8], 4
          %s451 = int_to_ptr.vmem [resolvable:$true] %s450
          %456 = dma.hbm_to_vmem [thread:$0]  %s3, 4096, %s451, [#allocation7], 128, 128, 8
        $region24: #{tpu_custom_call.1} parent=11 // pred_fallthru
          _
        // Predicated region
        $region25: #{tpu_custom_call.1} parent=11 // pred_check
          %p457 = pneg %p152
        $region26: #{tpu_custom_call.1} parent=11 // pred_check_branch
          %459 = sbr.rel (%p457) target = $region28
        $region27: #{tpu_custom_call.1} parent=11 // pred_region
          _
        $region28: #{tpu_custom_call.1} parent=11 // pred_fallthru
          _
        // Predicated region
        $region29: #{tpu_custom_call.1} parent=11 // pred_check
          %p460 = pneg %p173
        $region30: #{tpu_custom_call.1} parent=11 // pred_check_branch
          %462 = sbr.rel (%p460) target = $region32
        $region31: #{tpu_custom_call.1} parent=11 // pred_region
          _
        $region32: #{tpu_custom_call.1} parent=11 // pred_fallthru
          _
        // Predicated region
        $region33: #{tpu_custom_call.1} parent=11 // pred_check
          %p463 = pneg %p194
        $region34: #{tpu_custom_call.1} parent=11 // pred_check_branch
          %465 = sbr.rel (%p463) target = $region36
        $region35: #{tpu_custom_call.1} parent=11 // pred_region
          _
        $region36: #{tpu_custom_call.1} parent=11 // pred_fallthru
          _
        // Predicated region
        $region37: #{tpu_custom_call.1} parent=11 // pred_check
          %p466 = pneg %p215
        $region38: #{tpu_custom_call.1} parent=11 // pred_check_branch
          %468 = sbr.rel (%p466) target = $region40
        $region39: #{tpu_custom_call.1} parent=11 // pred_region
          %s470 = ssub.s32 2048, 2048
          %471 = vsyncadd [#allocation10], %s470
          %s472 = sshll.u32 [#allocation9], 4
          %s473 = int_to_ptr.vmem [resolvable:$true] %s472
          %478 = dma.hbm_to_vmem [thread:$0]  %s7, 2048, %s473, [#allocation10], 64, 64, 4
        $region40: #{tpu_custom_call.1} parent=11 // pred_fallthru
          _
        // Predicated region
        $region41: #{tpu_custom_call.1} parent=11 // pred_check
          %p479 = pneg %p236
        $region42: #{tpu_custom_call.1} parent=11 // pred_check_branch
          %481 = sbr.rel (%p479) target = $region44
        $region43: #{tpu_custom_call.1} parent=11 // pred_region
          _
        $region44: #{tpu_custom_call.1} parent=11 // pred_fallthru
          _
        // Predicated region
        $region45: #{tpu_custom_call.1} parent=11 // pred_check
          %p482 = pneg %p257
        $region46: #{tpu_custom_call.1} parent=11 // pred_check_branch
          %484 = sbr.rel (%p482) target = $region48
        $region47: #{tpu_custom_call.1} parent=11 // pred_region
          _
        $region48: #{tpu_custom_call.1} parent=11 // pred_fallthru
          _
        // Predicated region
        $region49: #{tpu_custom_call.1} parent=11 // pred_check
          %p485 = pneg %p283
        $region50: #{tpu_custom_call.1} parent=11 // pred_check_branch
          %487 = sbr.rel (%p485) target = $region52
        $region51: #{tpu_custom_call.1} parent=11 // pred_region
          %s489 = ssub.s32 3072, 3072
          %490 = vsyncadd [#allocation10], %s489
          %s491 = smul.addr %s40, 64
          %s492 = scalar_lea.hbm %s10, %s491
          %s493 = sshll.u32 [#allocation11], 4
          %s494 = int_to_ptr.vmem [resolvable:$true] %s493
          %499 = dma.hbm_to_vmem [thread:$0]  %s492, 3072, %s494, [#allocation10], 64, 64, 4
        $region52: #{tpu_custom_call.1} parent=11 // pred_fallthru
          _
        // Predicated region
        $region53: #{tpu_custom_call.1} parent=11 // pred_check
          %p500 = pneg %p309
        $region54: #{tpu_custom_call.1} parent=11 // pred_check_branch
          %502 = sbr.rel (%p500) target = $region56
        $region55: #{tpu_custom_call.1} parent=11 // pred_region
          %p503 = scmp.lt.s32.totalorder %s40, 0
          %s504 = scalar_select %p503, %s40, 0
          %s505 = scalar_lea.vmem %s11, %s504
        $region56: #{tpu_custom_call.1} parent=11 // pred_fallthru
          _
        // Predicated region
        $region57: #{tpu_custom_call.1} parent=11 // pred_check
          %p506 = pneg %p335
        $region58: #{tpu_custom_call.1} parent=11 // pred_check_branch
          %508 = sbr.rel (%p506) target = $region60
        $region59: #{tpu_custom_call.1} parent=11 // pred_region
          %s510 = ssub.s32 1024, 1024
          %511 = vsyncadd [#allocation13], %s510
          %s512 = smul.addr %s40, 64
          %s513 = scalar_lea.hbm %s12, %s512
          %s514 = sshll.u32 [#allocation12], 4
          %s515 = int_to_ptr.vmem [resolvable:$true] %s514
          %520 = dma.hbm_to_vmem [thread:$0]  %s513, 1024, %s515, [#allocation13], 64, 64, 4
        $region60: #{tpu_custom_call.1} parent=11 // pred_fallthru
          _
        // Predicated region
        $region61: #{tpu_custom_call.1} parent=11 // pred_check
          %p521 = pneg %p361
        $region62: #{tpu_custom_call.1} parent=11 // pred_check_branch
          %523 = sbr.rel (%p521) target = $region64
        $region63: #{tpu_custom_call.1} parent=11 // pred_region
          %p524 = scmp.lt.s32.totalorder %s40, 0
          %s525 = scalar_select %p524, %s40, 0
          %s526 = scalar_lea.vmem %s13, %s525
        $region64: #{tpu_custom_call.1} parent=11 // pred_fallthru
          _
        // Predicated region
        $region65: #{tpu_custom_call.1} parent=11 // pred_check
          %p527 = pneg %p387
        $region66: #{tpu_custom_call.1} parent=11 // pred_check_branch
          %529 = sbr.rel (%p527) target = $region68
        $region67: #{tpu_custom_call.1} parent=11 // pred_region
          %s530 = smul.u32 16, %s40
          %s532 = ssub.s32 1024, 1024
          %533 = vsyncadd [#allocation13], %s532
          %s534 = smul.addr %s530, 64
          %s535 = scalar_lea.hbm %s14, %s534
          %s536 = sshll.u32 [#allocation14], 4
          %s537 = int_to_ptr.vmem [resolvable:$true] %s536
          %542 = dma.hbm_to_vmem [thread:$0]  %s535, 1024, %s537, [#allocation13], 64, 64, 4
        $region68: #{tpu_custom_call.1} parent=11 // pred_fallthru
          _
      $region12: #{tpu_custom_call.1} parent=5 // pred_fallthru
        _
      %p543 = scmp.lt.s32.totalorder %s30, 2
      // Predicated region
      $region69: #{tpu_custom_call.1} parent=5 // pred_check
        %p544 = pneg %p543
      $region70: #{tpu_custom_call.1} parent=5 // pred_check_branch
        %546 = sbr.rel (%p544) target = $region72
      $region71: #{tpu_custom_call.1} parent=5 // pred_region
        // Predicated region
        $region73: #{tpu_custom_call.1} parent=71 // pred_check
          %p547 = pneg %p62
        $region74: #{tpu_custom_call.1} parent=71 // pred_check_branch
          %549 = sbr.rel (%p547) target = $region76
        $region75: #{tpu_custom_call.1} parent=71 // pred_region
          %s550 = sand.u32 %s52, 1
          %s551 = scalar_lea.sflag [#allocation4], %s550
          %s552 = sand.u32 %s52, 1
          %s553 = smul.addr %s552, 128
          %s554 = scalar_lea.vmem [#allocation3], %s553
          %s555 = smul.u32 32, %s37
          %s557 = ssub.s32 2048, 2048
          %558 = vsyncadd %s551, %s557
          %s559 = smul.addr %s555, 64
          %s560 = scalar_lea.hbm %s0, %s559
          %s561 = sshll.u32 %s554, 4
          %s562 = int_to_ptr.vmem [resolvable:$true] %s561
          %567 = dma.hbm_to_vmem [thread:$0]  %s560, 2048, %s562, %s551, 64, 64, 4
        $region76: #{tpu_custom_call.1} parent=71 // pred_fallthru
          _
      $region72: #{tpu_custom_call.1} parent=5 // pred_fallthru
        _
      %p568 = scmp.le.s32.totalorder 1, %s30
      %p569 = scmp.lt.s32.totalorder %s30, 3
      %p570 = pnand %p568, %p569
      %p571 = pneg %p570
      // Predicated region
      $region77: #{tpu_custom_call.1} parent=5 // pred_check
        _
      $region78: #{tpu_custom_call.1} parent=5 // pred_check_branch
        %573 = sbr.rel (%p570) target = $region80
      $region79: #{tpu_custom_call.1} parent=5 // pred_region
        %s574 = ssub.s32 %s30, 1
        %s575 = sand.u32 %s55, 1
        %s576 = scalar_lea.sflag [#allocation4], %s575
        %s577 = sand.u32 %s55, 1
        %s578 = smul.addr %s577, 128
        %s579 = scalar_lea.vmem [#allocation3], %s578
        // Predicated region
        $region81: #{tpu_custom_call.1} parent=79 // pred_check
          %p580 = pneg %p68
        $region82: #{tpu_custom_call.1} parent=79 // pred_check_branch
          %582 = sbr.rel (%p580) target = $region84
        $region83: #{tpu_custom_call.1} parent=79 // pred_region
          %583 = dma.done %s576, 2048
        $region84: #{tpu_custom_call.1} parent=79 // pred_fallthru
          _
        // Predicated region
        $region85: #{tpu_custom_call.1} parent=79 // pred_check
          %p584 = pneg %p89
        $region86: #{tpu_custom_call.1} parent=79 // pred_check_branch
          %586 = sbr.rel (%p584) target = $region88
        $region87: #{tpu_custom_call.1} parent=79 // pred_region
          %587 = dma.done [#allocation7], 2048
        $region88: #{tpu_custom_call.1} parent=79 // pred_fallthru
          _
        // Predicated region
        $region89: #{tpu_custom_call.1} parent=79 // pred_check
          %p588 = pneg %p131
        $region90: #{tpu_custom_call.1} parent=79 // pred_check_branch
          %590 = sbr.rel (%p588) target = $region92
        $region91: #{tpu_custom_call.1} parent=79 // pred_region
          %591 = dma.done [#allocation7], 4096
        $region92: #{tpu_custom_call.1} parent=79 // pred_fallthru
          _
        // Predicated region
        $region93: #{tpu_custom_call.1} parent=79 // pred_check
          %p592 = pneg %p215
        $region94: #{tpu_custom_call.1} parent=79 // pred_check_branch
          %594 = sbr.rel (%p592) target = $region96
        $region95: #{tpu_custom_call.1} parent=79 // pred_region
          %595 = dma.done [#allocation10], 2048
        $region96: #{tpu_custom_call.1} parent=79 // pred_fallthru
          _
        // Predicated region
        $region97: #{tpu_custom_call.1} parent=79 // pred_check
          %p596 = pneg %p283
        $region98: #{tpu_custom_call.1} parent=79 // pred_check_branch
          %598 = sbr.rel (%p596) target = $region100
        $region99: #{tpu_custom_call.1} parent=79 // pred_region
          %599 = dma.done [#allocation10], 3072
        $region100: #{tpu_custom_call.1} parent=79 // pred_fallthru
          _
        // Predicated region
        $region101: #{tpu_custom_call.1} parent=79 // pred_check
          %p600 = pneg %p335
        $region102: #{tpu_custom_call.1} parent=79 // pred_check_branch
          %602 = sbr.rel (%p600) target = $region104
        $region103: #{tpu_custom_call.1} parent=79 // pred_region
          %603 = dma.done [#allocation13], 1024
        $region104: #{tpu_custom_call.1} parent=79 // pred_fallthru
          _
        // Predicated region
        $region105: #{tpu_custom_call.1} parent=79 // pred_check
          %p604 = pneg %p387
        $region106: #{tpu_custom_call.1} parent=79 // pred_check_branch
          %606 = sbr.rel (%p604) target = $region108
        $region107: #{tpu_custom_call.1} parent=79 // pred_region
          %607 = dma.done [#allocation13], 1024
        $region108: #{tpu_custom_call.1} parent=79 // pred_fallthru
          _
        %s608 = sand.u32 %s55, 1
        %s609 = scalar_lea.sflag [#allocation4], %s608
        %s610 = sand.u32 %s55, 1
        %s611 = smul.addr %s610, 128
        %s612 = scalar_lea.vmem [#allocation3], %s611
        %p613 = pneg %p68
        %p614 = pneg %p65
        %p615 = pneg %p89
        %p616 = pneg %p86
        %p617 = pneg %p110
        %p618 = pneg %p107
        %p619 = pneg %p131
        %p620 = pneg %p128
        %p621 = pneg %p152
        %p622 = pneg %p149
        %p623 = pneg %p173
        %p624 = pneg %p170
        %p625 = pneg %p194
        %p626 = pneg %p191
        %p627 = pneg %p215
        %p628 = pneg %p212
        %p629 = pneg %p236
        %p630 = pneg %p233
        %p631 = pneg %p257
        %p632 = pneg %p254
        %p633 = pneg %p283
        %p634 = pneg %p280
        %p635 = scmp.lt.s32.totalorder %s40, 0
        %s636 = scalar_select %p635, %s40, 0
        %s637 = scalar_lea.vmem %s11, %s636
        %p638 = pneg %p309
        %p639 = pneg %p306
        %p640 = pneg %p335
        %p641 = pneg %p332
        %p642 = scmp.lt.s32.totalorder %s40, 0
        %s643 = scalar_select %p642, %s40, 0
        %s644 = scalar_lea.vmem %s13, %s643
        %p645 = pneg %p361
        %p646 = pneg %p358
        %p647 = pneg %p387
        %p648 = pneg %p384
        %p649 = pneg %p413
        %p650 = pneg %p410
        %s651 = sand.u32 %s400, 1
        %s652 = scalar_lea.sflag [#allocation5], %s651
        %s653 = sand.u32 %s400, 1
        %s654 = smul.addr %s653, 256
        %s655 = scalar_lea.vmem [#allocation15], %s654
        %s656 = smul.u32 32, %s39
        %p657 = scmp.lt.s32.totalorder %s40, 0
        %s658 = scalar_select %p657, %s40, 0
        %s659 = scalar_lea.vmem %s11, %s658
        %p660 = scmp.lt.s32.totalorder %s40, 0
        %s661 = scalar_select %p660, %s40, 0
        %s662 = scalar_lea.vmem %s13, %s661
        %s663 = smul.u32 16, %s40
        %s664 = smul.u32 32, %s39
        %p666 = scmp.eq.s32.totalorder %s40, 0
        // Predicated region
        $region109: #{tpu_custom_call.1} parent=79 // pred_check
          %p667 = pneg %p666
        $region110: #{tpu_custom_call.1} parent=79 // pred_check_branch
          %669 = sbr.rel (%p667) target = $region112
        $region111: #{tpu_custom_call.1} parent=79 // pred_region
          %v670 = vld [vmem:[%s579] sm:$0xf]
          %v671 = vld [vmem:[%s579 + $0x4] sm:$0xf]
          %v672 = vld [vmem:[%s579 + $0x8] sm:$0xf]
          %v673 = vld [vmem:[%s579 + $0xc] sm:$0xf]
          %v674 = vld [vmem:[%s579 + $0x10] sm:$0xf]
          %v675 = vld [vmem:[%s579 + $0x14] sm:$0xf]
          %v676 = vld [vmem:[%s579 + $0x18] sm:$0xf]
          %v677 = vld [vmem:[%s579 + $0x1c] sm:$0xf]
          %v678 = vld [vmem:[%s579 + $0x20] sm:$0xf]
          %v679 = vld [vmem:[%s579 + $0x24] sm:$0xf]
          %v680 = vld [vmem:[%s579 + $0x28] sm:$0xf]
          %v681 = vld [vmem:[%s579 + $0x2c] sm:$0xf]
          %v682 = vld [vmem:[%s579 + $0x30] sm:$0xf]
          %v683 = vld [vmem:[%s579 + $0x34] sm:$0xf]
          %v684 = vld [vmem:[%s579 + $0x38] sm:$0xf]
          %v685 = vld [vmem:[%s579 + $0x3c] sm:$0xf]
          %v686 = vld [vmem:[%s579 + $0x40] sm:$0xf]
          %v687 = vld [vmem:[%s579 + $0x44] sm:$0xf]
          %v688 = vld [vmem:[%s579 + $0x48] sm:$0xf]
          %v689 = vld [vmem:[%s579 + $0x4c] sm:$0xf]
          %v690 = vld [vmem:[%s579 + $0x50] sm:$0xf]
          %v691 = vld [vmem:[%s579 + $0x54] sm:$0xf]
          %v692 = vld [vmem:[%s579 + $0x58] sm:$0xf]
          %v693 = vld [vmem:[%s579 + $0x5c] sm:$0xf]
          %v694 = vld [vmem:[%s579 + $0x60] sm:$0xf]
          %v695 = vld [vmem:[%s579 + $0x64] sm:$0xf]
          %v696 = vld [vmem:[%s579 + $0x68] sm:$0xf]
          %v697 = vld [vmem:[%s579 + $0x6c] sm:$0xf]
          %v698 = vld [vmem:[%s579 + $0x70] sm:$0xf]
          %v699 = vld [vmem:[%s579 + $0x74] sm:$0xf]
          %v700 = vld [vmem:[%s579 + $0x78] sm:$0xf]
          %v701 = vld [vmem:[%s579 + $0x7c] sm:$0xf]
          %v702 = vld [vmem:[#allocation6] sm:$0xff]
          %v703 = vld [vmem:[#allocation6 + $0x8] sm:$0xff]
          %v704 = vld [vmem:[#allocation6 + $0x10] sm:$0xff]
          %v705 = vld [vmem:[#allocation6 + $0x18] sm:$0xff]
          %v706 = vld [vmem:[#allocation6 + $0x20] sm:$0xff]
          %v707 = vld [vmem:[#allocation6 + $0x28] sm:$0xff]
          %v708 = vld [vmem:[#allocation6 + $0x30] sm:$0xff]
          %v709 = vld [vmem:[#allocation6 + $0x38] sm:$0xff]
          %v710 = vld [vmem:[#allocation6 + $0x40] sm:$0xff]
          %v711 = vld [vmem:[#allocation6 + $0x48] sm:$0xff]
          %v712 = vld [vmem:[#allocation6 + $0x50] sm:$0xff]
          %v713 = vld [vmem:[#allocation6 + $0x58] sm:$0xff]
          %v714 = vld [vmem:[#allocation6 + $0x60] sm:$0xff]
          %v715 = vld [vmem:[#allocation6 + $0x68] sm:$0xff]
          %v716 = vld [vmem:[#allocation6 + $0x70] sm:$0xff]
          %v717 = vld [vmem:[#allocation6 + $0x78] sm:$0xff]
          %v718 = vld [vmem:[%s2] sm:$0x3]
          %v720 = vlaneseq
          %v721 = vshrl.u32 %v720, 7
          %v722 = vsub.s32 0, %v721
          %v723 = vrot.slane %v718, %v722
          %v724 = vlaneseq
          %v725 = vshrl.u32 %v724, 7
          %v726 = vsub.s32 1, %v725
          %v727 = vrot.slane %v718, %v726
          %v762 = vunpack.c.l.b16 %v670
          %v763 = vunpack.c.l.b16 %v671
          %v764 = vunpack.c.l.b16 %v672
          %v765 = vunpack.c.l.b16 %v673
          %v766 = vunpack.c.l.b16 %v674
          %v767 = vunpack.c.l.b16 %v675
          %v768 = vunpack.c.l.b16 %v676
          %v769 = vunpack.c.l.b16 %v677
          %v770 = vunpack.c.l.b16 %v678
          %v771 = vunpack.c.l.b16 %v679
          %v772 = vunpack.c.l.b16 %v680
          %v773 = vunpack.c.l.b16 %v681
          %v774 = vunpack.c.l.b16 %v682
          %v775 = vunpack.c.l.b16 %v683
          %v776 = vunpack.c.l.b16 %v684
          %v777 = vunpack.c.l.b16 %v685
          %v778 = vunpack.c.l.b16 %v686
          %v779 = vunpack.c.l.b16 %v687
          %v780 = vunpack.c.l.b16 %v688
          %v781 = vunpack.c.l.b16 %v689
          %v782 = vunpack.c.l.b16 %v690
          %v783 = vunpack.c.l.b16 %v691
          %v784 = vunpack.c.l.b16 %v692
          %v785 = vunpack.c.l.b16 %v693
          %v786 = vunpack.c.l.b16 %v694
          %v787 = vunpack.c.l.b16 %v695
          %v788 = vunpack.c.l.b16 %v696
          %v789 = vunpack.c.l.b16 %v697
          %v790 = vunpack.c.l.b16 %v698
          %v791 = vunpack.c.l.b16 %v699
          %v792 = vunpack.c.l.b16 %v700
          %v793 = vunpack.c.l.b16 %v701
          %v794 = vpack.c.b16 %v763, %v762
          %v795 = vpack.c.b16 %v765, %v764
          %v796 = vpack.c.b16 %v767, %v766
          %v797 = vpack.c.b16 %v769, %v768
          %v798 = vpack.c.b16 %v771, %v770
          %v799 = vpack.c.b16 %v773, %v772
          %v800 = vpack.c.b16 %v775, %v774
          %v801 = vpack.c.b16 %v777, %v776
          %v802 = vpack.c.b16 %v779, %v778
          %v803 = vpack.c.b16 %v781, %v780
          %v804 = vpack.c.b16 %v783, %v782
          %v805 = vpack.c.b16 %v785, %v784
          %v806 = vpack.c.b16 %v787, %v786
          %v807 = vpack.c.b16 %v789, %v788
          %v808 = vpack.c.b16 %v791, %v790
          %v809 = vpack.c.b16 %v793, %v792
          %v842 = vunpack.c.l.b16 %v702
          %v843 = vunpack.c.h.b16 %v702
          %v844 = vunpack.c.l.b16 %v703
          %v845 = vunpack.c.h.b16 %v703
          %v846 = vunpack.c.l.b16 %v704
          %v847 = vunpack.c.h.b16 %v704
          %v848 = vunpack.c.l.b16 %v705
          %v849 = vunpack.c.h.b16 %v705
          %v850 = vunpack.c.l.b16 %v706
          %v851 = vunpack.c.h.b16 %v706
          %v852 = vunpack.c.l.b16 %v707
          %v853 = vunpack.c.h.b16 %v707
          %v854 = vunpack.c.l.b16 %v708
          %v855 = vunpack.c.h.b16 %v708
          %v856 = vunpack.c.l.b16 %v709
          %v857 = vunpack.c.h.b16 %v709
          %v858 = vunpack.c.l.b16 %v710
          %v859 = vunpack.c.h.b16 %v710
          %v860 = vunpack.c.l.b16 %v711
          %v861 = vunpack.c.h.b16 %v711
          %v862 = vunpack.c.l.b16 %v712
          %v863 = vunpack.c.h.b16 %v712
          %v864 = vunpack.c.l.b16 %v713
          %v865 = vunpack.c.h.b16 %v713
          %v866 = vunpack.c.l.b16 %v714
          %v867 = vunpack.c.h.b16 %v714
          %v868 = vunpack.c.l.b16 %v715
          %v869 = vunpack.c.h.b16 %v715
          %v870 = vunpack.c.l.b16 %v716
          %v871 = vunpack.c.h.b16 %v716
          %v872 = vunpack.c.l.b16 %v717
          %v873 = vunpack.c.h.b16 %v717
          %v874 = vpack.c.b16 %v844, %v842
          %v875 = vpack.c.b16 %v845, %v843
          %v876 = vpack.c.b16 %v848, %v846
          %v877 = vpack.c.b16 %v849, %v847
          %v878 = vpack.c.b16 %v852, %v850
          %v879 = vpack.c.b16 %v853, %v851
          %v880 = vpack.c.b16 %v856, %v854
          %v881 = vpack.c.b16 %v857, %v855
          %v882 = vpack.c.b16 %v860, %v858
          %v883 = vpack.c.b16 %v861, %v859
          %v884 = vpack.c.b16 %v864, %v862
          %v885 = vpack.c.b16 %v865, %v863
          %v886 = vpack.c.b16 %v868, %v866
          %v887 = vpack.c.b16 %v869, %v867
          %v888 = vpack.c.b16 %v872, %v870
          %v889 = vpack.c.b16 %v873, %v871
          %906 = vmatprep.subr.bf16.mxu0 %v875
          %907 = vmatpush1.bf16.msra.mxu0 %v874
          %908 = vmatprep.subr.bf16.mxu0 %v877
          %909 = vmatpush1.bf16.msra.mxu0 %v876
          %910 = vmatprep.subr.bf16.mxu0 %v879
          %911 = vmatpush1.bf16.msra.mxu0 %v878
          %912 = vmatprep.subr.bf16.mxu0 %v881
          %913 = vmatpush1.bf16.msra.mxu0 %v880
          %914 = vmatprep.subr.bf16.mxu0 %v883
          %915 = vmatpush1.bf16.msra.mxu0 %v882
          %916 = vmatprep.subr.bf16.mxu0 %v885
          %917 = vmatpush1.bf16.msra.mxu0 %v884
          %918 = vmatprep.subr.bf16.mxu0 %v887
          %919 = vmatpush1.bf16.msra.mxu0 %v886
          %920 = vmatprep.subr.bf16.mxu0 %v889
          %921 = vmatpush1.bf16.msra.mxu0 %v888
          %922 = vmatprep.subr.bf16.mxu0 0
          %923 = vmatpush1.bf16.msra.mxu0 0
          %924 = vmatprep.subr.bf16.mxu0 0
          %925 = vmatpush1.bf16.msra.mxu0 0
          %926 = vmatprep.subr.bf16.mxu0 0
          %927 = vmatpush1.bf16.msra.mxu0 0
          %928 = vmatprep.subr.bf16.mxu0 0
          %929 = vmatpush1.bf16.msra.mxu0 0
          %930 = vmatprep.subr.bf16.mxu0 0
          %931 = vmatpush1.bf16.msra.mxu0 0
          %932 = vmatprep.subr.bf16.mxu0 0
          %933 = vmatpush1.bf16.msra.mxu0 0
          %934 = vmatprep.subr.bf16.mxu0 0
          %935 = vmatpush1.bf16.msra.mxu0 0
          %936 = vmatprep.subr.bf16.mxu0 0
          %937 = vmatpush1.bf16.msra.mxu0 0
          %938 = vmatprep.mubr.bf16.mxu0 0
          %939 = vmatmul.mubr.bf16.gmra.mrb[0].mxu0 %v794
          %v940 = vpop.f32.mrb[0].mxu0
          %v941 = vadd.f32 %v723, %v940
          %v942 = vpop.f32.mrb[0].mxu0
          %v943 = vadd.f32 %v727, %v942
          %v944 = vpop.f32.mrb[0].mxu0
          %v945 = vadd.f32 %v723, %v944
          %v946 = vpop.f32.mrb[0].mxu0
          %v947 = vadd.f32 %v727, %v946
          %948 = vmatprep.mubr.bf16.mxu0 0
          %949 = vmatmul.mubr.bf16.gmra.mrb[0].mxu0 %v795
          %v950 = vpop.f32.mrb[0].mxu0
          %v951 = vadd.f32 %v723, %v950
          %v952 = vpop.f32.mrb[0].mxu0
          %v953 = vadd.f32 %v727, %v952
          %v954 = vpop.f32.mrb[0].mxu0
          %v955 = vadd.f32 %v723, %v954
          %v956 = vpop.f32.mrb[0].mxu0
          %v957 = vadd.f32 %v727, %v956
          %958 = vmatprep.mubr.bf16.mxu0 0
          %959 = vmatmul.mubr.bf16.gmra.mrb[0].mxu0 %v796
          %v960 = vpop.f32.mrb[0].mxu0
          %v961 = vadd.f32 %v723, %v960
          %v962 = vpop.f32.mrb[0].mxu0
          %v963 = vadd.f32 %v727, %v962
          %v964 = vpop.f32.mrb[0].mxu0
          %v965 = vadd.f32 %v723, %v964
          %v966 = vpop.f32.mrb[0].mxu0
          %v967 = vadd.f32 %v727, %v966
          %968 = vmatprep.mubr.bf16.mxu0 0
          %969 = vmatmul.mubr.bf16.gmra.mrb[0].mxu0 %v797
          %v970 = vpop.f32.mrb[0].mxu0
          %v971 = vadd.f32 %v723, %v970
          %v972 = vpop.f32.mrb[0].mxu0
          %v973 = vadd.f32 %v727, %v972
          %v974 = vpop.f32.mrb[0].mxu0
          %v975 = vadd.f32 %v723, %v974
          %v976 = vpop.f32.mrb[0].mxu0
          %v977 = vadd.f32 %v727, %v976
          %978 = vmatprep.mubr.bf16.mxu0 0
          %979 = vmatmul.mubr.bf16.gmra.mrb[0].mxu0 %v798
          %v980 = vpop.f32.mrb[0].mxu0
          %v981 = vadd.f32 %v723, %v980
          %v982 = vpop.f32.mrb[0].mxu0
          %v983 = vadd.f32 %v727, %v982
          %v984 = vpop.f32.mrb[0].mxu0
          %v985 = vadd.f32 %v723, %v984
          %v986 = vpop.f32.mrb[0].mxu0
          %v987 = vadd.f32 %v727, %v986
          %988 = vmatprep.mubr.bf16.mxu0 0
          %989 = vmatmul.mubr.bf16.gmra.mrb[0].mxu0 %v799
          %v990 = vpop.f32.mrb[0].mxu0
          %v991 = vadd.f32 %v723, %v990
          %v992 = vpop.f32.mrb[0].mxu0
          %v993 = vadd.f32 %v727, %v992
          %v994 = vpop.f32.mrb[0].mxu0
          %v995 = vadd.f32 %v723, %v994
          %v996 = vpop.f32.mrb[0].mxu0
          %v997 = vadd.f32 %v727, %v996
          %998 = vmatprep.mubr.bf16.mxu0 0
          %999 = vmatmul.mubr.bf16.gmra.mrb[0].mxu0 %v800
          %v1000 = vpop.f32.mrb[0].mxu0
          %v1001 = vadd.f32 %v723, %v1000
          %v1002 = vpop.f32.mrb[0].mxu0
          %v1003 = vadd.f32 %v727, %v1002
          %v1004 = vpop.f32.mrb[0].mxu0
          %v1005 = vadd.f32 %v723, %v1004
          %v1006 = vpop.f32.mrb[0].mxu0
          %v1007 = vadd.f32 %v727, %v1006
          %1008 = vmatprep.mubr.bf16.mxu0 0
          %1009 = vmatmul.mubr.bf16.gmra.mrb[0].mxu0 %v801
          %v1010 = vpop.f32.mrb[0].mxu0
          %v1011 = vadd.f32 %v723, %v1010
          %v1012 = vpop.f32.mrb[0].mxu0
          %v1013 = vadd.f32 %v727, %v1012
          %v1014 = vpop.f32.mrb[0].mxu0
          %v1015 = vadd.f32 %v723, %v1014
          %v1016 = vpop.f32.mrb[0].mxu0
          %v1017 = vadd.f32 %v727, %v1016
          %1018 = vmatprep.mubr.bf16.mxu0 0
          %1019 = vmatmul.mubr.bf16.gmra.mrb[0].mxu0 %v802
          %v1020 = vpop.f32.mrb[0].mxu0
          %v1021 = vadd.f32 %v723, %v1020
          %v1022 = vpop.f32.mrb[0].mxu0
          %v1023 = vadd.f32 %v727, %v1022
          %v1024 = vpop.f32.mrb[0].mxu0
          %v1025 = vadd.f32 %v723, %v1024
          %v1026 = vpop.f32.mrb[0].mxu0
          %v1027 = vadd.f32 %v727, %v1026
          %1028 = vmatprep.mubr.bf16.mxu0 0
          %1029 = vmatmul.mubr.bf16.gmra.mrb[0].mxu0 %v803
          %v1030 = vpop.f32.mrb[0].mxu0
          %v1031 = vadd.f32 %v723, %v1030
          %v1032 = vpop.f32.mrb[0].mxu0
          %v1033 = vadd.f32 %v727, %v1032
          %v1034 = vpop.f32.mrb[0].mxu0
          %v1035 = vadd.f32 %v723, %v1034
          %v1036 = vpop.f32.mrb[0].mxu0
          %v1037 = vadd.f32 %v727, %v1036
          %1038 = vmatprep.mubr.bf16.mxu0 0
          %1039 = vmatmul.mubr.bf16.gmra.mrb[0].mxu0 %v804
          %v1040 = vpop.f32.mrb[0].mxu0
          %v1041 = vadd.f32 %v723, %v1040
          %v1042 = vpop.f32.mrb[0].mxu0
          %v1043 = vadd.f32 %v727, %v1042
          %v1044 = vpop.f32.mrb[0].mxu0
          %v1045 = vadd.f32 %v723, %v1044
          %v1046 = vpop.f32.mrb[0].mxu0
          %v1047 = vadd.f32 %v727, %v1046
          %1048 = vmatprep.mubr.bf16.mxu0 0
          %1049 = vmatmul.mubr.bf16.gmra.mrb[0].mxu0 %v805
          %v1050 = vpop.f32.mrb[0].mxu0
          %v1051 = vadd.f32 %v723, %v1050
          %v1052 = vpop.f32.mrb[0].mxu0
          %v1053 = vadd.f32 %v727, %v1052
          %v1054 = vpop.f32.mrb[0].mxu0
          %v1055 = vadd.f32 %v723, %v1054
          %v1056 = vpop.f32.mrb[0].mxu0
          %v1057 = vadd.f32 %v727, %v1056
          %1058 = vmatprep.mubr.bf16.mxu0 0
          %1059 = vmatmul.mubr.bf16.gmra.mrb[0].mxu0 %v806
          %v1060 = vpop.f32.mrb[0].mxu0
          %v1061 = vadd.f32 %v723, %v1060
          %v1062 = vpop.f32.mrb[0].mxu0
          %v1063 = vadd.f32 %v727, %v1062
          %v1064 = vpop.f32.mrb[0].mxu0
          %v1065 = vadd.f32 %v723, %v1064
          %v1066 = vpop.f32.mrb[0].mxu0
          %v1067 = vadd.f32 %v727, %v1066
          %1068 = vmatprep.mubr.bf16.mxu0 0
          %1069 = vmatmul.mubr.bf16.gmra.mrb[0].mxu0 %v807
          %v1070 = vpop.f32.mrb[0].mxu0
          %v1071 = vadd.f32 %v723, %v1070
          %v1072 = vpop.f32.mrb[0].mxu0
          %v1073 = vadd.f32 %v727, %v1072
          %v1074 = vpop.f32.mrb[0].mxu0
          %v1075 = vadd.f32 %v723, %v1074
          %v1076 = vpop.f32.mrb[0].mxu0
          %v1077 = vadd.f32 %v727, %v1076
          %1078 = vmatprep.mubr.bf16.mxu0 0
          %1079 = vmatmul.mubr.bf16.gmra.mrb[0].mxu0 %v808
          %v1080 = vpop.f32.mrb[0].mxu0
          %v1081 = vadd.f32 %v723, %v1080
          %v1082 = vpop.f32.mrb[0].mxu0
          %v1083 = vadd.f32 %v727, %v1082
          %v1084 = vpop.f32.mrb[0].mxu0
          %v1085 = vadd.f32 %v723, %v1084
          %v1086 = vpop.f32.mrb[0].mxu0
          %v1087 = vadd.f32 %v727, %v1086
          %1088 = vmatprep.mubr.bf16.mxu0 0
          %1089 = vmatmul.mubr.bf16.gmra.mrb[0].mxu0 %v809
          %v1090 = vpop.f32.mrb[0].mxu0
          %v1091 = vadd.f32 %v723, %v1090
          %v1092 = vpop.f32.mrb[0].mxu0
          %v1093 = vadd.f32 %v727, %v1092
          %v1094 = vpop.f32.mrb[0].mxu0
          %v1095 = vadd.f32 %v723, %v1094
          %v1096 = vpop.f32.mrb[0].mxu0
          %v1097 = vadd.f32 %v727, %v1096
          %1098 = vdwg.mxu0
          %v1099 = vmax.f32 %v941, 0.0
          %v1100 = vmax.f32 %v943, 0.0
          %v1101 = vmax.f32 %v945, 0.0
          %v1102 = vmax.f32 %v947, 0.0
          %v1103 = vmax.f32 %v951, 0.0
          %v1104 = vmax.f32 %v953, 0.0
          %v1105 = vmax.f32 %v955, 0.0
          %v1106 = vmax.f32 %v957, 0.0
          %v1107 = vmax.f32 %v961, 0.0
          %v1108 = vmax.f32 %v963, 0.0
          %v1109 = vmax.f32 %v965, 0.0
          %v1110 = vmax.f32 %v967, 0.0
          %v1111 = vmax.f32 %v971, 0.0
          %v1112 = vmax.f32 %v973, 0.0
          %v1113 = vmax.f32 %v975, 0.0
          %v1114 = vmax.f32 %v977, 0.0
          %v1115 = vmax.f32 %v981, 0.0
          %v1116 = vmax.f32 %v983, 0.0
          %v1117 = vmax.f32 %v985, 0.0
          %v1118 = vmax.f32 %v987, 0.0
          %v1119 = vmax.f32 %v991, 0.0
          %v1120 = vmax.f32 %v993, 0.0
          %v1121 = vmax.f32 %v995, 0.0
          %v1122 = vmax.f32 %v997, 0.0
          %v1123 = vmax.f32 %v1001, 0.0
          %v1124 = vmax.f32 %v1003, 0.0
          %v1125 = vmax.f32 %v1005, 0.0
          %v1126 = vmax.f32 %v1007, 0.0
          %v1127 = vmax.f32 %v1011, 0.0
          %v1128 = vmax.f32 %v1013, 0.0
          %v1129 = vmax.f32 %v1015, 0.0
          %v1130 = vmax.f32 %v1017, 0.0
          %v1131 = vmax.f32 %v1021, 0.0
          %v1132 = vmax.f32 %v1023, 0.0
          %v1133 = vmax.f32 %v1025, 0.0
          %v1134 = vmax.f32 %v1027, 0.0
          %v1135 = vmax.f32 %v1031, 0.0
          %v1136 = vmax.f32 %v1033, 0.0
          %v1137 = vmax.f32 %v1035, 0.0
          %v1138 = vmax.f32 %v1037, 0.0
          %v1139 = vmax.f32 %v1041, 0.0
          %v1140 = vmax.f32 %v1043, 0.0
          %v1141 = vmax.f32 %v1045, 0.0
          %v1142 = vmax.f32 %v1047, 0.0
          %v1143 = vmax.f32 %v1051, 0.0
          %v1144 = vmax.f32 %v1053, 0.0
          %v1145 = vmax.f32 %v1055, 0.0
          %v1146 = vmax.f32 %v1057, 0.0
          %v1147 = vmax.f32 %v1061, 0.0
          %v1148 = vmax.f32 %v1063, 0.0
          %v1149 = vmax.f32 %v1065, 0.0
          %v1150 = vmax.f32 %v1067, 0.0
          %v1151 = vmax.f32 %v1071, 0.0
          %v1152 = vmax.f32 %v1073, 0.0
          %v1153 = vmax.f32 %v1075, 0.0
          %v1154 = vmax.f32 %v1077, 0.0
          %v1155 = vmax.f32 %v1081, 0.0
          %v1156 = vmax.f32 %v1083, 0.0
          %v1157 = vmax.f32 %v1085, 0.0
          %v1158 = vmax.f32 %v1087, 0.0
          %v1159 = vmax.f32 %v1091, 0.0
          %v1160 = vmax.f32 %v1093, 0.0
          %v1161 = vmax.f32 %v1095, 0.0
          %v1162 = vmax.f32 %v1097, 0.0
          %v1163 = vpack.c.bf16 %v1101, %v1099
          %v1164 = vpack.c.bf16 %v1102, %v1100
          %v1165 = vpack.c.bf16 %v1105, %v1103
          %v1166 = vpack.c.bf16 %v1106, %v1104
          %v1167 = vpack.c.bf16 %v1109, %v1107
          %v1168 = vpack.c.bf16 %v1110, %v1108
          %v1169 = vpack.c.bf16 %v1113, %v1111
          %v1170 = vpack.c.bf16 %v1114, %v1112
          %v1171 = vpack.c.bf16 %v1117, %v1115
          %v1172 = vpack.c.bf16 %v1118, %v1116
          %v1173 = vpack.c.bf16 %v1121, %v1119
          %v1174 = vpack.c.bf16 %v1122, %v1120
          %v1175 = vpack.c.bf16 %v1125, %v1123
          %v1176 = vpack.c.bf16 %v1126, %v1124
          %v1177 = vpack.c.bf16 %v1129, %v1127
          %v1178 = vpack.c.bf16 %v1130, %v1128
          %v1179 = vpack.c.bf16 %v1133, %v1131
          %v1180 = vpack.c.bf16 %v1134, %v1132
          %v1181 = vpack.c.bf16 %v1137, %v1135
          %v1182 = vpack.c.bf16 %v1138, %v1136
          %v1183 = vpack.c.bf16 %v1141, %v1139
          %v1184 = vpack.c.bf16 %v1142, %v1140
          %v1185 = vpack.c.bf16 %v1145, %v1143
          %v1186 = vpack.c.bf16 %v1146, %v1144
          %v1187 = vpack.c.bf16 %v1149, %v1147
          %v1188 = vpack.c.bf16 %v1150, %v1148
          %v1189 = vpack.c.bf16 %v1153, %v1151
          %v1190 = vpack.c.bf16 %v1154, %v1152
          %v1191 = vpack.c.bf16 %v1157, %v1155
          %v1192 = vpack.c.bf16 %v1158, %v1156
          %v1193 = vpack.c.bf16 %v1161, %v1159
          %v1194 = vpack.c.bf16 %v1162, %v1160
          %v1195 = vld [vmem:[#allocation8] sm:$0xff]
          %v1196 = vld [vmem:[#allocation8 + $0x8] sm:$0xff]
          %v1197 = vld [vmem:[#allocation8 + $0x10] sm:$0xff]
          %v1198 = vld [vmem:[#allocation8 + $0x18] sm:$0xff]
          %v1199 = vld [vmem:[#allocation8 + $0x20] sm:$0xff]
          %v1200 = vld [vmem:[#allocation8 + $0x28] sm:$0xff]
          %v1201 = vld [vmem:[#allocation8 + $0x30] sm:$0xff]
          %v1202 = vld [vmem:[#allocation8 + $0x38] sm:$0xff]
          %v1203 = vld [vmem:[#allocation8 + $0x40] sm:$0xff]
          %v1204 = vld [vmem:[#allocation8 + $0x48] sm:$0xff]
          %v1205 = vld [vmem:[#allocation8 + $0x50] sm:$0xff]
          %v1206 = vld [vmem:[#allocation8 + $0x58] sm:$0xff]
          %v1207 = vld [vmem:[#allocation8 + $0x60] sm:$0xff]
          %v1208 = vld [vmem:[#allocation8 + $0x68] sm:$0xff]
          %v1209 = vld [vmem:[#allocation8 + $0x70] sm:$0xff]
          %v1210 = vld [vmem:[#allocation8 + $0x78] sm:$0xff]
          %v1211 = vld [vmem:[#allocation8 + $0x80] sm:$0xff]
          %v1212 = vld [vmem:[#allocation8 + $0x88] sm:$0xff]
          %v1213 = vld [vmem:[#allocation8 + $0x90] sm:$0xff]
          %v1214 = vld [vmem:[#allocation8 + $0x98] sm:$0xff]
          %v1215 = vld [vmem:[#allocation8 + $0xa0] sm:$0xff]
          %v1216 = vld [vmem:[#allocation8 + $0xa8] sm:$0xff]
          %v1217 = vld [vmem:[#allocation8 + $0xb0] sm:$0xff]
          %v1218 = vld [vmem:[#allocation8 + $0xb8] sm:$0xff]
          %v1219 = vld [vmem:[#allocation8 + $0xc0] sm:$0xff]
          %v1220 = vld [vmem:[#allocation8 + $0xc8] sm:$0xff]
          %v1221 = vld [vmem:[#allocation8 + $0xd0] sm:$0xff]
          %v1222 = vld [vmem:[#allocation8 + $0xd8] sm:$0xff]
          %v1223 = vld [vmem:[#allocation8 + $0xe0] sm:$0xff]
          %v1224 = vld [vmem:[#allocation8 + $0xe8] sm:$0xff]
          %v1225 = vld [vmem:[#allocation8 + $0xf0] sm:$0xff]
          %v1226 = vld [vmem:[#allocation8 + $0xf8] sm:$0xff]
          %v1259 = vunpack.c.l.b16 %v1195
          %v1260 = vunpack.c.h.b16 %v1195
          %v1261 = vunpack.c.l.b16 %v1196
          %v1262 = vunpack.c.h.b16 %v1196
          %v1263 = vunpack.c.l.b16 %v1197
          %v1264 = vunpack.c.h.b16 %v1197
          %v1265 = vunpack.c.l.b16 %v1198
          %v1266 = vunpack.c.h.b16 %v1198
          %v1267 = vunpack.c.l.b16 %v1199
          %v1268 = vunpack.c.h.b16 %v1199
          %v1269 = vunpack.c.l.b16 %v1200
          %v1270 = vunpack.c.h.b16 %v1200
          %v1271 = vunpack.c.l.b16 %v1201
          %v1272 = vunpack.c.h.b16 %v1201
          %v1273 = vunpack.c.l.b16 %v1202
          %v1274 = vunpack.c.h.b16 %v1202
          %v1275 = vunpack.c.l.b16 %v1203
          %v1276 = vunpack.c.h.b16 %v1203
          %v1277 = vunpack.c.l.b16 %v1204
          %v1278 = vunpack.c.h.b16 %v1204
          %v1279 = vunpack.c.l.b16 %v1205
          %v1280 = vunpack.c.h.b16 %v1205
          %v1281 = vunpack.c.l.b16 %v1206
          %v1282 = vunpack.c.h.b16 %v1206
          %v1283 = vunpack.c.l.b16 %v1207
          %v1284 = vunpack.c.h.b16 %v1207
          %v1285 = vunpack.c.l.b16 %v1208
          %v1286 = vunpack.c.h.b16 %v1208
          %v1287 = vunpack.c.l.b16 %v1209
          %v1288 = vunpack.c.h.b16 %v1209
          %v1289 = vunpack.c.l.b16 %v1210
          %v1290 = vunpack.c.h.b16 %v1210
          %v1291 = vunpack.c.l.b16 %v1211
          %v1292 = vunpack.c.h.b16 %v1211
          %v1293 = vunpack.c.l.b16 %v1212
          %v1294 = vunpack.c.h.b16 %v1212
          %v1295 = vunpack.c.l.b16 %v1213
          %v1296 = vunpack.c.h.b16 %v1213
          %v1297 = vunpack.c.l.b16 %v1214
          %v1298 = vunpack.c.h.b16 %v1214
          %v1299 = vunpack.c.l.b16 %v1215
          %v1300 = vunpack.c.h.b16 %v1215
          %v1301 = vunpack.c.l.b16 %v1216
          %v1302 = vunpack.c.h.b16 %v1216
          %v1303 = vunpack.c.l.b16 %v1217
          %v1304 = vunpack.c.h.b16 %v1217
          %v1305 = vunpack.c.l.b16 %v1218
          %v1306 = vunpack.c.h.b16 %v1218
          %v1307 = vunpack.c.l.b16 %v1219
          %v1308 = vunpack.c.h.b16 %v1219
          %v1309 = vunpack.c.l.b16 %v1220
          %v1310 = vunpack.c.h.b16 %v1220
          %v1311 = vunpack.c.l.b16 %v1221
          %v1312 = vunpack.c.h.b16 %v1221
          %v1313 = vunpack.c.l.b16 %v1222
          %v1314 = vunpack.c.h.b16 %v1222
          %v1315 = vunpack.c.l.b16 %v1223
          %v1316 = vunpack.c.h.b16 %v1223
          %v1317 = vunpack.c.l.b16 %v1224
          %v1318 = vunpack.c.h.b16 %v1224
          %v1319 = vunpack.c.l.b16 %v1225
          %v1320 = vunpack.c.h.b16 %v1225
          %v1321 = vunpack.c.l.b16 %v1226
          %v1322 = vunpack.c.h.b16 %v1226
          %v1323 = vpack.c.b16 %v1261, %v1259
          %v1324 = vpack.c.b16 %v1262, %v1260
          %v1325 = vpack.c.b16 %v1265, %v1263
          %v1326 = vpack.c.b16 %v1266, %v1264
          %v1327 = vpack.c.b16 %v1269, %v1267
          %v1328 = vpack.c.b16 %v1270, %v1268
          %v1329 = vpack.c.b16 %v1273, %v1271
          %v1330 = vpack.c.b16 %v1274, %v1272
          %v1331 = vpack.c.b16 %v1277, %v1275
          %v1332 = vpack.c.b16 %v1278, %v1276
          %v1333 = vpack.c.b16 %v1281, %v1279
          %v1334 = vpack.c.b16 %v1282, %v1280
          %v1335 = vpack.c.b16 %v1285, %v1283
          %v1336 = vpack.c.b16 %v1286, %v1284
          %v1337 = vpack.c.b16 %v1289, %v1287
          %v1338 = vpack.c.b16 %v1290, %v1288
          %v1339 = vpack.c.b16 %v1293, %v1291
          %v1340 = vpack.c.b16 %v1294, %v1292
          %v1341 = vpack.c.b16 %v1297, %v1295
          %v1342 = vpack.c.b16 %v1298, %v1296
          %v1343 = vpack.c.b16 %v1301, %v1299
          %v1344 = vpack.c.b16 %v1302, %v1300
          %v1345 = vpack.c.b16 %v1305, %v1303
          %v1346 = vpack.c.b16 %v1306, %v1304
          %v1347 = vpack.c.b16 %v1309, %v1307
          %v1348 = vpack.c.b16 %v1310, %v1308
          %v1349 = vpack.c.b16 %v1313, %v1311
          %v1350 = vpack.c.b16 %v1314, %v1312
          %v1351 = vpack.c.b16 %v1317, %v1315
          %v1352 = vpack.c.b16 %v1318, %v1316
          %v1353 = vpack.c.b16 %v1321, %v1319
          %v1354 = vpack.c.b16 %v1322, %v1320
          %1387 = vmatprep.subr.bf16.mxu0 %v1324
          %1388 = vmatpush1.bf16.msra.mxu0 %v1323
          %1389 = vmatprep.subr.bf16.mxu0 %v1326
          %1390 = vmatpush1.bf16.msra.mxu0 %v1325
          %1391 = vmatprep.subr.bf16.mxu0 %v1328
          %1392 = vmatpush1.bf16.msra.mxu0 %v1327
          %1393 = vmatprep.subr.bf16.mxu0 %v1330
          %1394 = vmatpush1.bf16.msra.mxu0 %v1329
          %1395 = vmatprep.subr.bf16.mxu0 %v1332
          %1396 = vmatpush1.bf16.msra.mxu0 %v1331
          %1397 = vmatprep.subr.bf16.mxu0 %v1334
          %1398 = vmatpush1.bf16.msra.mxu0 %v1333
          %1399 = vmatprep.subr.bf16.mxu0 %v1336
          %1400 = vmatpush1.bf16.msra.mxu0 %v1335
          %1401 = vmatprep.subr.bf16.mxu0 %v1338
          %1402 = vmatpush1.bf16.msra.mxu0 %v1337
          %1403 = vmatprep.subr.bf16.mxu0 %v1340
          %1404 = vmatpush1.bf16.msra.mxu0 %v1339
          %1405 = vmatprep.subr.bf16.mxu0 %v1342
          %1406 = vmatpush1.bf16.msra.mxu0 %v1341
          %1407 = vmatprep.subr.bf16.mxu0 %v1344
          %1408 = vmatpush1.bf16.msra.mxu0 %v1343
          %1409 = vmatprep.subr.bf16.mxu0 %v1346
          %1410 = vmatpush1.bf16.msra.mxu0 %v1345
          %1411 = vmatprep.subr.bf16.mxu0 %v1348
          %1412 = vmatpush1.bf16.msra.mxu0 %v1347
          %1413 = vmatprep.subr.bf16.mxu0 %v1350
          %1414 = vmatpush1.bf16.msra.mxu0 %v1349
          %1415 = vmatprep.subr.bf16.mxu0 %v1352
          %1416 = vmatpush1.bf16.msra.mxu0 %v1351
          %1417 = vmatprep.subr.bf16.mxu0 %v1354
          %1418 = vmatpush1.bf16.msra.mxu0 %v1353
          %1419 = vmatprep.mubr.bf16.mxu0 %v1164
          %1420 = vmatmul.mubr.bf16.gmra.mrb[0].mxu0 %v1163
          %v1421 = vpop.f32.mrb[0].mxu0
          %v1422 = vadd.f32 0.0, %v1421
          %v1423 = vpop.f32.mrb[0].mxu0
          %v1424 = vadd.f32 0.0, %v1423
          %v1425 = vpop.f32.mrb[0].mxu0
          %v1426 = vadd.f32 0.0, %v1425
          %v1427 = vpop.f32.mrb[0].mxu0
          %v1428 = vadd.f32 0.0, %v1427
          %1429 = vmatprep.mubr.bf16.mxu0 %v1166
          %1430 = vmatmul.mubr.bf16.gmra.mrb[0].mxu0 %v1165
          %v1431 = vpop.f32.mrb[0].mxu0
          %v1432 = vadd.f32 0.0, %v1431
          %v1433 = vpop.f32.mrb[0].mxu0
          %v1434 = vadd.f32 0.0, %v1433
          %v1435 = vpop.f32.mrb[0].mxu0
          %v1436 = vadd.f32 0.0, %v1435
          %v1437 = vpop.f32.mrb[0].mxu0
          %v1438 = vadd.f32 0.0, %v1437
          %1439 = vmatprep.mubr.bf16.mxu0 %v1168
          %1440 = vmatmul.mubr.bf16.gmra.mrb[0].mxu0 %v1167
          %v1441 = vpop.f32.mrb[0].mxu0
          %v1442 = vadd.f32 0.0, %v1441
          %v1443 = vpop.f32.mrb[0].mxu0
          %v1444 = vadd.f32 0.0, %v1443
          %v1445 = vpop.f32.mrb[0].mxu0
          %v1446 = vadd.f32 0.0, %v1445
          %v1447 = vpop.f32.mrb[0].mxu0
          %v1448 = vadd.f32 0.0, %v1447
          %1449 = vmatprep.mubr.bf16.mxu0 %v1170
          %1450 = vmatmul.mubr.bf16.gmra.mrb[0].mxu0 %v1169
          %v1451 = vpop.f32.mrb[0].mxu0
          %v1452 = vadd.f32 0.0, %v1451
          %v1453 = vpop.f32.mrb[0].mxu0
          %v1454 = vadd.f32 0.0, %v1453
          %v1455 = vpop.f32.mrb[0].mxu0
          %v1456 = vadd.f32 0.0, %v1455
          %v1457 = vpop.f32.mrb[0].mxu0
          %v1458 = vadd.f32 0.0, %v1457
          %1459 = vmatprep.mubr.bf16.mxu0 %v1172
          %1460 = vmatmul.mubr.bf16.gmra.mrb[0].mxu0 %v1171
          %v1461 = vpop.f32.mrb[0].mxu0
          %v1462 = vadd.f32 0.0, %v1461
          %v1463 = vpop.f32.mrb[0].mxu0
          %v1464 = vadd.f32 0.0, %v1463
          %v1465 = vpop.f32.mrb[0].mxu0
          %v1466 = vadd.f32 0.0, %v1465
          %v1467 = vpop.f32.mrb[0].mxu0
          %v1468 = vadd.f32 0.0, %v1467
          %1469 = vmatprep.mubr.bf16.mxu0 %v1174
          %1470 = vmatmul.mubr.bf16.gmra.mrb[0].mxu0 %v1173
          %v1471 = vpop.f32.mrb[0].mxu0
          %v1472 = vadd.f32 0.0, %v1471
          %v1473 = vpop.f32.mrb[0].mxu0
          %v1474 = vadd.f32 0.0, %v1473
          %v1475 = vpop.f32.mrb[0].mxu0
          %v1476 = vadd.f32 0.0, %v1475
          %v1477 = vpop.f32.mrb[0].mxu0
          %v1478 = vadd.f32 0.0, %v1477
          %1479 = vmatprep.mubr.bf16.mxu0 %v1176
          %1480 = vmatmul.mubr.bf16.gmra.mrb[0].mxu0 %v1175
          %v1481 = vpop.f32.mrb[0].mxu0
          %v1482 = vadd.f32 0.0, %v1481
          %v1483 = vpop.f32.mrb[0].mxu0
          %v1484 = vadd.f32 0.0, %v1483
          %v1485 = vpop.f32.mrb[0].mxu0
          %v1486 = vadd.f32 0.0, %v1485
          %v1487 = vpop.f32.mrb[0].mxu0
          %v1488 = vadd.f32 0.0, %v1487
          %1489 = vmatprep.mubr.bf16.mxu0 %v1178
          %1490 = vmatmul.mubr.bf16.gmra.mrb[0].mxu0 %v1177
          %v1491 = vpop.f32.mrb[0].mxu0
          %v1492 = vadd.f32 0.0, %v1491
          %v1493 = vpop.f32.mrb[0].mxu0
          %v1494 = vadd.f32 0.0, %v1493
          %v1495 = vpop.f32.mrb[0].mxu0
          %v1496 = vadd.f32 0.0, %v1495
          %v1497 = vpop.f32.mrb[0].mxu0
          %v1498 = vadd.f32 0.0, %v1497
          %1499 = vmatprep.mubr.bf16.mxu0 %v1180
          %1500 = vmatmul.mubr.bf16.gmra.mrb[0].mxu0 %v1179
          %v1501 = vpop.f32.mrb[0].mxu0
          %v1502 = vadd.f32 0.0, %v1501
          %v1503 = vpop.f32.mrb[0].mxu0
          %v1504 = vadd.f32 0.0, %v1503
          %v1505 = vpop.f32.mrb[0].mxu0
          %v1506 = vadd.f32 0.0, %v1505
          %v1507 = vpop.f32.mrb[0].mxu0
          %v1508 = vadd.f32 0.0, %v1507
          %1509 = vmatprep.mubr.bf16.mxu0 %v1182
          %1510 = vmatmul.mubr.bf16.gmra.mrb[0].mxu0 %v1181
          %v1511 = vpop.f32.mrb[0].mxu0
          %v1512 = vadd.f32 0.0, %v1511
          %v1513 = vpop.f32.mrb[0].mxu0
          %v1514 = vadd.f32 0.0, %v1513
          %v1515 = vpop.f32.mrb[0].mxu0
          %v1516 = vadd.f32 0.0, %v1515
          %v1517 = vpop.f32.mrb[0].mxu0
          %v1518 = vadd.f32 0.0, %v1517
          %1519 = vmatprep.mubr.bf16.mxu0 %v1184
          %1520 = vmatmul.mubr.bf16.gmra.mrb[0].mxu0 %v1183
          %v1521 = vpop.f32.mrb[0].mxu0
          %v1522 = vadd.f32 0.0, %v1521
          %v1523 = vpop.f32.mrb[0].mxu0
          %v1524 = vadd.f32 0.0, %v1523
          %v1525 = vpop.f32.mrb[0].mxu0
          %v1526 = vadd.f32 0.0, %v1525
          %v1527 = vpop.f32.mrb[0].mxu0
          %v1528 = vadd.f32 0.0, %v1527
          %1529 = vmatprep.mubr.bf16.mxu0 %v1186
          %1530 = vmatmul.mubr.bf16.gmra.mrb[0].mxu0 %v1185
          %v1531 = vpop.f32.mrb[0].mxu0
          %v1532 = vadd.f32 0.0, %v1531
          %v1533 = vpop.f32.mrb[0].mxu0
          %v1534 = vadd.f32 0.0, %v1533
          %v1535 = vpop.f32.mrb[0].mxu0
          %v1536 = vadd.f32 0.0, %v1535
          %v1537 = vpop.f32.mrb[0].mxu0
          %v1538 = vadd.f32 0.0, %v1537
          %1539 = vmatprep.mubr.bf16.mxu0 %v1188
          %1540 = vmatmul.mubr.bf16.gmra.mrb[0].mxu0 %v1187
          %v1541 = vpop.f32.mrb[0].mxu0
          %v1542 = vadd.f32 0.0, %v1541
          %v1543 = vpop.f32.mrb[0].mxu0
          %v1544 = vadd.f32 0.0, %v1543
          %v1545 = vpop.f32.mrb[0].mxu0
          %v1546 = vadd.f32 0.0, %v1545
          %v1547 = vpop.f32.mrb[0].mxu0
          %v1548 = vadd.f32 0.0, %v1547
          %1549 = vmatprep.mubr.bf16.mxu0 %v1190
          %1550 = vmatmul.mubr.bf16.gmra.mrb[0].mxu0 %v1189
          %v1551 = vpop.f32.mrb[0].mxu0
          %v1552 = vadd.f32 0.0, %v1551
          %v1553 = vpop.f32.mrb[0].mxu0
          %v1554 = vadd.f32 0.0, %v1553
          %v1555 = vpop.f32.mrb[0].mxu0
          %v1556 = vadd.f32 0.0, %v1555
          %v1557 = vpop.f32.mrb[0].mxu0
          %v1558 = vadd.f32 0.0, %v1557
          %1559 = vmatprep.mubr.bf16.mxu0 %v1192
          %1560 = vmatmul.mubr.bf16.gmra.mrb[0].mxu0 %v1191
          %v1561 = vpop.f32.mrb[0].mxu0
          %v1562 = vadd.f32 0.0, %v1561
          %v1563 = vpop.f32.mrb[0].mxu0
          %v1564 = vadd.f32 0.0, %v1563
          %v1565 = vpop.f32.mrb[0].mxu0
          %v1566 = vadd.f32 0.0, %v1565
          %v1567 = vpop.f32.mrb[0].mxu0
          %v1568 = vadd.f32 0.0, %v1567
          %1569 = vmatprep.mubr.bf16.mxu0 %v1194
          %1570 = vmatmul.mubr.bf16.gmra.mrb[0].mxu0 %v1193
          %v1571 = vpop.f32.mrb[0].mxu0
          %v1572 = vadd.f32 0.0, %v1571
          %v1573 = vpop.f32.mrb[0].mxu0
          %v1574 = vadd.f32 0.0, %v1573
          %v1575 = vpop.f32.mrb[0].mxu0
          %v1576 = vadd.f32 0.0, %v1575
          %v1577 = vpop.f32.mrb[0].mxu0
          %v1578 = vadd.f32 0.0, %v1577
          %1579 = vdwg.mxu0
          %v1580 = vadd.f32 %v1099, %v1422
          %v1581 = vadd.f32 %v1100, %v1424
          %v1582 = vadd.f32 %v1101, %v1426
          %v1583 = vadd.f32 %v1102, %v1428
          %v1584 = vadd.f32 %v1103, %v1432
          %v1585 = vadd.f32 %v1104, %v1434
          %v1586 = vadd.f32 %v1105, %v1436
          %v1587 = vadd.f32 %v1106, %v1438
          %v1588 = vadd.f32 %v1107, %v1442
          %v1589 = vadd.f32 %v1108, %v1444
          %v1590 = vadd.f32 %v1109, %v1446
          %v1591 = vadd.f32 %v1110, %v1448
          %v1592 = vadd.f32 %v1111, %v1452
          %v1593 = vadd.f32 %v1112, %v1454
          %v1594 = vadd.f32 %v1113, %v1456
          %v1595 = vadd.f32 %v1114, %v1458
          %v1596 = vadd.f32 %v1115, %v1462
          %v1597 = vadd.f32 %v1116, %v1464
          %v1598 = vadd.f32 %v1117, %v1466
          %v1599 = vadd.f32 %v1118, %v1468
          %v1600 = vadd.f32 %v1119, %v1472
          %v1601 = vadd.f32 %v1120, %v1474
          %v1602 = vadd.f32 %v1121, %v1476
          %v1603 = vadd.f32 %v1122, %v1478
          %v1604 = vadd.f32 %v1123, %v1482
          %v1605 = vadd.f32 %v1124, %v1484
          %v1606 = vadd.f32 %v1125, %v1486
          %v1607 = vadd.f32 %v1126, %v1488
          %v1608 = vadd.f32 %v1127, %v1492
          %v1609 = vadd.f32 %v1128, %v1494
          %v1610 = vadd.f32 %v1129, %v1496
          %v1611 = vadd.f32 %v1130, %v1498
          %v1612 = vadd.f32 %v1131, %v1502
          %v1613 = vadd.f32 %v1132, %v1504
          %v1614 = vadd.f32 %v1133, %v1506
          %v1615 = vadd.f32 %v1134, %v1508
          %v1616 = vadd.f32 %v1135, %v1512
          %v1617 = vadd.f32 %v1136, %v1514
          %v1618 = vadd.f32 %v1137, %v1516
          %v1619 = vadd.f32 %v1138, %v1518
          %v1620 = vadd.f32 %v1139, %v1522
          %v1621 = vadd.f32 %v1140, %v1524
          %v1622 = vadd.f32 %v1141, %v1526
          %v1623 = vadd.f32 %v1142, %v1528
          %v1624 = vadd.f32 %v1143, %v1532
          %v1625 = vadd.f32 %v1144, %v1534
          %v1626 = vadd.f32 %v1145, %v1536
          %v1627 = vadd.f32 %v1146, %v1538
          %v1628 = vadd.f32 %v1147, %v1542
          %v1629 = vadd.f32 %v1148, %v1544
          %v1630 = vadd.f32 %v1149, %v1546
          %v1631 = vadd.f32 %v1150, %v1548
          %v1632 = vadd.f32 %v1151, %v1552
          %v1633 = vadd.f32 %v1152, %v1554
          %v1634 = vadd.f32 %v1153, %v1556
          %v1635 = vadd.f32 %v1154, %v1558
          %v1636 = vadd.f32 %v1155, %v1562
          %v1637 = vadd.f32 %v1156, %v1564
          %v1638 = vadd.f32 %v1157, %v1566
          %v1639 = vadd.f32 %v1158, %v1568
          %v1640 = vadd.f32 %v1159, %v1572
          %v1641 = vadd.f32 %v1160, %v1574
          %v1642 = vadd.f32 %v1161, %v1576
          %v1643 = vadd.f32 %v1162, %v1578
          %v1644 = vld [vmem:[%s4] sm:$0x3]
          %v1646 = vlaneseq
          %v1647 = vshrl.u32 %v1646, 7
          %v1648 = vsub.s32 0, %v1647
          %v1649 = vrot.slane %v1644, %v1648
          %v1650 = vlaneseq
          %v1651 = vshrl.u32 %v1650, 7
          %v1652 = vsub.s32 1, %v1651
          %v1653 = vrot.slane %v1644, %v1652
          %v1656 = vadd.f32 %v1580, %v1649
          %v1657 = vadd.f32 %v1581, %v1653
          %v1658 = vadd.f32 %v1582, %v1649
          %v1659 = vadd.f32 %v1583, %v1653
          %v1660 = vadd.f32 %v1584, %v1649
          %v1661 = vadd.f32 %v1585, %v1653
          %v1662 = vadd.f32 %v1586, %v1649
          %v1663 = vadd.f32 %v1587, %v1653
          %v1664 = vadd.f32 %v1588, %v1649
          %v1665 = vadd.f32 %v1589, %v1653
          %v1666 = vadd.f32 %v1590, %v1649
          %v1667 = vadd.f32 %v1591, %v1653
          %v1668 = vadd.f32 %v1592, %v1649
          %v1669 = vadd.f32 %v1593, %v1653
          %v1670 = vadd.f32 %v1594, %v1649
          %v1671 = vadd.f32 %v1595, %v1653
          %v1672 = vadd.f32 %v1596, %v1649
          %v1673 = vadd.f32 %v1597, %v1653
          %v1674 = vadd.f32 %v1598, %v1649
          %v1675 = vadd.f32 %v1599, %v1653
          %v1676 = vadd.f32 %v1600, %v1649
          %v1677 = vadd.f32 %v1601, %v1653
          %v1678 = vadd.f32 %v1602, %v1649
          %v1679 = vadd.f32 %v1603, %v1653
          %v1680 = vadd.f32 %v1604, %v1649
          %v1681 = vadd.f32 %v1605, %v1653
          %v1682 = vadd.f32 %v1606, %v1649
          %v1683 = vadd.f32 %v1607, %v1653
          %v1684 = vadd.f32 %v1608, %v1649
          %v1685 = vadd.f32 %v1609, %v1653
          %v1686 = vadd.f32 %v1610, %v1649
          %v1687 = vadd.f32 %v1611, %v1653
          %v1688 = vadd.f32 %v1612, %v1649
          %v1689 = vadd.f32 %v1613, %v1653
          %v1690 = vadd.f32 %v1614, %v1649
          %v1691 = vadd.f32 %v1615, %v1653
          %v1692 = vadd.f32 %v1616, %v1649
          %v1693 = vadd.f32 %v1617, %v1653
          %v1694 = vadd.f32 %v1618, %v1649
          %v1695 = vadd.f32 %v1619, %v1653
          %v1696 = vadd.f32 %v1620, %v1649
          %v1697 = vadd.f32 %v1621, %v1653
          %v1698 = vadd.f32 %v1622, %v1649
          %v1699 = vadd.f32 %v1623, %v1653
          %v1700 = vadd.f32 %v1624, %v1649
          %v1701 = vadd.f32 %v1625, %v1653
          %v1702 = vadd.f32 %v1626, %v1649
          %v1703 = vadd.f32 %v1627, %v1653
          %v1704 = vadd.f32 %v1628, %v1649
          %v1705 = vadd.f32 %v1629, %v1653
          %v1706 = vadd.f32 %v1630, %v1649
          %v1707 = vadd.f32 %v1631, %v1653
          %v1708 = vadd.f32 %v1632, %v1649
          %v1709 = vadd.f32 %v1633, %v1653
          %v1710 = vadd.f32 %v1634, %v1649
          %v1711 = vadd.f32 %v1635, %v1653
          %v1712 = vadd.f32 %v1636, %v1649
          %v1713 = vadd.f32 %v1637, %v1653
          %v1714 = vadd.f32 %v1638, %v1649
          %v1715 = vadd.f32 %v1639, %v1653
          %v1716 = vadd.f32 %v1640, %v1649
          %v1717 = vadd.f32 %v1641, %v1653
          %v1718 = vadd.f32 %v1642, %v1649
          %v1719 = vadd.f32 %v1643, %v1653
          %v1720 = vadd.f32 %v1656, %v1657
          %1721 = vadd.xlane.f32.xlu0 %v1720
          %v1722 = vpop.xlane.xlu0 %1721
          %v1723 = vadd.f32 %v1658, %v1659
          %1724 = vadd.xlane.f32.xlu0 %v1723
          %v1725 = vpop.xlane.xlu0 %1724
          %v1726 = vadd.f32 %v1660, %v1661
          %1727 = vadd.xlane.f32.xlu0 %v1726
          %v1728 = vpop.xlane.xlu0 %1727
          %v1729 = vadd.f32 %v1662, %v1663
          %1730 = vadd.xlane.f32.xlu0 %v1729
          %v1731 = vpop.xlane.xlu0 %1730
          %v1732 = vadd.f32 %v1664, %v1665
          %1733 = vadd.xlane.f32.xlu0 %v1732
          %v1734 = vpop.xlane.xlu0 %1733
          %v1735 = vadd.f32 %v1666, %v1667
          %1736 = vadd.xlane.f32.xlu0 %v1735
          %v1737 = vpop.xlane.xlu0 %1736
          %v1738 = vadd.f32 %v1668, %v1669
          %1739 = vadd.xlane.f32.xlu0 %v1738
          %v1740 = vpop.xlane.xlu0 %1739
          %v1741 = vadd.f32 %v1670, %v1671
          %1742 = vadd.xlane.f32.xlu0 %v1741
          %v1743 = vpop.xlane.xlu0 %1742
          %v1744 = vadd.f32 %v1672, %v1673
          %1745 = vadd.xlane.f32.xlu0 %v1744
          %v1746 = vpop.xlane.xlu0 %1745
          %v1747 = vadd.f32 %v1674, %v1675
          %1748 = vadd.xlane.f32.xlu0 %v1747
          %v1749 = vpop.xlane.xlu0 %1748
          %v1750 = vadd.f32 %v1676, %v1677
          %1751 = vadd.xlane.f32.xlu0 %v1750
          %v1752 = vpop.xlane.xlu0 %1751
          %v1753 = vadd.f32 %v1678, %v1679
          %1754 = vadd.xlane.f32.xlu0 %v1753
          %v1755 = vpop.xlane.xlu0 %1754
          %v1756 = vadd.f32 %v1680, %v1681
          %1757 = vadd.xlane.f32.xlu0 %v1756
          %v1758 = vpop.xlane.xlu0 %1757
          %v1759 = vadd.f32 %v1682, %v1683
          %1760 = vadd.xlane.f32.xlu0 %v1759
          %v1761 = vpop.xlane.xlu0 %1760
          %v1762 = vadd.f32 %v1684, %v1685
          %1763 = vadd.xlane.f32.xlu0 %v1762
          %v1764 = vpop.xlane.xlu0 %1763
          %v1765 = vadd.f32 %v1686, %v1687
          %1766 = vadd.xlane.f32.xlu0 %v1765
          %v1767 = vpop.xlane.xlu0 %1766
          %v1768 = vadd.f32 %v1688, %v1689
          %1769 = vadd.xlane.f32.xlu0 %v1768
          %v1770 = vpop.xlane.xlu0 %1769
          %v1771 = vadd.f32 %v1690, %v1691
          %1772 = vadd.xlane.f32.xlu0 %v1771
          %v1773 = vpop.xlane.xlu0 %1772
          %v1774 = vadd.f32 %v1692, %v1693
          %1775 = vadd.xlane.f32.xlu0 %v1774
          %v1776 = vpop.xlane.xlu0 %1775
          %v1777 = vadd.f32 %v1694, %v1695
          %1778 = vadd.xlane.f32.xlu0 %v1777
          %v1779 = vpop.xlane.xlu0 %1778
          %v1780 = vadd.f32 %v1696, %v1697
          %1781 = vadd.xlane.f32.xlu0 %v1780
          %v1782 = vpop.xlane.xlu0 %1781
          %v1783 = vadd.f32 %v1698, %v1699
          %1784 = vadd.xlane.f32.xlu0 %v1783
          %v1785 = vpop.xlane.xlu0 %1784
          %v1786 = vadd.f32 %v1700, %v1701
          %1787 = vadd.xlane.f32.xlu0 %v1786
          %v1788 = vpop.xlane.xlu0 %1787
          %v1789 = vadd.f32 %v1702, %v1703
          %1790 = vadd.xlane.f32.xlu0 %v1789
          %v1791 = vpop.xlane.xlu0 %1790
          %v1792 = vadd.f32 %v1704, %v1705
          %1793 = vadd.xlane.f32.xlu0 %v1792
          %v1794 = vpop.xlane.xlu0 %1793
          %v1795 = vadd.f32 %v1706, %v1707
          %1796 = vadd.xlane.f32.xlu0 %v1795
          %v1797 = vpop.xlane.xlu0 %1796
          %v1798 = vadd.f32 %v1708, %v1709
          %1799 = vadd.xlane.f32.xlu0 %v1798
          %v1800 = vpop.xlane.xlu0 %1799
          %v1801 = vadd.f32 %v1710, %v1711
          %1802 = vadd.xlane.f32.xlu0 %v1801
          %v1803 = vpop.xlane.xlu0 %1802
          %v1804 = vadd.f32 %v1712, %v1713
          %1805 = vadd.xlane.f32.xlu0 %v1804
          %v1806 = vpop.xlane.xlu0 %1805
          %v1807 = vadd.f32 %v1714, %v1715
          %1808 = vadd.xlane.f32.xlu0 %v1807
          %v1809 = vpop.xlane.xlu0 %1808
          %v1810 = vadd.f32 %v1716, %v1717
          %1811 = vadd.xlane.f32.xlu0 %v1810
          %v1812 = vpop.xlane.xlu0 %1811
          %v1813 = vadd.f32 %v1718, %v1719
          %1814 = vadd.xlane.f32.xlu0 %v1813
          %v1815 = vpop.xlane.xlu0 %1814
          %v1816 = vmul.f32 %v1722, 0.00390625
          %v1817 = vmul.f32 %v1725, 0.00390625
          %v1818 = vmul.f32 %v1728, 0.00390625
          %v1819 = vmul.f32 %v1731, 0.00390625
          %v1820 = vmul.f32 %v1734, 0.00390625
          %v1821 = vmul.f32 %v1737, 0.00390625
          %v1822 = vmul.f32 %v1740, 0.00390625
          %v1823 = vmul.f32 %v1743, 0.00390625
          %v1824 = vmul.f32 %v1746, 0.00390625
          %v1825 = vmul.f32 %v1749, 0.00390625
          %v1826 = vmul.f32 %v1752, 0.00390625
          %v1827 = vmul.f32 %v1755, 0.00390625
          %v1828 = vmul.f32 %v1758, 0.00390625
          %v1829 = vmul.f32 %v1761, 0.00390625
          %v1830 = vmul.f32 %v1764, 0.00390625
          %v1831 = vmul.f32 %v1767, 0.00390625
          %v1832 = vmul.f32 %v1770, 0.00390625
          %v1833 = vmul.f32 %v1773, 0.00390625
          %v1834 = vmul.f32 %v1776, 0.00390625
          %v1835 = vmul.f32 %v1779, 0.00390625
          %v1836 = vmul.f32 %v1782, 0.00390625
          %v1837 = vmul.f32 %v1785, 0.00390625
          %v1838 = vmul.f32 %v1788, 0.00390625
          %v1839 = vmul.f32 %v1791, 0.00390625
          %v1840 = vmul.f32 %v1794, 0.00390625
          %v1841 = vmul.f32 %v1797, 0.00390625
          %v1842 = vmul.f32 %v1800, 0.00390625
          %v1843 = vmul.f32 %v1803, 0.00390625
          %v1844 = vmul.f32 %v1806, 0.00390625
          %v1845 = vmul.f32 %v1809, 0.00390625
          %v1846 = vmul.f32 %v1812, 0.00390625
          %v1847 = vmul.f32 %v1815, 0.00390625
          %v1848 = vmul.f32 %v1656, %v1656
          %v1849 = vmul.f32 %v1657, %v1657
          %v1850 = vmul.f32 %v1658, %v1658
          %v1851 = vmul.f32 %v1659, %v1659
          %v1852 = vmul.f32 %v1660, %v1660
          %v1853 = vmul.f32 %v1661, %v1661
          %v1854 = vmul.f32 %v1662, %v1662
          %v1855 = vmul.f32 %v1663, %v1663
          %v1856 = vmul.f32 %v1664, %v1664
          %v1857 = vmul.f32 %v1665, %v1665
          %v1858 = vmul.f32 %v1666, %v1666
          %v1859 = vmul.f32 %v1667, %v1667
          %v1860 = vmul.f32 %v1668, %v1668
          %v1861 = vmul.f32 %v1669, %v1669
          %v1862 = vmul.f32 %v1670, %v1670
          %v1863 = vmul.f32 %v1671, %v1671
          %v1864 = vmul.f32 %v1672, %v1672
          %v1865 = vmul.f32 %v1673, %v1673
          %v1866 = vmul.f32 %v1674, %v1674
          %v1867 = vmul.f32 %v1675, %v1675
          %v1868 = vmul.f32 %v1676, %v1676
          %v1869 = vmul.f32 %v1677, %v1677
          %v1870 = vmul.f32 %v1678, %v1678
          %v1871 = vmul.f32 %v1679, %v1679
          %v1872 = vmul.f32 %v1680, %v1680
          %v1873 = vmul.f32 %v1681, %v1681
          %v1874 = vmul.f32 %v1682, %v1682
          %v1875 = vmul.f32 %v1683, %v1683
          %v1876 = vmul.f32 %v1684, %v1684
          %v1877 = vmul.f32 %v1685, %v1685
          %v1878 = vmul.f32 %v1686, %v1686
          %v1879 = vmul.f32 %v1687, %v1687
          %v1880 = vmul.f32 %v1688, %v1688
          %v1881 = vmul.f32 %v1689, %v1689
          %v1882 = vmul.f32 %v1690, %v1690
          %v1883 = vmul.f32 %v1691, %v1691
          %v1884 = vmul.f32 %v1692, %v1692
          %v1885 = vmul.f32 %v1693, %v1693
          %v1886 = vmul.f32 %v1694, %v1694
          %v1887 = vmul.f32 %v1695, %v1695
          %v1888 = vmul.f32 %v1696, %v1696
          %v1889 = vmul.f32 %v1697, %v1697
          %v1890 = vmul.f32 %v1698, %v1698
          %v1891 = vmul.f32 %v1699, %v1699
          %v1892 = vmul.f32 %v1700, %v1700
          %v1893 = vmul.f32 %v1701, %v1701
          %v1894 = vmul.f32 %v1702, %v1702
          %v1895 = vmul.f32 %v1703, %v1703
          %v1896 = vmul.f32 %v1704, %v1704
          %v1897 = vmul.f32 %v1705, %v1705
          %v1898 = vmul.f32 %v1706, %v1706
          %v1899 = vmul.f32 %v1707, %v1707
          %v1900 = vmul.f32 %v1708, %v1708
          %v1901 = vmul.f32 %v1709, %v1709
          %v1902 = vmul.f32 %v1710, %v1710
          %v1903 = vmul.f32 %v1711, %v1711
          %v1904 = vmul.f32 %v1712, %v1712
          %v1905 = vmul.f32 %v1713, %v1713
          %v1906 = vmul.f32 %v1714, %v1714
          %v1907 = vmul.f32 %v1715, %v1715
          %v1908 = vmul.f32 %v1716, %v1716
          %v1909 = vmul.f32 %v1717, %v1717
          %v1910 = vmul.f32 %v1718, %v1718
          %v1911 = vmul.f32 %v1719, %v1719
          %v1912 = vadd.f32 %v1848, %v1849
          %1913 = vadd.xlane.f32.xlu0 %v1912
          %v1914 = vpop.xlane.xlu0 %1913
          %v1915 = vadd.f32 %v1850, %v1851
          %1916 = vadd.xlane.f32.xlu0 %v1915
          %v1917 = vpop.xlane.xlu0 %1916
          %v1918 = vadd.f32 %v1852, %v1853
          %1919 = vadd.xlane.f32.xlu0 %v1918
          %v1920 = vpop.xlane.xlu0 %1919
          %v1921 = vadd.f32 %v1854, %v1855
          %1922 = vadd.xlane.f32.xlu0 %v1921
          %v1923 = vpop.xlane.xlu0 %1922
          %v1924 = vadd.f32 %v1856, %v1857
          %1925 = vadd.xlane.f32.xlu0 %v1924
          %v1926 = vpop.xlane.xlu0 %1925
          %v1927 = vadd.f32 %v1858, %v1859
          %1928 = vadd.xlane.f32.xlu0 %v1927
          %v1929 = vpop.xlane.xlu0 %1928
          %v1930 = vadd.f32 %v1860, %v1861
          %1931 = vadd.xlane.f32.xlu0 %v1930
          %v1932 = vpop.xlane.xlu0 %1931
          %v1933 = vadd.f32 %v1862, %v1863
          %1934 = vadd.xlane.f32.xlu0 %v1933
          %v1935 = vpop.xlane.xlu0 %1934
          %v1936 = vadd.f32 %v1864, %v1865
          %1937 = vadd.xlane.f32.xlu0 %v1936
          %v1938 = vpop.xlane.xlu0 %1937
          %v1939 = vadd.f32 %v1866, %v1867
          %1940 = vadd.xlane.f32.xlu0 %v1939
          %v1941 = vpop.xlane.xlu0 %1940
          %v1942 = vadd.f32 %v1868, %v1869
          %1943 = vadd.xlane.f32.xlu0 %v1942
          %v1944 = vpop.xlane.xlu0 %1943
          %v1945 = vadd.f32 %v1870, %v1871
          %1946 = vadd.xlane.f32.xlu0 %v1945
          %v1947 = vpop.xlane.xlu0 %1946
          %v1948 = vadd.f32 %v1872, %v1873
          %1949 = vadd.xlane.f32.xlu0 %v1948
          %v1950 = vpop.xlane.xlu0 %1949
          %v1951 = vadd.f32 %v1874, %v1875
          %1952 = vadd.xlane.f32.xlu0 %v1951
          %v1953 = vpop.xlane.xlu0 %1952
          %v1954 = vadd.f32 %v1876, %v1877
          %1955 = vadd.xlane.f32.xlu0 %v1954
          %v1956 = vpop.xlane.xlu0 %1955
          %v1957 = vadd.f32 %v1878, %v1879
          %1958 = vadd.xlane.f32.xlu0 %v1957
          %v1959 = vpop.xlane.xlu0 %1958
          %v1960 = vadd.f32 %v1880, %v1881
          %1961 = vadd.xlane.f32.xlu0 %v1960
          %v1962 = vpop.xlane.xlu0 %1961
          %v1963 = vadd.f32 %v1882, %v1883
          %1964 = vadd.xlane.f32.xlu0 %v1963
          %v1965 = vpop.xlane.xlu0 %1964
          %v1966 = vadd.f32 %v1884, %v1885
          %1967 = vadd.xlane.f32.xlu0 %v1966
          %v1968 = vpop.xlane.xlu0 %1967
          %v1969 = vadd.f32 %v1886, %v1887
          %1970 = vadd.xlane.f32.xlu0 %v1969
          %v1971 = vpop.xlane.xlu0 %1970
          %v1972 = vadd.f32 %v1888, %v1889
          %1973 = vadd.xlane.f32.xlu0 %v1972
          %v1974 = vpop.xlane.xlu0 %1973
          %v1975 = vadd.f32 %v1890, %v1891
          %1976 = vadd.xlane.f32.xlu0 %v1975
          %v1977 = vpop.xlane.xlu0 %1976
          %v1978 = vadd.f32 %v1892, %v1893
          %1979 = vadd.xlane.f32.xlu0 %v1978
          %v1980 = vpop.xlane.xlu0 %1979
          %v1981 = vadd.f32 %v1894, %v1895
          %1982 = vadd.xlane.f32.xlu0 %v1981
          %v1983 = vpop.xlane.xlu0 %1982
          %v1984 = vadd.f32 %v1896, %v1897
          %1985 = vadd.xlane.f32.xlu0 %v1984
          %v1986 = vpop.xlane.xlu0 %1985
          %v1987 = vadd.f32 %v1898, %v1899
          %1988 = vadd.xlane.f32.xlu0 %v1987
          %v1989 = vpop.xlane.xlu0 %1988
          %v1990 = vadd.f32 %v1900, %v1901
          %1991 = vadd.xlane.f32.xlu0 %v1990
          %v1992 = vpop.xlane.xlu0 %1991
          %v1993 = vadd.f32 %v1902, %v1903
          %1994 = vadd.xlane.f32.xlu0 %v1993
          %v1995 = vpop.xlane.xlu0 %1994
          %v1996 = vadd.f32 %v1904, %v1905
          %1997 = vadd.xlane.f32.xlu0 %v1996
          %v1998 = vpop.xlane.xlu0 %1997
          %v1999 = vadd.f32 %v1906, %v1907
          %2000 = vadd.xlane.f32.xlu0 %v1999
          %v2001 = vpop.xlane.xlu0 %2000
          %v2002 = vadd.f32 %v1908, %v1909
          %2003 = vadd.xlane.f32.xlu0 %v2002
          %v2004 = vpop.xlane.xlu0 %2003
          %v2005 = vadd.f32 %v1910, %v1911
          %2006 = vadd.xlane.f32.xlu0 %v2005
          %v2007 = vpop.xlane.xlu0 %2006
          %v2008 = vmul.f32 %v1914, 0.00390625
          %v2009 = vmul.f32 %v1917, 0.00390625
          %v2010 = vmul.f32 %v1920, 0.00390625
          %v2011 = vmul.f32 %v1923, 0.00390625
          %v2012 = vmul.f32 %v1926, 0.00390625
          %v2013 = vmul.f32 %v1929, 0.00390625
          %v2014 = vmul.f32 %v1932, 0.00390625
          %v2015 = vmul.f32 %v1935, 0.00390625
          %v2016 = vmul.f32 %v1938, 0.00390625
          %v2017 = vmul.f32 %v1941, 0.00390625
          %v2018 = vmul.f32 %v1944, 0.00390625
          %v2019 = vmul.f32 %v1947, 0.00390625
          %v2020 = vmul.f32 %v1950, 0.00390625
          %v2021 = vmul.f32 %v1953, 0.00390625
          %v2022 = vmul.f32 %v1956, 0.00390625
          %v2023 = vmul.f32 %v1959, 0.00390625
          %v2024 = vmul.f32 %v1962, 0.00390625
          %v2025 = vmul.f32 %v1965, 0.00390625
          %v2026 = vmul.f32 %v1968, 0.00390625
          %v2027 = vmul.f32 %v1971, 0.00390625
          %v2028 = vmul.f32 %v1974, 0.00390625
          %v2029 = vmul.f32 %v1977, 0.00390625
          %v2030 = vmul.f32 %v1980, 0.00390625
          %v2031 = vmul.f32 %v1983, 0.00390625
          %v2032 = vmul.f32 %v1986, 0.00390625
          %v2033 = vmul.f32 %v1989, 0.00390625
          %v2034 = vmul.f32 %v1992, 0.00390625
          %v2035 = vmul.f32 %v1995, 0.00390625
          %v2036 = vmul.f32 %v1998, 0.00390625
          %v2037 = vmul.f32 %v2001, 0.00390625
          %v2038 = vmul.f32 %v2004, 0.00390625
          %v2039 = vmul.f32 %v2007, 0.00390625
          %v2040 = vmul.f32 %v1816, %v1816
          %v2041 = vmul.f32 %v1817, %v1817
          %v2042 = vmul.f32 %v1818, %v1818
          %v2043 = vmul.f32 %v1819, %v1819
          %v2044 = vmul.f32 %v1820, %v1820
          %v2045 = vmul.f32 %v1821, %v1821
          %v2046 = vmul.f32 %v1822, %v1822
          %v2047 = vmul.f32 %v1823, %v1823
          %v2048 = vmul.f32 %v1824, %v1824
          %v2049 = vmul.f32 %v1825, %v1825
          %v2050 = vmul.f32 %v1826, %v1826
          %v2051 = vmul.f32 %v1827, %v1827
          %v2052 = vmul.f32 %v1828, %v1828
          %v2053 = vmul.f32 %v1829, %v1829
          %v2054 = vmul.f32 %v1830, %v1830
          %v2055 = vmul.f32 %v1831, %v1831
          %v2056 = vmul.f32 %v1832, %v1832
          %v2057 = vmul.f32 %v1833, %v1833
          %v2058 = vmul.f32 %v1834, %v1834
          %v2059 = vmul.f32 %v1835, %v1835
          %v2060 = vmul.f32 %v1836, %v1836
          %v2061 = vmul.f32 %v1837, %v1837
          %v2062 = vmul.f32 %v1838, %v1838
          %v2063 = vmul.f32 %v1839, %v1839
          %v2064 = vmul.f32 %v1840, %v1840
          %v2065 = vmul.f32 %v1841, %v1841
          %v2066 = vmul.f32 %v1842, %v1842
          %v2067 = vmul.f32 %v1843, %v1843
          %v2068 = vmul.f32 %v1844, %v1844
          %v2069 = vmul.f32 %v1845, %v1845
          %v2070 = vmul.f32 %v1846, %v1846
          %v2071 = vmul.f32 %v1847, %v1847
          %v2072 = vsub.f32 %v2008, %v2040
          %v2073 = vsub.f32 %v2009, %v2041
          %v2074 = vsub.f32 %v2010, %v2042
          %v2075 = vsub.f32 %v2011, %v2043
          %v2076 = vsub.f32 %v2012, %v2044
          %v2077 = vsub.f32 %v2013, %v2045
          %v2078 = vsub.f32 %v2014, %v2046
          %v2079 = vsub.f32 %v2015, %v2047
          %v2080 = vsub.f32 %v2016, %v2048
          %v2081 = vsub.f32 %v2017, %v2049
          %v2082 = vsub.f32 %v2018, %v2050
          %v2083 = vsub.f32 %v2019, %v2051
          %v2084 = vsub.f32 %v2020, %v2052
          %v2085 = vsub.f32 %v2021, %v2053
          %v2086 = vsub.f32 %v2022, %v2054
          %v2087 = vsub.f32 %v2023, %v2055
          %v2088 = vsub.f32 %v2024, %v2056
          %v2089 = vsub.f32 %v2025, %v2057
          %v2090 = vsub.f32 %v2026, %v2058
          %v2091 = vsub.f32 %v2027, %v2059
          %v2092 = vsub.f32 %v2028, %v2060
          %v2093 = vsub.f32 %v2029, %v2061
          %v2094 = vsub.f32 %v2030, %v2062
          %v2095 = vsub.f32 %v2031, %v2063
          %v2096 = vsub.f32 %v2032, %v2064
          %v2097 = vsub.f32 %v2033, %v2065
          %v2098 = vsub.f32 %v2034, %v2066
          %v2099 = vsub.f32 %v2035, %v2067
          %v2100 = vsub.f32 %v2036, %v2068
          %v2101 = vsub.f32 %v2037, %v2069
          %v2102 = vsub.f32 %v2038, %v2070
          %v2103 = vsub.f32 %v2039, %v2071
          %v2104 = vsub.f32 %v1656, %v1816
          %v2105 = vsub.f32 %v1657, %v1816
          %v2106 = vsub.f32 %v1658, %v1817
          %v2107 = vsub.f32 %v1659, %v1817
          %v2108 = vsub.f32 %v1660, %v1818
          %v2109 = vsub.f32 %v1661, %v1818
          %v2110 = vsub.f32 %v1662, %v1819
          %v2111 = vsub.f32 %v1663, %v1819
          %v2112 = vsub.f32 %v1664, %v1820
          %v2113 = vsub.f32 %v1665, %v1820
          %v2114 = vsub.f32 %v1666, %v1821
          %v2115 = vsub.f32 %v1667, %v1821
          %v2116 = vsub.f32 %v1668, %v1822
          %v2117 = vsub.f32 %v1669, %v1822
          %v2118 = vsub.f32 %v1670, %v1823
          %v2119 = vsub.f32 %v1671, %v1823
          %v2120 = vsub.f32 %v1672, %v1824
          %v2121 = vsub.f32 %v1673, %v1824
          %v2122 = vsub.f32 %v1674, %v1825
          %v2123 = vsub.f32 %v1675, %v1825
          %v2124 = vsub.f32 %v1676, %v1826
          %v2125 = vsub.f32 %v1677, %v1826
          %v2126 = vsub.f32 %v1678, %v1827
          %v2127 = vsub.f32 %v1679, %v1827
          %v2128 = vsub.f32 %v1680, %v1828
          %v2129 = vsub.f32 %v1681, %v1828
          %v2130 = vsub.f32 %v1682, %v1829
          %v2131 = vsub.f32 %v1683, %v1829
          %v2132 = vsub.f32 %v1684, %v1830
          %v2133 = vsub.f32 %v1685, %v1830
          %v2134 = vsub.f32 %v1686, %v1831
          %v2135 = vsub.f32 %v1687, %v1831
          %v2136 = vsub.f32 %v1688, %v1832
          %v2137 = vsub.f32 %v1689, %v1832
          %v2138 = vsub.f32 %v1690, %v1833
          %v2139 = vsub.f32 %v1691, %v1833
          %v2140 = vsub.f32 %v1692, %v1834
          %v2141 = vsub.f32 %v1693, %v1834
          %v2142 = vsub.f32 %v1694, %v1835
          %v2143 = vsub.f32 %v1695, %v1835
          %v2144 = vsub.f32 %v1696, %v1836
          %v2145 = vsub.f32 %v1697, %v1836
          %v2146 = vsub.f32 %v1698, %v1837
          %v2147 = vsub.f32 %v1699, %v1837
          %v2148 = vsub.f32 %v1700, %v1838
          %v2149 = vsub.f32 %v1701, %v1838
          %v2150 = vsub.f32 %v1702, %v1839
          %v2151 = vsub.f32 %v1703, %v1839
          %v2152 = vsub.f32 %v1704, %v1840
          %v2153 = vsub.f32 %v1705, %v1840
          %v2154 = vsub.f32 %v1706, %v1841
          %v2155 = vsub.f32 %v1707, %v1841
          %v2156 = vsub.f32 %v1708, %v1842
          %v2157 = vsub.f32 %v1709, %v1842
          %v2158 = vsub.f32 %v1710, %v1843
          %v2159 = vsub.f32 %v1711, %v1843
          %v2160 = vsub.f32 %v1712, %v1844
          %v2161 = vsub.f32 %v1713, %v1844
          %v2162 = vsub.f32 %v1714, %v1845
          %v2163 = vsub.f32 %v1715, %v1845
          %v2164 = vsub.f32 %v1716, %v1846
          %v2165 = vsub.f32 %v1717, %v1846
          %v2166 = vsub.f32 %v1718, %v1847
          %v2167 = vsub.f32 %v1719, %v1847
          %v2168 = vadd.f32 %v2072, 1e-05
          %v2169 = vadd.f32 %v2073, 1e-05
          %v2170 = vadd.f32 %v2074, 1e-05
          %v2171 = vadd.f32 %v2075, 1e-05
          %v2172 = vadd.f32 %v2076, 1e-05
          %v2173 = vadd.f32 %v2077, 1e-05
          %v2174 = vadd.f32 %v2078, 1e-05
          %v2175 = vadd.f32 %v2079, 1e-05
          %v2176 = vadd.f32 %v2080, 1e-05
          %v2177 = vadd.f32 %v2081, 1e-05
          %v2178 = vadd.f32 %v2082, 1e-05
          %v2179 = vadd.f32 %v2083, 1e-05
          %v2180 = vadd.f32 %v2084, 1e-05
          %v2181 = vadd.f32 %v2085, 1e-05
          %v2182 = vadd.f32 %v2086, 1e-05
          %v2183 = vadd.f32 %v2087, 1e-05
          %v2184 = vadd.f32 %v2088, 1e-05
          %v2185 = vadd.f32 %v2089, 1e-05
          %v2186 = vadd.f32 %v2090, 1e-05
          %v2187 = vadd.f32 %v2091, 1e-05
          %v2188 = vadd.f32 %v2092, 1e-05
          %v2189 = vadd.f32 %v2093, 1e-05
          %v2190 = vadd.f32 %v2094, 1e-05
          %v2191 = vadd.f32 %v2095, 1e-05
          %v2192 = vadd.f32 %v2096, 1e-05
          %v2193 = vadd.f32 %v2097, 1e-05
          %v2194 = vadd.f32 %v2098, 1e-05
          %v2195 = vadd.f32 %v2099, 1e-05
          %v2196 = vadd.f32 %v2100, 1e-05
          %v2197 = vadd.f32 %v2101, 1e-05
          %v2198 = vadd.f32 %v2102, 1e-05
          %v2199 = vadd.f32 %v2103, 1e-05
          %v2200 = vrsqrt.pop %v2168
          %v2201 = vrsqrt.pop %v2169
          %v2202 = vrsqrt.pop %v2170
          %v2203 = vrsqrt.pop %v2171
          %v2204 = vrsqrt.pop %v2172
          %v2205 = vrsqrt.pop %v2173
          %v2206 = vrsqrt.pop %v2174
          %v2207 = vrsqrt.pop %v2175
          %v2208 = vrsqrt.pop %v2176
          %v2209 = vrsqrt.pop %v2177
          %v2210 = vrsqrt.pop %v2178
          %v2211 = vrsqrt.pop %v2179
          %v2212 = vrsqrt.pop %v2180
          %v2213 = vrsqrt.pop %v2181
          %v2214 = vrsqrt.pop %v2182
          %v2215 = vrsqrt.pop %v2183
          %v2216 = vrsqrt.pop %v2184
          %v2217 = vrsqrt.pop %v2185
          %v2218 = vrsqrt.pop %v2186
          %v2219 = vrsqrt.pop %v2187
          %v2220 = vrsqrt.pop %v2188
          %v2221 = vrsqrt.pop %v2189
          %v2222 = vrsqrt.pop %v2190
          %v2223 = vrsqrt.pop %v2191
          %v2224 = vrsqrt.pop %v2192
          %v2225 = vrsqrt.pop %v2193
          %v2226 = vrsqrt.pop %v2194
          %v2227 = vrsqrt.pop %v2195
          %v2228 = vrsqrt.pop %v2196
          %v2229 = vrsqrt.pop %v2197
          %v2230 = vrsqrt.pop %v2198
          %v2231 = vrsqrt.pop %v2199
          %v2232 = vmul.f32 %v2104, %v2200
          %v2233 = vmul.f32 %v2105, %v2200
          %v2234 = vmul.f32 %v2106, %v2201
          %v2235 = vmul.f32 %v2107, %v2201
          %v2236 = vmul.f32 %v2108, %v2202
          %v2237 = vmul.f32 %v2109, %v2202
          %v2238 = vmul.f32 %v2110, %v2203
          %v2239 = vmul.f32 %v2111, %v2203
          %v2240 = vmul.f32 %v2112, %v2204
          %v2241 = vmul.f32 %v2113, %v2204
          %v2242 = vmul.f32 %v2114, %v2205
          %v2243 = vmul.f32 %v2115, %v2205
          %v2244 = vmul.f32 %v2116, %v2206
          %v2245 = vmul.f32 %v2117, %v2206
          %v2246 = vmul.f32 %v2118, %v2207
          %v2247 = vmul.f32 %v2119, %v2207
          %v2248 = vmul.f32 %v2120, %v2208
          %v2249 = vmul.f32 %v2121, %v2208
          %v2250 = vmul.f32 %v2122, %v2209
          %v2251 = vmul.f32 %v2123, %v2209
          %v2252 = vmul.f32 %v2124, %v2210
          %v2253 = vmul.f32 %v2125, %v2210
          %v2254 = vmul.f32 %v2126, %v2211
          %v2255 = vmul.f32 %v2127, %v2211
          %v2256 = vmul.f32 %v2128, %v2212
          %v2257 = vmul.f32 %v2129, %v2212
          %v2258 = vmul.f32 %v2130, %v2213
          %v2259 = vmul.f32 %v2131, %v2213
          %v2260 = vmul.f32 %v2132, %v2214
          %v2261 = vmul.f32 %v2133, %v2214
          %v2262 = vmul.f32 %v2134, %v2215
          %v2263 = vmul.f32 %v2135, %v2215
          %v2264 = vmul.f32 %v2136, %v2216
          %v2265 = vmul.f32 %v2137, %v2216
          %v2266 = vmul.f32 %v2138, %v2217
          %v2267 = vmul.f32 %v2139, %v2217
          %v2268 = vmul.f32 %v2140, %v2218
          %v2269 = vmul.f32 %v2141, %v2218
          %v2270 = vmul.f32 %v2142, %v2219
          %v2271 = vmul.f32 %v2143, %v2219
          %v2272 = vmul.f32 %v2144, %v2220
          %v2273 = vmul.f32 %v2145, %v2220
          %v2274 = vmul.f32 %v2146, %v2221
          %v2275 = vmul.f32 %v2147, %v2221
          %v2276 = vmul.f32 %v2148, %v2222
          %v2277 = vmul.f32 %v2149, %v2222
          %v2278 = vmul.f32 %v2150, %v2223
          %v2279 = vmul.f32 %v2151, %v2223
          %v2280 = vmul.f32 %v2152, %v2224
          %v2281 = vmul.f32 %v2153, %v2224
          %v2282 = vmul.f32 %v2154, %v2225
          %v2283 = vmul.f32 %v2155, %v2225
          %v2284 = vmul.f32 %v2156, %v2226
          %v2285 = vmul.f32 %v2157, %v2226
          %v2286 = vmul.f32 %v2158, %v2227
          %v2287 = vmul.f32 %v2159, %v2227
          %v2288 = vmul.f32 %v2160, %v2228
          %v2289 = vmul.f32 %v2161, %v2228
          %v2290 = vmul.f32 %v2162, %v2229
          %v2291 = vmul.f32 %v2163, %v2229
          %v2292 = vmul.f32 %v2164, %v2230
          %v2293 = vmul.f32 %v2165, %v2230
          %v2294 = vmul.f32 %v2166, %v2231
          %v2295 = vmul.f32 %v2167, %v2231
          %v2296 = vld [vmem:[%s5] sm:$0x3]
          %v2298 = vlaneseq
          %v2299 = vshrl.u32 %v2298, 7
          %v2300 = vsub.s32 0, %v2299
          %v2301 = vrot.slane %v2296, %v2300
          %v2302 = vlaneseq
          %v2303 = vshrl.u32 %v2302, 7
          %v2304 = vsub.s32 1, %v2303
          %v2305 = vrot.slane %v2296, %v2304
          %v2308 = vmul.f32 %v2232, %v2301
          %v2309 = vmul.f32 %v2233, %v2305
          %v2310 = vmul.f32 %v2234, %v2301
          %v2311 = vmul.f32 %v2235, %v2305
          %v2312 = vmul.f32 %v2236, %v2301
          %v2313 = vmul.f32 %v2237, %v2305
          %v2314 = vmul.f32 %v2238, %v2301
          %v2315 = vmul.f32 %v2239, %v2305
          %v2316 = vmul.f32 %v2240, %v2301
          %v2317 = vmul.f32 %v2241, %v2305
          %v2318 = vmul.f32 %v2242, %v2301
          %v2319 = vmul.f32 %v2243, %v2305
          %v2320 = vmul.f32 %v2244, %v2301
          %v2321 = vmul.f32 %v2245, %v2305
          %v2322 = vmul.f32 %v2246, %v2301
          %v2323 = vmul.f32 %v2247, %v2305
          %v2324 = vmul.f32 %v2248, %v2301
          %v2325 = vmul.f32 %v2249, %v2305
          %v2326 = vmul.f32 %v2250, %v2301
          %v2327 = vmul.f32 %v2251, %v2305
          %v2328 = vmul.f32 %v2252, %v2301
          %v2329 = vmul.f32 %v2253, %v2305
          %v2330 = vmul.f32 %v2254, %v2301
          %v2331 = vmul.f32 %v2255, %v2305
          %v2332 = vmul.f32 %v2256, %v2301
          %v2333 = vmul.f32 %v2257, %v2305
          %v2334 = vmul.f32 %v2258, %v2301
          %v2335 = vmul.f32 %v2259, %v2305
          %v2336 = vmul.f32 %v2260, %v2301
          %v2337 = vmul.f32 %v2261, %v2305
          %v2338 = vmul.f32 %v2262, %v2301
          %v2339 = vmul.f32 %v2263, %v2305
          %v2340 = vmul.f32 %v2264, %v2301
          %v2341 = vmul.f32 %v2265, %v2305
          %v2342 = vmul.f32 %v2266, %v2301
          %v2343 = vmul.f32 %v2267, %v2305
          %v2344 = vmul.f32 %v2268, %v2301
          %v2345 = vmul.f32 %v2269, %v2305
          %v2346 = vmul.f32 %v2270, %v2301
          %v2347 = vmul.f32 %v2271, %v2305
          %v2348 = vmul.f32 %v2272, %v2301
          %v2349 = vmul.f32 %v2273, %v2305
          %v2350 = vmul.f32 %v2274, %v2301
          %v2351 = vmul.f32 %v2275, %v2305
          %v2352 = vmul.f32 %v2276, %v2301
          %v2353 = vmul.f32 %v2277, %v2305
          %v2354 = vmul.f32 %v2278, %v2301
          %v2355 = vmul.f32 %v2279, %v2305
          %v2356 = vmul.f32 %v2280, %v2301
          %v2357 = vmul.f32 %v2281, %v2305
          %v2358 = vmul.f32 %v2282, %v2301
          %v2359 = vmul.f32 %v2283, %v2305
          %v2360 = vmul.f32 %v2284, %v2301
          %v2361 = vmul.f32 %v2285, %v2305
          %v2362 = vmul.f32 %v2286, %v2301
          %v2363 = vmul.f32 %v2287, %v2305
          %v2364 = vmul.f32 %v2288, %v2301
          %v2365 = vmul.f32 %v2289, %v2305
          %v2366 = vmul.f32 %v2290, %v2301
          %v2367 = vmul.f32 %v2291, %v2305
          %v2368 = vmul.f32 %v2292, %v2301
          %v2369 = vmul.f32 %v2293, %v2305
          %v2370 = vmul.f32 %v2294, %v2301
          %v2371 = vmul.f32 %v2295, %v2305
          %v2372 = vld [vmem:[%s6] sm:$0x3]
          %v2374 = vlaneseq
          %v2375 = vshrl.u32 %v2374, 7
          %v2376 = vsub.s32 0, %v2375
          %v2377 = vrot.slane %v2372, %v2376
          %v2378 = vlaneseq
          %v2379 = vshrl.u32 %v2378, 7
          %v2380 = vsub.s32 1, %v2379
          %v2381 = vrot.slane %v2372, %v2380
          %v2384 = vadd.f32 %v2308, %v2377
          %v2385 = vadd.f32 %v2309, %v2381
          %v2386 = vadd.f32 %v2310, %v2377
          %v2387 = vadd.f32 %v2311, %v2381
          %v2388 = vadd.f32 %v2312, %v2377
          %v2389 = vadd.f32 %v2313, %v2381
          %v2390 = vadd.f32 %v2314, %v2377
          %v2391 = vadd.f32 %v2315, %v2381
          %v2392 = vadd.f32 %v2316, %v2377
          %v2393 = vadd.f32 %v2317, %v2381
          %v2394 = vadd.f32 %v2318, %v2377
          %v2395 = vadd.f32 %v2319, %v2381
          %v2396 = vadd.f32 %v2320, %v2377
          %v2397 = vadd.f32 %v2321, %v2381
          %v2398 = vadd.f32 %v2322, %v2377
          %v2399 = vadd.f32 %v2323, %v2381
          %v2400 = vadd.f32 %v2324, %v2377
          %v2401 = vadd.f32 %v2325, %v2381
          %v2402 = vadd.f32 %v2326, %v2377
          %v2403 = vadd.f32 %v2327, %v2381
          %v2404 = vadd.f32 %v2328, %v2377
          %v2405 = vadd.f32 %v2329, %v2381
          %v2406 = vadd.f32 %v2330, %v2377
          %v2407 = vadd.f32 %v2331, %v2381
          %v2408 = vadd.f32 %v2332, %v2377
          %v2409 = vadd.f32 %v2333, %v2381
          %v2410 = vadd.f32 %v2334, %v2377
          %v2411 = vadd.f32 %v2335, %v2381
          %v2412 = vadd.f32 %v2336, %v2377
          %v2413 = vadd.f32 %v2337, %v2381
          %v2414 = vadd.f32 %v2338, %v2377
          %v2415 = vadd.f32 %v2339, %v2381
          %v2416 = vadd.f32 %v2340, %v2377
          %v2417 = vadd.f32 %v2341, %v2381
          %v2418 = vadd.f32 %v2342, %v2377
          %v2419 = vadd.f32 %v2343, %v2381
          %v2420 = vadd.f32 %v2344, %v2377
          %v2421 = vadd.f32 %v2345, %v2381
          %v2422 = vadd.f32 %v2346, %v2377
          %v2423 = vadd.f32 %v2347, %v2381
          %v2424 = vadd.f32 %v2348, %v2377
          %v2425 = vadd.f32 %v2349, %v2381
          %v2426 = vadd.f32 %v2350, %v2377
          %v2427 = vadd.f32 %v2351, %v2381
          %v2428 = vadd.f32 %v2352, %v2377
          %v2429 = vadd.f32 %v2353, %v2381
          %v2430 = vadd.f32 %v2354, %v2377
          %v2431 = vadd.f32 %v2355, %v2381
          %v2432 = vadd.f32 %v2356, %v2377
          %v2433 = vadd.f32 %v2357, %v2381
          %v2434 = vadd.f32 %v2358, %v2377
          %v2435 = vadd.f32 %v2359, %v2381
          %v2436 = vadd.f32 %v2360, %v2377
          %v2437 = vadd.f32 %v2361, %v2381
          %v2438 = vadd.f32 %v2362, %v2377
          %v2439 = vadd.f32 %v2363, %v2381
          %v2440 = vadd.f32 %v2364, %v2377
          %v2441 = vadd.f32 %v2365, %v2381
          %v2442 = vadd.f32 %v2366, %v2377
          %v2443 = vadd.f32 %v2367, %v2381
          %v2444 = vadd.f32 %v2368, %v2377
          %v2445 = vadd.f32 %v2369, %v2381
          %v2446 = vadd.f32 %v2370, %v2377
          %v2447 = vadd.f32 %v2371, %v2381
          %v2448 = vpack.c.bf16 %v2386, %v2384
          %v2449 = vpack.c.bf16 %v2387, %v2385
          %v2450 = vpack.c.bf16 %v2390, %v2388
          %v2451 = vpack.c.bf16 %v2391, %v2389
          %v2452 = vpack.c.bf16 %v2394, %v2392
          %v2453 = vpack.c.bf16 %v2395, %v2393
          %v2454 = vpack.c.bf16 %v2398, %v2396
          %v2455 = vpack.c.bf16 %v2399, %v2397
          %v2456 = vpack.c.bf16 %v2402, %v2400
          %v2457 = vpack.c.bf16 %v2403, %v2401
          %v2458 = vpack.c.bf16 %v2406, %v2404
          %v2459 = vpack.c.bf16 %v2407, %v2405
          %v2460 = vpack.c.bf16 %v2410, %v2408
          %v2461 = vpack.c.bf16 %v2411, %v2409
          %v2462 = vpack.c.bf16 %v2414, %v2412
          %v2463 = vpack.c.bf16 %v2415, %v2413
          %v2464 = vpack.c.bf16 %v2418, %v2416
          %v2465 = vpack.c.bf16 %v2419, %v2417
          %v2466 = vpack.c.bf16 %v2422, %v2420
          %v2467 = vpack.c.bf16 %v2423, %v2421
          %v2468 = vpack.c.bf16 %v2426, %v2424
          %v2469 = vpack.c.bf16 %v2427, %v2425
          %v2470 = vpack.c.bf16 %v2430, %v2428
          %v2471 = vpack.c.bf16 %v2431, %v2429
          %v2472 = vpack.c.bf16 %v2434, %v2432
          %v2473 = vpack.c.bf16 %v2435, %v2433
          %v2474 = vpack.c.bf16 %v2438, %v2436
          %v2475 = vpack.c.bf16 %v2439, %v2437
          %v2476 = vpack.c.bf16 %v2442, %v2440
          %v2477 = vpack.c.bf16 %v2443, %v2441
          %v2478 = vpack.c.bf16 %v2446, %v2444
          %v2479 = vpack.c.bf16 %v2447, %v2445
          %v2480 = vld [vmem:[#allocation9] sm:$0xf]
          %v2481 = vld [vmem:[#allocation9 + $0x4] sm:$0xf]
          %v2482 = vld [vmem:[#allocation9 + $0x8] sm:$0xf]
          %v2483 = vld [vmem:[#allocation9 + $0xc] sm:$0xf]
          %v2484 = vld [vmem:[#allocation9 + $0x10] sm:$0xf]
          %v2485 = vld [vmem:[#allocation9 + $0x14] sm:$0xf]
          %v2486 = vld [vmem:[#allocation9 + $0x18] sm:$0xf]
          %v2487 = vld [vmem:[#allocation9 + $0x1c] sm:$0xf]
          %v2488 = vld [vmem:[#allocation9 + $0x20] sm:$0xf]
          %v2489 = vld [vmem:[#allocation9 + $0x24] sm:$0xf]
          %v2490 = vld [vmem:[#allocation9 + $0x28] sm:$0xf]
          %v2491 = vld [vmem:[#allocation9 + $0x2c] sm:$0xf]
          %v2492 = vld [vmem:[#allocation9 + $0x30] sm:$0xf]
          %v2493 = vld [vmem:[#allocation9 + $0x34] sm:$0xf]
          %v2494 = vld [vmem:[#allocation9 + $0x38] sm:$0xf]
          %v2495 = vld [vmem:[#allocation9 + $0x3c] sm:$0xf]
          %v2496 = vld [vmem:[#allocation9 + $0x40] sm:$0xf]
          %v2497 = vld [vmem:[#allocation9 + $0x44] sm:$0xf]
          %v2498 = vld [vmem:[#allocation9 + $0x48] sm:$0xf]
          %v2499 = vld [vmem:[#allocation9 + $0x4c] sm:$0xf]
          %v2500 = vld [vmem:[#allocation9 + $0x50] sm:$0xf]
          %v2501 = vld [vmem:[#allocation9 + $0x54] sm:$0xf]
          %v2502 = vld [vmem:[#allocation9 + $0x58] sm:$0xf]
          %v2503 = vld [vmem:[#allocation9 + $0x5c] sm:$0xf]
          %v2504 = vld [vmem:[#allocation9 + $0x60] sm:$0xf]
          %v2505 = vld [vmem:[#allocation9 + $0x64] sm:$0xf]
          %v2506 = vld [vmem:[#allocation9 + $0x68] sm:$0xf]
          %v2507 = vld [vmem:[#allocation9 + $0x6c] sm:$0xf]
          %v2508 = vld [vmem:[#allocation9 + $0x70] sm:$0xf]
          %v2509 = vld [vmem:[#allocation9 + $0x74] sm:$0xf]
          %v2510 = vld [vmem:[#allocation9 + $0x78] sm:$0xf]
          %v2511 = vld [vmem:[#allocation9 + $0x7c] sm:$0xf]
          %v2512 = vld [vmem:[%s8] sm:$0x1]
          %v2514 = vlaneseq
          %v2515 = vshrl.u32 %v2514, 7
          %v2516 = vsub.s32 0, %v2515
          %v2517 = vrot.slane %v2512, %v2516
          %v2551 = vunpack.c.l.b16 %v2480
          %v2552 = vunpack.c.l.b16 %v2481
          %v2553 = vunpack.c.l.b16 %v2482
          %v2554 = vunpack.c.l.b16 %v2483
          %v2555 = vunpack.c.l.b16 %v2484
          %v2556 = vunpack.c.l.b16 %v2485
          %v2557 = vunpack.c.l.b16 %v2486
          %v2558 = vunpack.c.l.b16 %v2487
          %v2559 = vunpack.c.l.b16 %v2488
          %v2560 = vunpack.c.l.b16 %v2489
          %v2561 = vunpack.c.l.b16 %v2490
          %v2562 = vunpack.c.l.b16 %v2491
          %v2563 = vunpack.c.l.b16 %v2492
          %v2564 = vunpack.c.l.b16 %v2493
          %v2565 = vunpack.c.l.b16 %v2494
          %v2566 = vunpack.c.l.b16 %v2495
          %v2567 = vunpack.c.l.b16 %v2496
          %v2568 = vunpack.c.l.b16 %v2497
          %v2569 = vunpack.c.l.b16 %v2498
          %v2570 = vunpack.c.l.b16 %v2499
          %v2571 = vunpack.c.l.b16 %v2500
          %v2572 = vunpack.c.l.b16 %v2501
          %v2573 = vunpack.c.l.b16 %v2502
          %v2574 = vunpack.c.l.b16 %v2503
          %v2575 = vunpack.c.l.b16 %v2504
          %v2576 = vunpack.c.l.b16 %v2505
          %v2577 = vunpack.c.l.b16 %v2506
          %v2578 = vunpack.c.l.b16 %v2507
          %v2579 = vunpack.c.l.b16 %v2508
          %v2580 = vunpack.c.l.b16 %v2509
          %v2581 = vunpack.c.l.b16 %v2510
          %v2582 = vunpack.c.l.b16 %v2511
          %v2583 = vpack.c.b16 %v2552, %v2551
          %v2584 = vpack.c.b16 %v2554, %v2553
          %v2585 = vpack.c.b16 %v2556, %v2555
          %v2586 = vpack.c.b16 %v2558, %v2557
          %v2587 = vpack.c.b16 %v2560, %v2559
          %v2588 = vpack.c.b16 %v2562, %v2561
          %v2589 = vpack.c.b16 %v2564, %v2563
          %v2590 = vpack.c.b16 %v2566, %v2565
          %v2591 = vpack.c.b16 %v2568, %v2567
          %v2592 = vpack.c.b16 %v2570, %v2569
          %v2593 = vpack.c.b16 %v2572, %v2571
          %v2594 = vpack.c.b16 %v2574, %v2573
          %v2595 = vpack.c.b16 %v2576, %v2575
          %v2596 = vpack.c.b16 %v2578, %v2577
          %v2597 = vpack.c.b16 %v2580, %v2579
          %v2598 = vpack.c.b16 %v2582, %v2581
          %2615 = vmatprep.subr.bf16.mxu0 0
          %2616 = vmatpush1.bf16.msra.mxu0 %v2583
          %2617 = vmatprep.subr.bf16.mxu0 0
          %2618 = vmatpush1.bf16.msra.mxu0 %v2584
          %2619 = vmatprep.subr.bf16.mxu0 0
          %2620 = vmatpush1.bf16.msra.mxu0 %v2585
          %2621 = vmatprep.subr.bf16.mxu0 0
          %2622 = vmatpush1.bf16.msra.mxu0 %v2586
          %2623 = vmatprep.subr.bf16.mxu0 0
          %2624 = vmatpush1.bf16.msra.mxu0 %v2587
          %2625 = vmatprep.subr.bf16.mxu0 0
          %2626 = vmatpush1.bf16.msra.mxu0 %v2588
          %2627 = vmatprep.subr.bf16.mxu0 0
          %2628 = vmatpush1.bf16.msra.mxu0 %v2589
          %2629 = vmatprep.subr.bf16.mxu0 0
          %2630 = vmatpush1.bf16.msra.mxu0 %v2590
          %2631 = vmatprep.subr.bf16.mxu0 0
          %2632 = vmatpush1.bf16.msra.mxu0 %v2591
          %2633 = vmatprep.subr.bf16.mxu0 0
          %2634 = vmatpush1.bf16.msra.mxu0 %v2592
          %2635 = vmatprep.subr.bf16.mxu0 0
          %2636 = vmatpush1.bf16.msra.mxu0 %v2593
          %2637 = vmatprep.subr.bf16.mxu0 0
          %2638 = vmatpush1.bf16.msra.mxu0 %v2594
          %2639 = vmatprep.subr.bf16.mxu0 0
          %2640 = vmatpush1.bf16.msra.mxu0 %v2595
          %2641 = vmatprep.subr.bf16.mxu0 0
          %2642 = vmatpush1.bf16.msra.mxu0 %v2596
          %2643 = vmatprep.subr.bf16.mxu0 0
          %2644 = vmatpush1.bf16.msra.mxu0 %v2597
          %2645 = vmatprep.subr.bf16.mxu0 0
          %2646 = vmatpush1.bf16.msra.mxu0 %v2598
          %2647 = vmatprep.mubr.bf16.mxu0 %v2449
          %2648 = vmatmul.mubr.bf16.gmra.mrb[0].mxu0 %v2448
          %v2649 = vpop.f32.mrb[0].mxu0
          %v2650 = vadd.f32 %v2517, %v2649
          %v2651 = vpop.f32.mrb[0].mxu0
          %v2652 = vpop.f32.mrb[0].mxu0
          %v2653 = vadd.f32 %v2517, %v2652
          %v2654 = vpop.f32.mrb[0].mxu0
          %2655 = vmatprep.mubr.bf16.mxu0 %v2451
          %2656 = vmatmul.mubr.bf16.gmra.mrb[0].mxu0 %v2450
          %v2657 = vpop.f32.mrb[0].mxu0
          %v2658 = vadd.f32 %v2517, %v2657
          %v2659 = vpop.f32.mrb[0].mxu0
          %v2660 = vpop.f32.mrb[0].mxu0
          %v2661 = vadd.f32 %v2517, %v2660
          %v2662 = vpop.f32.mrb[0].mxu0
          %2663 = vmatprep.mubr.bf16.mxu0 %v2453
          %2664 = vmatmul.mubr.bf16.gmra.mrb[0].mxu0 %v2452
          %v2665 = vpop.f32.mrb[0].mxu0
          %v2666 = vadd.f32 %v2517, %v2665
          %v2667 = vpop.f32.mrb[0].mxu0
          %v2668 = vpop.f32.mrb[0].mxu0
          %v2669 = vadd.f32 %v2517, %v2668
          %v2670 = vpop.f32.mrb[0].mxu0
          %2671 = vmatprep.mubr.bf16.mxu0 %v2455
          %2672 = vmatmul.mubr.bf16.gmra.mrb[0].mxu0 %v2454
          %v2673 = vpop.f32.mrb[0].mxu0
          %v2674 = vadd.f32 %v2517, %v2673
          %v2675 = vpop.f32.mrb[0].mxu0
          %v2676 = vpop.f32.mrb[0].mxu0
          %v2677 = vadd.f32 %v2517, %v2676
          %v2678 = vpop.f32.mrb[0].mxu0
          %2679 = vmatprep.mubr.bf16.mxu0 %v2457
          %2680 = vmatmul.mubr.bf16.gmra.mrb[0].mxu0 %v2456
          %v2681 = vpop.f32.mrb[0].mxu0
          %v2682 = vadd.f32 %v2517, %v2681
          %v2683 = vpop.f32.mrb[0].mxu0
          %v2684 = vpop.f32.mrb[0].mxu0
          %v2685 = vadd.f32 %v2517, %v2684
          %v2686 = vpop.f32.mrb[0].mxu0
          %2687 = vmatprep.mubr.bf16.mxu0 %v2459
          %2688 = vmatmul.mubr.bf16.gmra.mrb[0].mxu0 %v2458
          %v2689 = vpop.f32.mrb[0].mxu0
          %v2690 = vadd.f32 %v2517, %v2689
          %v2691 = vpop.f32.mrb[0].mxu0
          %v2692 = vpop.f32.mrb[0].mxu0
          %v2693 = vadd.f32 %v2517, %v2692
          %v2694 = vpop.f32.mrb[0].mxu0
          %2695 = vmatprep.mubr.bf16.mxu0 %v2461
          %2696 = vmatmul.mubr.bf16.gmra.mrb[0].mxu0 %v2460
          %v2697 = vpop.f32.mrb[0].mxu0
          %v2698 = vadd.f32 %v2517, %v2697
          %v2699 = vpop.f32.mrb[0].mxu0
          %v2700 = vpop.f32.mrb[0].mxu0
          %v2701 = vadd.f32 %v2517, %v2700
          %v2702 = vpop.f32.mrb[0].mxu0
          %2703 = vmatprep.mubr.bf16.mxu0 %v2463
          %2704 = vmatmul.mubr.bf16.gmra.mrb[0].mxu0 %v2462
          %v2705 = vpop.f32.mrb[0].mxu0
          %v2706 = vadd.f32 %v2517, %v2705
          %v2707 = vpop.f32.mrb[0].mxu0
          %v2708 = vpop.f32.mrb[0].mxu0
          %v2709 = vadd.f32 %v2517, %v2708
          %v2710 = vpop.f32.mrb[0].mxu0
          %2711 = vmatprep.mubr.bf16.mxu0 %v2465
          %2712 = vmatmul.mubr.bf16.gmra.mrb[0].mxu0 %v2464
          %v2713 = vpop.f32.mrb[0].mxu0
          %v2714 = vadd.f32 %v2517, %v2713
          %v2715 = vpop.f32.mrb[0].mxu0
          %v2716 = vpop.f32.mrb[0].mxu0
          %v2717 = vadd.f32 %v2517, %v2716
          %v2718 = vpop.f32.mrb[0].mxu0
          %2719 = vmatprep.mubr.bf16.mxu0 %v2467
          %2720 = vmatmul.mubr.bf16.gmra.mrb[0].mxu0 %v2466
          %v2721 = vpop.f32.mrb[0].mxu0
          %v2722 = vadd.f32 %v2517, %v2721
          %v2723 = vpop.f32.mrb[0].mxu0
          %v2724 = vpop.f32.mrb[0].mxu0
          %v2725 = vadd.f32 %v2517, %v2724
          %v2726 = vpop.f32.mrb[0].mxu0
          %2727 = vmatprep.mubr.bf16.mxu0 %v2469
          %2728 = vmatmul.mubr.bf16.gmra.mrb[0].mxu0 %v2468
          %v2729 = vpop.f32.mrb[0].mxu0
          %v2730 = vadd.f32 %v2517, %v2729
          %v2731 = vpop.f32.mrb[0].mxu0
          %v2732 = vpop.f32.mrb[0].mxu0
          %v2733 = vadd.f32 %v2517, %v2732
          %v2734 = vpop.f32.mrb[0].mxu0
          %2735 = vmatprep.mubr.bf16.mxu0 %v2471
          %2736 = vmatmul.mubr.bf16.gmra.mrb[0].mxu0 %v2470
          %v2737 = vpop.f32.mrb[0].mxu0
          %v2738 = vadd.f32 %v2517, %v2737
          %v2739 = vpop.f32.mrb[0].mxu0
          %v2740 = vpop.f32.mrb[0].mxu0
          %v2741 = vadd.f32 %v2517, %v2740
          %v2742 = vpop.f32.mrb[0].mxu0
          %2743 = vmatprep.mubr.bf16.mxu0 %v2473
          %2744 = vmatmul.mubr.bf16.gmra.mrb[0].mxu0 %v2472
          %v2745 = vpop.f32.mrb[0].mxu0
          %v2746 = vadd.f32 %v2517, %v2745
          %v2747 = vpop.f32.mrb[0].mxu0
          %v2748 = vpop.f32.mrb[0].mxu0
          %v2749 = vadd.f32 %v2517, %v2748
          %v2750 = vpop.f32.mrb[0].mxu0
          %2751 = vmatprep.mubr.bf16.mxu0 %v2475
          %2752 = vmatmul.mubr.bf16.gmra.mrb[0].mxu0 %v2474
          %v2753 = vpop.f32.mrb[0].mxu0
          %v2754 = vadd.f32 %v2517, %v2753
          %v2755 = vpop.f32.mrb[0].mxu0
          %v2756 = vpop.f32.mrb[0].mxu0
          %v2757 = vadd.f32 %v2517, %v2756
          %v2758 = vpop.f32.mrb[0].mxu0
          %2759 = vmatprep.mubr.bf16.mxu0 %v2477
          %2760 = vmatmul.mubr.bf16.gmra.mrb[0].mxu0 %v2476
          %v2761 = vpop.f32.mrb[0].mxu0
          %v2762 = vadd.f32 %v2517, %v2761
          %v2763 = vpop.f32.mrb[0].mxu0
          %v2764 = vpop.f32.mrb[0].mxu0
          %v2765 = vadd.f32 %v2517, %v2764
          %v2766 = vpop.f32.mrb[0].mxu0
          %2767 = vmatprep.mubr.bf16.mxu0 %v2479
          %2768 = vmatmul.mubr.bf16.gmra.mrb[0].mxu0 %v2478
          %v2769 = vpop.f32.mrb[0].mxu0
          %v2770 = vadd.f32 %v2517, %v2769
          %v2771 = vpop.f32.mrb[0].mxu0
          %v2772 = vpop.f32.mrb[0].mxu0
          %v2773 = vadd.f32 %v2517, %v2772
          %v2774 = vpop.f32.mrb[0].mxu0
          %2775 = vdwg.mxu0
          %v2776 = vmax.f32 %v2650, 0.0
          %v2777 = vmax.f32 %v2653, 0.0
          %v2778 = vmax.f32 %v2658, 0.0
          %v2779 = vmax.f32 %v2661, 0.0
          %v2780 = vmax.f32 %v2666, 0.0
          %v2781 = vmax.f32 %v2669, 0.0
          %v2782 = vmax.f32 %v2674, 0.0
          %v2783 = vmax.f32 %v2677, 0.0
          %v2784 = vmax.f32 %v2682, 0.0
          %v2785 = vmax.f32 %v2685, 0.0
          %v2786 = vmax.f32 %v2690, 0.0
          %v2787 = vmax.f32 %v2693, 0.0
          %v2788 = vmax.f32 %v2698, 0.0
          %v2789 = vmax.f32 %v2701, 0.0
          %v2790 = vmax.f32 %v2706, 0.0
          %v2791 = vmax.f32 %v2709, 0.0
          %v2792 = vmax.f32 %v2714, 0.0
          %v2793 = vmax.f32 %v2717, 0.0
          %v2794 = vmax.f32 %v2722, 0.0
          %v2795 = vmax.f32 %v2725, 0.0
          %v2796 = vmax.f32 %v2730, 0.0
          %v2797 = vmax.f32 %v2733, 0.0
          %v2798 = vmax.f32 %v2738, 0.0
          %v2799 = vmax.f32 %v2741, 0.0
          %v2800 = vmax.f32 %v2746, 0.0
          %v2801 = vmax.f32 %v2749, 0.0
          %v2802 = vmax.f32 %v2754, 0.0
          %v2803 = vmax.f32 %v2757, 0.0
          %v2804 = vmax.f32 %v2762, 0.0
          %v2805 = vmax.f32 %v2765, 0.0
          %v2806 = vmax.f32 %v2770, 0.0
          %v2807 = vmax.f32 %v2773, 0.0
          %2808 = vst [vmem:[#allocation2] sm:$0xff] %v2448
          %2809 = vst [vmem:[#allocation2 + $0x8] sm:$0xff] %v2449
          %2810 = vst [vmem:[#allocation2 + $0x18] sm:$0xff] %v2450
          %2811 = vst [vmem:[#allocation2 + $0x20] sm:$0xff] %v2451
          %2812 = vst [vmem:[#allocation2 + $0x30] sm:$0xff] %v2452
          %2813 = vst [vmem:[#allocation2 + $0x38] sm:$0xff] %v2453
          %2814 = vst [vmem:[#allocation2 + $0x48] sm:$0xff] %v2454
          %2815 = vst [vmem:[#allocation2 + $0x50] sm:$0xff] %v2455
          %2816 = vst [vmem:[#allocation2 + $0x60] sm:$0xff] %v2456
          %2817 = vst [vmem:[#allocation2 + $0x68] sm:$0xff] %v2457
          %2818 = vst [vmem:[#allocation2 + $0x78] sm:$0xff] %v2458
          %2819 = vst [vmem:[#allocation2 + $0x80] sm:$0xff] %v2459
          %2820 = vst [vmem:[#allocation2 + $0x90] sm:$0xff] %v2460
          %2821 = vst [vmem:[#allocation2 + $0x98] sm:$0xff] %v2461
          %2822 = vst [vmem:[#allocation2 + $0xa8] sm:$0xff] %v2462
          %2823 = vst [vmem:[#allocation2 + $0xb0] sm:$0xff] %v2463
          %2824 = vst [vmem:[#allocation2 + $0xc0] sm:$0xff] %v2464
          %2825 = vst [vmem:[#allocation2 + $0xc8] sm:$0xff] %v2465
          %2826 = vst [vmem:[#allocation2 + $0xd8] sm:$0xff] %v2466
          %2827 = vst [vmem:[#allocation2 + $0xe0] sm:$0xff] %v2467
          %2828 = vst [vmem:[#allocation2 + $0xf0] sm:$0xff] %v2468
          %2829 = vst [vmem:[#allocation2 + $0xf8] sm:$0xff] %v2469
          %2830 = vst [vmem:[#allocation2 + $0x108] sm:$0xff] %v2470
          %2831 = vst [vmem:[#allocation2 + $0x110] sm:$0xff] %v2471
          %2832 = vst [vmem:[#allocation2 + $0x120] sm:$0xff] %v2472
          %2833 = vst [vmem:[#allocation2 + $0x128] sm:$0xff] %v2473
          %2834 = vst [vmem:[#allocation2 + $0x138] sm:$0xff] %v2474
          %2835 = vst [vmem:[#allocation2 + $0x140] sm:$0xff] %v2475
          %2836 = vst [vmem:[#allocation2 + $0x150] sm:$0xff] %v2476
          %2837 = vst [vmem:[#allocation2 + $0x158] sm:$0xff] %v2477
          %2838 = vst [vmem:[#allocation2 + $0x168] sm:$0xff] %v2478
          %2839 = vst [vmem:[#allocation2 + $0x170] sm:$0xff] %v2479
          %v2840 = vpack.c.bf16 %v2777, %v2776
          %v2841 = vpack.c.bf16 %v2779, %v2778
          %v2842 = vpack.c.bf16 %v2781, %v2780
          %v2843 = vpack.c.bf16 %v2783, %v2782
          %v2844 = vpack.c.bf16 %v2785, %v2784
          %v2845 = vpack.c.bf16 %v2787, %v2786
          %v2846 = vpack.c.bf16 %v2789, %v2788
          %v2847 = vpack.c.bf16 %v2791, %v2790
          %v2848 = vpack.c.bf16 %v2793, %v2792
          %v2849 = vpack.c.bf16 %v2795, %v2794
          %v2850 = vpack.c.bf16 %v2797, %v2796
          %v2851 = vpack.c.bf16 %v2799, %v2798
          %v2852 = vpack.c.bf16 %v2801, %v2800
          %v2853 = vpack.c.bf16 %v2803, %v2802
          %v2854 = vpack.c.bf16 %v2805, %v2804
          %v2855 = vpack.c.bf16 %v2807, %v2806
          %2856 = vst [vmem:[#allocation2 + $0x10] sm:$0xff] %v2840
          %2857 = vst [vmem:[#allocation2 + $0x28] sm:$0xff] %v2841
          %2858 = vst [vmem:[#allocation2 + $0x40] sm:$0xff] %v2842
          %2859 = vst [vmem:[#allocation2 + $0x58] sm:$0xff] %v2843
          %2860 = vst [vmem:[#allocation2 + $0x70] sm:$0xff] %v2844
          %2861 = vst [vmem:[#allocation2 + $0x88] sm:$0xff] %v2845
          %2862 = vst [vmem:[#allocation2 + $0xa0] sm:$0xff] %v2846
          %2863 = vst [vmem:[#allocation2 + $0xb8] sm:$0xff] %v2847
          %2864 = vst [vmem:[#allocation2 + $0xd0] sm:$0xff] %v2848
          %2865 = vst [vmem:[#allocation2 + $0xe8] sm:$0xff] %v2849
          %2866 = vst [vmem:[#allocation2 + $0x100] sm:$0xff] %v2850
          %2867 = vst [vmem:[#allocation2 + $0x118] sm:$0xff] %v2851
          %2868 = vst [vmem:[#allocation2 + $0x130] sm:$0xff] %v2852
          %2869 = vst [vmem:[#allocation2 + $0x148] sm:$0xff] %v2853
          %2870 = vst [vmem:[#allocation2 + $0x160] sm:$0xff] %v2854
          %2871 = vst [vmem:[#allocation2 + $0x178] sm:$0xff] %v2855
          %v2872 = vld [vmem:[%s9] sm:$0x1]
          %v2874 = vlaneseq
          %v2875 = vshrl.u32 %v2874, 7
          %v2876 = vsub.s32 0, %v2875
          %v2877 = vrot.slane %v2872, %v2876
          %2879 = vst [vmem:[%s655] sm:$0xff] %v2877
          %2880 = vst [vmem:[%s655 + $0x8] sm:$0xff] %v2877
          %2881 = vst [vmem:[%s655 + $0x10] sm:$0xff] %v2877
          %2882 = vst [vmem:[%s655 + $0x18] sm:$0xff] %v2877
          %2883 = vst [vmem:[%s655 + $0x20] sm:$0xff] %v2877
          %2884 = vst [vmem:[%s655 + $0x28] sm:$0xff] %v2877
          %2885 = vst [vmem:[%s655 + $0x30] sm:$0xff] %v2877
          %2886 = vst [vmem:[%s655 + $0x38] sm:$0xff] %v2877
          %2887 = vst [vmem:[%s655 + $0x40] sm:$0xff] %v2877
          %2888 = vst [vmem:[%s655 + $0x48] sm:$0xff] %v2877
          %2889 = vst [vmem:[%s655 + $0x50] sm:$0xff] %v2877
          %2890 = vst [vmem:[%s655 + $0x58] sm:$0xff] %v2877
          %2891 = vst [vmem:[%s655 + $0x60] sm:$0xff] %v2877
          %2892 = vst [vmem:[%s655 + $0x68] sm:$0xff] %v2877
          %2893 = vst [vmem:[%s655 + $0x70] sm:$0xff] %v2877
          %2894 = vst [vmem:[%s655 + $0x78] sm:$0xff] %v2877
          %2895 = vst [vmem:[%s655 + $0x80] sm:$0xff] %v2877
          %2896 = vst [vmem:[%s655 + $0x88] sm:$0xff] %v2877
          %2897 = vst [vmem:[%s655 + $0x90] sm:$0xff] %v2877
          %2898 = vst [vmem:[%s655 + $0x98] sm:$0xff] %v2877
          %2899 = vst [vmem:[%s655 + $0xa0] sm:$0xff] %v2877
          %2900 = vst [vmem:[%s655 + $0xa8] sm:$0xff] %v2877
          %2901 = vst [vmem:[%s655 + $0xb0] sm:$0xff] %v2877
          %2902 = vst [vmem:[%s655 + $0xb8] sm:$0xff] %v2877
          %2903 = vst [vmem:[%s655 + $0xc0] sm:$0xff] %v2877
          %2904 = vst [vmem:[%s655 + $0xc8] sm:$0xff] %v2877
          %2905 = vst [vmem:[%s655 + $0xd0] sm:$0xff] %v2877
          %2906 = vst [vmem:[%s655 + $0xd8] sm:$0xff] %v2877
          %2907 = vst [vmem:[%s655 + $0xe0] sm:$0xff] %v2877
          %2908 = vst [vmem:[%s655 + $0xe8] sm:$0xff] %v2877
          %2909 = vst [vmem:[%s655 + $0xf0] sm:$0xff] %v2877
          %2910 = vst [vmem:[%s655 + $0xf8] sm:$0xff] %v2877
        $region112: #{tpu_custom_call.1} parent=79 // pred_fallthru
          _
        %v2911 = vld [vmem:[#allocation2] sm:$0xff]
        %v2912 = vld [vmem:[#allocation2 + $0x8] sm:$0xff]
        %v2913 = vld [vmem:[#allocation2 + $0x10] sm:$0xff]
        %v2914 = vld [vmem:[#allocation2 + $0x18] sm:$0xff]
        %v2915 = vld [vmem:[#allocation2 + $0x20] sm:$0xff]
        %v2916 = vld [vmem:[#allocation2 + $0x28] sm:$0xff]
        %v2917 = vld [vmem:[#allocation2 + $0x30] sm:$0xff]
        %v2918 = vld [vmem:[#allocation2 + $0x38] sm:$0xff]
        %v2919 = vld [vmem:[#allocation2 + $0x40] sm:$0xff]
        %v2920 = vld [vmem:[#allocation2 + $0x48] sm:$0xff]
        %v2921 = vld [vmem:[#allocation2 + $0x50] sm:$0xff]
        %v2922 = vld [vmem:[#allocation2 + $0x58] sm:$0xff]
        %v2923 = vld [vmem:[#allocation2 + $0x60] sm:$0xff]
        %v2924 = vld [vmem:[#allocation2 + $0x68] sm:$0xff]
        %v2925 = vld [vmem:[#allocation2 + $0x70] sm:$0xff]
        %v2926 = vld [vmem:[#allocation2 + $0x78] sm:$0xff]
        %v2927 = vld [vmem:[#allocation2 + $0x80] sm:$0xff]
        %v2928 = vld [vmem:[#allocation2 + $0x88] sm:$0xff]
        %v2929 = vld [vmem:[#allocation2 + $0x90] sm:$0xff]
        %v2930 = vld [vmem:[#allocation2 + $0x98] sm:$0xff]
        %v2931 = vld [vmem:[#allocation2 + $0xa0] sm:$0xff]
        %v2932 = vld [vmem:[#allocation2 + $0xa8] sm:$0xff]
        %v2933 = vld [vmem:[#allocation2 + $0xb0] sm:$0xff]
        %v2934 = vld [vmem:[#allocation2 + $0xb8] sm:$0xff]
        %v2935 = vld [vmem:[#allocation2 + $0xc0] sm:$0xff]
        %v2936 = vld [vmem:[#allocation2 + $0xc8] sm:$0xff]
        %v2937 = vld [vmem:[#allocation2 + $0xd0] sm:$0xff]
        %v2938 = vld [vmem:[#allocation2 + $0xd8] sm:$0xff]
        %v2939 = vld [vmem:[#allocation2 + $0xe0] sm:$0xff]
        %v2940 = vld [vmem:[#allocation2 + $0xe8] sm:$0xff]
        %v2941 = vld [vmem:[#allocation2 + $0xf0] sm:$0xff]
        %v2942 = vld [vmem:[#allocation2 + $0xf8] sm:$0xff]
        %v2943 = vld [vmem:[#allocation2 + $0x100] sm:$0xff]
        %v2944 = vld [vmem:[#allocation2 + $0x108] sm:$0xff]
        %v2945 = vld [vmem:[#allocation2 + $0x110] sm:$0xff]
        %v2946 = vld [vmem:[#allocation2 + $0x118] sm:$0xff]
        %v2947 = vld [vmem:[#allocation2 + $0x120] sm:$0xff]
        %v2948 = vld [vmem:[#allocation2 + $0x128] sm:$0xff]
        %v2949 = vld [vmem:[#allocation2 + $0x130] sm:$0xff]
        %v2950 = vld [vmem:[#allocation2 + $0x138] sm:$0xff]
        %v2951 = vld [vmem:[#allocation2 + $0x140] sm:$0xff]
        %v2952 = vld [vmem:[#allocation2 + $0x148] sm:$0xff]
        %v2953 = vld [vmem:[#allocation2 + $0x150] sm:$0xff]
        %v2954 = vld [vmem:[#allocation2 + $0x158] sm:$0xff]
        %v2955 = vld [vmem:[#allocation2 + $0x160] sm:$0xff]
        %v2956 = vld [vmem:[#allocation2 + $0x168] sm:$0xff]
        %v2957 = vld [vmem:[#allocation2 + $0x170] sm:$0xff]
        %v2958 = vld [vmem:[#allocation2 + $0x178] sm:$0xff]
        %v2959 = vld [vmem:[#allocation11] sm:$0xf]
        %v2960 = vld [vmem:[#allocation11 + $0x4] sm:$0xf]
        %v2961 = vld [vmem:[#allocation11 + $0x8] sm:$0xf]
        %v2962 = vld [vmem:[#allocation11 + $0xc] sm:$0xf]
        %v2963 = vld [vmem:[#allocation11 + $0x10] sm:$0xf]
        %v2964 = vld [vmem:[#allocation11 + $0x14] sm:$0xf]
        %v2965 = vld [vmem:[#allocation11 + $0x18] sm:$0xf]
        %v2966 = vld [vmem:[#allocation11 + $0x1c] sm:$0xf]
        %v2967 = vld [vmem:[#allocation11 + $0x20] sm:$0xf]
        %v2968 = vld [vmem:[#allocation11 + $0x24] sm:$0xf]
        %v2969 = vld [vmem:[#allocation11 + $0x28] sm:$0xf]
        %v2970 = vld [vmem:[#allocation11 + $0x2c] sm:$0xf]
        %v2971 = vld [vmem:[#allocation11 + $0x30] sm:$0xf]
        %v2972 = vld [vmem:[#allocation11 + $0x34] sm:$0xf]
        %v2973 = vld [vmem:[#allocation11 + $0x38] sm:$0xf]
        %v2974 = vld [vmem:[#allocation11 + $0x3c] sm:$0xf]
        %v2975 = vld [vmem:[#allocation11 + $0x40] sm:$0xf]
        %v2976 = vld [vmem:[#allocation11 + $0x44] sm:$0xf]
        %v2977 = vld [vmem:[#allocation11 + $0x48] sm:$0xf]
        %v2978 = vld [vmem:[#allocation11 + $0x4c] sm:$0xf]
        %v2979 = vld [vmem:[#allocation11 + $0x50] sm:$0xf]
        %v2980 = vld [vmem:[#allocation11 + $0x54] sm:$0xf]
        %v2981 = vld [vmem:[#allocation11 + $0x58] sm:$0xf]
        %v2982 = vld [vmem:[#allocation11 + $0x5c] sm:$0xf]
        %v2983 = vld [vmem:[#allocation11 + $0x60] sm:$0xf]
        %v2984 = vld [vmem:[#allocation11 + $0x64] sm:$0xf]
        %v2985 = vld [vmem:[#allocation11 + $0x68] sm:$0xf]
        %v2986 = vld [vmem:[#allocation11 + $0x6c] sm:$0xf]
        %v2987 = vld [vmem:[#allocation11 + $0x70] sm:$0xf]
        %v2988 = vld [vmem:[#allocation11 + $0x74] sm:$0xf]
        %v2989 = vld [vmem:[#allocation11 + $0x78] sm:$0xf]
        %v2990 = vld [vmem:[#allocation11 + $0x7c] sm:$0xf]
        %v2991 = vld [vmem:[#allocation11 + $0x80] sm:$0xf]
        %v2992 = vld [vmem:[#allocation11 + $0x84] sm:$0xf]
        %v2993 = vld [vmem:[#allocation11 + $0x88] sm:$0xf]
        %v2994 = vld [vmem:[#allocation11 + $0x8c] sm:$0xf]
        %v2995 = vld [vmem:[#allocation11 + $0x90] sm:$0xf]
        %v2996 = vld [vmem:[#allocation11 + $0x94] sm:$0xf]
        %v2997 = vld [vmem:[#allocation11 + $0x98] sm:$0xf]
        %v2998 = vld [vmem:[#allocation11 + $0x9c] sm:$0xf]
        %v2999 = vld [vmem:[#allocation11 + $0xa0] sm:$0xf]
        %v3000 = vld [vmem:[#allocation11 + $0xa4] sm:$0xf]
        %v3001 = vld [vmem:[#allocation11 + $0xa8] sm:$0xf]
        %v3002 = vld [vmem:[#allocation11 + $0xac] sm:$0xf]
        %v3003 = vld [vmem:[#allocation11 + $0xb0] sm:$0xf]
        %v3004 = vld [vmem:[#allocation11 + $0xb4] sm:$0xf]
        %v3005 = vld [vmem:[#allocation11 + $0xb8] sm:$0xf]
        %v3006 = vld [vmem:[#allocation11 + $0xbc] sm:$0xf]
        %v3007 = vld [vmem:[%s659] sm:$0x1]
        %v3009 = vlaneseq
        %v3010 = vshrl.u32 %v3009, 7
        %v3011 = vsub.s32 0, %v3010
        %v3012 = vrot.slane %v3007, %v3011
        %v3062 = vunpack.c.l.b16 %v2959
        %v3063 = vunpack.c.l.b16 %v2960
        %v3064 = vunpack.c.l.b16 %v2961
        %v3065 = vunpack.c.l.b16 %v2962
        %v3066 = vunpack.c.l.b16 %v2963
        %v3067 = vunpack.c.l.b16 %v2964
        %v3068 = vunpack.c.l.b16 %v2965
        %v3069 = vunpack.c.l.b16 %v2966
        %v3070 = vunpack.c.l.b16 %v2967
        %v3071 = vunpack.c.l.b16 %v2968
        %v3072 = vunpack.c.l.b16 %v2969
        %v3073 = vunpack.c.l.b16 %v2970
        %v3074 = vunpack.c.l.b16 %v2971
        %v3075 = vunpack.c.l.b16 %v2972
        %v3076 = vunpack.c.l.b16 %v2973
        %v3077 = vunpack.c.l.b16 %v2974
        %v3078 = vunpack.c.l.b16 %v2975
        %v3079 = vunpack.c.l.b16 %v2976
        %v3080 = vunpack.c.l.b16 %v2977
        %v3081 = vunpack.c.l.b16 %v2978
        %v3082 = vunpack.c.l.b16 %v2979
        %v3083 = vunpack.c.l.b16 %v2980
        %v3084 = vunpack.c.l.b16 %v2981
        %v3085 = vunpack.c.l.b16 %v2982
        %v3086 = vunpack.c.l.b16 %v2983
        %v3087 = vunpack.c.l.b16 %v2984
        %v3088 = vunpack.c.l.b16 %v2985
        %v3089 = vunpack.c.l.b16 %v2986
        %v3090 = vunpack.c.l.b16 %v2987
        %v3091 = vunpack.c.l.b16 %v2988
        %v3092 = vunpack.c.l.b16 %v2989
        %v3093 = vunpack.c.l.b16 %v2990
        %v3094 = vunpack.c.l.b16 %v2991
        %v3095 = vunpack.c.l.b16 %v2992
        %v3096 = vunpack.c.l.b16 %v2993
        %v3097 = vunpack.c.l.b16 %v2994
        %v3098 = vunpack.c.l.b16 %v2995
        %v3099 = vunpack.c.l.b16 %v2996
        %v3100 = vunpack.c.l.b16 %v2997
        %v3101 = vunpack.c.l.b16 %v2998
        %v3102 = vunpack.c.l.b16 %v2999
        %v3103 = vunpack.c.l.b16 %v3000
        %v3104 = vunpack.c.l.b16 %v3001
        %v3105 = vunpack.c.l.b16 %v3002
        %v3106 = vunpack.c.l.b16 %v3003
        %v3107 = vunpack.c.l.b16 %v3004
        %v3108 = vunpack.c.l.b16 %v3005
        %v3109 = vunpack.c.l.b16 %v3006
        %v3110 = vpack.c.b16 %v3063, %v3062
        %v3111 = vpack.c.b16 %v3065, %v3064
        %v3112 = vpack.c.b16 %v3067, %v3066
        %v3113 = vpack.c.b16 %v3069, %v3068
        %v3114 = vpack.c.b16 %v3071, %v3070
        %v3115 = vpack.c.b16 %v3073, %v3072
        %v3116 = vpack.c.b16 %v3075, %v3074
        %v3117 = vpack.c.b16 %v3077, %v3076
        %v3118 = vpack.c.b16 %v3079, %v3078
        %v3119 = vpack.c.b16 %v3081, %v3080
        %v3120 = vpack.c.b16 %v3083, %v3082
        %v3121 = vpack.c.b16 %v3085, %v3084
        %v3122 = vpack.c.b16 %v3087, %v3086
        %v3123 = vpack.c.b16 %v3089, %v3088
        %v3124 = vpack.c.b16 %v3091, %v3090
        %v3125 = vpack.c.b16 %v3093, %v3092
        %v3126 = vpack.c.b16 %v3095, %v3094
        %v3127 = vpack.c.b16 %v3097, %v3096
        %v3128 = vpack.c.b16 %v3099, %v3098
        %v3129 = vpack.c.b16 %v3101, %v3100
        %v3130 = vpack.c.b16 %v3103, %v3102
        %v3131 = vpack.c.b16 %v3105, %v3104
        %v3132 = vpack.c.b16 %v3107, %v3106
        %v3133 = vpack.c.b16 %v3109, %v3108
        %3158 = vmatprep.subr.bf16.mxu0 0
        %3159 = vmatpush1.bf16.msra.mxu0 %v3110
        %3160 = vmatprep.subr.bf16.mxu0 0
        %3161 = vmatpush1.bf16.msra.mxu0 %v3111
        %3162 = vmatprep.subr.bf16.mxu0 0
        %3163 = vmatpush1.bf16.msra.mxu0 %v3112
        %3164 = vmatprep.subr.bf16.mxu0 0
        %3165 = vmatpush1.bf16.msra.mxu0 %v3113
        %3166 = vmatprep.subr.bf16.mxu0 0
        %3167 = vmatpush1.bf16.msra.mxu0 %v3114
        %3168 = vmatprep.subr.bf16.mxu0 0
        %3169 = vmatpush1.bf16.msra.mxu0 %v3115
        %3170 = vmatprep.subr.bf16.mxu0 0
        %3171 = vmatpush1.bf16.msra.mxu0 %v3116
        %3172 = vmatprep.subr.bf16.mxu0 0
        %3173 = vmatpush1.bf16.msra.mxu0 %v3117
        %3174 = vmatprep.subr.bf16.mxu0 0
        %3175 = vmatpush1.bf16.msra.mxu0 %v3118
        %3176 = vmatprep.subr.bf16.mxu0 0
        %3177 = vmatpush1.bf16.msra.mxu0 %v3119
        %3178 = vmatprep.subr.bf16.mxu0 0
        %3179 = vmatpush1.bf16.msra.mxu0 %v3120
        %3180 = vmatprep.subr.bf16.mxu0 0
        %3181 = vmatpush1.bf16.msra.mxu0 %v3121
        %3182 = vmatprep.subr.bf16.mxu0 0
        %3183 = vmatpush1.bf16.msra.mxu0 %v3122
        %3184 = vmatprep.subr.bf16.mxu0 0
        %3185 = vmatpush1.bf16.msra.mxu0 %v3123
        %3186 = vmatprep.subr.bf16.mxu0 0
        %3187 = vmatpush1.bf16.msra.mxu0 %v3124
        %3188 = vmatprep.subr.bf16.mxu0 0
        %3189 = vmatpush1.bf16.msra.mxu0 %v3125
        %3190 = vmatprep.mubr.bf16.mxu0 %v2912
        %3191 = vmatmul.mubr.bf16.gmra.mrb[0].mxu0 %v2911
        %v3192 = vpop.f32.mrb[0].mxu0
        %v3193 = vadd.f32 %v3012, %v3192
        %v3194 = vpop.f32.mrb[0].mxu0
        %v3195 = vpop.f32.mrb[0].mxu0
        %v3196 = vadd.f32 %v3012, %v3195
        %v3197 = vpop.f32.mrb[0].mxu0
        %3198 = vmatprep.mubr.bf16.mxu0 %v2915
        %3199 = vmatmul.mubr.bf16.gmra.mrb[0].mxu0 %v2914
        %v3200 = vpop.f32.mrb[0].mxu0
        %v3201 = vadd.f32 %v3012, %v3200
        %v3202 = vpop.f32.mrb[0].mxu0
        %v3203 = vpop.f32.mrb[0].mxu0
        %v3204 = vadd.f32 %v3012, %v3203
        %v3205 = vpop.f32.mrb[0].mxu0
        %3206 = vmatprep.mubr.bf16.mxu0 %v2918
        %3207 = vmatmul.mubr.bf16.gmra.mrb[0].mxu0 %v2917
        %v3208 = vpop.f32.mrb[0].mxu0
        %v3209 = vadd.f32 %v3012, %v3208
        %v3210 = vpop.f32.mrb[0].mxu0
        %v3211 = vpop.f32.mrb[0].mxu0
        %v3212 = vadd.f32 %v3012, %v3211
        %v3213 = vpop.f32.mrb[0].mxu0
        %3214 = vmatprep.mubr.bf16.mxu0 %v2921
        %3215 = vmatmul.mubr.bf16.gmra.mrb[0].mxu0 %v2920
        %v3216 = vpop.f32.mrb[0].mxu0
        %v3217 = vadd.f32 %v3012, %v3216
        %v3218 = vpop.f32.mrb[0].mxu0
        %v3219 = vpop.f32.mrb[0].mxu0
        %v3220 = vadd.f32 %v3012, %v3219
        %v3221 = vpop.f32.mrb[0].mxu0
        %3222 = vmatprep.mubr.bf16.mxu0 %v2924
        %3223 = vmatmul.mubr.bf16.gmra.mrb[0].mxu0 %v2923
        %v3224 = vpop.f32.mrb[0].mxu0
        %v3225 = vadd.f32 %v3012, %v3224
        %v3226 = vpop.f32.mrb[0].mxu0
        %v3227 = vpop.f32.mrb[0].mxu0
        %v3228 = vadd.f32 %v3012, %v3227
        %v3229 = vpop.f32.mrb[0].mxu0
        %3230 = vmatprep.mubr.bf16.mxu0 %v2927
        %3231 = vmatmul.mubr.bf16.gmra.mrb[0].mxu0 %v2926
        %v3232 = vpop.f32.mrb[0].mxu0
        %v3233 = vadd.f32 %v3012, %v3232
        %v3234 = vpop.f32.mrb[0].mxu0
        %v3235 = vpop.f32.mrb[0].mxu0
        %v3236 = vadd.f32 %v3012, %v3235
        %v3237 = vpop.f32.mrb[0].mxu0
        %3238 = vmatprep.mubr.bf16.mxu0 %v2930
        %3239 = vmatmul.mubr.bf16.gmra.mrb[0].mxu0 %v2929
        %v3240 = vpop.f32.mrb[0].mxu0
        %v3241 = vadd.f32 %v3012, %v3240
        %v3242 = vpop.f32.mrb[0].mxu0
        %v3243 = vpop.f32.mrb[0].mxu0
        %v3244 = vadd.f32 %v3012, %v3243
        %v3245 = vpop.f32.mrb[0].mxu0
        %3246 = vmatprep.mubr.bf16.mxu0 %v2933
        %3247 = vmatmul.mubr.bf16.gmra.mrb[0].mxu0 %v2932
        %v3248 = vpop.f32.mrb[0].mxu0
        %v3249 = vadd.f32 %v3012, %v3248
        %v3250 = vpop.f32.mrb[0].mxu0
        %v3251 = vpop.f32.mrb[0].mxu0
        %v3252 = vadd.f32 %v3012, %v3251
        %v3253 = vpop.f32.mrb[0].mxu0
        %3254 = vmatprep.mubr.bf16.mxu0 %v2936
        %3255 = vmatmul.mubr.bf16.gmra.mrb[0].mxu0 %v2935
        %v3256 = vpop.f32.mrb[0].mxu0
        %v3257 = vadd.f32 %v3012, %v3256
        %v3258 = vpop.f32.mrb[0].mxu0
        %v3259 = vpop.f32.mrb[0].mxu0
        %v3260 = vadd.f32 %v3012, %v3259
        %v3261 = vpop.f32.mrb[0].mxu0
        %3262 = vmatprep.mubr.bf16.mxu0 %v2939
        %3263 = vmatmul.mubr.bf16.gmra.mrb[0].mxu0 %v2938
        %v3264 = vpop.f32.mrb[0].mxu0
        %v3265 = vadd.f32 %v3012, %v3264
        %v3266 = vpop.f32.mrb[0].mxu0
        %v3267 = vpop.f32.mrb[0].mxu0
        %v3268 = vadd.f32 %v3012, %v3267
        %v3269 = vpop.f32.mrb[0].mxu0
        %3270 = vmatprep.mubr.bf16.mxu0 %v2942
        %3271 = vmatmul.mubr.bf16.gmra.mrb[0].mxu0 %v2941
        %v3272 = vpop.f32.mrb[0].mxu0
        %v3273 = vadd.f32 %v3012, %v3272
        %v3274 = vpop.f32.mrb[0].mxu0
        %v3275 = vpop.f32.mrb[0].mxu0
        %v3276 = vadd.f32 %v3012, %v3275
        %v3277 = vpop.f32.mrb[0].mxu0
        %3278 = vmatprep.mubr.bf16.mxu0 %v2945
        %3279 = vmatmul.mubr.bf16.gmra.mrb[0].mxu0 %v2944
        %v3280 = vpop.f32.mrb[0].mxu0
        %v3281 = vadd.f32 %v3012, %v3280
        %v3282 = vpop.f32.mrb[0].mxu0
        %v3283 = vpop.f32.mrb[0].mxu0
        %v3284 = vadd.f32 %v3012, %v3283
        %v3285 = vpop.f32.mrb[0].mxu0
        %3286 = vmatprep.mubr.bf16.mxu0 %v2948
        %3287 = vmatmul.mubr.bf16.gmra.mrb[0].mxu0 %v2947
        %v3288 = vpop.f32.mrb[0].mxu0
        %v3289 = vadd.f32 %v3012, %v3288
        %v3290 = vpop.f32.mrb[0].mxu0
        %v3291 = vpop.f32.mrb[0].mxu0
        %v3292 = vadd.f32 %v3012, %v3291
        %v3293 = vpop.f32.mrb[0].mxu0
        %3294 = vmatprep.mubr.bf16.mxu0 %v2951
        %3295 = vmatmul.mubr.bf16.gmra.mrb[0].mxu0 %v2950
        %v3296 = vpop.f32.mrb[0].mxu0
        %v3297 = vadd.f32 %v3012, %v3296
        %v3298 = vpop.f32.mrb[0].mxu0
        %v3299 = vpop.f32.mrb[0].mxu0
        %v3300 = vadd.f32 %v3012, %v3299
        %v3301 = vpop.f32.mrb[0].mxu0
        %3302 = vmatprep.mubr.bf16.mxu0 %v2954
        %3303 = vmatmul.mubr.bf16.gmra.mrb[0].mxu0 %v2953
        %v3304 = vpop.f32.mrb[0].mxu0
        %v3305 = vadd.f32 %v3012, %v3304
        %v3306 = vpop.f32.mrb[0].mxu0
        %v3307 = vpop.f32.mrb[0].mxu0
        %v3308 = vadd.f32 %v3012, %v3307
        %v3309 = vpop.f32.mrb[0].mxu0
        %3310 = vmatprep.mubr.bf16.mxu0 %v2957
        %3311 = vmatmul.mubr.bf16.gmra.mrb[0].mxu0 %v2956
        %v3312 = vpop.f32.mrb[0].mxu0
        %v3313 = vadd.f32 %v3012, %v3312
        %v3314 = vpop.f32.mrb[0].mxu0
        %v3315 = vpop.f32.mrb[0].mxu0
        %v3316 = vadd.f32 %v3012, %v3315
        %v3317 = vpop.f32.mrb[0].mxu0
        %3318 = vdwg.mxu0
        %3319 = vmatprep.subr.bf16.mxu0 0
        %3320 = vmatpush1.bf16.msra.mxu0 %v3126
        %3321 = vmatprep.subr.bf16.mxu0 0
        %3322 = vmatpush1.bf16.msra.mxu0 %v3127
        %3323 = vmatprep.subr.bf16.mxu0 0
        %3324 = vmatpush1.bf16.msra.mxu0 %v3128
        %3325 = vmatprep.subr.bf16.mxu0 0
        %3326 = vmatpush1.bf16.msra.mxu0 %v3129
        %3327 = vmatprep.subr.bf16.mxu0 0
        %3328 = vmatpush1.bf16.msra.mxu0 %v3130
        %3329 = vmatprep.subr.bf16.mxu0 0
        %3330 = vmatpush1.bf16.msra.mxu0 %v3131
        %3331 = vmatprep.subr.bf16.mxu0 0
        %3332 = vmatpush1.bf16.msra.mxu0 %v3132
        %3333 = vmatprep.subr.bf16.mxu0 0
        %3334 = vmatpush1.bf16.msra.mxu0 %v3133
        %3335 = vmatprep.subr.bf16.mxu0 0
        %3336 = vmatpush1.bf16.msra.mxu0 0
        %3337 = vmatprep.subr.bf16.mxu0 0
        %3338 = vmatpush1.bf16.msra.mxu0 0
        %3339 = vmatprep.subr.bf16.mxu0 0
        %3340 = vmatpush1.bf16.msra.mxu0 0
        %3341 = vmatprep.subr.bf16.mxu0 0
        %3342 = vmatpush1.bf16.msra.mxu0 0
        %3343 = vmatprep.subr.bf16.mxu0 0
        %3344 = vmatpush1.bf16.msra.mxu0 0
        %3345 = vmatprep.subr.bf16.mxu0 0
        %3346 = vmatpush1.bf16.msra.mxu0 0
        %3347 = vmatprep.subr.bf16.mxu0 0
        %3348 = vmatpush1.bf16.msra.mxu0 0
        %3349 = vmatprep.subr.bf16.mxu0 0
        %3350 = vmatpush1.bf16.msra.mxu0 0
        %3351 = vmatprep.mubr.bf16.mxu0 0
        %3352 = vmatmul.mubr.bf16.gmra.mrb[0].mxu0 %v2913
        %v3353 = vpop.f32.mrb[0].mxu0
        %v3354 = vadd.f32 %v3193, %v3353
        %v3355 = vpop.f32.mrb[0].mxu0
        %v3356 = vpop.f32.mrb[0].mxu0
        %v3357 = vadd.f32 %v3196, %v3356
        %v3358 = vpop.f32.mrb[0].mxu0
        %3359 = vmatprep.mubr.bf16.mxu0 0
        %3360 = vmatmul.mubr.bf16.gmra.mrb[0].mxu0 %v2916
        %v3361 = vpop.f32.mrb[0].mxu0
        %v3362 = vadd.f32 %v3201, %v3361
        %v3363 = vpop.f32.mrb[0].mxu0
        %v3364 = vpop.f32.mrb[0].mxu0
        %v3365 = vadd.f32 %v3204, %v3364
        %v3366 = vpop.f32.mrb[0].mxu0
        %3367 = vmatprep.mubr.bf16.mxu0 0
        %3368 = vmatmul.mubr.bf16.gmra.mrb[0].mxu0 %v2919
        %v3369 = vpop.f32.mrb[0].mxu0
        %v3370 = vadd.f32 %v3209, %v3369
        %v3371 = vpop.f32.mrb[0].mxu0
        %v3372 = vpop.f32.mrb[0].mxu0
        %v3373 = vadd.f32 %v3212, %v3372
        %v3374 = vpop.f32.mrb[0].mxu0
        %3375 = vmatprep.mubr.bf16.mxu0 0
        %3376 = vmatmul.mubr.bf16.gmra.mrb[0].mxu0 %v2922
        %v3377 = vpop.f32.mrb[0].mxu0
        %v3378 = vadd.f32 %v3217, %v3377
        %v3379 = vpop.f32.mrb[0].mxu0
        %v3380 = vpop.f32.mrb[0].mxu0
        %v3381 = vadd.f32 %v3220, %v3380
        %v3382 = vpop.f32.mrb[0].mxu0
        %3383 = vmatprep.mubr.bf16.mxu0 0
        %3384 = vmatmul.mubr.bf16.gmra.mrb[0].mxu0 %v2925
        %v3385 = vpop.f32.mrb[0].mxu0
        %v3386 = vadd.f32 %v3225, %v3385
        %v3387 = vpop.f32.mrb[0].mxu0
        %v3388 = vpop.f32.mrb[0].mxu0
        %v3389 = vadd.f32 %v3228, %v3388
        %v3390 = vpop.f32.mrb[0].mxu0
        %3391 = vmatprep.mubr.bf16.mxu0 0
        %3392 = vmatmul.mubr.bf16.gmra.mrb[0].mxu0 %v2928
        %v3393 = vpop.f32.mrb[0].mxu0
        %v3394 = vadd.f32 %v3233, %v3393
        %v3395 = vpop.f32.mrb[0].mxu0
        %v3396 = vpop.f32.mrb[0].mxu0
        %v3397 = vadd.f32 %v3236, %v3396
        %v3398 = vpop.f32.mrb[0].mxu0
        %3399 = vmatprep.mubr.bf16.mxu0 0
        %3400 = vmatmul.mubr.bf16.gmra.mrb[0].mxu0 %v2931
        %v3401 = vpop.f32.mrb[0].mxu0
        %v3402 = vadd.f32 %v3241, %v3401
        %v3403 = vpop.f32.mrb[0].mxu0
        %v3404 = vpop.f32.mrb[0].mxu0
        %v3405 = vadd.f32 %v3244, %v3404
        %v3406 = vpop.f32.mrb[0].mxu0
        %3407 = vmatprep.mubr.bf16.mxu0 0
        %3408 = vmatmul.mubr.bf16.gmra.mrb[0].mxu0 %v2934
        %v3409 = vpop.f32.mrb[0].mxu0
        %v3410 = vadd.f32 %v3249, %v3409
        %v3411 = vpop.f32.mrb[0].mxu0
        %v3412 = vpop.f32.mrb[0].mxu0
        %v3413 = vadd.f32 %v3252, %v3412
        %v3414 = vpop.f32.mrb[0].mxu0
        %3415 = vmatprep.mubr.bf16.mxu0 0
        %3416 = vmatmul.mubr.bf16.gmra.mrb[0].mxu0 %v2937
        %v3417 = vpop.f32.mrb[0].mxu0
        %v3418 = vadd.f32 %v3257, %v3417
        %v3419 = vpop.f32.mrb[0].mxu0
        %v3420 = vpop.f32.mrb[0].mxu0
        %v3421 = vadd.f32 %v3260, %v3420
        %v3422 = vpop.f32.mrb[0].mxu0
        %3423 = vmatprep.mubr.bf16.mxu0 0
        %3424 = vmatmul.mubr.bf16.gmra.mrb[0].mxu0 %v2940
        %v3425 = vpop.f32.mrb[0].mxu0
        %v3426 = vadd.f32 %v3265, %v3425
        %v3427 = vpop.f32.mrb[0].mxu0
        %v3428 = vpop.f32.mrb[0].mxu0
        %v3429 = vadd.f32 %v3268, %v3428
        %v3430 = vpop.f32.mrb[0].mxu0
        %3431 = vmatprep.mubr.bf16.mxu0 0
        %3432 = vmatmul.mubr.bf16.gmra.mrb[0].mxu0 %v2943
        %v3433 = vpop.f32.mrb[0].mxu0
        %v3434 = vadd.f32 %v3273, %v3433
        %v3435 = vpop.f32.mrb[0].mxu0
        %v3436 = vpop.f32.mrb[0].mxu0
        %v3437 = vadd.f32 %v3276, %v3436
        %v3438 = vpop.f32.mrb[0].mxu0
        %3439 = vmatprep.mubr.bf16.mxu0 0
        %3440 = vmatmul.mubr.bf16.gmra.mrb[0].mxu0 %v2946
        %v3441 = vpop.f32.mrb[0].mxu0
        %v3442 = vadd.f32 %v3281, %v3441
        %v3443 = vpop.f32.mrb[0].mxu0
        %v3444 = vpop.f32.mrb[0].mxu0
        %v3445 = vadd.f32 %v3284, %v3444
        %v3446 = vpop.f32.mrb[0].mxu0
        %3447 = vmatprep.mubr.bf16.mxu0 0
        %3448 = vmatmul.mubr.bf16.gmra.mrb[0].mxu0 %v2949
        %v3449 = vpop.f32.mrb[0].mxu0
        %v3450 = vadd.f32 %v3289, %v3449
        %v3451 = vpop.f32.mrb[0].mxu0
        %v3452 = vpop.f32.mrb[0].mxu0
        %v3453 = vadd.f32 %v3292, %v3452
        %v3454 = vpop.f32.mrb[0].mxu0
        %3455 = vmatprep.mubr.bf16.mxu0 0
        %3456 = vmatmul.mubr.bf16.gmra.mrb[0].mxu0 %v2952
        %v3457 = vpop.f32.mrb[0].mxu0
        %v3458 = vadd.f32 %v3297, %v3457
        %v3459 = vpop.f32.mrb[0].mxu0
        %v3460 = vpop.f32.mrb[0].mxu0
        %v3461 = vadd.f32 %v3300, %v3460
        %v3462 = vpop.f32.mrb[0].mxu0
        %3463 = vmatprep.mubr.bf16.mxu0 0
        %3464 = vmatmul.mubr.bf16.gmra.mrb[0].mxu0 %v2955
        %v3465 = vpop.f32.mrb[0].mxu0
        %v3466 = vadd.f32 %v3305, %v3465
        %v3467 = vpop.f32.mrb[0].mxu0
        %v3468 = vpop.f32.mrb[0].mxu0
        %v3469 = vadd.f32 %v3308, %v3468
        %v3470 = vpop.f32.mrb[0].mxu0
        %3471 = vmatprep.mubr.bf16.mxu0 0
        %3472 = vmatmul.mubr.bf16.gmra.mrb[0].mxu0 %v2958
        %v3473 = vpop.f32.mrb[0].mxu0
        %v3474 = vadd.f32 %v3313, %v3473
        %v3475 = vpop.f32.mrb[0].mxu0
        %v3476 = vpop.f32.mrb[0].mxu0
        %v3477 = vadd.f32 %v3316, %v3476
        %v3478 = vpop.f32.mrb[0].mxu0
        %3479 = vdwg.mxu0
        %v3480 = vld [vmem:[#allocation12] sm:$0xf]
        %v3481 = vld [vmem:[#allocation12 + $0x4] sm:$0xf]
        %v3482 = vld [vmem:[#allocation12 + $0x8] sm:$0xf]
        %v3483 = vld [vmem:[#allocation12 + $0xc] sm:$0xf]
        %v3484 = vld [vmem:[#allocation12 + $0x10] sm:$0xf]
        %v3485 = vld [vmem:[#allocation12 + $0x14] sm:$0xf]
        %v3486 = vld [vmem:[#allocation12 + $0x18] sm:$0xf]
        %v3487 = vld [vmem:[#allocation12 + $0x1c] sm:$0xf]
        %v3488 = vld [vmem:[#allocation12 + $0x20] sm:$0xf]
        %v3489 = vld [vmem:[#allocation12 + $0x24] sm:$0xf]
        %v3490 = vld [vmem:[#allocation12 + $0x28] sm:$0xf]
        %v3491 = vld [vmem:[#allocation12 + $0x2c] sm:$0xf]
        %v3492 = vld [vmem:[#allocation12 + $0x30] sm:$0xf]
        %v3493 = vld [vmem:[#allocation12 + $0x34] sm:$0xf]
        %v3494 = vld [vmem:[#allocation12 + $0x38] sm:$0xf]
        %v3495 = vld [vmem:[#allocation12 + $0x3c] sm:$0xf]
        %v3496 = vld [vmem:[%s662] sm:$0x1]
        %v3498 = vlaneseq
        %v3499 = vshrl.u32 %v3498, 7
        %v3500 = vsub.s32 0, %v3499
        %v3501 = vrot.slane %v3496, %v3500
        %v3519 = vunpack.c.l.b16 %v3480
        %v3520 = vunpack.c.l.b16 %v3481
        %v3521 = vunpack.c.l.b16 %v3482
        %v3522 = vunpack.c.l.b16 %v3483
        %v3523 = vunpack.c.l.b16 %v3484
        %v3524 = vunpack.c.l.b16 %v3485
        %v3525 = vunpack.c.l.b16 %v3486
        %v3526 = vunpack.c.l.b16 %v3487
        %v3527 = vunpack.c.l.b16 %v3488
        %v3528 = vunpack.c.l.b16 %v3489
        %v3529 = vunpack.c.l.b16 %v3490
        %v3530 = vunpack.c.l.b16 %v3491
        %v3531 = vunpack.c.l.b16 %v3492
        %v3532 = vunpack.c.l.b16 %v3493
        %v3533 = vunpack.c.l.b16 %v3494
        %v3534 = vunpack.c.l.b16 %v3495
        %v3535 = vpack.c.b16 %v3520, %v3519
        %v3536 = vpack.c.b16 %v3522, %v3521
        %v3537 = vpack.c.b16 %v3524, %v3523
        %v3538 = vpack.c.b16 %v3526, %v3525
        %v3539 = vpack.c.b16 %v3528, %v3527
        %v3540 = vpack.c.b16 %v3530, %v3529
        %v3541 = vpack.c.b16 %v3532, %v3531
        %v3542 = vpack.c.b16 %v3534, %v3533
        %3551 = vmatprep.subr.bf16.mxu0 0
        %3552 = vmatpush1.bf16.msra.mxu0 %v3535
        %3553 = vmatprep.subr.bf16.mxu0 0
        %3554 = vmatpush1.bf16.msra.mxu0 %v3536
        %3555 = vmatprep.subr.bf16.mxu0 0
        %3556 = vmatpush1.bf16.msra.mxu0 %v3537
        %3557 = vmatprep.subr.bf16.mxu0 0
        %3558 = vmatpush1.bf16.msra.mxu0 %v3538
        %3559 = vmatprep.subr.bf16.mxu0 0
        %3560 = vmatpush1.bf16.msra.mxu0 %v3539
        %3561 = vmatprep.subr.bf16.mxu0 0
        %3562 = vmatpush1.bf16.msra.mxu0 %v3540
        %3563 = vmatprep.subr.bf16.mxu0 0
        %3564 = vmatpush1.bf16.msra.mxu0 %v3541
        %3565 = vmatprep.subr.bf16.mxu0 0
        %3566 = vmatpush1.bf16.msra.mxu0 %v3542
        %3567 = vmatprep.subr.bf16.mxu0 0
        %3568 = vmatpush1.bf16.msra.mxu0 0
        %3569 = vmatprep.subr.bf16.mxu0 0
        %3570 = vmatpush1.bf16.msra.mxu0 0
        %3571 = vmatprep.subr.bf16.mxu0 0
        %3572 = vmatpush1.bf16.msra.mxu0 0
        %3573 = vmatprep.subr.bf16.mxu0 0
        %3574 = vmatpush1.bf16.msra.mxu0 0
        %3575 = vmatprep.subr.bf16.mxu0 0
        %3576 = vmatpush1.bf16.msra.mxu0 0
        %3577 = vmatprep.subr.bf16.mxu0 0
        %3578 = vmatpush1.bf16.msra.mxu0 0
        %3579 = vmatprep.subr.bf16.mxu0 0
        %3580 = vmatpush1.bf16.msra.mxu0 0
        %3581 = vmatprep.subr.bf16.mxu0 0
        %3582 = vmatpush1.bf16.msra.mxu0 0
        %3583 = vmatprep.mubr.bf16.mxu0 0
        %3584 = vmatmul.mubr.bf16.gmra.mrb[0].mxu0 %v2913
        %v3585 = vpop.f32.mrb[0].mxu0
        %v3586 = vadd.f32 %v3501, %v3585
        %v3587 = vpop.f32.mrb[0].mxu0
        %v3588 = vpop.f32.mrb[0].mxu0
        %v3589 = vadd.f32 %v3501, %v3588
        %v3590 = vpop.f32.mrb[0].mxu0
        %3591 = vmatprep.mubr.bf16.mxu0 0
        %3592 = vmatmul.mubr.bf16.gmra.mrb[0].mxu0 %v2916
        %v3593 = vpop.f32.mrb[0].mxu0
        %v3594 = vadd.f32 %v3501, %v3593
        %v3595 = vpop.f32.mrb[0].mxu0
        %v3596 = vpop.f32.mrb[0].mxu0
        %v3597 = vadd.f32 %v3501, %v3596
        %v3598 = vpop.f32.mrb[0].mxu0
        %3599 = vmatprep.mubr.bf16.mxu0 0
        %3600 = vmatmul.mubr.bf16.gmra.mrb[0].mxu0 %v2919
        %v3601 = vpop.f32.mrb[0].mxu0
        %v3602 = vadd.f32 %v3501, %v3601
        %v3603 = vpop.f32.mrb[0].mxu0
        %v3604 = vpop.f32.mrb[0].mxu0
        %v3605 = vadd.f32 %v3501, %v3604
        %v3606 = vpop.f32.mrb[0].mxu0
        %3607 = vmatprep.mubr.bf16.mxu0 0
        %3608 = vmatmul.mubr.bf16.gmra.mrb[0].mxu0 %v2922
        %v3609 = vpop.f32.mrb[0].mxu0
        %v3610 = vadd.f32 %v3501, %v3609
        %v3611 = vpop.f32.mrb[0].mxu0
        %v3612 = vpop.f32.mrb[0].mxu0
        %v3613 = vadd.f32 %v3501, %v3612
        %v3614 = vpop.f32.mrb[0].mxu0
        %3615 = vmatprep.mubr.bf16.mxu0 0
        %3616 = vmatmul.mubr.bf16.gmra.mrb[0].mxu0 %v2925
        %v3617 = vpop.f32.mrb[0].mxu0
        %v3618 = vadd.f32 %v3501, %v3617
        %v3619 = vpop.f32.mrb[0].mxu0
        %v3620 = vpop.f32.mrb[0].mxu0
        %v3621 = vadd.f32 %v3501, %v3620
        %v3622 = vpop.f32.mrb[0].mxu0
        %3623 = vmatprep.mubr.bf16.mxu0 0
        %3624 = vmatmul.mubr.bf16.gmra.mrb[0].mxu0 %v2928
        %v3625 = vpop.f32.mrb[0].mxu0
        %v3626 = vadd.f32 %v3501, %v3625
        %v3627 = vpop.f32.mrb[0].mxu0
        %v3628 = vpop.f32.mrb[0].mxu0
        %v3629 = vadd.f32 %v3501, %v3628
        %v3630 = vpop.f32.mrb[0].mxu0
        %3631 = vmatprep.mubr.bf16.mxu0 0
        %3632 = vmatmul.mubr.bf16.gmra.mrb[0].mxu0 %v2931
        %v3633 = vpop.f32.mrb[0].mxu0
        %v3634 = vadd.f32 %v3501, %v3633
        %v3635 = vpop.f32.mrb[0].mxu0
        %v3636 = vpop.f32.mrb[0].mxu0
        %v3637 = vadd.f32 %v3501, %v3636
        %v3638 = vpop.f32.mrb[0].mxu0
        %3639 = vmatprep.mubr.bf16.mxu0 0
        %3640 = vmatmul.mubr.bf16.gmra.mrb[0].mxu0 %v2934
        %v3641 = vpop.f32.mrb[0].mxu0
        %v3642 = vadd.f32 %v3501, %v3641
        %v3643 = vpop.f32.mrb[0].mxu0
        %v3644 = vpop.f32.mrb[0].mxu0
        %v3645 = vadd.f32 %v3501, %v3644
        %v3646 = vpop.f32.mrb[0].mxu0
        %3647 = vmatprep.mubr.bf16.mxu0 0
        %3648 = vmatmul.mubr.bf16.gmra.mrb[0].mxu0 %v2937
        %v3649 = vpop.f32.mrb[0].mxu0
        %v3650 = vadd.f32 %v3501, %v3649
        %v3651 = vpop.f32.mrb[0].mxu0
        %v3652 = vpop.f32.mrb[0].mxu0
        %v3653 = vadd.f32 %v3501, %v3652
        %v3654 = vpop.f32.mrb[0].mxu0
        %3655 = vmatprep.mubr.bf16.mxu0 0
        %3656 = vmatmul.mubr.bf16.gmra.mrb[0].mxu0 %v2940
        %v3657 = vpop.f32.mrb[0].mxu0
        %v3658 = vadd.f32 %v3501, %v3657
        %v3659 = vpop.f32.mrb[0].mxu0
        %v3660 = vpop.f32.mrb[0].mxu0
        %v3661 = vadd.f32 %v3501, %v3660
        %v3662 = vpop.f32.mrb[0].mxu0
        %3663 = vmatprep.mubr.bf16.mxu0 0
        %3664 = vmatmul.mubr.bf16.gmra.mrb[0].mxu0 %v2943
        %v3665 = vpop.f32.mrb[0].mxu0
        %v3666 = vadd.f32 %v3501, %v3665
        %v3667 = vpop.f32.mrb[0].mxu0
        %v3668 = vpop.f32.mrb[0].mxu0
        %v3669 = vadd.f32 %v3501, %v3668
        %v3670 = vpop.f32.mrb[0].mxu0
        %3671 = vmatprep.mubr.bf16.mxu0 0
        %3672 = vmatmul.mubr.bf16.gmra.mrb[0].mxu0 %v2946
        %v3673 = vpop.f32.mrb[0].mxu0
        %v3674 = vadd.f32 %v3501, %v3673
        %v3675 = vpop.f32.mrb[0].mxu0
        %v3676 = vpop.f32.mrb[0].mxu0
        %v3677 = vadd.f32 %v3501, %v3676
        %v3678 = vpop.f32.mrb[0].mxu0
        %3679 = vmatprep.mubr.bf16.mxu0 0
        %3680 = vmatmul.mubr.bf16.gmra.mrb[0].mxu0 %v2949
        %v3681 = vpop.f32.mrb[0].mxu0
        %v3682 = vadd.f32 %v3501, %v3681
        %v3683 = vpop.f32.mrb[0].mxu0
        %v3684 = vpop.f32.mrb[0].mxu0
        %v3685 = vadd.f32 %v3501, %v3684
        %v3686 = vpop.f32.mrb[0].mxu0
        %3687 = vmatprep.mubr.bf16.mxu0 0
        %3688 = vmatmul.mubr.bf16.gmra.mrb[0].mxu0 %v2952
        %v3689 = vpop.f32.mrb[0].mxu0
        %v3690 = vadd.f32 %v3501, %v3689
        %v3691 = vpop.f32.mrb[0].mxu0
        %v3692 = vpop.f32.mrb[0].mxu0
        %v3693 = vadd.f32 %v3501, %v3692
        %v3694 = vpop.f32.mrb[0].mxu0
        %3695 = vmatprep.mubr.bf16.mxu0 0
        %3696 = vmatmul.mubr.bf16.gmra.mrb[0].mxu0 %v2955
        %v3697 = vpop.f32.mrb[0].mxu0
        %v3698 = vadd.f32 %v3501, %v3697
        %v3699 = vpop.f32.mrb[0].mxu0
        %v3700 = vpop.f32.mrb[0].mxu0
        %v3701 = vadd.f32 %v3501, %v3700
        %v3702 = vpop.f32.mrb[0].mxu0
        %3703 = vmatprep.mubr.bf16.mxu0 0
        %3704 = vmatmul.mubr.bf16.gmra.mrb[0].mxu0 %v2958
        %v3705 = vpop.f32.mrb[0].mxu0
        %v3706 = vadd.f32 %v3501, %v3705
        %v3707 = vpop.f32.mrb[0].mxu0
        %v3708 = vpop.f32.mrb[0].mxu0
        %v3709 = vadd.f32 %v3501, %v3708
        %v3710 = vpop.f32.mrb[0].mxu0
        %3711 = vdwg.mxu0
        %v3712 = vxor.u32 %v3354, 2147483648
        %v3713 = vxor.u32 %v3357, 2147483648
        %v3714 = vxor.u32 %v3362, 2147483648
        %v3715 = vxor.u32 %v3365, 2147483648
        %v3716 = vxor.u32 %v3370, 2147483648
        %v3717 = vxor.u32 %v3373, 2147483648
        %v3718 = vxor.u32 %v3378, 2147483648
        %v3719 = vxor.u32 %v3381, 2147483648
        %v3720 = vxor.u32 %v3386, 2147483648
        %v3721 = vxor.u32 %v3389, 2147483648
        %v3722 = vxor.u32 %v3394, 2147483648
        %v3723 = vxor.u32 %v3397, 2147483648
        %v3724 = vxor.u32 %v3402, 2147483648
        %v3725 = vxor.u32 %v3405, 2147483648
        %v3726 = vxor.u32 %v3410, 2147483648
        %v3727 = vxor.u32 %v3413, 2147483648
        %v3728 = vxor.u32 %v3418, 2147483648
        %v3729 = vxor.u32 %v3421, 2147483648
        %v3730 = vxor.u32 %v3426, 2147483648
        %v3731 = vxor.u32 %v3429, 2147483648
        %v3732 = vxor.u32 %v3434, 2147483648
        %v3733 = vxor.u32 %v3437, 2147483648
        %v3734 = vxor.u32 %v3442, 2147483648
        %v3735 = vxor.u32 %v3445, 2147483648
        %v3736 = vxor.u32 %v3450, 2147483648
        %v3737 = vxor.u32 %v3453, 2147483648
        %v3738 = vxor.u32 %v3458, 2147483648
        %v3739 = vxor.u32 %v3461, 2147483648
        %v3740 = vxor.u32 %v3466, 2147483648
        %v3741 = vxor.u32 %v3469, 2147483648
        %v3742 = vxor.u32 %v3474, 2147483648
        %v3743 = vxor.u32 %v3477, 2147483648
        %v3744 = vmul.f32 %v3712, 1.442695
        %v3745 = vpow.pop %v3744
        %v3746 = vmul.f32 %v3713, 1.442695
        %v3747 = vpow.pop %v3746
        %v3748 = vmul.f32 %v3714, 1.442695
        %v3749 = vpow.pop %v3748
        %v3750 = vmul.f32 %v3715, 1.442695
        %v3751 = vpow.pop %v3750
        %v3752 = vmul.f32 %v3716, 1.442695
        %v3753 = vpow.pop %v3752
        %v3754 = vmul.f32 %v3717, 1.442695
        %v3755 = vpow.pop %v3754
        %v3756 = vmul.f32 %v3718, 1.442695
        %v3757 = vpow.pop %v3756
        %v3758 = vmul.f32 %v3719, 1.442695
        %v3759 = vpow.pop %v3758
        %v3760 = vmul.f32 %v3720, 1.442695
        %v3761 = vpow.pop %v3760
        %v3762 = vmul.f32 %v3721, 1.442695
        %v3763 = vpow.pop %v3762
        %v3764 = vmul.f32 %v3722, 1.442695
        %v3765 = vpow.pop %v3764
        %v3766 = vmul.f32 %v3723, 1.442695
        %v3767 = vpow.pop %v3766
        %v3768 = vmul.f32 %v3724, 1.442695
        %v3769 = vpow.pop %v3768
        %v3770 = vmul.f32 %v3725, 1.442695
        %v3771 = vpow.pop %v3770
        %v3772 = vmul.f32 %v3726, 1.442695
        %v3773 = vpow.pop %v3772
        %v3774 = vmul.f32 %v3727, 1.442695
        %v3775 = vpow.pop %v3774
        %v3776 = vmul.f32 %v3728, 1.442695
        %v3777 = vpow.pop %v3776
        %v3778 = vmul.f32 %v3729, 1.442695
        %v3779 = vpow.pop %v3778
        %v3780 = vmul.f32 %v3730, 1.442695
        %v3781 = vpow.pop %v3780
        %v3782 = vmul.f32 %v3731, 1.442695
        %v3783 = vpow.pop %v3782
        %v3784 = vmul.f32 %v3732, 1.442695
        %v3785 = vpow.pop %v3784
        %v3786 = vmul.f32 %v3733, 1.442695
        %v3787 = vpow.pop %v3786
        %v3788 = vmul.f32 %v3734, 1.442695
        %v3789 = vpow.pop %v3788
        %v3790 = vmul.f32 %v3735, 1.442695
        %v3791 = vpow.pop %v3790
        %v3792 = vmul.f32 %v3736, 1.442695
        %v3793 = vpow.pop %v3792
        %v3794 = vmul.f32 %v3737, 1.442695
        %v3795 = vpow.pop %v3794
        %v3796 = vmul.f32 %v3738, 1.442695
        %v3797 = vpow.pop %v3796
        %v3798 = vmul.f32 %v3739, 1.442695
        %v3799 = vpow.pop %v3798
        %v3800 = vmul.f32 %v3740, 1.442695
        %v3801 = vpow.pop %v3800
        %v3802 = vmul.f32 %v3741, 1.442695
        %v3803 = vpow.pop %v3802
        %v3804 = vmul.f32 %v3742, 1.442695
        %v3805 = vpow.pop %v3804
        %v3806 = vmul.f32 %v3743, 1.442695
        %v3807 = vpow.pop %v3806
        %v3808 = vadd.f32 %v3745, 1.0
        %v3809 = vadd.f32 %v3747, 1.0
        %v3810 = vadd.f32 %v3749, 1.0
        %v3811 = vadd.f32 %v3751, 1.0
        %v3812 = vadd.f32 %v3753, 1.0
        %v3813 = vadd.f32 %v3755, 1.0
        %v3814 = vadd.f32 %v3757, 1.0
        %v3815 = vadd.f32 %v3759, 1.0
        %v3816 = vadd.f32 %v3761, 1.0
        %v3817 = vadd.f32 %v3763, 1.0
        %v3818 = vadd.f32 %v3765, 1.0
        %v3819 = vadd.f32 %v3767, 1.0
        %v3820 = vadd.f32 %v3769, 1.0
        %v3821 = vadd.f32 %v3771, 1.0
        %v3822 = vadd.f32 %v3773, 1.0
        %v3823 = vadd.f32 %v3775, 1.0
        %v3824 = vadd.f32 %v3777, 1.0
        %v3825 = vadd.f32 %v3779, 1.0
        %v3826 = vadd.f32 %v3781, 1.0
        %v3827 = vadd.f32 %v3783, 1.0
        %v3828 = vadd.f32 %v3785, 1.0
        %v3829 = vadd.f32 %v3787, 1.0
        %v3830 = vadd.f32 %v3789, 1.0
        %v3831 = vadd.f32 %v3791, 1.0
        %v3832 = vadd.f32 %v3793, 1.0
        %v3833 = vadd.f32 %v3795, 1.0
        %v3834 = vadd.f32 %v3797, 1.0
        %v3835 = vadd.f32 %v3799, 1.0
        %v3836 = vadd.f32 %v3801, 1.0
        %v3837 = vadd.f32 %v3803, 1.0
        %v3838 = vadd.f32 %v3805, 1.0
        %v3839 = vadd.f32 %v3807, 1.0
        %v3840 = vrcp.pop %v3808
        %v3841 = vmul.f32 1.0, %v3840
        %v3842 = vrcp.pop %v3809
        %v3843 = vmul.f32 1.0, %v3842
        %v3844 = vrcp.pop %v3810
        %v3845 = vmul.f32 1.0, %v3844
        %v3846 = vrcp.pop %v3811
        %v3847 = vmul.f32 1.0, %v3846
        %v3848 = vrcp.pop %v3812
        %v3849 = vmul.f32 1.0, %v3848
        %v3850 = vrcp.pop %v3813
        %v3851 = vmul.f32 1.0, %v3850
        %v3852 = vrcp.pop %v3814
        %v3853 = vmul.f32 1.0, %v3852
        %v3854 = vrcp.pop %v3815
        %v3855 = vmul.f32 1.0, %v3854
        %v3856 = vrcp.pop %v3816
        %v3857 = vmul.f32 1.0, %v3856
        %v3858 = vrcp.pop %v3817
        %v3859 = vmul.f32 1.0, %v3858
        %v3860 = vrcp.pop %v3818
        %v3861 = vmul.f32 1.0, %v3860
        %v3862 = vrcp.pop %v3819
        %v3863 = vmul.f32 1.0, %v3862
        %v3864 = vrcp.pop %v3820
        %v3865 = vmul.f32 1.0, %v3864
        %v3866 = vrcp.pop %v3821
        %v3867 = vmul.f32 1.0, %v3866
        %v3868 = vrcp.pop %v3822
        %v3869 = vmul.f32 1.0, %v3868
        %v3870 = vrcp.pop %v3823
        %v3871 = vmul.f32 1.0, %v3870
        %v3872 = vrcp.pop %v3824
        %v3873 = vmul.f32 1.0, %v3872
        %v3874 = vrcp.pop %v3825
        %v3875 = vmul.f32 1.0, %v3874
        %v3876 = vrcp.pop %v3826
        %v3877 = vmul.f32 1.0, %v3876
        %v3878 = vrcp.pop %v3827
        %v3879 = vmul.f32 1.0, %v3878
        %v3880 = vrcp.pop %v3828
        %v3881 = vmul.f32 1.0, %v3880
        %v3882 = vrcp.pop %v3829
        %v3883 = vmul.f32 1.0, %v3882
        %v3884 = vrcp.pop %v3830
        %v3885 = vmul.f32 1.0, %v3884
        %v3886 = vrcp.pop %v3831
        %v3887 = vmul.f32 1.0, %v3886
        %v3888 = vrcp.pop %v3832
        %v3889 = vmul.f32 1.0, %v3888
        %v3890 = vrcp.pop %v3833
        %v3891 = vmul.f32 1.0, %v3890
        %v3892 = vrcp.pop %v3834
        %v3893 = vmul.f32 1.0, %v3892
        %v3894 = vrcp.pop %v3835
        %v3895 = vmul.f32 1.0, %v3894
        %v3896 = vrcp.pop %v3836
        %v3897 = vmul.f32 1.0, %v3896
        %v3898 = vrcp.pop %v3837
        %v3899 = vmul.f32 1.0, %v3898
        %v3900 = vrcp.pop %v3838
        %v3901 = vmul.f32 1.0, %v3900
        %v3902 = vrcp.pop %v3839
        %v3903 = vmul.f32 1.0, %v3902
        %v3904 = vmul.f32 %v3586, %v3841
        %v3905 = vmul.f32 %v3589, %v3843
        %v3906 = vmul.f32 %v3594, %v3845
        %v3907 = vmul.f32 %v3597, %v3847
        %v3908 = vmul.f32 %v3602, %v3849
        %v3909 = vmul.f32 %v3605, %v3851
        %v3910 = vmul.f32 %v3610, %v3853
        %v3911 = vmul.f32 %v3613, %v3855
        %v3912 = vmul.f32 %v3618, %v3857
        %v3913 = vmul.f32 %v3621, %v3859
        %v3914 = vmul.f32 %v3626, %v3861
        %v3915 = vmul.f32 %v3629, %v3863
        %v3916 = vmul.f32 %v3634, %v3865
        %v3917 = vmul.f32 %v3637, %v3867
        %v3918 = vmul.f32 %v3642, %v3869
        %v3919 = vmul.f32 %v3645, %v3871
        %v3920 = vmul.f32 %v3650, %v3873
        %v3921 = vmul.f32 %v3653, %v3875
        %v3922 = vmul.f32 %v3658, %v3877
        %v3923 = vmul.f32 %v3661, %v3879
        %v3924 = vmul.f32 %v3666, %v3881
        %v3925 = vmul.f32 %v3669, %v3883
        %v3926 = vmul.f32 %v3674, %v3885
        %v3927 = vmul.f32 %v3677, %v3887
        %v3928 = vmul.f32 %v3682, %v3889
        %v3929 = vmul.f32 %v3685, %v3891
        %v3930 = vmul.f32 %v3690, %v3893
        %v3931 = vmul.f32 %v3693, %v3895
        %v3932 = vmul.f32 %v3698, %v3897
        %v3933 = vmul.f32 %v3701, %v3899
        %v3934 = vmul.f32 %v3706, %v3901
        %v3935 = vmul.f32 %v3709, %v3903
        %v3936 = vld [vmem:[%s655] sm:$0xff]
        %v3937 = vld [vmem:[%s655 + $0x8] sm:$0xff]
        %v3938 = vld [vmem:[%s655 + $0x10] sm:$0xff]
        %v3939 = vld [vmem:[%s655 + $0x18] sm:$0xff]
        %v3940 = vld [vmem:[%s655 + $0x20] sm:$0xff]
        %v3941 = vld [vmem:[%s655 + $0x28] sm:$0xff]
        %v3942 = vld [vmem:[%s655 + $0x30] sm:$0xff]
        %v3943 = vld [vmem:[%s655 + $0x38] sm:$0xff]
        %v3944 = vld [vmem:[%s655 + $0x40] sm:$0xff]
        %v3945 = vld [vmem:[%s655 + $0x48] sm:$0xff]
        %v3946 = vld [vmem:[%s655 + $0x50] sm:$0xff]
        %v3947 = vld [vmem:[%s655 + $0x58] sm:$0xff]
        %v3948 = vld [vmem:[%s655 + $0x60] sm:$0xff]
        %v3949 = vld [vmem:[%s655 + $0x68] sm:$0xff]
        %v3950 = vld [vmem:[%s655 + $0x70] sm:$0xff]
        %v3951 = vld [vmem:[%s655 + $0x78] sm:$0xff]
        %v3952 = vld [vmem:[%s655 + $0x80] sm:$0xff]
        %v3953 = vld [vmem:[%s655 + $0x88] sm:$0xff]
        %v3954 = vld [vmem:[%s655 + $0x90] sm:$0xff]
        %v3955 = vld [vmem:[%s655 + $0x98] sm:$0xff]
        %v3956 = vld [vmem:[%s655 + $0xa0] sm:$0xff]
        %v3957 = vld [vmem:[%s655 + $0xa8] sm:$0xff]
        %v3958 = vld [vmem:[%s655 + $0xb0] sm:$0xff]
        %v3959 = vld [vmem:[%s655 + $0xb8] sm:$0xff]
        %v3960 = vld [vmem:[%s655 + $0xc0] sm:$0xff]
        %v3961 = vld [vmem:[%s655 + $0xc8] sm:$0xff]
        %v3962 = vld [vmem:[%s655 + $0xd0] sm:$0xff]
        %v3963 = vld [vmem:[%s655 + $0xd8] sm:$0xff]
        %v3964 = vld [vmem:[%s655 + $0xe0] sm:$0xff]
        %v3965 = vld [vmem:[%s655 + $0xe8] sm:$0xff]
        %v3966 = vld [vmem:[%s655 + $0xf0] sm:$0xff]
        %v3967 = vld [vmem:[%s655 + $0xf8] sm:$0xff]
        %v3968 = vpack.c.bf16 %v3905, %v3904
        %v3969 = vpack.c.bf16 %v3907, %v3906
        %v3970 = vpack.c.bf16 %v3909, %v3908
        %v3971 = vpack.c.bf16 %v3911, %v3910
        %v3972 = vpack.c.bf16 %v3913, %v3912
        %v3973 = vpack.c.bf16 %v3915, %v3914
        %v3974 = vpack.c.bf16 %v3917, %v3916
        %v3975 = vpack.c.bf16 %v3919, %v3918
        %v3976 = vpack.c.bf16 %v3921, %v3920
        %v3977 = vpack.c.bf16 %v3923, %v3922
        %v3978 = vpack.c.bf16 %v3925, %v3924
        %v3979 = vpack.c.bf16 %v3927, %v3926
        %v3980 = vpack.c.bf16 %v3929, %v3928
        %v3981 = vpack.c.bf16 %v3931, %v3930
        %v3982 = vpack.c.bf16 %v3933, %v3932
        %v3983 = vpack.c.bf16 %v3935, %v3934
        %v3984 = vld [vmem:[#allocation14] sm:$0xf]
        %v3985 = vld [vmem:[#allocation14 + $0x4] sm:$0xf]
        %v3986 = vld [vmem:[#allocation14 + $0x8] sm:$0xf]
        %v3987 = vld [vmem:[#allocation14 + $0xc] sm:$0xf]
        %v3988 = vld [vmem:[#allocation14 + $0x10] sm:$0xf]
        %v3989 = vld [vmem:[#allocation14 + $0x14] sm:$0xf]
        %v3990 = vld [vmem:[#allocation14 + $0x18] sm:$0xf]
        %v3991 = vld [vmem:[#allocation14 + $0x1c] sm:$0xf]
        %v3992 = vld [vmem:[#allocation14 + $0x20] sm:$0xf]
        %v3993 = vld [vmem:[#allocation14 + $0x24] sm:$0xf]
        %v3994 = vld [vmem:[#allocation14 + $0x28] sm:$0xf]
        %v3995 = vld [vmem:[#allocation14 + $0x2c] sm:$0xf]
        %v3996 = vld [vmem:[#allocation14 + $0x30] sm:$0xf]
        %v3997 = vld [vmem:[#allocation14 + $0x34] sm:$0xf]
        %v3998 = vld [vmem:[#allocation14 + $0x38] sm:$0xf]
        %v3999 = vld [vmem:[#allocation14 + $0x3c] sm:$0xf]
        %v4016 = vunpack.c.l.b16 %v3984
        %v4017 = vunpack.c.l.b16 %v3985
        %v4018 = vunpack.c.l.b16 %v3986
        %v4019 = vunpack.c.l.b16 %v3987
        %v4020 = vunpack.c.l.b16 %v3988
        %v4021 = vunpack.c.l.b16 %v3989
        %v4022 = vunpack.c.l.b16 %v3990
        %v4023 = vunpack.c.l.b16 %v3991
        %v4024 = vunpack.c.l.b16 %v3992
        %v4025 = vunpack.c.l.b16 %v3993
        %v4026 = vunpack.c.l.b16 %v3994
        %v4027 = vunpack.c.l.b16 %v3995
        %v4028 = vunpack.c.l.b16 %v3996
        %v4029 = vunpack.c.l.b16 %v3997
        %v4030 = vunpack.c.l.b16 %v3998
        %v4031 = vunpack.c.l.b16 %v3999
        %v4032 = vpack.c.b16 %v4017, %v4016
        %v4033 = vpack.c.b16 %v4019, %v4018
        %v4034 = vpack.c.b16 %v4021, %v4020
        %v4035 = vpack.c.b16 %v4023, %v4022
        %v4036 = vpack.c.b16 %v4025, %v4024
        %v4037 = vpack.c.b16 %v4027, %v4026
        %v4038 = vpack.c.b16 %v4029, %v4028
        %v4039 = vpack.c.b16 %v4031, %v4030
        %4048 = vmatprep.subr.bf16.mxu0 0
        %4049 = vmatpush1.bf16.msra.mxu0 %v4032
        %4050 = vmatprep.subr.bf16.mxu0 0
        %4051 = vmatpush1.bf16.msra.mxu0 %v4033
        %4052 = vmatprep.subr.bf16.mxu0 0
        %4053 = vmatpush1.bf16.msra.mxu0 %v4034
        %4054 = vmatprep.subr.bf16.mxu0 0
        %4055 = vmatpush1.bf16.msra.mxu0 %v4035
        %4056 = vmatprep.subr.bf16.mxu0 0
        %4057 = vmatpush1.bf16.msra.mxu0 %v4036
        %4058 = vmatprep.subr.bf16.mxu0 0
        %4059 = vmatpush1.bf16.msra.mxu0 %v4037
        %4060 = vmatprep.subr.bf16.mxu0 0
        %4061 = vmatpush1.bf16.msra.mxu0 %v4038
        %4062 = vmatprep.subr.bf16.mxu0 0
        %4063 = vmatpush1.bf16.msra.mxu0 %v4039
        %4064 = vmatprep.subr.bf16.mxu0 0
        %4065 = vmatpush1.bf16.msra.mxu0 0
        %4066 = vmatprep.subr.bf16.mxu0 0
        %4067 = vmatpush1.bf16.msra.mxu0 0
        %4068 = vmatprep.subr.bf16.mxu0 0
        %4069 = vmatpush1.bf16.msra.mxu0 0
        %4070 = vmatprep.subr.bf16.mxu0 0
        %4071 = vmatpush1.bf16.msra.mxu0 0
        %4072 = vmatprep.subr.bf16.mxu0 0
        %4073 = vmatpush1.bf16.msra.mxu0 0
        %4074 = vmatprep.subr.bf16.mxu0 0
        %4075 = vmatpush1.bf16.msra.mxu0 0
        %4076 = vmatprep.subr.bf16.mxu0 0
        %4077 = vmatpush1.bf16.msra.mxu0 0
        %4078 = vmatprep.subr.bf16.mxu0 0
        %4079 = vmatpush1.bf16.msra.mxu0 0
        %4080 = vmatprep.mubr.bf16.mxu0 0
        %4081 = vmatmul.mubr.bf16.gmra.mrb[0].mxu0 %v3968
        %v4082 = vpop.f32.mrb[0].mxu0
        %v4083 = vadd.f32 0.0, %v4082
        %v4084 = vpop.f32.mrb[0].mxu0
        %v4085 = vpop.f32.mrb[0].mxu0
        %v4086 = vadd.f32 0.0, %v4085
        %v4087 = vpop.f32.mrb[0].mxu0
        %4088 = vmatprep.mubr.bf16.mxu0 0
        %4089 = vmatmul.mubr.bf16.gmra.mrb[0].mxu0 %v3969
        %v4090 = vpop.f32.mrb[0].mxu0
        %v4091 = vadd.f32 0.0, %v4090
        %v4092 = vpop.f32.mrb[0].mxu0
        %v4093 = vpop.f32.mrb[0].mxu0
        %v4094 = vadd.f32 0.0, %v4093
        %v4095 = vpop.f32.mrb[0].mxu0
        %4096 = vmatprep.mubr.bf16.mxu0 0
        %4097 = vmatmul.mubr.bf16.gmra.mrb[0].mxu0 %v3970
        %v4098 = vpop.f32.mrb[0].mxu0
        %v4099 = vadd.f32 0.0, %v4098
        %v4100 = vpop.f32.mrb[0].mxu0
        %v4101 = vpop.f32.mrb[0].mxu0
        %v4102 = vadd.f32 0.0, %v4101
        %v4103 = vpop.f32.mrb[0].mxu0
        %4104 = vmatprep.mubr.bf16.mxu0 0
        %4105 = vmatmul.mubr.bf16.gmra.mrb[0].mxu0 %v3971
        %v4106 = vpop.f32.mrb[0].mxu0
        %v4107 = vadd.f32 0.0, %v4106
        %v4108 = vpop.f32.mrb[0].mxu0
        %v4109 = vpop.f32.mrb[0].mxu0
        %v4110 = vadd.f32 0.0, %v4109
        %v4111 = vpop.f32.mrb[0].mxu0
        %4112 = vmatprep.mubr.bf16.mxu0 0
        %4113 = vmatmul.mubr.bf16.gmra.mrb[0].mxu0 %v3972
        %v4114 = vpop.f32.mrb[0].mxu0
        %v4115 = vadd.f32 0.0, %v4114
        %v4116 = vpop.f32.mrb[0].mxu0
        %v4117 = vpop.f32.mrb[0].mxu0
        %v4118 = vadd.f32 0.0, %v4117
        %v4119 = vpop.f32.mrb[0].mxu0
        %4120 = vmatprep.mubr.bf16.mxu0 0
        %4121 = vmatmul.mubr.bf16.gmra.mrb[0].mxu0 %v3973
        %v4122 = vpop.f32.mrb[0].mxu0
        %v4123 = vadd.f32 0.0, %v4122
        %v4124 = vpop.f32.mrb[0].mxu0
        %v4125 = vpop.f32.mrb[0].mxu0
        %v4126 = vadd.f32 0.0, %v4125
        %v4127 = vpop.f32.mrb[0].mxu0
        %4128 = vmatprep.mubr.bf16.mxu0 0
        %4129 = vmatmul.mubr.bf16.gmra.mrb[0].mxu0 %v3974
        %v4130 = vpop.f32.mrb[0].mxu0
        %v4131 = vadd.f32 0.0, %v4130
        %v4132 = vpop.f32.mrb[0].mxu0
        %v4133 = vpop.f32.mrb[0].mxu0
        %v4134 = vadd.f32 0.0, %v4133
        %v4135 = vpop.f32.mrb[0].mxu0
        %4136 = vmatprep.mubr.bf16.mxu0 0
        %4137 = vmatmul.mubr.bf16.gmra.mrb[0].mxu0 %v3975
        %v4138 = vpop.f32.mrb[0].mxu0
        %v4139 = vadd.f32 0.0, %v4138
        %v4140 = vpop.f32.mrb[0].mxu0
        %v4141 = vpop.f32.mrb[0].mxu0
        %v4142 = vadd.f32 0.0, %v4141
        %v4143 = vpop.f32.mrb[0].mxu0
        %4144 = vmatprep.mubr.bf16.mxu0 0
        %4145 = vmatmul.mubr.bf16.gmra.mrb[0].mxu0 %v3976
        %v4146 = vpop.f32.mrb[0].mxu0
        %v4147 = vadd.f32 0.0, %v4146
        %v4148 = vpop.f32.mrb[0].mxu0
        %v4149 = vpop.f32.mrb[0].mxu0
        %v4150 = vadd.f32 0.0, %v4149
        %v4151 = vpop.f32.mrb[0].mxu0
        %4152 = vmatprep.mubr.bf16.mxu0 0
        %4153 = vmatmul.mubr.bf16.gmra.mrb[0].mxu0 %v3977
        %v4154 = vpop.f32.mrb[0].mxu0
        %v4155 = vadd.f32 0.0, %v4154
        %v4156 = vpop.f32.mrb[0].mxu0
        %v4157 = vpop.f32.mrb[0].mxu0
        %v4158 = vadd.f32 0.0, %v4157
        %v4159 = vpop.f32.mrb[0].mxu0
        %4160 = vmatprep.mubr.bf16.mxu0 0
        %4161 = vmatmul.mubr.bf16.gmra.mrb[0].mxu0 %v3978
        %v4162 = vpop.f32.mrb[0].mxu0
        %v4163 = vadd.f32 0.0, %v4162
        %v4164 = vpop.f32.mrb[0].mxu0
        %v4165 = vpop.f32.mrb[0].mxu0
        %v4166 = vadd.f32 0.0, %v4165
        %v4167 = vpop.f32.mrb[0].mxu0
        %4168 = vmatprep.mubr.bf16.mxu0 0
        %4169 = vmatmul.mubr.bf16.gmra.mrb[0].mxu0 %v3979
        %v4170 = vpop.f32.mrb[0].mxu0
        %v4171 = vadd.f32 0.0, %v4170
        %v4172 = vpop.f32.mrb[0].mxu0
        %v4173 = vpop.f32.mrb[0].mxu0
        %v4174 = vadd.f32 0.0, %v4173
        %v4175 = vpop.f32.mrb[0].mxu0
        %4176 = vmatprep.mubr.bf16.mxu0 0
        %4177 = vmatmul.mubr.bf16.gmra.mrb[0].mxu0 %v3980
        %v4178 = vpop.f32.mrb[0].mxu0
        %v4179 = vadd.f32 0.0, %v4178
        %v4180 = vpop.f32.mrb[0].mxu0
        %v4181 = vpop.f32.mrb[0].mxu0
        %v4182 = vadd.f32 0.0, %v4181
        %v4183 = vpop.f32.mrb[0].mxu0
        %4184 = vmatprep.mubr.bf16.mxu0 0
        %4185 = vmatmul.mubr.bf16.gmra.mrb[0].mxu0 %v3981
        %v4186 = vpop.f32.mrb[0].mxu0
        %v4187 = vadd.f32 0.0, %v4186
        %v4188 = vpop.f32.mrb[0].mxu0
        %v4189 = vpop.f32.mrb[0].mxu0
        %v4190 = vadd.f32 0.0, %v4189
        %v4191 = vpop.f32.mrb[0].mxu0
        %4192 = vmatprep.mubr.bf16.mxu0 0
        %4193 = vmatmul.mubr.bf16.gmra.mrb[0].mxu0 %v3982
        %v4194 = vpop.f32.mrb[0].mxu0
        %v4195 = vadd.f32 0.0, %v4194
        %v4196 = vpop.f32.mrb[0].mxu0
        %v4197 = vpop.f32.mrb[0].mxu0
        %v4198 = vadd.f32 0.0, %v4197
        %v4199 = vpop.f32.mrb[0].mxu0
        %4200 = vmatprep.mubr.bf16.mxu0 0
        %4201 = vmatmul.mubr.bf16.gmra.mrb[0].mxu0 %v3983
        %v4202 = vpop.f32.mrb[0].mxu0
        %v4203 = vadd.f32 0.0, %v4202
        %v4204 = vpop.f32.mrb[0].mxu0
        %v4205 = vpop.f32.mrb[0].mxu0
        %v4206 = vadd.f32 0.0, %v4205
        %v4207 = vpop.f32.mrb[0].mxu0
        %4208 = vdwg.mxu0
        %v4209 = vadd.f32 %v3936, %v4083
        %v4210 = vadd.f32 %v3937, %v4086
        %v4211 = vadd.f32 %v3938, %v4091
        %v4212 = vadd.f32 %v3939, %v4094
        %v4213 = vadd.f32 %v3940, %v4099
        %v4214 = vadd.f32 %v3941, %v4102
        %v4215 = vadd.f32 %v3942, %v4107
        %v4216 = vadd.f32 %v3943, %v4110
        %v4217 = vadd.f32 %v3944, %v4115
        %v4218 = vadd.f32 %v3945, %v4118
        %v4219 = vadd.f32 %v3946, %v4123
        %v4220 = vadd.f32 %v3947, %v4126
        %v4221 = vadd.f32 %v3948, %v4131
        %v4222 = vadd.f32 %v3949, %v4134
        %v4223 = vadd.f32 %v3950, %v4139
        %v4224 = vadd.f32 %v3951, %v4142
        %v4225 = vadd.f32 %v3952, %v4147
        %v4226 = vadd.f32 %v3953, %v4150
        %v4227 = vadd.f32 %v3954, %v4155
        %v4228 = vadd.f32 %v3955, %v4158
        %v4229 = vadd.f32 %v3956, %v4163
        %v4230 = vadd.f32 %v3957, %v4166
        %v4231 = vadd.f32 %v3958, %v4171
        %v4232 = vadd.f32 %v3959, %v4174
        %v4233 = vadd.f32 %v3960, %v4179
        %v4234 = vadd.f32 %v3961, %v4182
        %v4235 = vadd.f32 %v3962, %v4187
        %v4236 = vadd.f32 %v3963, %v4190
        %v4237 = vadd.f32 %v3964, %v4195
        %v4238 = vadd.f32 %v3965, %v4198
        %v4239 = vadd.f32 %v3966, %v4203
        %v4240 = vadd.f32 %v3967, %v4206
        %4241 = vst [vmem:[%s655] sm:$0xff] %v4209
        %4242 = vst [vmem:[%s655 + $0x8] sm:$0xff] %v4210
        %4243 = vst [vmem:[%s655 + $0x10] sm:$0xff] %v4211
        %4244 = vst [vmem:[%s655 + $0x18] sm:$0xff] %v4212
        %4245 = vst [vmem:[%s655 + $0x20] sm:$0xff] %v4213
        %4246 = vst [vmem:[%s655 + $0x28] sm:$0xff] %v4214
        %4247 = vst [vmem:[%s655 + $0x30] sm:$0xff] %v4215
        %4248 = vst [vmem:[%s655 + $0x38] sm:$0xff] %v4216
        %4249 = vst [vmem:[%s655 + $0x40] sm:$0xff] %v4217
        %4250 = vst [vmem:[%s655 + $0x48] sm:$0xff] %v4218
        %4251 = vst [vmem:[%s655 + $0x50] sm:$0xff] %v4219
        %4252 = vst [vmem:[%s655 + $0x58] sm:$0xff] %v4220
        %4253 = vst [vmem:[%s655 + $0x60] sm:$0xff] %v4221
        %4254 = vst [vmem:[%s655 + $0x68] sm:$0xff] %v4222
        %4255 = vst [vmem:[%s655 + $0x70] sm:$0xff] %v4223
        %4256 = vst [vmem:[%s655 + $0x78] sm:$0xff] %v4224
        %4257 = vst [vmem:[%s655 + $0x80] sm:$0xff] %v4225
        %4258 = vst [vmem:[%s655 + $0x88] sm:$0xff] %v4226
        %4259 = vst [vmem:[%s655 + $0x90] sm:$0xff] %v4227
        %4260 = vst [vmem:[%s655 + $0x98] sm:$0xff] %v4228
        %4261 = vst [vmem:[%s655 + $0xa0] sm:$0xff] %v4229
        %4262 = vst [vmem:[%s655 + $0xa8] sm:$0xff] %v4230
        %4263 = vst [vmem:[%s655 + $0xb0] sm:$0xff] %v4231
        %4264 = vst [vmem:[%s655 + $0xb8] sm:$0xff] %v4232
        %4265 = vst [vmem:[%s655 + $0xc0] sm:$0xff] %v4233
        %4266 = vst [vmem:[%s655 + $0xc8] sm:$0xff] %v4234
        %4267 = vst [vmem:[%s655 + $0xd0] sm:$0xff] %v4235
        %4268 = vst [vmem:[%s655 + $0xd8] sm:$0xff] %v4236
        %4269 = vst [vmem:[%s655 + $0xe0] sm:$0xff] %v4237
        %4270 = vst [vmem:[%s655 + $0xe8] sm:$0xff] %v4238
        %4271 = vst [vmem:[%s655 + $0xf0] sm:$0xff] %v4239
        %4272 = vst [vmem:[%s655 + $0xf8] sm:$0xff] %v4240
        %s4273 = sand.u32 %s400, 1
        %s4274 = scalar_lea.sflag [#allocation5], %s4273
        %s4275 = sand.u32 %s400, 1
        %s4276 = smul.addr %s4275, 256
        %s4277 = scalar_lea.vmem [#allocation15], %s4276
        // Predicated region
        $region113: #{tpu_custom_call.1} parent=79 // pred_check
          %p4278 = pneg %p410
        $region114: #{tpu_custom_call.1} parent=79 // pred_check_branch
          %4280 = sbr.rel (%p4278) target = $region116
        $region115: #{tpu_custom_call.1} parent=79 // pred_region
          %s4281 = smul.u32 32, %s39
          %s4283 = ssub.s32 4096, 4096
          %4284 = vsyncadd %s4274, %s4283
          %s4285 = smul.addr %s4281, 128
          %s4286 = scalar_lea.hbm %s15, %s4285
          %s4287 = sshll.u32 %s4277, 4
          %s4288 = int_to_ptr.vmem [resolvable:$true] %s4287
          %4293 = dma.vmem_to_hbm [thread:$0]  %s4288, 4096, %s4286, %s4274, 128, 128, 8
        $region116: #{tpu_custom_call.1} parent=79 // pred_fallthru
          _
      $region80: #{tpu_custom_call.1} parent=5 // pred_fallthru
        _
      %p4294 = scmp.le.s32.totalorder 2, %s30
      // Predicated region
      $region117: #{tpu_custom_call.1} parent=5 // pred_check
        %p4295 = pneg %p4294
      $region118: #{tpu_custom_call.1} parent=5 // pred_check_branch
        %4297 = sbr.rel (%p4295) target = $region120
      $region119: #{tpu_custom_call.1} parent=5 // pred_region
        %s4298 = ssub.s32 %s30, 2
        // Predicated region
        $region121: #{tpu_custom_call.1} parent=119 // pred_check
          %p4299 = pneg %p416
        $region122: #{tpu_custom_call.1} parent=119 // pred_check_branch
          %4301 = sbr.rel (%p4299) target = $region124
        $region123: #{tpu_custom_call.1} parent=119 // pred_region
          %s4302 = sand.u32 %s401, 1
          %s4303 = scalar_lea.sflag [#allocation5], %s4302
          %s4304 = sand.u32 %s401, 1
          %s4305 = smul.addr %s4304, 256
          %s4306 = scalar_lea.vmem [#allocation15], %s4305
          %4307 = dma.done %s4303, 4096
        $region124: #{tpu_custom_call.1} parent=119 // pred_fallthru
          _
      $region120: #{tpu_custom_call.1} parent=5 // pred_fallthru
        _
    $region6: #{tpu_custom_call.1} parent=1 // loop_footer
      %s34 = sadd.s32 1, %s30
    $region7: #{tpu_custom_call.1} parent=1 // loop_footer_branch
      %29 = sbr.rel target = $region3
    $region8: #{tpu_custom_call.1} parent=1 // loop_exit
      _
    %4308 = vsyncpa [#allocation4], 1
    %s4309 = scalar_lea.sflag [#allocation4], 1
    %4310 = vsyncpa %s4309, 1
    %4311 = vsyncpa [#allocation7], 1
    %4312 = vsyncpa [#allocation10], 1
    %4313 = vsyncpa [#allocation13], 1
    %4314 = vsyncpa [#allocation5], 1
    %s4315 = scalar_lea.sflag [#allocation5], 1
    %4316 = vsyncpa %s4315, 1

// kernel: tpu_custom_call.1
$region0: #{tpu_custom_call.1}
  #allocation0 [shape = 'u32[]', space=smem, size = 0x4, offset = 0x4, fixed_abs, tag = 'smem constant byte address 0x4 - core index']
  #allocation1 [shape = 'u32[144,128]{1,0:T(1,128)}', space=vmem, size = 0x12000, scoped, tag = 'internal scratch']
  #allocation2 [shape = 'bf16[256,384]{1,0:T(16,128)(2,1)}', space=vmem, size = 0x30000, scoped, tag = 'scratch operand']
  %s0 = inlined_call_operand.hbm [shape: bf16[512,128], index: 0, kind: input, shape index: {}]
  %s1 = inlined_call_operand.hbm [shape: bf16[128,256], index: 1, kind: input, shape index: {}]
  %s2 = inlined_call_operand.vmem [shape: f32[1,256], index: 2, kind: input, shape index: {}]
  %s3 = inlined_call_operand.hbm [shape: bf16[256,256], index: 3, kind: input, shape index: {}]
  %s4 = inlined_call_operand.vmem [shape: f32[1,256], index: 4, kind: input, shape index: {}]
  %s5 = inlined_call_operand.vmem [shape: f32[1,256], index: 5, kind: input, shape index: {}]
  %s6 = inlined_call_operand.vmem [shape: f32[1,256], index: 6, kind: input, shape index: {}]
  %s7 = inlined_call_operand.hbm [shape: bf16[256,128], index: 7, kind: input, shape index: {}]
  %s8 = inlined_call_operand.vmem [shape: f32[1,128], index: 8, kind: input, shape index: {}]
  %s9 = inlined_call_operand.vmem [shape: f32[1,128], index: 9, kind: input, shape index: {}]
  %s10 = inlined_call_operand.hbm [shape: bf16[384,128], index: 10, kind: input, shape index: {}]
  %s11 = inlined_call_operand.vmem [shape: f32[1,128], index: 11, kind: input, shape index: {}]
  %s12 = inlined_call_operand.hbm [shape: bf16[128,128], index: 12, kind: input, shape index: {}]
  %s13 = inlined_call_operand.vmem [shape: f32[1,128], index: 13, kind: input, shape index: {}]
  %s14 = inlined_call_operand.hbm [shape: bf16[128,128], index: 14, kind: input, shape index: {}]
  %s15 = inlined_call_operand.hbm [shape: f32[512,128], index: 15, kind: output, shape index: {}]
  %s16 = sld [smem:[#allocation0]]
  $region125: #{tpu_custom_call.1} parent=0
    _
  %s18 = ssub.s32 1, %s16
  %s19 = scalar_select 0, %s18, %s16
  $region1: #{tpu_custom_call.1} parent=0
    #allocation3 [shape = 'u8[131072]{0}', space=vmem, size = 0x20000, scoped, tag = 'input window, operand 0']
    #allocation4 [shape = 's32[2]{0}', space=sflag, size = 0x8, scoped, tag = 'scoped memory for tpu_custom_call.1']
    #allocation5 [shape = 's32[2]{0}', space=sflag, size = 0x8, scoped, tag = 'scoped memory for tpu_custom_call.1']
    #allocation6 [shape = 'u8[65536]{0}', space=vmem, size = 0x10000, scoped, tag = 'input window, operand 1, single buffered']
    #allocation7 [shape = 's32[1]{0}', space=sflag, size = 0x4, scoped, tag = 'scoped memory for tpu_custom_call.1']
    #allocation8 [shape = 'u8[131072]{0}', space=vmem, size = 0x20000, scoped, tag = 'input window, operand 3, single buffered']
    #allocation9 [shape = 'u8[65536]{0}', space=vmem, size = 0x10000, scoped, tag = 'input window, operand 7, single buffered']
    #allocation10 [shape = 's32[1]{0}', space=sflag, size = 0x4, scoped, tag = 'scoped memory for tpu_custom_call.1']
    #allocation11 [shape = 'u8[98304]{0}', space=vmem, size = 0x18000, scoped, tag = 'input window, operand 10, single buffered']
    #allocation12 [shape = 'u8[32768]{0}', space=vmem, size = 0x8000, scoped, tag = 'input window, operand 12, single buffered']
    #allocation13 [shape = 's32[1]{0}', space=sflag, size = 0x4, scoped, tag = 'scoped memory for tpu_custom_call.1']
    #allocation14 [shape = 'u8[32768]{0}', space=vmem, size = 0x8000, scoped, tag = 'input window, operand 14, single buffered']
    #allocation15 [shape = 'u8[262144]{0}', space=vmem, size = 0x40000, scoped, tag = 'output window, operand 0']
    %20 = vsyncpa [#allocation4], 0
    %s21 = scalar_lea.sflag [#allocation4], 1
    %22 = vsyncpa %s21, 0
    %23 = vsyncpa [#allocation7], 0
    %24 = vsyncpa [#allocation10], 0
    %25 = vsyncpa [#allocation13], 0
    %26 = vsyncpa [#allocation5], 0
    %s27 = scalar_lea.sflag [#allocation5], 1
    %28 = vsyncpa %s27, 0
    loop: start=0, step=1, limit=4
    $region2: #{tpu_custom_call.1} parent=1 // loop_pre_header
      _
    $region3: #{tpu_custom_call.1} parent=1 // loop_header
      %s30 = sphi 0, %s34
      %p31 = scmp.ge.s32.totalorder %s30, 4
      %s37 = sphi 0, %s49
      %s38 = sphi 0, %s45
      %s39 = sphi 0, %s37
      %s40 = sphi 0, %s38
      %s41 = sphi 0, %s39
      %s42 = sphi 0, %s40
      %s52 = sphi 0, %s54
      %s55 = sphi 0, %s52
      %s56 = sphi 0, %s55
      %s72 = sphi 0, %s56
      %s76 = sphi 0, %s76
      %s78 = sphi 0, %s76
      %s79 = sphi 0, %s78
      %s93 = sphi 0, %s79
      %s97 = sphi 0, %s97
      %s99 = sphi 0, %s97
      %s100 = sphi 0, %s99
      %s114 = sphi 0, %s100
      %s118 = sphi 0, %s118
      %s120 = sphi 0, %s118
      %s121 = sphi 0, %s120
      %s135 = sphi 0, %s121
      %s139 = sphi 0, %s139
      %s141 = sphi 0, %s139
      %s142 = sphi 0, %s141
      %s156 = sphi 0, %s142
      %s160 = sphi 0, %s160
      %s162 = sphi 0, %s160
      %s163 = sphi 0, %s162
      %s177 = sphi 0, %s163
      %s181 = sphi 0, %s181
      %s183 = sphi 0, %s181
      %s184 = sphi 0, %s183
      %s198 = sphi 0, %s184
      %s202 = sphi 0, %s202
      %s204 = sphi 0, %s202
      %s205 = sphi 0, %s204
      %s219 = sphi 0, %s205
      %s223 = sphi 0, %s223
      %s225 = sphi 0, %s223
      %s226 = sphi 0, %s225
      %s240 = sphi 0, %s226
      %s244 = sphi 0, %s244
      %s246 = sphi 0, %s244
      %s247 = sphi 0, %s246
      %s261 = sphi 0, %s247
      %s267 = sphi 0, %s269
      %s270 = sphi 0, %s267
      %s271 = sphi 0, %s270
      %s287 = sphi 0, %s271
      %s293 = sphi 0, %s295
      %s296 = sphi 0, %s293
      %s297 = sphi 0, %s296
      %s313 = sphi 0, %s297
      %s319 = sphi 0, %s321
      %s322 = sphi 0, %s319
      %s323 = sphi 0, %s322
      %s339 = sphi 0, %s323
      %s345 = sphi 0, %s347
      %s348 = sphi 0, %s345
      %s349 = sphi 0, %s348
      %s365 = sphi 0, %s349
      %s371 = sphi 0, %s373
      %s374 = sphi 0, %s371
      %s375 = sphi 0, %s374
      %s391 = sphi 0, %s375
      %s397 = sphi 0, %s399
      %s400 = sphi 0, %s397
      %s401 = sphi 0, %s400
      %s417 = sphi 0, %s401
    $region4: #{tpu_custom_call.1} parent=1 // loop_header_branch
      %33 = sbr.rel (%p31) target = $region8
    $region5: #{tpu_custom_call.1} parent=1 // loop_body
      %s35 = ssub.s32 %s30, 1
      %s36 = ssub.s32 %s30, 2
      %s43 = sadd.s32 1, %s38
      %p44 = scmp.ge.s32.totalorder %s43, 1
      %s45 = scalar_select %p44, 0, %s43
      %s46 = sadd.s32 1, %s37
      %s47 = scalar_select %p44, %s46, %s37
      %p48 = scmp.ge.s32.totalorder %s47, 2
      %s49 = scalar_select %p48, 0, %s47
      %s50 = ssub.s32 %s37, %s49
      %p51 = scmp.eq.s32.totalorder %s50, 0
      %s53 = sadd.s32 %s52, 1
      %s54 = scalar_select %p51, %s52, %s53
      %p57 = pneg %p51
      %p58 = scmp.eq.s32.totalorder %s30, 1
      %p59 = por %p57, %p58
      %p60 = scmp.ne.s32.totalorder %s52, %s55
      %p61 = scmp.eq.s32.totalorder %s30, 0
      %p62 = por %p60, %p61
      %p63 = scmp.ne.s32.totalorder %s52, %s55
      %p64 = scmp.eq.s32.totalorder %s35, 1
      %p65 = por %p63, %p64
      %p66 = scmp.ne.s32.totalorder %s55, %s56
      %p67 = scmp.eq.s32.totalorder %s35, 0
      %p68 = por %p66, %p67
      %p69 = scmp.ne.s32.totalorder %s55, %s56
      %p70 = scmp.eq.s32.totalorder %s36, 1
      %p71 = por %p69, %p70
      %p73 = scmp.ne.s32.totalorder %s56, %s72
      %p74 = scmp.eq.s32.totalorder %s36, 0
      %p75 = por %p73, %p74
      %s77 = sadd.s32 %s76, 1
      %p80 = scmp.eq.s32.totalorder %s30, 1
      %p81 = scmp.ne.s32.totalorder %s76, %s78
      %p82 = scmp.eq.s32.totalorder %s30, 0
      %p83 = por %p81, %p82
      %p84 = scmp.ne.s32.totalorder %s76, %s78
      %p85 = scmp.eq.s32.totalorder %s35, 1
      %p86 = por %p84, %p85
      %p87 = scmp.ne.s32.totalorder %s78, %s79
      %p88 = scmp.eq.s32.totalorder %s35, 0
      %p89 = por %p87, %p88
      %p90 = scmp.ne.s32.totalorder %s78, %s79
      %p91 = scmp.eq.s32.totalorder %s36, 1
      %p92 = por %p90, %p91
      %p94 = scmp.ne.s32.totalorder %s79, %s93
      %p95 = scmp.eq.s32.totalorder %s36, 0
      %p96 = por %p94, %p95
      %s98 = sadd.s32 %s97, 1
      %p101 = scmp.eq.s32.totalorder %s30, 1
      %p102 = scmp.ne.s32.totalorder %s97, %s99
      %p103 = scmp.eq.s32.totalorder %s30, 0
      %p104 = por %p102, %p103
      %p105 = scmp.ne.s32.totalorder %s97, %s99
      %p106 = scmp.eq.s32.totalorder %s35, 1
      %p107 = por %p105, %p106
      %p108 = scmp.ne.s32.totalorder %s99, %s100
      %p109 = scmp.eq.s32.totalorder %s35, 0
      %p110 = por %p108, %p109
      %p111 = scmp.ne.s32.totalorder %s99, %s100
      %p112 = scmp.eq.s32.totalorder %s36, 1
      %p113 = por %p111, %p112
      %p115 = scmp.ne.s32.totalorder %s100, %s114
      %p116 = scmp.eq.s32.totalorder %s36, 0
      %p117 = por %p115, %p116
      %s119 = sadd.s32 %s118, 1
      %p122 = scmp.eq.s32.totalorder %s30, 1
      %p123 = scmp.ne.s32.totalorder %s118, %s120
      %p124 = scmp.eq.s32.totalorder %s30, 0
      %p125 = por %p123, %p124
      %p126 = scmp.ne.s32.totalorder %s118, %s120
      %p127 = scmp.eq.s32.totalorder %s35, 1
      %p128 = por %p126, %p127
      %p129 = scmp.ne.s32.totalorder %s120, %s121
      %p130 = scmp.eq.s32.totalorder %s35, 0
      %p131 = por %p129, %p130
      %p132 = scmp.ne.s32.totalorder %s120, %s121
      %p133 = scmp.eq.s32.totalorder %s36, 1
      %p134 = por %p132, %p133
      %p136 = scmp.ne.s32.totalorder %s121, %s135
      %p137 = scmp.eq.s32.totalorder %s36, 0
      %p138 = por %p136, %p137
      %s140 = sadd.s32 %s139, 1
      %p143 = scmp.eq.s32.totalorder %s30, 1
      %p144 = scmp.ne.s32.totalorder %s139, %s141
      %p145 = scmp.eq.s32.totalorder %s30, 0
      %p146 = por %p144, %p145
      %p147 = scmp.ne.s32.totalorder %s139, %s141
      %p148 = scmp.eq.s32.totalorder %s35, 1
      %p149 = por %p147, %p148
      %p150 = scmp.ne.s32.totalorder %s141, %s142
      %p151 = scmp.eq.s32.totalorder %s35, 0
      %p152 = por %p150, %p151
      %p153 = scmp.ne.s32.totalorder %s141, %s142
      %p154 = scmp.eq.s32.totalorder %s36, 1
      %p155 = por %p153, %p154
      %p157 = scmp.ne.s32.totalorder %s142, %s156
      %p158 = scmp.eq.s32.totalorder %s36, 0
      %p159 = por %p157, %p158
      %s161 = sadd.s32 %s160, 1
      %p164 = scmp.eq.s32.totalorder %s30, 1
      %p165 = scmp.ne.s32.totalorder %s160, %s162
      %p166 = scmp.eq.s32.totalorder %s30, 0
      %p167 = por %p165, %p166
      %p168 = scmp.ne.s32.totalorder %s160, %s162
      %p169 = scmp.eq.s32.totalorder %s35, 1
      %p170 = por %p168, %p169
      %p171 = scmp.ne.s32.totalorder %s162, %s163
      %p172 = scmp.eq.s32.totalorder %s35, 0
      %p173 = por %p171, %p172
      %p174 = scmp.ne.s32.totalorder %s162, %s163
      %p175 = scmp.eq.s32.totalorder %s36, 1
      %p176 = por %p174, %p175
      %p178 = scmp.ne.s32.totalorder %s163, %s177
      %p179 = scmp.eq.s32.totalorder %s36, 0
      %p180 = por %p178, %p179
      %s182 = sadd.s32 %s181, 1
      %p185 = scmp.eq.s32.totalorder %s30, 1
      %p186 = scmp.ne.s32.totalorder %s181, %s183
      %p187 = scmp.eq.s32.totalorder %s30, 0
      %p188 = por %p186, %p187
      %p189 = scmp.ne.s32.totalorder %s181, %s183
      %p190 = scmp.eq.s32.totalorder %s35, 1
      %p191 = por %p189, %p190
      %p192 = scmp.ne.s32.totalorder %s183, %s184
      %p193 = scmp.eq.s32.totalorder %s35, 0
      %p194 = por %p192, %p193
      %p195 = scmp.ne.s32.totalorder %s183, %s184
      %p196 = scmp.eq.s32.totalorder %s36, 1
      %p197 = por %p195, %p196
      %p199 = scmp.ne.s32.totalorder %s184, %s198
      %p200 = scmp.eq.s32.totalorder %s36, 0
      %p201 = por %p199, %p200
      %s203 = sadd.s32 %s202, 1
      %p206 = scmp.eq.s32.totalorder %s30, 1
      %p207 = scmp.ne.s32.totalorder %s202, %s204
      %p208 = scmp.eq.s32.totalorder %s30, 0
      %p209 = por %p207, %p208
      %p210 = scmp.ne.s32.totalorder %s202, %s204
      %p211 = scmp.eq.s32.totalorder %s35, 1
      %p212 = por %p210, %p211
      %p213 = scmp.ne.s32.totalorder %s204, %s205
      %p214 = scmp.eq.s32.totalorder %s35, 0
      %p215 = por %p213, %p214
      %p216 = scmp.ne.s32.totalorder %s204, %s205
      %p217 = scmp.eq.s32.totalorder %s36, 1
      %p218 = por %p216, %p217
      %p220 = scmp.ne.s32.totalorder %s205, %s219
      %p221 = scmp.eq.s32.totalorder %s36, 0
      %p222 = por %p220, %p221
      %s224 = sadd.s32 %s223, 1
      %p227 = scmp.eq.s32.totalorder %s30, 1
      %p228 = scmp.ne.s32.totalorder %s223, %s225
      %p229 = scmp.eq.s32.totalorder %s30, 0
      %p230 = por %p228, %p229
      %p231 = scmp.ne.s32.totalorder %s223, %s225
      %p232 = scmp.eq.s32.totalorder %s35, 1
      %p233 = por %p231, %p232
      %p234 = scmp.ne.s32.totalorder %s225, %s226
      %p235 = scmp.eq.s32.totalorder %s35, 0
      %p236 = por %p234, %p235
      %p237 = scmp.ne.s32.totalorder %s225, %s226
      %p238 = scmp.eq.s32.totalorder %s36, 1
      %p239 = por %p237, %p238
      %p241 = scmp.ne.s32.totalorder %s226, %s240
      %p242 = scmp.eq.s32.totalorder %s36, 0
      %p243 = por %p241, %p242
      %s245 = sadd.s32 %s244, 1
      %p248 = scmp.eq.s32.totalorder %s30, 1
      %p249 = scmp.ne.s32.totalorder %s244, %s246
      %p250 = scmp.eq.s32.totalorder %s30, 0
      %p251 = por %p249, %p250
      %p252 = scmp.ne.s32.totalorder %s244, %s246
      %p253 = scmp.eq.s32.totalorder %s35, 1
      %p254 = por %p252, %p253
      %p255 = scmp.ne.s32.totalorder %s246, %s247
      %p256 = scmp.eq.s32.totalorder %s35, 0
      %p257 = por %p255, %p256
      %p258 = scmp.ne.s32.totalorder %s246, %s247
      %p259 = scmp.eq.s32.totalorder %s36, 1
      %p260 = por %p258, %p259
      %p262 = scmp.ne.s32.totalorder %s247, %s261
      %p263 = scmp.eq.s32.totalorder %s36, 0
      %p264 = por %p262, %p263
      %s265 = ssub.s32 %s38, %s45
      %p266 = scmp.eq.s32.totalorder %s265, 0
      %s268 = sadd.s32 %s267, 1
      %s269 = scalar_select %p266, %s267, %s268
      %p272 = pneg %p266
      %p273 = scmp.eq.s32.totalorder %s30, 1
      %p274 = por %p272, %p273
      %p275 = scmp.ne.s32.totalorder %s267, %s270
      %p276 = scmp.eq.s32.totalorder %s30, 0
      %p277 = por %p275, %p276
      %p278 = scmp.ne.s32.totalorder %s267, %s270
      %p279 = scmp.eq.s32.totalorder %s35, 1
      %p280 = por %p278, %p279
      %p281 = scmp.ne.s32.totalorder %s270, %s271
      %p282 = scmp.eq.s32.totalorder %s35, 0
      %p283 = por %p281, %p282
      %p284 = scmp.ne.s32.totalorder %s270, %s271
      %p285 = scmp.eq.s32.totalorder %s36, 1
      %p286 = por %p284, %p285
      %p288 = scmp.ne.s32.totalorder %s271, %s287
      %p289 = scmp.eq.s32.totalorder %s36, 0
      %p290 = por %p288, %p289
      %s291 = ssub.s32 %s38, %s45
      %p292 = scmp.eq.s32.totalorder %s291, 0
      %s294 = sadd.s32 %s293, 1
      %s295 = scalar_select %p292, %s293, %s294
      %p298 = pneg %p292
      %p299 = scmp.eq.s32.totalorder %s30, 1
      %p300 = por %p298, %p299
      %p301 = scmp.ne.s32.totalorder %s293, %s296
      %p302 = scmp.eq.s32.totalorder %s30, 0
      %p303 = por %p301, %p302
      %p304 = scmp.ne.s32.totalorder %s293, %s296
      %p305 = scmp.eq.s32.totalorder %s35, 1
      %p306 = por %p304, %p305
      %p307 = scmp.ne.s32.totalorder %s296, %s297
      %p308 = scmp.eq.s32.totalorder %s35, 0
      %p309 = por %p307, %p308
      %p310 = scmp.ne.s32.totalorder %s296, %s297
      %p311 = scmp.eq.s32.totalorder %s36, 1
      %p312 = por %p310, %p311
      %p314 = scmp.ne.s32.totalorder %s297, %s313
      %p315 = scmp.eq.s32.totalorder %s36, 0
      %p316 = por %p314, %p315
      %s317 = ssub.s32 %s38, %s45
      %p318 = scmp.eq.s32.totalorder %s317, 0
      %s320 = sadd.s32 %s319, 1
      %s321 = scalar_select %p318, %s319, %s320
      %p324 = pneg %p318
      %p325 = scmp.eq.s32.totalorder %s30, 1
      %p326 = por %p324, %p325
      %p327 = scmp.ne.s32.totalorder %s319, %s322
      %p328 = scmp.eq.s32.totalorder %s30, 0
      %p329 = por %p327, %p328
      %p330 = scmp.ne.s32.totalorder %s319, %s322
      %p331 = scmp.eq.s32.totalorder %s35, 1
      %p332 = por %p330, %p331
      %p333 = scmp.ne.s32.totalorder %s322, %s323
      %p334 = scmp.eq.s32.totalorder %s35, 0
      %p335 = por %p333, %p334
      %p336 = scmp.ne.s32.totalorder %s322, %s323
      %p337 = scmp.eq.s32.totalorder %s36, 1
      %p338 = por %p336, %p337
      %p340 = scmp.ne.s32.totalorder %s323, %s339
      %p341 = scmp.eq.s32.totalorder %s36, 0
      %p342 = por %p340, %p341
      %s343 = ssub.s32 %s38, %s45
      %p344 = scmp.eq.s32.totalorder %s343, 0
      %s346 = sadd.s32 %s345, 1
      %s347 = scalar_select %p344, %s345, %s346
      %p350 = pneg %p344
      %p351 = scmp.eq.s32.totalorder %s30, 1
      %p352 = por %p350, %p351
      %p353 = scmp.ne.s32.totalorder %s345, %s348
      %p354 = scmp.eq.s32.totalorder %s30, 0
      %p355 = por %p353, %p354
      %p356 = scmp.ne.s32.totalorder %s345, %s348
      %p357 = scmp.eq.s32.totalorder %s35, 1
      %p358 = por %p356, %p357
      %p359 = scmp.ne.s32.totalorder %s348, %s349
      %p360 = scmp.eq.s32.totalorder %s35, 0
      %p361 = por %p359, %p360
      %p362 = scmp.ne.s32.totalorder %s348, %s349
      %p363 = scmp.eq.s32.totalorder %s36, 1
      %p364 = por %p362, %p363
      %p366 = scmp.ne.s32.totalorder %s349, %s365
      %p367 = scmp.eq.s32.totalorder %s36, 0
      %p368 = por %p366, %p367
      %s369 = ssub.s32 %s38, %s45
      %p370 = scmp.eq.s32.totalorder %s369, 0
      %s372 = sadd.s32 %s371, 1
      %s373 = scalar_select %p370, %s371, %s372
      %p376 = pneg %p370
      %p377 = scmp.eq.s32.totalorder %s30, 1
      %p378 = por %p376, %p377
      %p379 = scmp.ne.s32.totalorder %s371, %s374
      %p380 = scmp.eq.s32.totalorder %s30, 0
      %p381 = por %p379, %p380
      %p382 = scmp.ne.s32.totalorder %s371, %s374
      %p383 = scmp.eq.s32.totalorder %s35, 1
      %p384 = por %p382, %p383
      %p385 = scmp.ne.s32.totalorder %s374, %s375
      %p386 = scmp.eq.s32.totalorder %s35, 0
      %p387 = por %p385, %p386
      %p388 = scmp.ne.s32.totalorder %s374, %s375
      %p389 = scmp.eq.s32.totalorder %s36, 1
      %p390 = por %p388, %p389
      %p392 = scmp.ne.s32.totalorder %s375, %s391
      %p393 = scmp.eq.s32.totalorder %s36, 0
      %p394 = por %p392, %p393
      %s395 = ssub.s32 %s37, %s49
      %p396 = scmp.eq.s32.totalorder %s395, 0
      %s398 = sadd.s32 %s397, 1
      %s399 = scalar_select %p396, %s397, %s398
      %p402 = pneg %p396
      %p403 = scmp.eq.s32.totalorder %s30, 1
      %p404 = por %p402, %p403
      %p405 = scmp.ne.s32.totalorder %s397, %s400
      %p406 = scmp.eq.s32.totalorder %s30, 0
      %p407 = por %p405, %p406
      %p408 = scmp.ne.s32.totalorder %s397, %s400
      %p409 = scmp.eq.s32.totalorder %s35, 1
      %p410 = por %p408, %p409
      %p411 = scmp.ne.s32.totalorder %s400, %s401
      %p412 = scmp.eq.s32.totalorder %s35, 0
      %p413 = por %p411, %p412
      %p414 = scmp.ne.s32.totalorder %s400, %s401
      %p415 = scmp.eq.s32.totalorder %s36, 1
      %p416 = por %p414, %p415
      %p418 = scmp.ne.s32.totalorder %s401, %s417
      %p419 = scmp.eq.s32.totalorder %s36, 0
      %p420 = por %p418, %p419
      %p421 = scmp.le.s32.totalorder 1, %s30
      %p422 = scmp.lt.s32.totalorder %s30, 3
      %p423 = pnand %p421, %p422
      %p424 = pneg %p423
      // Predicated region
      $region9: #{tpu_custom_call.1} parent=5 // pred_check
        _
      $region10: #{tpu_custom_call.1} parent=5 // pred_check_branch
        %426 = sbr.rel (%p423) target = $region12
      $region11: #{tpu_custom_call.1} parent=5 // pred_region
        %s427 = ssub.s32 %s30, 1
        // Predicated region
        $region13: #{tpu_custom_call.1} parent=11 // pred_check
          %p428 = pneg %p89
        $region14: #{tpu_custom_call.1} parent=11 // pred_check_branch
          %430 = sbr.rel (%p428) target = $region16
        $region15: #{tpu_custom_call.1} parent=11 // pred_region
          %s432 = ssub.s32 2048, 2048
          %433 = vsyncadd [#allocation7], %s432
          %s434 = sshll.u32 [#allocation6], 4
          %s435 = int_to_ptr.vmem [resolvable:$true] %s434
          %440 = dma.hbm_to_vmem [thread:$0]  %s1, 2048, %s435, [#allocation7], 128, 128, 8
        $region16: #{tpu_custom_call.1} parent=11 // pred_fallthru
          _
        // Predicated region
        $region17: #{tpu_custom_call.1} parent=11 // pred_check
          %p441 = pneg %p110
        $region18: #{tpu_custom_call.1} parent=11 // pred_check_branch
          %443 = sbr.rel (%p441) target = $region20
        $region19: #{tpu_custom_call.1} parent=11 // pred_region
          _
        $region20: #{tpu_custom_call.1} parent=11 // pred_fallthru
          _
        // Predicated region
        $region21: #{tpu_custom_call.1} parent=11 // pred_check
          %p444 = pneg %p131
        $region22: #{tpu_custom_call.1} parent=11 // pred_check_branch
          %446 = sbr.rel (%p444) target = $region24
        $region23: #{tpu_custom_call.1} parent=11 // pred_region
          %s448 = ssub.s32 4096, 4096
          %449 = vsyncadd [#allocation7], %s448
          %s450 = sshll.u32 [#allocation8], 4
          %s451 = int_to_ptr.vmem [resolvable:$true] %s450
          %456 = dma.hbm_to_vmem [thread:$0]  %s3, 4096, %s451, [#allocation7], 128, 128, 8
        $region24: #{tpu_custom_call.1} parent=11 // pred_fallthru
          _
        // Predicated region
        $region25: #{tpu_custom_call.1} parent=11 // pred_check
          %p457 = pneg %p152
        $region26: #{tpu_custom_call.1} parent=11 // pred_check_branch
          %459 = sbr.rel (%p457) target = $region28
        $region27: #{tpu_custom_call.1} parent=11 // pred_region
          _
        $region28: #{tpu_custom_call.1} parent=11 // pred_fallthru
          _
        // Predicated region
        $region29: #{tpu_custom_call.1} parent=11 // pred_check
          %p460 = pneg %p173
        $region30: #{tpu_custom_call.1} parent=11 // pred_check_branch
          %462 = sbr.rel (%p460) target = $region32
        $region31: #{tpu_custom_call.1} parent=11 // pred_region
          _
        $region32: #{tpu_custom_call.1} parent=11 // pred_fallthru
          _
        // Predicated region
        $region33: #{tpu_custom_call.1} parent=11 // pred_check
          %p463 = pneg %p194
        $region34: #{tpu_custom_call.1} parent=11 // pred_check_branch
          %465 = sbr.rel (%p463) target = $region36
        $region35: #{tpu_custom_call.1} parent=11 // pred_region
          _
        $region36: #{tpu_custom_call.1} parent=11 // pred_fallthru
          _
        // Predicated region
        $region37: #{tpu_custom_call.1} parent=11 // pred_check
          %p466 = pneg %p215
        $region38: #{tpu_custom_call.1} parent=11 // pred_check_branch
          %468 = sbr.rel (%p466) target = $region40
        $region39: #{tpu_custom_call.1} parent=11 // pred_region
          %s470 = ssub.s32 2048, 2048
          %471 = vsyncadd [#allocation10], %s470
          %s472 = sshll.u32 [#allocation9], 4
          %s473 = int_to_ptr.vmem [resolvable:$true] %s472
          %478 = dma.hbm_to_vmem [thread:$0]  %s7, 2048, %s473, [#allocation10], 64, 64, 4
        $region40: #{tpu_custom_call.1} parent=11 // pred_fallthru
          _
        // Predicated region
        $region41: #{tpu_custom_call.1} parent=11 // pred_check
          %p479 = pneg %p236
        $region42: #{tpu_custom_call.1} parent=11 // pred_check_branch
          %481 = sbr.rel (%p479) target = $region44
        $region43: #{tpu_custom_call.1} parent=11 // pred_region
          _
        $region44: #{tpu_custom_call.1} parent=11 // pred_fallthru
          _
        // Predicated region
        $region45: #{tpu_custom_call.1} parent=11 // pred_check
          %p482 = pneg %p257
        $region46: #{tpu_custom_call.1} parent=11 // pred_check_branch
          %484 = sbr.rel (%p482) target = $region48
        $region47: #{tpu_custom_call.1} parent=11 // pred_region
          _
        $region48: #{tpu_custom_call.1} parent=11 // pred_fallthru
          _
        // Predicated region
        $region49: #{tpu_custom_call.1} parent=11 // pred_check
          %p485 = pneg %p283
        $region50: #{tpu_custom_call.1} parent=11 // pred_check_branch
          %487 = sbr.rel (%p485) target = $region52
        $region51: #{tpu_custom_call.1} parent=11 // pred_region
          %s489 = ssub.s32 3072, 3072
          %490 = vsyncadd [#allocation10], %s489
          %s491 = smul.addr %s40, 64
          %s492 = scalar_lea.hbm %s10, %s491
          %s493 = sshll.u32 [#allocation11], 4
          %s494 = int_to_ptr.vmem [resolvable:$true] %s493
          %499 = dma.hbm_to_vmem [thread:$0]  %s492, 3072, %s494, [#allocation10], 64, 64, 4
        $region52: #{tpu_custom_call.1} parent=11 // pred_fallthru
          _
        // Predicated region
        $region53: #{tpu_custom_call.1} parent=11 // pred_check
          %p500 = pneg %p309
        $region54: #{tpu_custom_call.1} parent=11 // pred_check_branch
          %502 = sbr.rel (%p500) target = $region56
        $region55: #{tpu_custom_call.1} parent=11 // pred_region
          %p503 = scmp.lt.s32.totalorder %s40, 0
          %s504 = scalar_select %p503, %s40, 0
          %s505 = scalar_lea.vmem %s11, %s504
        $region56: #{tpu_custom_call.1} parent=11 // pred_fallthru
          _
        // Predicated region
        $region57: #{tpu_custom_call.1} parent=11 // pred_check
          %p506 = pneg %p335
        $region58: #{tpu_custom_call.1} parent=11 // pred_check_branch
          %508 = sbr.rel (%p506) target = $region60
        $region59: #{tpu_custom_call.1} parent=11 // pred_region
          %s510 = ssub.s32 1024, 1024
          %511 = vsyncadd [#allocation13], %s510
          %s512 = smul.addr %s40, 64
          %s513 = scalar_lea.hbm %s12, %s512
          %s514 = sshll.u32 [#allocation12], 4
          %s515 = int_to_ptr.vmem [resolvable:$true] %s514
          %520 = dma.hbm_to_vmem [thread:$0]  %s513, 1024, %s515, [#allocation13], 64, 64, 4
        $region60: #{tpu_custom_call.1} parent=11 // pred_fallthru
          _
        // Predicated region
        $region61: #{tpu_custom_call.1} parent=11 // pred_check
          %p521 = pneg %p361
        $region62: #{tpu_custom_call.1} parent=11 // pred_check_branch
          %523 = sbr.rel (%p521) target = $region64
        $region63: #{tpu_custom_call.1} parent=11 // pred_region
          %p524 = scmp.lt.s32.totalorder %s40, 0
          %s525 = scalar_select %p524, %s40, 0
          %s526 = scalar_lea.vmem %s13, %s525
        $region64: #{tpu_custom_call.1} parent=11 // pred_fallthru
          _
        // Predicated region
        $region65: #{tpu_custom_call.1} parent=11 // pred_check
          %p527 = pneg %p387
        $region66: #{tpu_custom_call.1} parent=11 // pred_check_branch
          %529 = sbr.rel (%p527) target = $region68
        $region67: #{tpu_custom_call.1} parent=11 // pred_region
          %s530 = smul.u32 16, %s40
          %s532 = ssub.s32 1024, 1024
          %533 = vsyncadd [#allocation13], %s532
          %s534 = smul.addr %s530, 64
          %s535 = scalar_lea.hbm %s14, %s534
          %s536 = sshll.u32 [#allocation14], 4
          %s537 = int_to_ptr.vmem [resolvable:$true] %s536
          %542 = dma.hbm_to_vmem [thread:$0]  %s535, 1024, %s537, [#allocation13], 64, 64, 4
        $region68: #{tpu_custom_call.1} parent=11 // pred_fallthru
          _
      $region12: #{tpu_custom_call.1} parent=5 // pred_fallthru
        _
      %p543 = scmp.lt.s32.totalorder %s30, 2
      // Predicated region
      $region69: #{tpu_custom_call.1} parent=5 // pred_check
        %p544 = pneg %p543
      $region70: #{tpu_custom_call.1} parent=5 // pred_check_branch
        %546 = sbr.rel (%p544) target = $region72
      $region71: #{tpu_custom_call.1} parent=5 // pred_region
        // Predicated region
        $region73: #{tpu_custom_call.1} parent=71 // pred_check
          %p547 = pneg %p62
        $region74: #{tpu_custom_call.1} parent=71 // pred_check_branch
          %549 = sbr.rel (%p547) target = $region76
        $region75: #{tpu_custom_call.1} parent=71 // pred_region
          %s550 = sand.u32 %s52, 1
          %s551 = scalar_lea.sflag [#allocation4], %s550
          %s552 = sand.u32 %s52, 1
          %s553 = smul.addr %s552, 128
          %s554 = scalar_lea.vmem [#allocation3], %s553
          %s555 = smul.u32 32, %s37
          %s557 = ssub.s32 2048, 2048
          %558 = vsyncadd %s551, %s557
          %s559 = smul.addr %s555, 64
          %s560 = scalar_lea.hbm %s0, %s559
          %s561 = sshll.u32 %s554, 4
          %s562 = int_to_ptr.vmem [resolvable:$true] %s561
          %567 = dma.hbm_to_vmem [thread:$0]  %s560, 2048, %s562, %s551, 64, 64, 4
        $region76: #{tpu_custom_call.1} parent=71 // pred_fallthru
          _
      $region72: #{tpu_custom_call.1} parent=5 // pred_fallthru
        _
      %p568 = scmp.le.s32.totalorder 1, %s30
      %p569 = scmp.lt.s32.totalorder %s30, 3
      %p570 = pnand %p568, %p569
      %p571 = pneg %p570
      // Predicated region
      $region77: #{tpu_custom_call.1} parent=5 // pred_check
        _
      $region78: #{tpu_custom_call.1} parent=5 // pred_check_branch
        %573 = sbr.rel (%p570) target = $region80
      $region79: #{tpu_custom_call.1} parent=5 // pred_region
        %s574 = ssub.s32 %s30, 1
        %s575 = sand.u32 %s55, 1
        %s576 = scalar_lea.sflag [#allocation4], %s575
        %s577 = sand.u32 %s55, 1
        %s578 = smul.addr %s577, 128
        %s579 = scalar_lea.vmem [#allocation3], %s578
        // Predicated region
        $region81: #{tpu_custom_call.1} parent=79 // pred_check
          %p580 = pneg %p68
        $region82: #{tpu_custom_call.1} parent=79 // pred_check_branch
          %582 = sbr.rel (%p580) target = $region84
        $region83: #{tpu_custom_call.1} parent=79 // pred_region
          %583 = dma.done %s576, 2048
        $region84: #{tpu_custom_call.1} parent=79 // pred_fallthru
          _
        // Predicated region
        $region85: #{tpu_custom_call.1} parent=79 // pred_check
          %p584 = pneg %p89
        $region86: #{tpu_custom_call.1} parent=79 // pred_check_branch
          %586 = sbr.rel (%p584) target = $region88
        $region87: #{tpu_custom_call.1} parent=79 // pred_region
          %587 = dma.done [#allocation7], 2048
        $region88: #{tpu_custom_call.1} parent=79 // pred_fallthru
          _
        // Predicated region
        $region89: #{tpu_custom_call.1} parent=79 // pred_check
          %p588 = pneg %p131
        $region90: #{tpu_custom_call.1} parent=79 // pred_check_branch
          %590 = sbr.rel (%p588) target = $region92
        $region91: #{tpu_custom_call.1} parent=79 // pred_region
          %591 = dma.done [#allocation7], 4096
        $region92: #{tpu_custom_call.1} parent=79 // pred_fallthru
          _
        // Predicated region
        $region93: #{tpu_custom_call.1} parent=79 // pred_check
          %p592 = pneg %p215
        $region94: #{tpu_custom_call.1} parent=79 // pred_check_branch
          %594 = sbr.rel (%p592) target = $region96
        $region95: #{tpu_custom_call.1} parent=79 // pred_region
          %595 = dma.done [#allocation10], 2048
        $region96: #{tpu_custom_call.1} parent=79 // pred_fallthru
          _
        // Predicated region
        $region97: #{tpu_custom_call.1} parent=79 // pred_check
          %p596 = pneg %p283
        $region98: #{tpu_custom_call.1} parent=79 // pred_check_branch
          %598 = sbr.rel (%p596) target = $region100
        $region99: #{tpu_custom_call.1} parent=79 // pred_region
          %599 = dma.done [#allocation10], 3072
        $region100: #{tpu_custom_call.1} parent=79 // pred_fallthru
          _
        // Predicated region
        $region101: #{tpu_custom_call.1} parent=79 // pred_check
          %p600 = pneg %p335
        $region102: #{tpu_custom_call.1} parent=79 // pred_check_branch
          %602 = sbr.rel (%p600) target = $region104
        $region103: #{tpu_custom_call.1} parent=79 // pred_region
          %603 = dma.done [#allocation13], 1024
        $region104: #{tpu_custom_call.1} parent=79 // pred_fallthru
          _
        // Predicated region
        $region105: #{tpu_custom_call.1} parent=79 // pred_check
          %p604 = pneg %p387
        $region106: #{tpu_custom_call.1} parent=79 // pred_check_branch
          %606 = sbr.rel (%p604) target = $region108
        $region107: #{tpu_custom_call.1} parent=79 // pred_region
          %607 = dma.done [#allocation13], 1024
        $region108: #{tpu_custom_call.1} parent=79 // pred_fallthru
          _
        %s608 = sand.u32 %s55, 1
        %s609 = scalar_lea.sflag [#allocation4], %s608
        %s610 = sand.u32 %s55, 1
        %s611 = smul.addr %s610, 128
        %s612 = scalar_lea.vmem [#allocation3], %s611
        %p613 = pneg %p68
        %p614 = pneg %p65
        %p615 = pneg %p89
        %p616 = pneg %p86
        %p617 = pneg %p110
        %p618 = pneg %p107
        %p619 = pneg %p131
        %p620 = pneg %p128
        %p621 = pneg %p152
        %p622 = pneg %p149
        %p623 = pneg %p173
        %p624 = pneg %p170
        %p625 = pneg %p194
        %p626 = pneg %p191
        %p627 = pneg %p215
        %p628 = pneg %p212
        %p629 = pneg %p236
        %p630 = pneg %p233
        %p631 = pneg %p257
        %p632 = pneg %p254
        %p633 = pneg %p283
        %p634 = pneg %p280
        %p635 = scmp.lt.s32.totalorder %s40, 0
        %s636 = scalar_select %p635, %s40, 0
        %s637 = scalar_lea.vmem %s11, %s636
        %p638 = pneg %p309
        %p639 = pneg %p306
        %p640 = pneg %p335
        %p641 = pneg %p332
        %p642 = scmp.lt.s32.totalorder %s40, 0
        %s643 = scalar_select %p642, %s40, 0
        %s644 = scalar_lea.vmem %s13, %s643
        %p645 = pneg %p361
        %p646 = pneg %p358
        %p647 = pneg %p387
        %p648 = pneg %p384
        %p649 = pneg %p413
        %p650 = pneg %p410
        %s651 = sand.u32 %s400, 1
        %s652 = scalar_lea.sflag [#allocation5], %s651
        %s653 = sand.u32 %s400, 1
        %s654 = smul.addr %s653, 256
        %s655 = scalar_lea.vmem [#allocation15], %s654
        %s656 = smul.u32 32, %s39
        %p657 = scmp.lt.s32.totalorder %s40, 0
        %s658 = scalar_select %p657, %s40, 0
        %s659 = scalar_lea.vmem %s11, %s658
        %p660 = scmp.lt.s32.totalorder %s40, 0
        %s661 = scalar_select %p660, %s40, 0
        %s662 = scalar_lea.vmem %s13, %s661
        %s663 = smul.u32 16, %s40
        %s664 = smul.u32 32, %s39
        %p666 = scmp.eq.s32.totalorder %s40, 0
        // Predicated region
        $region109: #{tpu_custom_call.1} parent=79 // pred_check
          %p667 = pneg %p666
        $region110: #{tpu_custom_call.1} parent=79 // pred_check_branch
          %669 = sbr.rel (%p667) target = $region112
        $region111: #{tpu_custom_call.1} parent=79 // pred_region
          %v670 = vld [vmem:[%s579] sm:$0xf]
          %v671 = vld [vmem:[%s579 + $0x4] sm:$0xf]
          %v672 = vld [vmem:[%s579 + $0x8] sm:$0xf]
          %v673 = vld [vmem:[%s579 + $0xc] sm:$0xf]
          %v674 = vld [vmem:[%s579 + $0x10] sm:$0xf]
          %v675 = vld [vmem:[%s579 + $0x14] sm:$0xf]
          %v676 = vld [vmem:[%s579 + $0x18] sm:$0xf]
          %v677 = vld [vmem:[%s579 + $0x1c] sm:$0xf]
          %v678 = vld [vmem:[%s579 + $0x20] sm:$0xf]
          %v679 = vld [vmem:[%s579 + $0x24] sm:$0xf]
          %v680 = vld [vmem:[%s579 + $0x28] sm:$0xf]
          %v681 = vld [vmem:[%s579 + $0x2c] sm:$0xf]
          %v682 = vld [vmem:[%s579 + $0x30] sm:$0xf]
          %v683 = vld [vmem:[%s579 + $0x34] sm:$0xf]
          %v684 = vld [vmem:[%s579 + $0x38] sm:$0xf]
          %v685 = vld [vmem:[%s579 + $0x3c] sm:$0xf]
          %v686 = vld [vmem:[%s579 + $0x40] sm:$0xf]
          %v687 = vld [vmem:[%s579 + $0x44] sm:$0xf]
          %v688 = vld [vmem:[%s579 + $0x48] sm:$0xf]
          %v689 = vld [vmem:[%s579 + $0x4c] sm:$0xf]
          %v690 = vld [vmem:[%s579 + $0x50] sm:$0xf]
          %v691 = vld [vmem:[%s579 + $0x54] sm:$0xf]
          %v692 = vld [vmem:[%s579 + $0x58] sm:$0xf]
          %v693 = vld [vmem:[%s579 + $0x5c] sm:$0xf]
          %v694 = vld [vmem:[%s579 + $0x60] sm:$0xf]
          %v695 = vld [vmem:[%s579 + $0x64] sm:$0xf]
          %v696 = vld [vmem:[%s579 + $0x68] sm:$0xf]
          %v697 = vld [vmem:[%s579 + $0x6c] sm:$0xf]
          %v698 = vld [vmem:[%s579 + $0x70] sm:$0xf]
          %v699 = vld [vmem:[%s579 + $0x74] sm:$0xf]
          %v700 = vld [vmem:[%s579 + $0x78] sm:$0xf]
          %v701 = vld [vmem:[%s579 + $0x7c] sm:$0xf]
          %v702 = vld [vmem:[#allocation6] sm:$0xff]
          %v703 = vld [vmem:[#allocation6 + $0x8] sm:$0xff]
          %v704 = vld [vmem:[#allocation6 + $0x10] sm:$0xff]
          %v705 = vld [vmem:[#allocation6 + $0x18] sm:$0xff]
          %v706 = vld [vmem:[#allocation6 + $0x20] sm:$0xff]
          %v707 = vld [vmem:[#allocation6 + $0x28] sm:$0xff]
          %v708 = vld [vmem:[#allocation6 + $0x30] sm:$0xff]
          %v709 = vld [vmem:[#allocation6 + $0x38] sm:$0xff]
          %v710 = vld [vmem:[#allocation6 + $0x40] sm:$0xff]
          %v711 = vld [vmem:[#allocation6 + $0x48] sm:$0xff]
          %v712 = vld [vmem:[#allocation6 + $0x50] sm:$0xff]
          %v713 = vld [vmem:[#allocation6 + $0x58] sm:$0xff]
          %v714 = vld [vmem:[#allocation6 + $0x60] sm:$0xff]
          %v715 = vld [vmem:[#allocation6 + $0x68] sm:$0xff]
          %v716 = vld [vmem:[#allocation6 + $0x70] sm:$0xff]
          %v717 = vld [vmem:[#allocation6 + $0x78] sm:$0xff]
          %v718 = vld [vmem:[%s2] sm:$0x3]
          %v720 = vlaneseq
          %v721 = vshrl.u32 %v720, 7
          %v722 = vsub.s32 0, %v721
          %v723 = vrot.slane %v718, %v722
          %v724 = vlaneseq
          %v725 = vshrl.u32 %v724, 7
          %v726 = vsub.s32 1, %v725
          %v727 = vrot.slane %v718, %v726
          %v762 = vunpack.c.l.b16 %v670
          %v763 = vunpack.c.l.b16 %v671
          %v764 = vunpack.c.l.b16 %v672
          %v765 = vunpack.c.l.b16 %v673
          %v766 = vunpack.c.l.b16 %v674
          %v767 = vunpack.c.l.b16 %v675
          %v768 = vunpack.c.l.b16 %v676
          %v769 = vunpack.c.l.b16 %v677
          %v770 = vunpack.c.l.b16 %v678
          %v771 = vunpack.c.l.b16 %v679
          %v772 = vunpack.c.l.b16 %v680
          %v773 = vunpack.c.l.b16 %v681
          %v774 = vunpack.c.l.b16 %v682
          %v775 = vunpack.c.l.b16 %v683
          %v776 = vunpack.c.l.b16 %v684
          %v777 = vunpack.c.l.b16 %v685
          %v778 = vunpack.c.l.b16 %v686
          %v779 = vunpack.c.l.b16 %v687
          %v780 = vunpack.c.l.b16 %v688
          %v781 = vunpack.c.l.b16 %v689
          %v782 = vunpack.c.l.b16 %v690
          %v783 = vunpack.c.l.b16 %v691
          %v784 = vunpack.c.l.b16 %v692
          %v785 = vunpack.c.l.b16 %v693
          %v786 = vunpack.c.l.b16 %v694
          %v787 = vunpack.c.l.b16 %v695
          %v788 = vunpack.c.l.b16 %v696
          %v789 = vunpack.c.l.b16 %v697
          %v790 = vunpack.c.l.b16 %v698
          %v791 = vunpack.c.l.b16 %v699
          %v792 = vunpack.c.l.b16 %v700
          %v793 = vunpack.c.l.b16 %v701
          %v794 = vpack.c.b16 %v763, %v762
          %v795 = vpack.c.b16 %v765, %v764
          %v796 = vpack.c.b16 %v767, %v766
          %v797 = vpack.c.b16 %v769, %v768
          %v798 = vpack.c.b16 %v771, %v770
          %v799 = vpack.c.b16 %v773, %v772
          %v800 = vpack.c.b16 %v775, %v774
          %v801 = vpack.c.b16 %v777, %v776
          %v802 = vpack.c.b16 %v779, %v778
          %v803 = vpack.c.b16 %v781, %v780
          %v804 = vpack.c.b16 %v783, %v782
          %v805 = vpack.c.b16 %v785, %v784
          %v806 = vpack.c.b16 %v787, %v786
          %v807 = vpack.c.b16 %v789, %v788
          %v808 = vpack.c.b16 %v791, %v790
          %v809 = vpack.c.b16 %v793, %v792
          %v842 = vunpack.c.l.b16 %v702
          %v843 = vunpack.c.h.b16 %v702
          %v844 = vunpack.c.l.b16 %v703
          %v845 = vunpack.c.h.b16 %v703
          %v846 = vunpack.c.l.b16 %v704
          %v847 = vunpack.c.h.b16 %v704
          %v848 = vunpack.c.l.b16 %v705
          %v849 = vunpack.c.h.b16 %v705
          %v850 = vunpack.c.l.b16 %v706
          %v851 = vunpack.c.h.b16 %v706
          %v852 = vunpack.c.l.b16 %v707
          %v853 = vunpack.c.h.b16 %v707
          %v854 = vunpack.c.l.b16 %v708
          %v855 = vunpack.c.h.b16 %v708
          %v856 = vunpack.c.l.b16 %v709
          %v857 = vunpack.c.h.b16 %v709
          %v858 = vunpack.c.l.b16 %v710
          %v859 = vunpack.c.h.b16 %v710
          %v860 = vunpack.c.l.b16 %v711
          %v861 = vunpack.c.h.b16 %v711
          %v862 = vunpack.c.l.b16 %v712
          %v863 = vunpack.c.h.b16 %v712
          %v864 = vunpack.c.l.b16 %v713
          %v865 = vunpack.c.h.b16 %v713
          %v866 = vunpack.c.l.b16 %v714
          %v867 = vunpack.c.h.b16 %v714
          %v868 = vunpack.c.l.b16 %v715
          %v869 = vunpack.c.h.b16 %v715
          %v870 = vunpack.c.l.b16 %v716
          %v871 = vunpack.c.h.b16 %v716
          %v872 = vunpack.c.l.b16 %v717
          %v873 = vunpack.c.h.b16 %v717
          %v874 = vpack.c.b16 %v844, %v842
          %v875 = vpack.c.b16 %v845, %v843
          %v876 = vpack.c.b16 %v848, %v846
          %v877 = vpack.c.b16 %v849, %v847
          %v878 = vpack.c.b16 %v852, %v850
          %v879 = vpack.c.b16 %v853, %v851
          %v880 = vpack.c.b16 %v856, %v854
          %v881 = vpack.c.b16 %v857, %v855
          %v882 = vpack.c.b16 %v860, %v858
          %v883 = vpack.c.b16 %v861, %v859
          %v884 = vpack.c.b16 %v864, %v862
          %v885 = vpack.c.b16 %v865, %v863
          %v886 = vpack.c.b16 %v868, %v866
          %v887 = vpack.c.b16 %v869, %v867
          %v888 = vpack.c.b16 %v872, %v870
          %v889 = vpack.c.b16 %v873, %v871
          %906 = vmatprep.subr.bf16.mxu0 %v875
          %907 = vmatpush1.bf16.msra.mxu0 %v874
          %908 = vmatprep.subr.bf16.mxu0 %v877
          %909 = vmatpush1.bf16.msra.mxu0 %v876
          %910 = vmatprep.subr.bf16.mxu0 %v879
          %911 = vmatpush1.bf16.msra.mxu0 %v878
          %912 = vmatprep.subr.bf16.mxu0 %v881
          %913 = vmatpush1.bf16.msra.mxu0 %v880
          %914 = vmatprep.subr.bf16.mxu0 %v883
          %915 = vmatpush1.bf16.msra.mxu0 %v882
          %916 = vmatprep.subr.bf16.mxu0 %v885
          %917 = vmatpush1.bf16.msra.mxu0 %v884
          %918 = vmatprep.subr.bf16.mxu0 %v887
          %919 = vmatpush1.bf16.msra.mxu0 %v886
          %920 = vmatprep.subr.bf16.mxu0 %v889
          %921 = vmatpush1.bf16.msra.mxu0 %v888
          %922 = vmatprep.subr.bf16.mxu0 0
          %923 = vmatpush1.bf16.msra.mxu0 0
          %924 = vmatprep.subr.bf16.mxu0 0
          %925 = vmatpush1.bf16.msra.mxu0 0
          %926 = vmatprep.subr.bf16.mxu0 0
          %927 = vmatpush1.bf16.msra.mxu0 0
          %928 = vmatprep.subr.bf16.mxu0 0
          %929 = vmatpush1.bf16.msra.mxu0 0
          %930 = vmatprep.subr.bf16.mxu0 0
          %931 = vmatpush1.bf16.msra.mxu0 0
          %932 = vmatprep.subr.bf16.mxu0 0
          %933 = vmatpush1.bf16.msra.mxu0 0
          %934 = vmatprep.subr.bf16.mxu0 0
          %935 = vmatpush1.bf16.msra.mxu0 0
          %936 = vmatprep.subr.bf16.mxu0 0
          %937 = vmatpush1.bf16.msra.mxu0 0
          %938 = vmatprep.mubr.bf16.mxu0 0
          %939 = vmatmul.mubr.bf16.gmra.mrb[0].mxu0 %v794
          %v940 = vpop.f32.mrb[0].mxu0
          %v941 = vadd.f32 %v723, %v940
          %v942 = vpop.f32.mrb[0].mxu0
          %v943 = vadd.f32 %v727, %v942
          %v944 = vpop.f32.mrb[0].mxu0
          %v945 = vadd.f32 %v723, %v944
          %v946 = vpop.f32.mrb[0].mxu0
          %v947 = vadd.f32 %v727, %v946
          %948 = vmatprep.mubr.bf16.mxu0 0
          %949 = vmatmul.mubr.bf16.gmra.mrb[0].mxu0 %v795
          %v950 = vpop.f32.mrb[0].mxu0
          %v951 = vadd.f32 %v723, %v950
          %v952 = vpop.f32.mrb[0].mxu0
          %v953 = vadd.f32 %v727, %v952
          %v954 = vpop.f32.mrb[0].mxu0
          %v955 = vadd.f32 %v723, %v954
          %v956 = vpop.f32.mrb[0].mxu0
          %v957 = vadd.f32 %v727, %v956
          %958 = vmatprep.mubr.bf16.mxu0 0
          %959 = vmatmul.mubr.bf16.gmra.mrb[0].mxu0 %v796
          %v960 = vpop.f32.mrb[0].mxu0
          %v961 = vadd.f32 %v723, %v960
          %v962 = vpop.f32.mrb[0].mxu0
          %v963 = vadd.f32 %v727, %v962
          %v964 = vpop.f32.mrb[0].mxu0
          %v965 = vadd.f32 %v723, %v964
          %v966 = vpop.f32.mrb[0].mxu0
          %v967 = vadd.f32 %v727, %v966
          %968 = vmatprep.mubr.bf16.mxu0 0
          %969 = vmatmul.mubr.bf16.gmra.mrb[0].mxu0 %v797
          %v970 = vpop.f32.mrb[0].mxu0
          %v971 = vadd.f32 %v723, %v970
          %v972 = vpop.f32.mrb[0].mxu0
          %v973 = vadd.f32 %v727, %v972
          %v974 = vpop.f32.mrb[0].mxu0
          %v975 = vadd.f32 %v723, %v974
          %v976 = vpop.f32.mrb[0].mxu0
          %v977 = vadd.f32 %v727, %v976
          %978 = vmatprep.mubr.bf16.mxu0 0
          %979 = vmatmul.mubr.bf16.gmra.mrb[0].mxu0 %v798
          %v980 = vpop.f32.mrb[0].mxu0
          %v981 = vadd.f32 %v723, %v980
          %v982 = vpop.f32.mrb[0].mxu0
          %v983 = vadd.f32 %v727, %v982
          %v984 = vpop.f32.mrb[0].mxu0
          %v985 = vadd.f32 %v723, %v984
          %v986 = vpop.f32.mrb[0].mxu0
          %v987 = vadd.f32 %v727, %v986
          %988 = vmatprep.mubr.bf16.mxu0 0
          %989 = vmatmul.mubr.bf16.gmra.mrb[0].mxu0 %v799
          %v990 = vpop.f32.mrb[0].mxu0
          %v991 = vadd.f32 %v723, %v990
          %v992 = vpop.f32.mrb[0].mxu0
          %v993 = vadd.f32 %v727, %v992
          %v994 = vpop.f32.mrb[0].mxu0
          %v995 = vadd.f32 %v723, %v994
          %v996 = vpop.f32.mrb[0].mxu0
          %v997 = vadd.f32 %v727, %v996
          %998 = vmatprep.mubr.bf16.mxu0 0
          %999 = vmatmul.mubr.bf16.gmra.mrb[0].mxu0 %v800
          %v1000 = vpop.f32.mrb[0].mxu0
          %v1001 = vadd.f32 %v723, %v1000
          %v1002 = vpop.f32.mrb[0].mxu0
          %v1003 = vadd.f32 %v727, %v1002
          %v1004 = vpop.f32.mrb[0].mxu0
          %v1005 = vadd.f32 %v723, %v1004
          %v1006 = vpop.f32.mrb[0].mxu0
          %v1007 = vadd.f32 %v727, %v1006
          %1008 = vmatprep.mubr.bf16.mxu0 0
          %1009 = vmatmul.mubr.bf16.gmra.mrb[0].mxu0 %v801
          %v1010 = vpop.f32.mrb[0].mxu0
          %v1011 = vadd.f32 %v723, %v1010
          %v1012 = vpop.f32.mrb[0].mxu0
          %v1013 = vadd.f32 %v727, %v1012
          %v1014 = vpop.f32.mrb[0].mxu0
          %v1015 = vadd.f32 %v723, %v1014
          %v1016 = vpop.f32.mrb[0].mxu0
          %v1017 = vadd.f32 %v727, %v1016
          %1018 = vmatprep.mubr.bf16.mxu0 0
          %1019 = vmatmul.mubr.bf16.gmra.mrb[0].mxu0 %v802
          %v1020 = vpop.f32.mrb[0].mxu0
          %v1021 = vadd.f32 %v723, %v1020
          %v1022 = vpop.f32.mrb[0].mxu0
          %v1023 = vadd.f32 %v727, %v1022
          %v1024 = vpop.f32.mrb[0].mxu0
          %v1025 = vadd.f32 %v723, %v1024
          %v1026 = vpop.f32.mrb[0].mxu0
          %v1027 = vadd.f32 %v727, %v1026
          %1028 = vmatprep.mubr.bf16.mxu0 0
          %1029 = vmatmul.mubr.bf16.gmra.mrb[0].mxu0 %v803
          %v1030 = vpop.f32.mrb[0].mxu0
          %v1031 = vadd.f32 %v723, %v1030
          %v1032 = vpop.f32.mrb[0].mxu0
          %v1033 = vadd.f32 %v727, %v1032
          %v1034 = vpop.f32.mrb[0].mxu0
          %v1035 = vadd.f32 %v723, %v1034
          %v1036 = vpop.f32.mrb[0].mxu0
          %v1037 = vadd.f32 %v727, %v1036
          %1038 = vmatprep.mubr.bf16.mxu0 0
          %1039 = vmatmul.mubr.bf16.gmra.mrb[0].mxu0 %v804
          %v1040 = vpop.f32.mrb[0].mxu0
          %v1041 = vadd.f32 %v723, %v1040
          %v1042 = vpop.f32.mrb[0].mxu0
          %v1043 = vadd.f32 %v727, %v1042
          %v1044 = vpop.f32.mrb[0].mxu0
          %v1045 = vadd.f32 %v723, %v1044
          %v1046 = vpop.f32.mrb[0].mxu0
          %v1047 = vadd.f32 %v727, %v1046
          %1048 = vmatprep.mubr.bf16.mxu0 0
          %1049 = vmatmul.mubr.bf16.gmra.mrb[0].mxu0 %v805
          %v1050 = vpop.f32.mrb[0].mxu0
          %v1051 = vadd.f32 %v723, %v1050
          %v1052 = vpop.f32.mrb[0].mxu0
          %v1053 = vadd.f32 %v727, %v1052
          %v1054 = vpop.f32.mrb[0].mxu0
          %v1055 = vadd.f32 %v723, %v1054
          %v1056 = vpop.f32.mrb[0].mxu0
          %v1057 = vadd.f32 %v727, %v1056
          %1058 = vmatprep.mubr.bf16.mxu0 0
          %1059 = vmatmul.mubr.bf16.gmra.mrb[0].mxu0 %v806
          %v1060 = vpop.f32.mrb[0].mxu0
          %v1061 = vadd.f32 %v723, %v1060
          %v1062 = vpop.f32.mrb[0].mxu0
          %v1063 = vadd.f32 %v727, %v1062
          %v1064 = vpop.f32.mrb[0].mxu0
          %v1065 = vadd.f32 %v723, %v1064
          %v1066 = vpop.f32.mrb[0].mxu0
          %v1067 = vadd.f32 %v727, %v1066
          %1068 = vmatprep.mubr.bf16.mxu0 0
          %1069 = vmatmul.mubr.bf16.gmra.mrb[0].mxu0 %v807
          %v1070 = vpop.f32.mrb[0].mxu0
          %v1071 = vadd.f32 %v723, %v1070
          %v1072 = vpop.f32.mrb[0].mxu0
          %v1073 = vadd.f32 %v727, %v1072
          %v1074 = vpop.f32.mrb[0].mxu0
          %v1075 = vadd.f32 %v723, %v1074
          %v1076 = vpop.f32.mrb[0].mxu0
          %v1077 = vadd.f32 %v727, %v1076
          %1078 = vmatprep.mubr.bf16.mxu0 0
          %1079 = vmatmul.mubr.bf16.gmra.mrb[0].mxu0 %v808
          %v1080 = vpop.f32.mrb[0].mxu0
          %v1081 = vadd.f32 %v723, %v1080
          %v1082 = vpop.f32.mrb[0].mxu0
          %v1083 = vadd.f32 %v727, %v1082
          %v1084 = vpop.f32.mrb[0].mxu0
          %v1085 = vadd.f32 %v723, %v1084
          %v1086 = vpop.f32.mrb[0].mxu0
          %v1087 = vadd.f32 %v727, %v1086
          %1088 = vmatprep.mubr.bf16.mxu0 0
          %1089 = vmatmul.mubr.bf16.gmra.mrb[0].mxu0 %v809
          %v1090 = vpop.f32.mrb[0].mxu0
          %v1091 = vadd.f32 %v723, %v1090
          %v1092 = vpop.f32.mrb[0].mxu0
          %v1093 = vadd.f32 %v727, %v1092
          %v1094 = vpop.f32.mrb[0].mxu0
          %v1095 = vadd.f32 %v723, %v1094
          %v1096 = vpop.f32.mrb[0].mxu0
          %v1097 = vadd.f32 %v727, %v1096
          %1098 = vdwg.mxu0
          %v1099 = vmax.f32 %v941, 0.0
          %v1100 = vmax.f32 %v943, 0.0
          %v1101 = vmax.f32 %v945, 0.0
          %v1102 = vmax.f32 %v947, 0.0
          %v1103 = vmax.f32 %v951, 0.0
          %v1104 = vmax.f32 %v953, 0.0
          %v1105 = vmax.f32 %v955, 0.0
          %v1106 = vmax.f32 %v957, 0.0
          %v1107 = vmax.f32 %v961, 0.0
          %v1108 = vmax.f32 %v963, 0.0
          %v1109 = vmax.f32 %v965, 0.0
          %v1110 = vmax.f32 %v967, 0.0
          %v1111 = vmax.f32 %v971, 0.0
          %v1112 = vmax.f32 %v973, 0.0
          %v1113 = vmax.f32 %v975, 0.0
          %v1114 = vmax.f32 %v977, 0.0
          %v1115 = vmax.f32 %v981, 0.0
          %v1116 = vmax.f32 %v983, 0.0
          %v1117 = vmax.f32 %v985, 0.0
          %v1118 = vmax.f32 %v987, 0.0
          %v1119 = vmax.f32 %v991, 0.0
          %v1120 = vmax.f32 %v993, 0.0
          %v1121 = vmax.f32 %v995, 0.0
          %v1122 = vmax.f32 %v997, 0.0
          %v1123 = vmax.f32 %v1001, 0.0
          %v1124 = vmax.f32 %v1003, 0.0
          %v1125 = vmax.f32 %v1005, 0.0
          %v1126 = vmax.f32 %v1007, 0.0
          %v1127 = vmax.f32 %v1011, 0.0
          %v1128 = vmax.f32 %v1013, 0.0
          %v1129 = vmax.f32 %v1015, 0.0
          %v1130 = vmax.f32 %v1017, 0.0
          %v1131 = vmax.f32 %v1021, 0.0
          %v1132 = vmax.f32 %v1023, 0.0
          %v1133 = vmax.f32 %v1025, 0.0
          %v1134 = vmax.f32 %v1027, 0.0
          %v1135 = vmax.f32 %v1031, 0.0
          %v1136 = vmax.f32 %v1033, 0.0
          %v1137 = vmax.f32 %v1035, 0.0
          %v1138 = vmax.f32 %v1037, 0.0
          %v1139 = vmax.f32 %v1041, 0.0
          %v1140 = vmax.f32 %v1043, 0.0
          %v1141 = vmax.f32 %v1045, 0.0
          %v1142 = vmax.f32 %v1047, 0.0
          %v1143 = vmax.f32 %v1051, 0.0
          %v1144 = vmax.f32 %v1053, 0.0
          %v1145 = vmax.f32 %v1055, 0.0
          %v1146 = vmax.f32 %v1057, 0.0
          %v1147 = vmax.f32 %v1061, 0.0
          %v1148 = vmax.f32 %v1063, 0.0
          %v1149 = vmax.f32 %v1065, 0.0
          %v1150 = vmax.f32 %v1067, 0.0
          %v1151 = vmax.f32 %v1071, 0.0
          %v1152 = vmax.f32 %v1073, 0.0
          %v1153 = vmax.f32 %v1075, 0.0
          %v1154 = vmax.f32 %v1077, 0.0
          %v1155 = vmax.f32 %v1081, 0.0
          %v1156 = vmax.f32 %v1083, 0.0
          %v1157 = vmax.f32 %v1085, 0.0
          %v1158 = vmax.f32 %v1087, 0.0
          %v1159 = vmax.f32 %v1091, 0.0
          %v1160 = vmax.f32 %v1093, 0.0
          %v1161 = vmax.f32 %v1095, 0.0
          %v1162 = vmax.f32 %v1097, 0.0
          %v1163 = vpack.c.bf16 %v1101, %v1099
          %v1164 = vpack.c.bf16 %v1102, %v1100
          %v1165 = vpack.c.bf16 %v1105, %v1103
          %v1166 = vpack.c.bf16 %v1106, %v1104
          %v1167 = vpack.c.bf16 %v1109, %v1107
          %v1168 = vpack.c.bf16 %v1110, %v1108
          %v1169 = vpack.c.bf16 %v1113, %v1111
          %v1170 = vpack.c.bf16 %v1114, %v1112
          %v1171 = vpack.c.bf16 %v1117, %v1115
          %v1172 = vpack.c.bf16 %v1118, %v1116
          %v1173 = vpack.c.bf16 %v1121, %v1119
          %v1174 = vpack.c.bf16 %v1122, %v1120
          %v1175 = vpack.c.bf16 %v1125, %v1123
          %v1176 = vpack.c.bf16 %v1126, %v1124
          %v1177 = vpack.c.bf16 %v1129, %v1127
          %v1178 = vpack.c.bf16 %v1130, %v1128
          %v1179 = vpack.c.bf16 %v1133, %v1131
          %v1180 = vpack.c.bf16 %v1134, %v1132
          %v1181 = vpack.c.bf16 %v1137, %v1135
          %v1182 = vpack.c.bf16 %v1138, %v1136
          %v1183 = vpack.c.bf16 %v1141, %v1139
          %v1184 = vpack.c.bf16 %v1142, %v1140
          %v1185 = vpack.c.bf16 %v1145, %v1143
          %v1186 = vpack.c.bf16 %v1146, %v1144
          %v1187 = vpack.c.bf16 %v1149, %v1147
          %v1188 = vpack.c.bf16 %v1150, %v1148
          %v1189 = vpack.c.bf16 %v1153, %v1151
          %v1190 = vpack.c.bf16 %v1154, %v1152
          %v1191 = vpack.c.bf16 %v1157, %v1155
          %v1192 = vpack.c.bf16 %v1158, %v1156
          %v1193 = vpack.c.bf16 %v1161, %v1159
          %v1194 = vpack.c.bf16 %v1162, %v1160
          %v1195 = vld [vmem:[#allocation8] sm:$0xff]
          %v1196 = vld [vmem:[#allocation8 + $0x8] sm:$0xff]
          %v1197 = vld [vmem:[#allocation8 + $0x10] sm:$0xff]
          %v1198 = vld [vmem:[#allocation8 + $0x18] sm:$0xff]
          %v1199 = vld [vmem:[#allocation8 + $0x20] sm:$0xff]
          %v1200 = vld [vmem:[#allocation8 + $0x28] sm:$0xff]
          %v1201 = vld [vmem:[#allocation8 + $0x30] sm:$0xff]
          %v1202 = vld [vmem:[#allocation8 + $0x38] sm:$0xff]
          %v1203 = vld [vmem:[#allocation8 + $0x40] sm:$0xff]
          %v1204 = vld [vmem:[#allocation8 + $0x48] sm:$0xff]
          %v1205 = vld [vmem:[#allocation8 + $0x50] sm:$0xff]
          %v1206 = vld [vmem:[#allocation8 + $0x58] sm:$0xff]
          %v1207 = vld [vmem:[#allocation8 + $0x60] sm:$0xff]
          %v1208 = vld [vmem:[#allocation8 + $0x68] sm:$0xff]
          %v1209 = vld [vmem:[#allocation8 + $0x70] sm:$0xff]
          %v1210 = vld [vmem:[#allocation8 + $0x78] sm:$0xff]
          %v1211 = vld [vmem:[#allocation8 + $0x80] sm:$0xff]
          %v1212 = vld [vmem:[#allocation8 + $0x88] sm:$0xff]
          %v1213 = vld [vmem:[#allocation8 + $0x90] sm:$0xff]
          %v1214 = vld [vmem:[#allocation8 + $0x98] sm:$0xff]
          %v1215 = vld [vmem:[#allocation8 + $0xa0] sm:$0xff]
          %v1216 = vld [vmem:[#allocation8 + $0xa8] sm:$0xff]
          %v1217 = vld [vmem:[#allocation8 + $0xb0] sm:$0xff]
          %v1218 = vld [vmem:[#allocation8 + $0xb8] sm:$0xff]
          %v1219 = vld [vmem:[#allocation8 + $0xc0] sm:$0xff]
          %v1220 = vld [vmem:[#allocation8 + $0xc8] sm:$0xff]
          %v1221 = vld [vmem:[#allocation8 + $0xd0] sm:$0xff]
          %v1222 = vld [vmem:[#allocation8 + $0xd8] sm:$0xff]
          %v1223 = vld [vmem:[#allocation8 + $0xe0] sm:$0xff]
          %v1224 = vld [vmem:[#allocation8 + $0xe8] sm:$0xff]
          %v1225 = vld [vmem:[#allocation8 + $0xf0] sm:$0xff]
          %v1226 = vld [vmem:[#allocation8 + $0xf8] sm:$0xff]
          %v1259 = vunpack.c.l.b16 %v1195
          %v1260 = vunpack.c.h.b16 %v1195
          %v1261 = vunpack.c.l.b16 %v1196
          %v1262 = vunpack.c.h.b16 %v1196
          %v1263 = vunpack.c.l.b16 %v1197
          %v1264 = vunpack.c.h.b16 %v1197
          %v1265 = vunpack.c.l.b16 %v1198
          %v1266 = vunpack.c.h.b16 %v1198
          %v1267 = vunpack.c.l.b16 %v1199
          %v1268 = vunpack.c.h.b16 %v1199
          %v1269 = vunpack.c.l.b16 %v1200
          %v1270 = vunpack.c.h.b16 %v1200
          %v1271 = vunpack.c.l.b16 %v1201
          %v1272 = vunpack.c.h.b16 %v1201
          %v1273 = vunpack.c.l.b16 %v1202
          %v1274 = vunpack.c.h.b16 %v1202
          %v1275 = vunpack.c.l.b16 %v1203
          %v1276 = vunpack.c.h.b16 %v1203
          %v1277 = vunpack.c.l.b16 %v1204
          %v1278 = vunpack.c.h.b16 %v1204
          %v1279 = vunpack.c.l.b16 %v1205
          %v1280 = vunpack.c.h.b16 %v1205
          %v1281 = vunpack.c.l.b16 %v1206
          %v1282 = vunpack.c.h.b16 %v1206
          %v1283 = vunpack.c.l.b16 %v1207
          %v1284 = vunpack.c.h.b16 %v1207
          %v1285 = vunpack.c.l.b16 %v1208
          %v1286 = vunpack.c.h.b16 %v1208
          %v1287 = vunpack.c.l.b16 %v1209
          %v1288 = vunpack.c.h.b16 %v1209
          %v1289 = vunpack.c.l.b16 %v1210
          %v1290 = vunpack.c.h.b16 %v1210
          %v1291 = vunpack.c.l.b16 %v1211
          %v1292 = vunpack.c.h.b16 %v1211
          %v1293 = vunpack.c.l.b16 %v1212
          %v1294 = vunpack.c.h.b16 %v1212
          %v1295 = vunpack.c.l.b16 %v1213
          %v1296 = vunpack.c.h.b16 %v1213
          %v1297 = vunpack.c.l.b16 %v1214
          %v1298 = vunpack.c.h.b16 %v1214
          %v1299 = vunpack.c.l.b16 %v1215
          %v1300 = vunpack.c.h.b16 %v1215
          %v1301 = vunpack.c.l.b16 %v1216
          %v1302 = vunpack.c.h.b16 %v1216
          %v1303 = vunpack.c.l.b16 %v1217
          %v1304 = vunpack.c.h.b16 %v1217
          %v1305 = vunpack.c.l.b16 %v1218
          %v1306 = vunpack.c.h.b16 %v1218
          %v1307 = vunpack.c.l.b16 %v1219
          %v1308 = vunpack.c.h.b16 %v1219
          %v1309 = vunpack.c.l.b16 %v1220
          %v1310 = vunpack.c.h.b16 %v1220
          %v1311 = vunpack.c.l.b16 %v1221
          %v1312 = vunpack.c.h.b16 %v1221
          %v1313 = vunpack.c.l.b16 %v1222
          %v1314 = vunpack.c.h.b16 %v1222
          %v1315 = vunpack.c.l.b16 %v1223
          %v1316 = vunpack.c.h.b16 %v1223
          %v1317 = vunpack.c.l.b16 %v1224
          %v1318 = vunpack.c.h.b16 %v1224
          %v1319 = vunpack.c.l.b16 %v1225
          %v1320 = vunpack.c.h.b16 %v1225
          %v1321 = vunpack.c.l.b16 %v1226
          %v1322 = vunpack.c.h.b16 %v1226
          %v1323 = vpack.c.b16 %v1261, %v1259
          %v1324 = vpack.c.b16 %v1262, %v1260
          %v1325 = vpack.c.b16 %v1265, %v1263
          %v1326 = vpack.c.b16 %v1266, %v1264
          %v1327 = vpack.c.b16 %v1269, %v1267
          %v1328 = vpack.c.b16 %v1270, %v1268
          %v1329 = vpack.c.b16 %v1273, %v1271
          %v1330 = vpack.c.b16 %v1274, %v1272
          %v1331 = vpack.c.b16 %v1277, %v1275
          %v1332 = vpack.c.b16 %v1278, %v1276
          %v1333 = vpack.c.b16 %v1281, %v1279
          %v1334 = vpack.c.b16 %v1282, %v1280
          %v1335 = vpack.c.b16 %v1285, %v1283
          %v1336 = vpack.c.b16 %v1286, %v1284
          %v1337 = vpack.c.b16 %v1289, %v1287
          %v1338 = vpack.c.b16 %v1290, %v1288
          %v1339 = vpack.c.b16 %v1293, %v1291
          %v1340 = vpack.c.b16 %v1294, %v1292
          %v1341 = vpack.c.b16 %v1297, %v1295
          %v1342 = vpack.c.b16 %v1298, %v1296
          %v1343 = vpack.c.b16 %v1301, %v1299
          %v1344 = vpack.c.b16 %v1302, %v1300
          %v1345 = vpack.c.b16 %v1305, %v1303
          %v1346 = vpack.c.b16 %v1306, %v1304
          %v1347 = vpack.c.b16 %v1309, %v1307
          %v1348 = vpack.c.b16 %v1310, %v1308
          %v1349 = vpack.c.b16 %v1313, %v1311
          %v1350 = vpack.c.b16 %v1314, %v1312
          %v1351 = vpack.c.b16 %v1317, %v1315
          %v1352 = vpack.c.b16 %v1318, %v1316
          %v1353 = vpack.c.b16 %v1321, %v1319
          %v1354 = vpack.c.b16 %v1322, %v1320
          %1387 = vmatprep.subr.bf16.mxu0 %v1324
          %1388 = vmatpush1.bf16.msra.mxu0 %v1323
          %1389 = vmatprep.subr.bf16.mxu0 %v1326
          %1390 = vmatpush1.bf16.msra.mxu0 %v1325
          %1391 = vmatprep.subr.bf16.mxu0 %v1328
          %1392 = vmatpush1.bf16.msra.mxu0 %v1327
          %1393 = vmatprep.subr.bf16.mxu0 %v1330
          %1394 = vmatpush1.bf16.msra.mxu0 %v1329
          %1395 = vmatprep.subr.bf16.mxu0 %v1332
          %1396 = vmatpush1.bf16.msra.mxu0 %v1331
          %1397 = vmatprep.subr.bf16.mxu0 %v1334
          %1398 = vmatpush1.bf16.msra.mxu0 %v1333
          %1399 = vmatprep.subr.bf16.mxu0 %v1336
          %1400 = vmatpush1.bf16.msra.mxu0 %v1335
          %1401 = vmatprep.subr.bf16.mxu0 %v1338
          %1402 = vmatpush1.bf16.msra.mxu0 %v1337
          %1403 = vmatprep.subr.bf16.mxu0 %v1340
          %1404 = vmatpush1.bf16.msra.mxu0 %v1339
          %1405 = vmatprep.subr.bf16.mxu0 %v1342
          %1406 = vmatpush1.bf16.msra.mxu0 %v1341
          %1407 = vmatprep.subr.bf16.mxu0 %v1344
          %1408 = vmatpush1.bf16.msra.mxu0 %v1343
          %1409 = vmatprep.subr.bf16.mxu0 %v1346
          %1410 = vmatpush1.bf16.msra.mxu0 %v1345
          %1411 = vmatprep.subr.bf16.mxu0 %v1348
          %1412 = vmatpush1.bf16.msra.mxu0 %v1347
          %1413 = vmatprep.subr.bf16.mxu0 %v1350
          %1414 = vmatpush1.bf16.msra.mxu0 %v1349
          %1415 = vmatprep.subr.bf16.mxu0 %v1352
          %1416 = vmatpush1.bf16.msra.mxu0 %v1351
          %1417 = vmatprep.subr.bf16.mxu0 %v1354
          %1418 = vmatpush1.bf16.msra.mxu0 %v1353
          %1419 = vmatprep.mubr.bf16.mxu0 %v1164
          %1420 = vmatmul.mubr.bf16.gmra.mrb[0].mxu0 %v1163
          %v1421 = vpop.f32.mrb[0].mxu0
          %v1422 = vadd.f32 0.0, %v1421
          %v1423 = vpop.f32.mrb[0].mxu0
          %v1424 = vadd.f32 0.0, %v1423
          %v1425 = vpop.f32.mrb[0].mxu0
          %v1426 = vadd.f32 0.0, %v1425
          %v1427 = vpop.f32.mrb[0].mxu0
          %v1428 = vadd.f32 0.0, %v1427
          %1429 = vmatprep.mubr.bf16.mxu0 %v1166
          %1430 = vmatmul.mubr.bf16.gmra.mrb[0].mxu0 %v1165
          %v1431 = vpop.f32.mrb[0].mxu0
          %v1432 = vadd.f32 0.0, %v1431
          %v1433 = vpop.f32.mrb[0].mxu0
          %v1434 = vadd.f32 0.0, %v1433
          %v1435 = vpop.f32.mrb[0].mxu0
          %v1436 = vadd.f32 0.0, %v1435
          %v1437 = vpop.f32.mrb[0].mxu0
          %v1438 = vadd.f32 0.0, %v1437
          %1439 = vmatprep.mubr.bf16.mxu0 %v1168
          %1440 = vmatmul.mubr.bf16.gmra.mrb[0].mxu0 %v1167
          %v1441 = vpop.f32.mrb[0].mxu0
          %v1442 = vadd.f32 0.0, %v1441
          %v1443 = vpop.f32.mrb[0].mxu0
          %v1444 = vadd.f32 0.0, %v1443
          %v1445 = vpop.f32.mrb[0].mxu0
          %v1446 = vadd.f32 0.0, %v1445
          %v1447 = vpop.f32.mrb[0].mxu0
          %v1448 = vadd.f32 0.0, %v1447
          %1449 = vmatprep.mubr.bf16.mxu0 %v1170
          %1450 = vmatmul.mubr.bf16.gmra.mrb[0].mxu0 %v1169
          %v1451 = vpop.f32.mrb[0].mxu0
          %v1452 = vadd.f32 0.0, %v1451
          %v1453 = vpop.f32.mrb[0].mxu0
          %v1454 = vadd.f32 0.0, %v1453
          %v1455 = vpop.f32.mrb[0].mxu0
          %v1456 = vadd.f32 0.0, %v1455
          %v1457 = vpop.f32.mrb[0].mxu0
          %v1458 = vadd.f32 0.0, %v1457
          %1459 = vmatprep.mubr.bf16.mxu0 %v1172
          %1460 = vmatmul.mubr.bf16.gmra.mrb[0].mxu0 %v1171
          %v1461 = vpop.f32.mrb[0].mxu0
          %v1462 = vadd.f32 0.0, %v1461
          %v1463 = vpop.f32.mrb[0].mxu0
          %v1464 = vadd.f32 0.0, %v1463
          %v1465 = vpop.f32.mrb[0].mxu0
          %v1466 = vadd.f32 0.0, %v1465
          %v1467 = vpop.f32.mrb[0].mxu0
          %v1468 = vadd.f32 0.0, %v1467
          %1469 = vmatprep.mubr.bf16.mxu0 %v1174
          %1470 = vmatmul.mubr.bf16.gmra.mrb[0].mxu0 %v1173
          %v1471 = vpop.f32.mrb[0].mxu0
          %v1472 = vadd.f32 0.0, %v1471
          %v1473 = vpop.f32.mrb[0].mxu0
          %v1474 = vadd.f32 0.0, %v1473
          %v1475 = vpop.f32.mrb[0].mxu0
          %v1476 = vadd.f32 0.0, %v1475
          %v1477 = vpop.f32.mrb[0].mxu0
          %v1478 = vadd.f32 0.0, %v1477
          %1479 = vmatprep.mubr.bf16.mxu0 %v1176
          %1480 = vmatmul.mubr.bf16.gmra.mrb[0].mxu0 %v1175
          %v1481 = vpop.f32.mrb[0].mxu0
          %v1482 = vadd.f32 0.0, %v1481
          %v1483 = vpop.f32.mrb[0].mxu0
          %v1484 = vadd.f32 0.0, %v1483
          %v1485 = vpop.f32.mrb[0].mxu0
          %v1486 = vadd.f32 0.0, %v1485
          %v1487 = vpop.f32.mrb[0].mxu0
          %v1488 = vadd.f32 0.0, %v1487
          %1489 = vmatprep.mubr.bf16.mxu0 %v1178
          %1490 = vmatmul.mubr.bf16.gmra.mrb[0].mxu0 %v1177
          %v1491 = vpop.f32.mrb[0].mxu0
          %v1492 = vadd.f32 0.0, %v1491
          %v1493 = vpop.f32.mrb[0].mxu0
          %v1494 = vadd.f32 0.0, %v1493
          %v1495 = vpop.f32.mrb[0].mxu0
          %v1496 = vadd.f32 0.0, %v1495
          %v1497 = vpop.f32.mrb[0].mxu0
          %v1498 = vadd.f32 0.0, %v1497
          %1499 = vmatprep.mubr.bf16.mxu0 %v1180
          %1500 = vmatmul.mubr.bf16.gmra.mrb[0].mxu0 %v1179
          %v1501 = vpop.f32.mrb[0].mxu0
          %v1502 = vadd.f32 0.0, %v1501
          %v1503 = vpop.f32.mrb[0].mxu0
          %v1504 = vadd.f32 0.0, %v1503
          %v1505 = vpop.f32.mrb[0].mxu0
          %v1506 = vadd.f32 0.0, %v1505
          %v1507 = vpop.f32.mrb[0].mxu0
          %v1508 = vadd.f32 0.0, %v1507
          %1509 = vmatprep.mubr.bf16.mxu0 %v1182
          %1510 = vmatmul.mubr.bf16.gmra.mrb[0].mxu0 %v1181
          %v1511 = vpop.f32.mrb[0].mxu0
          %v1512 = vadd.f32 0.0, %v1511
          %v1513 = vpop.f32.mrb[0].mxu0
          %v1514 = vadd.f32 0.0, %v1513
          %v1515 = vpop.f32.mrb[0].mxu0
          %v1516 = vadd.f32 0.0, %v1515
          %v1517 = vpop.f32.mrb[0].mxu0
          %v1518 = vadd.f32 0.0, %v1517
          %1519 = vmatprep.mubr.bf16.mxu0 %v1184
          %1520 = vmatmul.mubr.bf16.gmra.mrb[0].mxu0 %v1183
          %v1521 = vpop.f32.mrb[0].mxu0
          %v1522 = vadd.f32 0.0, %v1521
          %v1523 = vpop.f32.mrb[0].mxu0
          %v1524 = vadd.f32 0.0, %v1523
          %v1525 = vpop.f32.mrb[0].mxu0
          %v1526 = vadd.f32 0.0, %v1525
          %v1527 = vpop.f32.mrb[0].mxu0
          %v1528 = vadd.f32 0.0, %v1527
          %1529 = vmatprep.mubr.bf16.mxu0 %v1186
          %1530 = vmatmul.mubr.bf16.gmra.mrb[0].mxu0 %v1185
          %v1531 = vpop.f32.mrb[0].mxu0
          %v1532 = vadd.f32 0.0, %v1531
          %v1533 = vpop.f32.mrb[0].mxu0
          %v1534 = vadd.f32 0.0, %v1533
          %v1535 = vpop.f32.mrb[0].mxu0
          %v1536 = vadd.f32 0.0, %v1535
          %v1537 = vpop.f32.mrb[0].mxu0
          %v1538 = vadd.f32 0.0, %v1537
          %1539 = vmatprep.mubr.bf16.mxu0 %v1188
          %1540 = vmatmul.mubr.bf16.gmra.mrb[0].mxu0 %v1187
          %v1541 = vpop.f32.mrb[0].mxu0
          %v1542 = vadd.f32 0.0, %v1541
          %v1543 = vpop.f32.mrb[0].mxu0
          %v1544 = vadd.f32 0.0, %v1543
          %v1545 = vpop.f32.mrb[0].mxu0
          %v1546 = vadd.f32 0.0, %v1545
          %v1547 = vpop.f32.mrb[0].mxu0
          %v1548 = vadd.f32 0.0, %v1547
          %1549 = vmatprep.mubr.bf16.mxu0 %v1190
          %1550 = vmatmul.mubr.bf16.gmra.mrb[0].mxu0 %v1189
          %v1551 = vpop.f32.mrb[0].mxu0
          %v1552 = vadd.f32 0.0, %v1551
          %v1553 = vpop.f32.mrb[0].mxu0
          %v1554 = vadd.f32 0.0, %v1553
          %v1555 = vpop.f32.mrb[0].mxu0
          %v1556 = vadd.f32 0.0, %v1555
          %v1557 = vpop.f32.mrb[0].mxu0
          %v1558 = vadd.f32 0.0, %v1557
          %1559 = vmatprep.mubr.bf16.mxu0 %v1192
          %1560 = vmatmul.mubr.bf16.gmra.mrb[0].mxu0 %v1191
          %v1561 = vpop.f32.mrb[0].mxu0
          %v1562 = vadd.f32 0.0, %v1561
          %v1563 = vpop.f32.mrb[0].mxu0
          %v1564 = vadd.f32 0.0, %v1563
          %v1565 = vpop.f32.mrb[0].mxu0
          %v1566 = vadd.f32 0.0, %v1565
          %v1567 = vpop.f32.mrb[0].mxu0
          %v1568 = vadd.f32 0.0, %v1567
          %1569 = vmatprep.mubr.bf16.mxu0 %v1194
          %1570 = vmatmul.mubr.bf16.gmra.mrb[0].mxu0 %v1193
          %v1571 = vpop.f32.mrb[0].mxu0
          %v1572 = vadd.f32 0.0, %v1571
          %v1573 = vpop.f32.mrb[0].mxu0
          %v1574 = vadd.f32 0.0, %v1573
          %v1575 = vpop.f32.mrb[0].mxu0
          %v1576 = vadd.f32 0.0, %v1575
          %v1577 = vpop.f32.mrb[0].mxu0
          %v1578 = vadd.f32 0.0, %v1577
          %1579 = vdwg.mxu0
          %v1580 = vadd.f32 %v1099, %v1422
          %v1581 = vadd.f32 %v1100, %v1424
          %v1582 = vadd.f32 %v1101, %v1426
          %v1583 = vadd.f32 %v1102, %v1428
          %v1584 = vadd.f32 %v1103, %v1432
          %v1585 = vadd.f32 %v1104, %v1434
          %v1586 = vadd.f32 %v1105, %v1436
          %v1587 = vadd.f32 %v1106, %v1438
          %v1588 = vadd.f32 %v1107, %v1442
          %v1589 = vadd.f32 %v1108, %v1444
          %v1590 = vadd.f32 %v1109, %v1446
          %v1591 = vadd.f32 %v1110, %v1448
          %v1592 = vadd.f32 %v1111, %v1452
          %v1593 = vadd.f32 %v1112, %v1454
          %v1594 = vadd.f32 %v1113, %v1456
          %v1595 = vadd.f32 %v1114, %v1458
          %v1596 = vadd.f32 %v1115, %v1462
          %v1597 = vadd.f32 %v1116, %v1464
          %v1598 = vadd.f32 %v1117, %v1466
          %v1599 = vadd.f32 %v1118, %v1468
          %v1600 = vadd.f32 %v1119, %v1472
          %v1601 = vadd.f32 %v1120, %v1474
          %v1602 = vadd.f32 %v1121, %v1476
          %v1603 = vadd.f32 %v1122, %v1478
          %v1604 = vadd.f32 %v1123, %v1482
          %v1605 = vadd.f32 %v1124, %v1484
          %v1606 = vadd.f32 %v1125, %v1486
          %v1607 = vadd.f32 %v1126, %v1488
          %v1608 = vadd.f32 %v1127, %v1492
          %v1609 = vadd.f32 %v1128, %v1494
          %v1610 = vadd.f32 %v1129, %v1496
          %v1611 = vadd.f32 %v1130, %v1498
          %v1612 = vadd.f32 %v1131, %v1502
          %v1613 = vadd.f32 %v1132, %v1504
          %v1614 = vadd.f32 %v1133, %v1506
          %v1615 = vadd.f32 %v1134, %v1508
          %v1616 = vadd.f32 %v1135, %v1512
          %v1617 = vadd.f32 %v1136, %v1514
          %v1618 = vadd.f32 %v1137, %v1516
          %v1619 = vadd.f32 %v1138, %v1518
          %v1620 = vadd.f32 %v1139, %v1522
          %v1621 = vadd.f32 %v1140, %v1524
          %v1622 = vadd.f32 %v1141, %v1526
          %v1623 = vadd.f32 %v1142, %v1528
          %v1624 = vadd.f32 %v1143, %v1532
          %v1625 = vadd.f32 %v1144, %v1534
          %v1626 = vadd.f32 %v1145, %v1536
          %v1627 = vadd.f32 %v1146, %v1538
          %v1628 = vadd.f32 %v1147, %v1542
          %v1629 = vadd.f32 %v1148, %v1544
          %v1630 = vadd.f32 %v1149, %v1546
          %v1631 = vadd.f32 %v1150, %v1548
          %v1632 = vadd.f32 %v1151, %v1552
          %v1633 = vadd.f32 %v1152, %v1554
          %v1634 = vadd.f32 %v1153, %v1556
          %v1635 = vadd.f32 %v1154, %v1558
          %v1636 = vadd.f32 %v1155, %v1562
          %v1637 = vadd.f32 %v1156, %v1564
          %v1638 = vadd.f32 %v1157, %v1566
          %v1639 = vadd.f32 %v1158, %v1568
          %v1640 = vadd.f32 %v1159, %v1572
          %v1641 = vadd.f32 %v1160, %v1574
          %v1642 = vadd.f32 %v1161, %v1576
          %v1643 = vadd.f32 %v1162, %v1578
          %v1644 = vld [vmem:[%s4] sm:$0x3]
          %v1646 = vlaneseq
          %v1647 = vshrl.u32 %v1646, 7
          %v1648 = vsub.s32 0, %v1647
          %v1649 = vrot.slane %v1644, %v1648
          %v1650 = vlaneseq
          %v1651 = vshrl.u32 %v1650, 7
          %v1652 = vsub.s32 1, %v1651
          %v1653 = vrot.slane %v1644, %v1652
          %v1656 = vadd.f32 %v1580, %v1649
          %v1657 = vadd.f32 %v1581, %v1653
          %v1658 = vadd.f32 %v1582, %v1649
          %v1659 = vadd.f32 %v1583, %v1653
          %v1660 = vadd.f32 %v1584, %v1649
          %v1661 = vadd.f32 %v1585, %v1653
          %v1662 = vadd.f32 %v1586, %v1649
          %v1663 = vadd.f32 %v1587, %v1653
          %v1664 = vadd.f32 %v1588, %v1649
          %v1665 = vadd.f32 %v1589, %v1653
          %v1666 = vadd.f32 %v1590, %v1649
          %v1667 = vadd.f32 %v1591, %v1653
          %v1668 = vadd.f32 %v1592, %v1649
          %v1669 = vadd.f32 %v1593, %v1653
          %v1670 = vadd.f32 %v1594, %v1649
          %v1671 = vadd.f32 %v1595, %v1653
          %v1672 = vadd.f32 %v1596, %v1649
          %v1673 = vadd.f32 %v1597, %v1653
          %v1674 = vadd.f32 %v1598, %v1649
          %v1675 = vadd.f32 %v1599, %v1653
          %v1676 = vadd.f32 %v1600, %v1649
          %v1677 = vadd.f32 %v1601, %v1653
          %v1678 = vadd.f32 %v1602, %v1649
          %v1679 = vadd.f32 %v1603, %v1653
          %v1680 = vadd.f32 %v1604, %v1649
          %v1681 = vadd.f32 %v1605, %v1653
          %v1682 = vadd.f32 %v1606, %v1649
          %v1683 = vadd.f32 %v1607, %v1653
          %v1684 = vadd.f32 %v1608, %v1649
          %v1685 = vadd.f32 %v1609, %v1653
          %v1686 = vadd.f32 %v1610, %v1649
          %v1687 = vadd.f32 %v1611, %v1653
          %v1688 = vadd.f32 %v1612, %v1649
          %v1689 = vadd.f32 %v1613, %v1653
          %v1690 = vadd.f32 %v1614, %v1649
          %v1691 = vadd.f32 %v1615, %v1653
          %v1692 = vadd.f32 %v1616, %v1649
          %v1693 = vadd.f32 %v1617, %v1653
          %v1694 = vadd.f32 %v1618, %v1649
          %v1695 = vadd.f32 %v1619, %v1653
          %v1696 = vadd.f32 %v1620, %v1649
          %v1697 = vadd.f32 %v1621, %v1653
          %v1698 = vadd.f32 %v1622, %v1649
          %v1699 = vadd.f32 %v1623, %v1653
          %v1700 = vadd.f32 %v1624, %v1649
          %v1701 = vadd.f32 %v1625, %v1653
          %v1702 = vadd.f32 %v1626, %v1649
          %v1703 = vadd.f32 %v1627, %v1653
          %v1704 = vadd.f32 %v1628, %v1649
          %v1705 = vadd.f32 %v1629, %v1653
          %v1706 = vadd.f32 %v1630, %v1649
          %v1707 = vadd.f32 %v1631, %v1653
          %v1708 = vadd.f32 %v1632, %v1649
          %v1709 = vadd.f32 %v1633, %v1653
          %v1710 = vadd.f32 %v1634, %v1649
          %v1711 = vadd.f32 %v1635, %v1653
          %v1712 = vadd.f32 %v1636, %v1649
          %v1713 = vadd.f32 %v1637, %v1653
          %v1714 = vadd.f32 %v1638, %v1649
          %v1715 = vadd.f32 %v1639, %v1653
          %v1716 = vadd.f32 %v1640, %v1649
          %v1717 = vadd.f32 %v1641, %v1653
          %v1718 = vadd.f32 %v1642, %v1649
          %v1719 = vadd.f32 %v1643, %v1653
          %v1720 = vadd.f32 %v1656, %v1657
          %1721 = vadd.xlane.f32.xlu0 %v1720
          %v1722 = vpop.xlane.xlu0 %1721
          %v1723 = vadd.f32 %v1658, %v1659
          %1724 = vadd.xlane.f32.xlu0 %v1723
          %v1725 = vpop.xlane.xlu0 %1724
          %v1726 = vadd.f32 %v1660, %v1661
          %1727 = vadd.xlane.f32.xlu0 %v1726
          %v1728 = vpop.xlane.xlu0 %1727
          %v1729 = vadd.f32 %v1662, %v1663
          %1730 = vadd.xlane.f32.xlu0 %v1729
          %v1731 = vpop.xlane.xlu0 %1730
          %v1732 = vadd.f32 %v1664, %v1665
          %1733 = vadd.xlane.f32.xlu0 %v1732
          %v1734 = vpop.xlane.xlu0 %1733
          %v1735 = vadd.f32 %v1666, %v1667
          %1736 = vadd.xlane.f32.xlu0 %v1735
          %v1737 = vpop.xlane.xlu0 %1736
          %v1738 = vadd.f32 %v1668, %v1669
          %1739 = vadd.xlane.f32.xlu0 %v1738
          %v1740 = vpop.xlane.xlu0 %1739
          %v1741 = vadd.f32 %v1670, %v1671
          %1742 = vadd.xlane.f32.xlu0 %v1741
          %v1743 = vpop.xlane.xlu0 %1742
          %v1744 = vadd.f32 %v1672, %v1673
          %1745 = vadd.xlane.f32.xlu0 %v1744
          %v1746 = vpop.xlane.xlu0 %1745
          %v1747 = vadd.f32 %v1674, %v1675
          %1748 = vadd.xlane.f32.xlu0 %v1747
          %v1749 = vpop.xlane.xlu0 %1748
          %v1750 = vadd.f32 %v1676, %v1677
          %1751 = vadd.xlane.f32.xlu0 %v1750
          %v1752 = vpop.xlane.xlu0 %1751
          %v1753 = vadd.f32 %v1678, %v1679
          %1754 = vadd.xlane.f32.xlu0 %v1753
          %v1755 = vpop.xlane.xlu0 %1754
          %v1756 = vadd.f32 %v1680, %v1681
          %1757 = vadd.xlane.f32.xlu0 %v1756
          %v1758 = vpop.xlane.xlu0 %1757
          %v1759 = vadd.f32 %v1682, %v1683
          %1760 = vadd.xlane.f32.xlu0 %v1759
          %v1761 = vpop.xlane.xlu0 %1760
          %v1762 = vadd.f32 %v1684, %v1685
          %1763 = vadd.xlane.f32.xlu0 %v1762
          %v1764 = vpop.xlane.xlu0 %1763
          %v1765 = vadd.f32 %v1686, %v1687
          %1766 = vadd.xlane.f32.xlu0 %v1765
          %v1767 = vpop.xlane.xlu0 %1766
          %v1768 = vadd.f32 %v1688, %v1689
          %1769 = vadd.xlane.f32.xlu0 %v1768
          %v1770 = vpop.xlane.xlu0 %1769
          %v1771 = vadd.f32 %v1690, %v1691
          %1772 = vadd.xlane.f32.xlu0 %v1771
          %v1773 = vpop.xlane.xlu0 %1772
          %v1774 = vadd.f32 %v1692, %v1693
          %1775 = vadd.xlane.f32.xlu0 %v1774
          %v1776 = vpop.xlane.xlu0 %1775
          %v1777 = vadd.f32 %v1694, %v1695
          %1778 = vadd.xlane.f32.xlu0 %v1777
          %v1779 = vpop.xlane.xlu0 %1778
          %v1780 = vadd.f32 %v1696, %v1697
          %1781 = vadd.xlane.f32.xlu0 %v1780
          %v1782 = vpop.xlane.xlu0 %1781
          %v1783 = vadd.f32 %v1698, %v1699
          %1784 = vadd.xlane.f32.xlu0 %v1783
          %v1785 = vpop.xlane.xlu0 %1784
          %v1786 = vadd.f32 %v1700, %v1701
          %1787 = vadd.xlane.f32.xlu0 %v1786
          %v1788 = vpop.xlane.xlu0 %1787
          %v1789 = vadd.f32 %v1702, %v1703
          %1790 = vadd.xlane.f32.xlu0 %v1789
          %v1791 = vpop.xlane.xlu0 %1790
          %v1792 = vadd.f32 %v1704, %v1705
          %1793 = vadd.xlane.f32.xlu0 %v1792
          %v1794 = vpop.xlane.xlu0 %1793
          %v1795 = vadd.f32 %v1706, %v1707
          %1796 = vadd.xlane.f32.xlu0 %v1795
          %v1797 = vpop.xlane.xlu0 %1796
          %v1798 = vadd.f32 %v1708, %v1709
          %1799 = vadd.xlane.f32.xlu0 %v1798
          %v1800 = vpop.xlane.xlu0 %1799
          %v1801 = vadd.f32 %v1710, %v1711
          %1802 = vadd.xlane.f32.xlu0 %v1801
          %v1803 = vpop.xlane.xlu0 %1802
          %v1804 = vadd.f32 %v1712, %v1713
          %1805 = vadd.xlane.f32.xlu0 %v1804
          %v1806 = vpop.xlane.xlu0 %1805
          %v1807 = vadd.f32 %v1714, %v1715
          %1808 = vadd.xlane.f32.xlu0 %v1807
          %v1809 = vpop.xlane.xlu0 %1808
          %v1810 = vadd.f32 %v1716, %v1717
          %1811 = vadd.xlane.f32.xlu0 %v1810
          %v1812 = vpop.xlane.xlu0 %1811
          %v1813 = vadd.f32 %v1718, %v1719
          %1814 = vadd.xlane.f32.xlu0 %v1813
          %v1815 = vpop.xlane.xlu0 %1814
          %v1816 = vmul.f32 %v1722, 0.00390625
          %v1817 = vmul.f32 %v1725, 0.00390625
          %v1818 = vmul.f32 %v1728, 0.00390625
          %v1819 = vmul.f32 %v1731, 0.00390625
          %v1820 = vmul.f32 %v1734, 0.00390625
          %v1821 = vmul.f32 %v1737, 0.00390625
          %v1822 = vmul.f32 %v1740, 0.00390625
          %v1823 = vmul.f32 %v1743, 0.00390625
          %v1824 = vmul.f32 %v1746, 0.00390625
          %v1825 = vmul.f32 %v1749, 0.00390625
          %v1826 = vmul.f32 %v1752, 0.00390625
          %v1827 = vmul.f32 %v1755, 0.00390625
          %v1828 = vmul.f32 %v1758, 0.00390625
          %v1829 = vmul.f32 %v1761, 0.00390625
          %v1830 = vmul.f32 %v1764, 0.00390625
          %v1831 = vmul.f32 %v1767, 0.00390625
          %v1832 = vmul.f32 %v1770, 0.00390625
          %v1833 = vmul.f32 %v1773, 0.00390625
          %v1834 = vmul.f32 %v1776, 0.00390625
          %v1835 = vmul.f32 %v1779, 0.00390625
          %v1836 = vmul.f32 %v1782, 0.00390625
          %v1837 = vmul.f32 %v1785, 0.00390625
          %v1838 = vmul.f32 %v1788, 0.00390625
          %v1839 = vmul.f32 %v1791, 0.00390625
          %v1840 = vmul.f32 %v1794, 0.00390625
          %v1841 = vmul.f32 %v1797, 0.00390625
          %v1842 = vmul.f32 %v1800, 0.00390625
          %v1843 = vmul.f32 %v1803, 0.00390625
          %v1844 = vmul.f32 %v1806, 0.00390625
          %v1845 = vmul.f32 %v1809, 0.00390625
          %v1846 = vmul.f32 %v1812, 0.00390625
          %v1847 = vmul.f32 %v1815, 0.00390625
          %v1848 = vmul.f32 %v1656, %v1656
          %v1849 = vmul.f32 %v1657, %v1657
          %v1850 = vmul.f32 %v1658, %v1658
          %v1851 = vmul.f32 %v1659, %v1659
          %v1852 = vmul.f32 %v1660, %v1660
          %v1853 = vmul.f32 %v1661, %v1661
          %v1854 = vmul.f32 %v1662, %v1662
          %v1855 = vmul.f32 %v1663, %v1663
          %v1856 = vmul.f32 %v1664, %v1664
          %v1857 = vmul.f32 %v1665, %v1665
          %v1858 = vmul.f32 %v1666, %v1666
          %v1859 = vmul.f32 %v1667, %v1667
          %v1860 = vmul.f32 %v1668, %v1668
          %v1861 = vmul.f32 %v1669, %v1669
          %v1862 = vmul.f32 %v1670, %v1670
          %v1863 = vmul.f32 %v1671, %v1671
          %v1864 = vmul.f32 %v1672, %v1672
          %v1865 = vmul.f32 %v1673, %v1673
          %v1866 = vmul.f32 %v1674, %v1674
          %v1867 = vmul.f32 %v1675, %v1675
          %v1868 = vmul.f32 %v1676, %v1676
          %v1869 = vmul.f32 %v1677, %v1677
          %v1870 = vmul.f32 %v1678, %v1678
          %v1871 = vmul.f32 %v1679, %v1679
          %v1872 = vmul.f32 %v1680, %v1680
          %v1873 = vmul.f32 %v1681, %v1681
          %v1874 = vmul.f32 %v1682, %v1682
          %v1875 = vmul.f32 %v1683, %v1683
          %v1876 = vmul.f32 %v1684, %v1684
          %v1877 = vmul.f32 %v1685, %v1685
          %v1878 = vmul.f32 %v1686, %v1686
          %v1879 = vmul.f32 %v1687, %v1687
          %v1880 = vmul.f32 %v1688, %v1688
          %v1881 = vmul.f32 %v1689, %v1689
          %v1882 = vmul.f32 %v1690, %v1690
          %v1883 = vmul.f32 %v1691, %v1691
          %v1884 = vmul.f32 %v1692, %v1692
          %v1885 = vmul.f32 %v1693, %v1693
          %v1886 = vmul.f32 %v1694, %v1694
          %v1887 = vmul.f32 %v1695, %v1695
          %v1888 = vmul.f32 %v1696, %v1696
          %v1889 = vmul.f32 %v1697, %v1697
          %v1890 = vmul.f32 %v1698, %v1698
          %v1891 = vmul.f32 %v1699, %v1699
          %v1892 = vmul.f32 %v1700, %v1700
          %v1893 = vmul.f32 %v1701, %v1701
          %v1894 = vmul.f32 %v1702, %v1702
          %v1895 = vmul.f32 %v1703, %v1703
          %v1896 = vmul.f32 %v1704, %v1704
          %v1897 = vmul.f32 %v1705, %v1705
          %v1898 = vmul.f32 %v1706, %v1706
          %v1899 = vmul.f32 %v1707, %v1707
          %v1900 = vmul.f32 %v1708, %v1708
          %v1901 = vmul.f32 %v1709, %v1709
          %v1902 = vmul.f32 %v1710, %v1710
          %v1903 = vmul.f32 %v1711, %v1711
          %v1904 = vmul.f32 %v1712, %v1712
          %v1905 = vmul.f32 %v1713, %v1713
          %v1906 = vmul.f32 %v1714, %v1714
          %v1907 = vmul.f32 %v1715, %v1715
          %v1908 = vmul.f32 %v1716, %v1716
          %v1909 = vmul.f32 %v1717, %v1717
          %v1910 = vmul.f32 %v1718, %v1718
          %v1911 = vmul.f32 %v1719, %v1719
          %v1912 = vadd.f32 %v1848, %v1849
          %1913 = vadd.xlane.f32.xlu0 %v1912
          %v1914 = vpop.xlane.xlu0 %1913
          %v1915 = vadd.f32 %v1850, %v1851
          %1916 = vadd.xlane.f32.xlu0 %v1915
          %v1917 = vpop.xlane.xlu0 %1916
          %v1918 = vadd.f32 %v1852, %v1853
          %1919 = vadd.xlane.f32.xlu0 %v1918
          %v1920 = vpop.xlane.xlu0 %1919
          %v1921 = vadd.f32 %v1854, %v1855
          %1922 = vadd.xlane.f32.xlu0 %v1921
          %v1923 = vpop.xlane.xlu0 %1922
          %v1924 = vadd.f32 %v1856, %v1857
          %1925 = vadd.xlane.f32.xlu0 %v1924
          %v1926 = vpop.xlane.xlu0 %1925
          %v1927 = vadd.f32 %v1858, %v1859
          %1928 = vadd.xlane.f32.xlu0 %v1927
          %v1929 = vpop.xlane.xlu0 %1928
          %v1930 = vadd.f32 %v1860, %v1861
          %1931 = vadd.xlane.f32.xlu0 %v1930
          %v1932 = vpop.xlane.xlu0 %1931
          %v1933 = vadd.f32 %v1862, %v1863
          %1934 = vadd.xlane.f32.xlu0 %v1933
          %v1935 = vpop.xlane.xlu0 %1934
          %v1936 = vadd.f32 %v1864, %v1865
          %1937 = vadd.xlane.f32.xlu0 %v1936
          %v1938 = vpop.xlane.xlu0 %1937
          %v1939 = vadd.f32 %v1866, %v1867
          %1940 = vadd.xlane.f32.xlu0 %v1939
          %v1941 = vpop.xlane.xlu0 %1940
          %v1942 = vadd.f32 %v1868, %v1869
          %1943 = vadd.xlane.f32.xlu0 %v1942
          %v1944 = vpop.xlane.xlu0 %1943
          %v1945 = vadd.f32 %v1870, %v1871
          %1946 = vadd.xlane.f32.xlu0 %v1945
          %v1947 = vpop.xlane.xlu0 %1946
          %v1948 = vadd.f32 %v1872, %v1873
          %1949 = vadd.xlane.f32.xlu0 %v1948
          %v1950 = vpop.xlane.xlu0 %1949
          %v1951 = vadd.f32 %v1874, %v1875
          %1952 = vadd.xlane.f32.xlu0 %v1951
          %v1953 = vpop.xlane.xlu0 %1952
          %v1954 = vadd.f32 %v1876, %v1877
          %1955 = vadd.xlane.f32.xlu0 %v1954
          %v1956 = vpop.xlane.xlu0 %1955
          %v1957 = vadd.f32 %v1878, %v1879
          %1958 = vadd.xlane.f32.xlu0 %v1957
          %v1959 = vpop.xlane.xlu0 %1958
          %v1960 = vadd.f32 %v1880, %v1881
          %1961 = vadd.xlane.f32.xlu0 %v1960
          %v1962 = vpop.xlane.xlu0 %1961
          %v1963 = vadd.f32 %v1882, %v1883
          %1964 = vadd.xlane.f32.xlu0 %v1963
          %v1965 = vpop.xlane.xlu0 %1964
          %v1966 = vadd.f32 %v1884, %v1885
          %1967 = vadd.xlane.f32.xlu0 %v1966
          %v1968 = vpop.xlane.xlu0 %1967
          %v1969 = vadd.f32 %v1886, %v1887
          %1970 = vadd.xlane.f32.xlu0 %v1969
          %v1971 = vpop.xlane.xlu0 %1970
          %v1972 = vadd.f32 %v1888, %v1889
          %1973 = vadd.xlane.f32.xlu0 %v1972
          %v1974 = vpop.xlane.xlu0 %1973
          %v1975 = vadd.f32 %v1890, %v1891
          %1976 = vadd.xlane.f32.xlu0 %v1975
          %v1977 = vpop.xlane.xlu0 %1976
          %v1978 = vadd.f32 %v1892, %v1893
          %1979 = vadd.xlane.f32.xlu0 %v1978
          %v1980 = vpop.xlane.xlu0 %1979
          %v1981 = vadd.f32 %v1894, %v1895
          %1982 = vadd.xlane.f32.xlu0 %v1981
          %v1983 = vpop.xlane.xlu0 %1982
          %v1984 = vadd.f32 %v1896, %v1897
          %1985 = vadd.xlane.f32.xlu0 %v1984
          %v1986 = vpop.xlane.xlu0 %1985
          %v1987 = vadd.f32 %v1898, %v1899
          %1988 = vadd.xlane.f32.xlu0 %v1987
          %v1989 = vpop.xlane.xlu0 %1988
          %v1990 = vadd.f32 %v1900, %v1901
          %1991 = vadd.xlane.f32.xlu0 %v1990
          %v1992 = vpop.xlane.xlu0 %1991
          %v1993 = vadd.f32 %v1902, %v1903
          %1994 = vadd.xlane.f32.xlu0 %v1993
          %v1995 = vpop.xlane.xlu0 %1994
          %v1996 = vadd.f32 %v1904, %v1905
          %1997 = vadd.xlane.f32.xlu0 %v1996
          %v1998 = vpop.xlane.xlu0 %1997
          %v1999 = vadd.f32 %v1906, %v1907
          %2000 = vadd.xlane.f32.xlu0 %v1999
          %v2001 = vpop.xlane.xlu0 %2000
          %v2002 = vadd.f32 %v1908, %v1909
          %2003 = vadd.xlane.f32.xlu0 %v2002
          %v2004 = vpop.xlane.xlu0 %2003
          %v2005 = vadd.f32 %v1910, %v1911
          %2006 = vadd.xlane.f32.xlu0 %v2005
          %v2007 = vpop.xlane.xlu0 %2006
          %v2008 = vmul.f32 %v1914, 0.00390625
          %v2009 = vmul.f32 %v1917, 0.00390625
          %v2010 = vmul.f32 %v1920, 0.00390625
          %v2011 = vmul.f32 %v1923, 0.00390625
          %v2012 = vmul.f32 %v1926, 0.00390625
          %v2013 = vmul.f32 %v1929, 0.00390625
          %v2014 = vmul.f32 %v1932, 0.00390625
          %v2015 = vmul.f32 %v1935, 0.00390625
          %v2016 = vmul.f32 %v1938, 0.00390625
          %v2017 = vmul.f32 %v1941, 0.00390625
          %v2018 = vmul.f32 %v1944, 0.00390625
          %v2019 = vmul.f32 %v1947, 0.00390625
          %v2020 = vmul.f32 %v1950, 0.00390625
          %v2021 = vmul.f32 %v1953, 0.00390625
          %v2022 = vmul.f32 %v1956, 0.00390625
          %v2023 = vmul.f32 %v1959, 0.00390625
          %v2024 = vmul.f32 %v1962, 0.00390625
          %v2025 = vmul.f32 %v1965, 0.00390625
          %v2026 = vmul.f32 %v1968, 0.00390625
          %v2027 = vmul.f32 %v1971, 0.00390625
          %v2028 = vmul.f32 %v1974, 0.00390625
          %v2029 = vmul.f32 %v1977, 0.00390625
          %v2030 = vmul.f32 %v1980, 0.00390625
          %v2031 = vmul.f32 %v1983, 0.00390625
          %v2032 = vmul.f32 %v1986, 0.00390625
          %v2033 = vmul.f32 %v1989, 0.00390625
          %v2034 = vmul.f32 %v1992, 0.00390625
          %v2035 = vmul.f32 %v1995, 0.00390625
          %v2036 = vmul.f32 %v1998, 0.00390625
          %v2037 = vmul.f32 %v2001, 0.00390625
          %v2038 = vmul.f32 %v2004, 0.00390625
          %v2039 = vmul.f32 %v2007, 0.00390625
          %v2040 = vmul.f32 %v1816, %v1816
          %v2041 = vmul.f32 %v1817, %v1817
          %v2042 = vmul.f32 %v1818, %v1818
          %v2043 = vmul.f32 %v1819, %v1819
          %v2044 = vmul.f32 %v1820, %v1820
          %v2045 = vmul.f32 %v1821, %v1821
          %v2046 = vmul.f32 %v1822, %v1822
          %v2047 = vmul.f32 %v1823, %v1823
          %v2048 = vmul.f32 %v1824, %v1824
          %v2049 = vmul.f32 %v1825, %v1825
          %v2050 = vmul.f32 %v1826, %v1826
          %v2051 = vmul.f32 %v1827, %v1827
          %v2052 = vmul.f32 %v1828, %v1828
          %v2053 = vmul.f32 %v1829, %v1829
          %v2054 = vmul.f32 %v1830, %v1830
          %v2055 = vmul.f32 %v1831, %v1831
          %v2056 = vmul.f32 %v1832, %v1832
          %v2057 = vmul.f32 %v1833, %v1833
          %v2058 = vmul.f32 %v1834, %v1834
          %v2059 = vmul.f32 %v1835, %v1835
          %v2060 = vmul.f32 %v1836, %v1836
          %v2061 = vmul.f32 %v1837, %v1837
          %v2062 = vmul.f32 %v1838, %v1838
          %v2063 = vmul.f32 %v1839, %v1839
          %v2064 = vmul.f32 %v1840, %v1840
          %v2065 = vmul.f32 %v1841, %v1841
          %v2066 = vmul.f32 %v1842, %v1842
          %v2067 = vmul.f32 %v1843, %v1843
          %v2068 = vmul.f32 %v1844, %v1844
          %v2069 = vmul.f32 %v1845, %v1845
          %v2070 = vmul.f32 %v1846, %v1846
          %v2071 = vmul.f32 %v1847, %v1847
          %v2072 = vsub.f32 %v2008, %v2040
          %v2073 = vsub.f32 %v2009, %v2041
          %v2074 = vsub.f32 %v2010, %v2042
          %v2075 = vsub.f32 %v2011, %v2043
          %v2076 = vsub.f32 %v2012, %v2044
          %v2077 = vsub.f32 %v2013, %v2045
          %v2078 = vsub.f32 %v2014, %v2046
          %v2079 = vsub.f32 %v2015, %v2047
          %v2080 = vsub.f32 %v2016, %v2048
          %v2081 = vsub.f32 %v2017, %v2049
          %v2082 = vsub.f32 %v2018, %v2050
          %v2083 = vsub.f32 %v2019, %v2051
          %v2084 = vsub.f32 %v2020, %v2052
          %v2085 = vsub.f32 %v2021, %v2053
          %v2086 = vsub.f32 %v2022, %v2054
          %v2087 = vsub.f32 %v2023, %v2055
          %v2088 = vsub.f32 %v2024, %v2056
          %v2089 = vsub.f32 %v2025, %v2057
          %v2090 = vsub.f32 %v2026, %v2058
          %v2091 = vsub.f32 %v2027, %v2059
          %v2092 = vsub.f32 %v2028, %v2060
          %v2093 = vsub.f32 %v2029, %v2061
          %v2094 = vsub.f32 %v2030, %v2062
          %v2095 = vsub.f32 %v2031, %v2063
          %v2096 = vsub.f32 %v2032, %v2064
          %v2097 = vsub.f32 %v2033, %v2065
          %v2098 = vsub.f32 %v2034, %v2066
          %v2099 = vsub.f32 %v2035, %v2067
          %v2100 = vsub.f32 %v2036, %v2068
          %v2101 = vsub.f32 %v2037, %v2069
          %v2102 = vsub.f32 %v2038, %v2070
          %v2103 = vsub.f32 %v2039, %v2071
          %v2104 = vsub.f32 %v1656, %v1816
          %v2105 = vsub.f32 %v1657, %v1816
          %v2106 = vsub.f32 %v1658, %v1817
          %v2107 = vsub.f32 %v1659, %v1817
          %v2108 = vsub.f32 %v1660, %v1818
          %v2109 = vsub.f32 %v1661, %v1818
          %v2110 = vsub.f32 %v1662, %v1819
          %v2111 = vsub.f32 %v1663, %v1819
          %v2112 = vsub.f32 %v1664, %v1820
          %v2113 = vsub.f32 %v1665, %v1820
          %v2114 = vsub.f32 %v1666, %v1821
          %v2115 = vsub.f32 %v1667, %v1821
          %v2116 = vsub.f32 %v1668, %v1822
          %v2117 = vsub.f32 %v1669, %v1822
          %v2118 = vsub.f32 %v1670, %v1823
          %v2119 = vsub.f32 %v1671, %v1823
          %v2120 = vsub.f32 %v1672, %v1824
          %v2121 = vsub.f32 %v1673, %v1824
          %v2122 = vsub.f32 %v1674, %v1825
          %v2123 = vsub.f32 %v1675, %v1825
          %v2124 = vsub.f32 %v1676, %v1826
          %v2125 = vsub.f32 %v1677, %v1826
          %v2126 = vsub.f32 %v1678, %v1827
          %v2127 = vsub.f32 %v1679, %v1827
          %v2128 = vsub.f32 %v1680, %v1828
          %v2129 = vsub.f32 %v1681, %v1828
          %v2130 = vsub.f32 %v1682, %v1829
          %v2131 = vsub.f32 %v1683, %v1829
          %v2132 = vsub.f32 %v1684, %v1830
          %v2133 = vsub.f32 %v1685, %v1830
          %v2134 = vsub.f32 %v1686, %v1831
          %v2135 = vsub.f32 %v1687, %v1831
          %v2136 = vsub.f32 %v1688, %v1832
          %v2137 = vsub.f32 %v1689, %v1832
          %v2138 = vsub.f32 %v1690, %v1833
          %v2139 = vsub.f32 %v1691, %v1833
          %v2140 = vsub.f32 %v1692, %v1834
          %v2141 = vsub.f32 %v1693, %v1834
          %v2142 = vsub.f32 %v1694, %v1835
          %v2143 = vsub.f32 %v1695, %v1835
          %v2144 = vsub.f32 %v1696, %v1836
          %v2145 = vsub.f32 %v1697, %v1836
          %v2146 = vsub.f32 %v1698, %v1837
          %v2147 = vsub.f32 %v1699, %v1837
          %v2148 = vsub.f32 %v1700, %v1838
          %v2149 = vsub.f32 %v1701, %v1838
          %v2150 = vsub.f32 %v1702, %v1839
          %v2151 = vsub.f32 %v1703, %v1839
          %v2152 = vsub.f32 %v1704, %v1840
          %v2153 = vsub.f32 %v1705, %v1840
          %v2154 = vsub.f32 %v1706, %v1841
          %v2155 = vsub.f32 %v1707, %v1841
          %v2156 = vsub.f32 %v1708, %v1842
          %v2157 = vsub.f32 %v1709, %v1842
          %v2158 = vsub.f32 %v1710, %v1843
          %v2159 = vsub.f32 %v1711, %v1843
          %v2160 = vsub.f32 %v1712, %v1844
          %v2161 = vsub.f32 %v1713, %v1844
          %v2162 = vsub.f32 %v1714, %v1845
          %v2163 = vsub.f32 %v1715, %v1845
          %v2164 = vsub.f32 %v1716, %v1846
          %v2165 = vsub.f32 %v1717, %v1846
          %v2166 = vsub.f32 %v1718, %v1847
          %v2167 = vsub.f32 %v1719, %v1847
          %v2168 = vadd.f32 %v2072, 1e-05
          %v2169 = vadd.f32 %v2073, 1e-05
          %v2170 = vadd.f32 %v2074, 1e-05
          %v2171 = vadd.f32 %v2075, 1e-05
          %v2172 = vadd.f32 %v2076, 1e-05
          %v2173 = vadd.f32 %v2077, 1e-05
          %v2174 = vadd.f32 %v2078, 1e-05
          %v2175 = vadd.f32 %v2079, 1e-05
          %v2176 = vadd.f32 %v2080, 1e-05
          %v2177 = vadd.f32 %v2081, 1e-05
          %v2178 = vadd.f32 %v2082, 1e-05
          %v2179 = vadd.f32 %v2083, 1e-05
          %v2180 = vadd.f32 %v2084, 1e-05
          %v2181 = vadd.f32 %v2085, 1e-05
          %v2182 = vadd.f32 %v2086, 1e-05
          %v2183 = vadd.f32 %v2087, 1e-05
          %v2184 = vadd.f32 %v2088, 1e-05
          %v2185 = vadd.f32 %v2089, 1e-05
          %v2186 = vadd.f32 %v2090, 1e-05
          %v2187 = vadd.f32 %v2091, 1e-05
          %v2188 = vadd.f32 %v2092, 1e-05
          %v2189 = vadd.f32 %v2093, 1e-05
          %v2190 = vadd.f32 %v2094, 1e-05
          %v2191 = vadd.f32 %v2095, 1e-05
          %v2192 = vadd.f32 %v2096, 1e-05
          %v2193 = vadd.f32 %v2097, 1e-05
          %v2194 = vadd.f32 %v2098, 1e-05
          %v2195 = vadd.f32 %v2099, 1e-05
          %v2196 = vadd.f32 %v2100, 1e-05
          %v2197 = vadd.f32 %v2101, 1e-05
          %v2198 = vadd.f32 %v2102, 1e-05
          %v2199 = vadd.f32 %v2103, 1e-05
          %v2200 = vrsqrt.pop %v2168
          %v2201 = vrsqrt.pop %v2169
          %v2202 = vrsqrt.pop %v2170
          %v2203 = vrsqrt.pop %v2171
          %v2204 = vrsqrt.pop %v2172
          %v2205 = vrsqrt.pop %v2173
          %v2206 = vrsqrt.pop %v2174
          %v2207 = vrsqrt.pop %v2175
          %v2208 = vrsqrt.pop %v2176
          %v2209 = vrsqrt.pop %v2177
          %v2210 = vrsqrt.pop %v2178
          %v2211 = vrsqrt.pop %v2179
          %v2212 = vrsqrt.pop %v2180
          %v2213 = vrsqrt.pop %v2181
          %v2214 = vrsqrt.pop %v2182
          %v2215 = vrsqrt.pop %v2183
          %v2216 = vrsqrt.pop %v2184
          %v2217 = vrsqrt.pop %v2185
          %v2218 = vrsqrt.pop %v2186
          %v2219 = vrsqrt.pop %v2187
          %v2220 = vrsqrt.pop %v2188
          %v2221 = vrsqrt.pop %v2189
          %v2222 = vrsqrt.pop %v2190
          %v2223 = vrsqrt.pop %v2191
          %v2224 = vrsqrt.pop %v2192
          %v2225 = vrsqrt.pop %v2193
          %v2226 = vrsqrt.pop %v2194
          %v2227 = vrsqrt.pop %v2195
          %v2228 = vrsqrt.pop %v2196
          %v2229 = vrsqrt.pop %v2197
          %v2230 = vrsqrt.pop %v2198
          %v2231 = vrsqrt.pop %v2199
          %v2232 = vmul.f32 %v2104, %v2200
          %v2233 = vmul.f32 %v2105, %v2200
          %v2234 = vmul.f32 %v2106, %v2201
          %v2235 = vmul.f32 %v2107, %v2201
          %v2236 = vmul.f32 %v2108, %v2202
          %v2237 = vmul.f32 %v2109, %v2202
          %v2238 = vmul.f32 %v2110, %v2203
          %v2239 = vmul.f32 %v2111, %v2203
          %v2240 = vmul.f32 %v2112, %v2204
          %v2241 = vmul.f32 %v2113, %v2204
          %v2242 = vmul.f32 %v2114, %v2205
          %v2243 = vmul.f32 %v2115, %v2205
          %v2244 = vmul.f32 %v2116, %v2206
          %v2245 = vmul.f32 %v2117, %v2206
          %v2246 = vmul.f32 %v2118, %v2207
          %v2247 = vmul.f32 %v2119, %v2207
          %v2248 = vmul.f32 %v2120, %v2208
          %v2249 = vmul.f32 %v2121, %v2208
          %v2250 = vmul.f32 %v2122, %v2209
          %v2251 = vmul.f32 %v2123, %v2209
          %v2252 = vmul.f32 %v2124, %v2210
          %v2253 = vmul.f32 %v2125, %v2210
          %v2254 = vmul.f32 %v2126, %v2211
          %v2255 = vmul.f32 %v2127, %v2211
          %v2256 = vmul.f32 %v2128, %v2212
          %v2257 = vmul.f32 %v2129, %v2212
          %v2258 = vmul.f32 %v2130, %v2213
          %v2259 = vmul.f32 %v2131, %v2213
          %v2260 = vmul.f32 %v2132, %v2214
          %v2261 = vmul.f32 %v2133, %v2214
          %v2262 = vmul.f32 %v2134, %v2215
          %v2263 = vmul.f32 %v2135, %v2215
          %v2264 = vmul.f32 %v2136, %v2216
          %v2265 = vmul.f32 %v2137, %v2216
          %v2266 = vmul.f32 %v2138, %v2217
          %v2267 = vmul.f32 %v2139, %v2217
          %v2268 = vmul.f32 %v2140, %v2218
          %v2269 = vmul.f32 %v2141, %v2218
          %v2270 = vmul.f32 %v2142, %v2219
          %v2271 = vmul.f32 %v2143, %v2219
          %v2272 = vmul.f32 %v2144, %v2220
          %v2273 = vmul.f32 %v2145, %v2220
          %v2274 = vmul.f32 %v2146, %v2221
          %v2275 = vmul.f32 %v2147, %v2221
          %v2276 = vmul.f32 %v2148, %v2222
          %v2277 = vmul.f32 %v2149, %v2222
          %v2278 = vmul.f32 %v2150, %v2223
          %v2279 = vmul.f32 %v2151, %v2223
          %v2280 = vmul.f32 %v2152, %v2224
          %v2281 = vmul.f32 %v2153, %v2224
          %v2282 = vmul.f32 %v2154, %v2225
          %v2283 = vmul.f32 %v2155, %v2225
          %v2284 = vmul.f32 %v2156, %v2226
          %v2285 = vmul.f32 %v2157, %v2226
          %v2286 = vmul.f32 %v2158, %v2227
          %v2287 = vmul.f32 %v2159, %v2227
          %v2288 = vmul.f32 %v2160, %v2228
          %v2289 = vmul.f32 %v2161, %v2228
          %v2290 = vmul.f32 %v2162, %v2229
          %v2291 = vmul.f32 %v2163, %v2229
          %v2292 = vmul.f32 %v2164, %v2230
          %v2293 = vmul.f32 %v2165, %v2230
          %v2294 = vmul.f32 %v2166, %v2231
          %v2295 = vmul.f32 %v2167, %v2231
          %v2296 = vld [vmem:[%s5] sm:$0x3]
          %v2298 = vlaneseq
          %v2299 = vshrl.u32 %v2298, 7
          %v2300 = vsub.s32 0, %v2299
          %v2301 = vrot.slane %v2296, %v2300
          %v2302 = vlaneseq
          %v2303 = vshrl.u32 %v2302, 7
          %v2304 = vsub.s32 1, %v2303
          %v2305 = vrot.slane %v2296, %v2304
          %v2308 = vmul.f32 %v2232, %v2301
          %v2309 = vmul.f32 %v2233, %v2305
          %v2310 = vmul.f32 %v2234, %v2301
          %v2311 = vmul.f32 %v2235, %v2305
          %v2312 = vmul.f32 %v2236, %v2301
          %v2313 = vmul.f32 %v2237, %v2305
          %v2314 = vmul.f32 %v2238, %v2301
          %v2315 = vmul.f32 %v2239, %v2305
          %v2316 = vmul.f32 %v2240, %v2301
          %v2317 = vmul.f32 %v2241, %v2305
          %v2318 = vmul.f32 %v2242, %v2301
          %v2319 = vmul.f32 %v2243, %v2305
          %v2320 = vmul.f32 %v2244, %v2301
          %v2321 = vmul.f32 %v2245, %v2305
          %v2322 = vmul.f32 %v2246, %v2301
          %v2323 = vmul.f32 %v2247, %v2305
          %v2324 = vmul.f32 %v2248, %v2301
          %v2325 = vmul.f32 %v2249, %v2305
          %v2326 = vmul.f32 %v2250, %v2301
          %v2327 = vmul.f32 %v2251, %v2305
          %v2328 = vmul.f32 %v2252, %v2301
          %v2329 = vmul.f32 %v2253, %v2305
          %v2330 = vmul.f32 %v2254, %v2301
          %v2331 = vmul.f32 %v2255, %v2305
          %v2332 = vmul.f32 %v2256, %v2301
          %v2333 = vmul.f32 %v2257, %v2305
          %v2334 = vmul.f32 %v2258, %v2301
          %v2335 = vmul.f32 %v2259, %v2305
          %v2336 = vmul.f32 %v2260, %v2301
          %v2337 = vmul.f32 %v2261, %v2305
          %v2338 = vmul.f32 %v2262, %v2301
          %v2339 = vmul.f32 %v2263, %v2305
          %v2340 = vmul.f32 %v2264, %v2301
          %v2341 = vmul.f32 %v2265, %v2305
          %v2342 = vmul.f32 %v2266, %v2301
          %v2343 = vmul.f32 %v2267, %v2305
          %v2344 = vmul.f32 %v2268, %v2301
          %v2345 = vmul.f32 %v2269, %v2305
          %v2346 = vmul.f32 %v2270, %v2301
          %v2347 = vmul.f32 %v2271, %v2305
          %v2348 = vmul.f32 %v2272, %v2301
          %v2349 = vmul.f32 %v2273, %v2305
          %v2350 = vmul.f32 %v2274, %v2301
          %v2351 = vmul.f32 %v2275, %v2305
          %v2352 = vmul.f32 %v2276, %v2301
          %v2353 = vmul.f32 %v2277, %v2305
          %v2354 = vmul.f32 %v2278, %v2301
          %v2355 = vmul.f32 %v2279, %v2305
          %v2356 = vmul.f32 %v2280, %v2301
          %v2357 = vmul.f32 %v2281, %v2305
          %v2358 = vmul.f32 %v2282, %v2301
          %v2359 = vmul.f32 %v2283, %v2305
          %v2360 = vmul.f32 %v2284, %v2301
          %v2361 = vmul.f32 %v2285, %v2305
          %v2362 = vmul.f32 %v2286, %v2301
          %v2363 = vmul.f32 %v2287, %v2305
          %v2364 = vmul.f32 %v2288, %v2301
          %v2365 = vmul.f32 %v2289, %v2305
          %v2366 = vmul.f32 %v2290, %v2301
          %v2367 = vmul.f32 %v2291, %v2305
          %v2368 = vmul.f32 %v2292, %v2301
          %v2369 = vmul.f32 %v2293, %v2305
          %v2370 = vmul.f32 %v2294, %v2301
          %v2371 = vmul.f32 %v2295, %v2305
          %v2372 = vld [vmem:[%s6] sm:$0x3]
          %v2374 = vlaneseq
          %v2375 = vshrl.u32 %v2374, 7
          %v2376 = vsub.s32 0, %v2375
          %v2377 = vrot.slane %v2372, %v2376
          %v2378 = vlaneseq
          %v2379 = vshrl.u32 %v2378, 7
          %v2380 = vsub.s32 1, %v2379
          %v2381 = vrot.slane %v2372, %v2380
          %v2384 = vadd.f32 %v2308, %v2377
          %v2385 = vadd.f32 %v2309, %v2381
          %v2386 = vadd.f32 %v2310, %v2377
          %v2387 = vadd.f32 %v2311, %v2381
          %v2388 = vadd.f32 %v2312, %v2377
          %v2389 = vadd.f32 %v2313, %v2381
          %v2390 = vadd.f32 %v2314, %v2377
          %v2391 = vadd.f32 %v2315, %v2381
          %v2392 = vadd.f32 %v2316, %v2377
          %v2393 = vadd.f32 %v2317, %v2381
          %v2394 = vadd.f32 %v2318, %v2377
          %v2395 = vadd.f32 %v2319, %v2381
          %v2396 = vadd.f32 %v2320, %v2377
          %v2397 = vadd.f32 %v2321, %v2381
          %v2398 = vadd.f32 %v2322, %v2377
          %v2399 = vadd.f32 %v2323, %v2381
          %v2400 = vadd.f32 %v2324, %v2377
          %v2401 = vadd.f32 %v2325, %v2381
          %v2402 = vadd.f32 %v2326, %v2377
          %v2403 = vadd.f32 %v2327, %v2381
          %v2404 = vadd.f32 %v2328, %v2377
          %v2405 = vadd.f32 %v2329, %v2381
          %v2406 = vadd.f32 %v2330, %v2377
          %v2407 = vadd.f32 %v2331, %v2381
          %v2408 = vadd.f32 %v2332, %v2377
          %v2409 = vadd.f32 %v2333, %v2381
          %v2410 = vadd.f32 %v2334, %v2377
          %v2411 = vadd.f32 %v2335, %v2381
          %v2412 = vadd.f32 %v2336, %v2377
          %v2413 = vadd.f32 %v2337, %v2381
          %v2414 = vadd.f32 %v2338, %v2377
          %v2415 = vadd.f32 %v2339, %v2381
          %v2416 = vadd.f32 %v2340, %v2377
          %v2417 = vadd.f32 %v2341, %v2381
          %v2418 = vadd.f32 %v2342, %v2377
          %v2419 = vadd.f32 %v2343, %v2381
          %v2420 = vadd.f32 %v2344, %v2377
          %v2421 = vadd.f32 %v2345, %v2381
          %v2422 = vadd.f32 %v2346, %v2377
          %v2423 = vadd.f32 %v2347, %v2381
          %v2424 = vadd.f32 %v2348, %v2377
          %v2425 = vadd.f32 %v2349, %v2381
          %v2426 = vadd.f32 %v2350, %v2377
          %v2427 = vadd.f32 %v2351, %v2381
          %v2428 = vadd.f32 %v2352, %v2377
          %v2429 = vadd.f32 %v2353, %v2381
          %v2430 = vadd.f32 %v2354, %v2377
          %v2431 = vadd.f32 %v2355, %v2381
          %v2432 = vadd.f32 %v2356, %v2377
          %v2433 = vadd.f32 %v2357, %v2381
          %v2434 = vadd.f32 %v2358, %v2377
          %v2435 = vadd.f32 %v2359, %v2381
          %v2436 = vadd.f32 %v2360, %v2377
          %v2437 = vadd.f32 %v2361, %v2381
          %v2438 = vadd.f32 %v2362, %v2377
          %v2439 = vadd.f32 %v2363, %v2381
          %v2440 = vadd.f32 %v2364, %v2377
          %v2441 = vadd.f32 %v2365, %v2381
          %v2442 = vadd.f32 %v2366, %v2377
          %v2443 = vadd.f32 %v2367, %v2381
          %v2444 = vadd.f32 %v2368, %v2377
          %v2445 = vadd.f32 %v2369, %v2381
          %v2446 = vadd.f32 %v2370, %v2377
          %v2447 = vadd.f32 %v2371, %v2381
          %v2448 = vpack.c.bf16 %v2386, %v2384
          %v2449 = vpack.c.bf16 %v2387, %v2385
          %v2450 = vpack.c.bf16 %v2390, %v2388
          %v2451 = vpack.c.bf16 %v2391, %v2389
          %v2452 = vpack.c.bf16 %v2394, %v2392
          %v2453 = vpack.c.bf16 %v2395, %v2393
          %v2454 = vpack.c.bf16 %v2398, %v2396
          %v2455 = vpack.c.bf16 %v2399, %v2397
          %v2456 = vpack.c.bf16 %v2402, %v2400
          %v2457 = vpack.c.bf16 %v2403, %v2401
          %v2458 = vpack.c.bf16 %v2406, %v2404
          %v2459 = vpack.c.bf16 %v2407, %v2405
          %v2460 = vpack.c.bf16 %v2410, %v2408
          %v2461 = vpack.c.bf16 %v2411, %v2409
          %v2462 = vpack.c.bf16 %v2414, %v2412
          %v2463 = vpack.c.bf16 %v2415, %v2413
          %v2464 = vpack.c.bf16 %v2418, %v2416
          %v2465 = vpack.c.bf16 %v2419, %v2417
          %v2466 = vpack.c.bf16 %v2422, %v2420
          %v2467 = vpack.c.bf16 %v2423, %v2421
          %v2468 = vpack.c.bf16 %v2426, %v2424
          %v2469 = vpack.c.bf16 %v2427, %v2425
          %v2470 = vpack.c.bf16 %v2430, %v2428
          %v2471 = vpack.c.bf16 %v2431, %v2429
          %v2472 = vpack.c.bf16 %v2434, %v2432
          %v2473 = vpack.c.bf16 %v2435, %v2433
          %v2474 = vpack.c.bf16 %v2438, %v2436
          %v2475 = vpack.c.bf16 %v2439, %v2437
          %v2476 = vpack.c.bf16 %v2442, %v2440
          %v2477 = vpack.c.bf16 %v2443, %v2441
          %v2478 = vpack.c.bf16 %v2446, %v2444
          %v2479 = vpack.c.bf16 %v2447, %v2445
          %v2480 = vld [vmem:[#allocation9] sm:$0xf]
          %v2481 = vld [vmem:[#allocation9 + $0x4] sm:$0xf]
          %v2482 = vld [vmem:[#allocation9 + $0x8] sm:$0xf]
          %v2483 = vld [vmem:[#allocation9 + $0xc] sm:$0xf]
          %v2484 = vld [vmem:[#allocation9 + $0x10] sm:$0xf]
          %v2485 = vld [vmem:[#allocation9 + $0x14] sm:$0xf]
          %v2486 = vld [vmem:[#allocation9 + $0x18] sm:$0xf]
          %v2487 = vld [vmem:[#allocation9 + $0x1c] sm:$0xf]
          %v2488 = vld [vmem:[#allocation9 + $0x20] sm:$0xf]
          %v2489 = vld [vmem:[#allocation9 + $0x24] sm:$0xf]
          %v2490 = vld [vmem:[#allocation9 + $0x28] sm:$0xf]
          %v2491 = vld [vmem:[#allocation9 + $0x2c] sm:$0xf]
          %v2492 = vld [vmem:[#allocation9 + $0x30] sm:$0xf]
          %v2493 = vld [vmem:[#allocation9 + $0x34] sm:$0xf]
          %v2494 = vld [vmem:[#allocation9 + $0x38] sm:$0xf]
          %v2495 = vld [vmem:[#allocation9 + $0x3c] sm:$0xf]
          %v2496 = vld [vmem:[#allocation9 + $0x40] sm:$0xf]
          %v2497 = vld [vmem:[#allocation9 + $0x44] sm:$0xf]
          %v2498 = vld [vmem:[#allocation9 + $0x48] sm:$0xf]
          %v2499 = vld [vmem:[#allocation9 + $0x4c] sm:$0xf]
          %v2500 = vld [vmem:[#allocation9 + $0x50] sm:$0xf]
          %v2501 = vld [vmem:[#allocation9 + $0x54] sm:$0xf]
          %v2502 = vld [vmem:[#allocation9 + $0x58] sm:$0xf]
          %v2503 = vld [vmem:[#allocation9 + $0x5c] sm:$0xf]
          %v2504 = vld [vmem:[#allocation9 + $0x60] sm:$0xf]
          %v2505 = vld [vmem:[#allocation9 + $0x64] sm:$0xf]
          %v2506 = vld [vmem:[#allocation9 + $0x68] sm:$0xf]
          %v2507 = vld [vmem:[#allocation9 + $0x6c] sm:$0xf]
          %v2508 = vld [vmem:[#allocation9 + $0x70] sm:$0xf]
          %v2509 = vld [vmem:[#allocation9 + $0x74] sm:$0xf]
          %v2510 = vld [vmem:[#allocation9 + $0x78] sm:$0xf]
          %v2511 = vld [vmem:[#allocation9 + $0x7c] sm:$0xf]
          %v2512 = vld [vmem:[%s8] sm:$0x1]
          %v2514 = vlaneseq
          %v2515 = vshrl.u32 %v2514, 7
          %v2516 = vsub.s32 0, %v2515
          %v2517 = vrot.slane %v2512, %v2516
          %v2551 = vunpack.c.l.b16 %v2480
          %v2552 = vunpack.c.l.b16 %v2481
          %v2553 = vunpack.c.l.b16 %v2482
          %v2554 = vunpack.c.l.b16 %v2483
          %v2555 = vunpack.c.l.b16 %v2484
          %v2556 = vunpack.c.l.b16 %v2485
          %v2557 = vunpack.c.l.b16 %v2486
          %v2558 = vunpack.c.l.b16 %v2487
          %v2559 = vunpack.c.l.b16 %v2488
          %v2560 = vunpack.c.l.b16 %v2489
          %v2561 = vunpack.c.l.b16 %v2490
          %v2562 = vunpack.c.l.b16 %v2491
          %v2563 = vunpack.c.l.b16 %v2492
          %v2564 = vunpack.c.l.b16 %v2493
          %v2565 = vunpack.c.l.b16 %v2494
          %v2566 = vunpack.c.l.b16 %v2495
          %v2567 = vunpack.c.l.b16 %v2496
          %v2568 = vunpack.c.l.b16 %v2497
          %v2569 = vunpack.c.l.b16 %v2498
          %v2570 = vunpack.c.l.b16 %v2499
          %v2571 = vunpack.c.l.b16 %v2500
          %v2572 = vunpack.c.l.b16 %v2501
          %v2573 = vunpack.c.l.b16 %v2502
          %v2574 = vunpack.c.l.b16 %v2503
          %v2575 = vunpack.c.l.b16 %v2504
          %v2576 = vunpack.c.l.b16 %v2505
          %v2577 = vunpack.c.l.b16 %v2506
          %v2578 = vunpack.c.l.b16 %v2507
          %v2579 = vunpack.c.l.b16 %v2508
          %v2580 = vunpack.c.l.b16 %v2509
          %v2581 = vunpack.c.l.b16 %v2510
          %v2582 = vunpack.c.l.b16 %v2511
          %v2583 = vpack.c.b16 %v2552, %v2551
          %v2584 = vpack.c.b16 %v2554, %v2553
          %v2585 = vpack.c.b16 %v2556, %v2555
          %v2586 = vpack.c.b16 %v2558, %v2557
          %v2587 = vpack.c.b16 %v2560, %v2559
          %v2588 = vpack.c.b16 %v2562, %v2561
          %v2589 = vpack.c.b16 %v2564, %v2563
          %v2590 = vpack.c.b16 %v2566, %v2565
          %v2591 = vpack.c.b16 %v2568, %v2567
          %v2592 = vpack.c.b16 %v2570, %v2569
          %v2593 = vpack.c.b16 %v2572, %v2571
          %v2594 = vpack.c.b16 %v2574, %v2573
          %v2595 = vpack.c.b16 %v2576, %v2575
          %v2596 = vpack.c.b16 %v2578, %v2577
          %v2597 = vpack.c.b16 %v2580, %v2579
          %v2598 = vpack.c.b16 %v2582, %v2581
          %2615 = vmatprep.subr.bf16.mxu0 0
          %2616 = vmatpush1.bf16.msra.mxu0 %v2583
          %2617 = vmatprep.subr.bf16.mxu0 0
          %2618 = vmatpush1.bf16.msra.mxu0 %v2584
          %2619 = vmatprep.subr.bf16.mxu0 0
          %2620 = vmatpush1.bf16.msra.mxu0 %v2585
          %2621 = vmatprep.subr.bf16.mxu0 0
          %2622 = vmatpush1.bf16.msra.mxu0 %v2586
          %2623 = vmatprep.subr.bf16.mxu0 0
          %2624 = vmatpush1.bf16.msra.mxu0 %v2587
          %2625 = vmatprep.subr.bf16.mxu0 0
          %2626 = vmatpush1.bf16.msra.mxu0 %v2588
          %2627 = vmatprep.subr.bf16.mxu0 0
          %2628 = vmatpush1.bf16.msra.mxu0 %v2589
          %2629 = vmatprep.subr.bf16.mxu0 0
          %2630 = vmatpush1.bf16.msra.mxu0 %v2590
          %2631 = vmatprep.subr.bf16.mxu0 0
          %2632 = vmatpush1.bf16.msra.mxu0 %v2591
          %2633 = vmatprep.subr.bf16.mxu0 0
          %2634 = vmatpush1.bf16.msra.mxu0 %v2592
          %2635 = vmatprep.subr.bf16.mxu0 0
          %2636 = vmatpush1.bf16.msra.mxu0 %v2593
          %2637 = vmatprep.subr.bf16.mxu0 0
          %2638 = vmatpush1.bf16.msra.mxu0 %v2594
          %2639 = vmatprep.subr.bf16.mxu0 0
          %2640 = vmatpush1.bf16.msra.mxu0 %v2595
          %2641 = vmatprep.subr.bf16.mxu0 0
          %2642 = vmatpush1.bf16.msra.mxu0 %v2596
          %2643 = vmatprep.subr.bf16.mxu0 0
          %2644 = vmatpush1.bf16.msra.mxu0 %v2597
          %2645 = vmatprep.subr.bf16.mxu0 0
          %2646 = vmatpush1.bf16.msra.mxu0 %v2598
          %2647 = vmatprep.mubr.bf16.mxu0 %v2449
          %2648 = vmatmul.mubr.bf16.gmra.mrb[0].mxu0 %v2448
          %v2649 = vpop.f32.mrb[0].mxu0
          %v2650 = vadd.f32 %v2517, %v2649
          %v2651 = vpop.f32.mrb[0].mxu0
          %v2652 = vpop.f32.mrb[0].mxu0
          %v2653 = vadd.f32 %v2517, %v2652
          %v2654 = vpop.f32.mrb[0].mxu0
          %2655 = vmatprep.mubr.bf16.mxu0 %v2451
          %2656 = vmatmul.mubr.bf16.gmra.mrb[0].mxu0 %v2450
          %v2657 = vpop.f32.mrb[0].mxu0
          %v2658 = vadd.f32 %v2517, %v2657
          %v2659 = vpop.f32.mrb[0].mxu0
          %v2660 = vpop.f32.mrb[0].mxu0
          %v2661 = vadd.f32 %v2517, %v2660
          %v2662 = vpop.f32.mrb[0].mxu0
          %2663 = vmatprep.mubr.bf16.mxu0 %v2453
          %2664 = vmatmul.mubr.bf16.gmra.mrb[0].mxu0 %v2452
          %v2665 = vpop.f32.mrb[0].mxu0
          %v2666 = vadd.f32 %v2517, %v2665
          %v2667 = vpop.f32.mrb[0].mxu0
          %v2668 = vpop.f32.mrb[0].mxu0
          %v2669 = vadd.f32 %v2517, %v2668
          %v2670 = vpop.f32.mrb[0].mxu0
          %2671 = vmatprep.mubr.bf16.mxu0 %v2455
          %2672 = vmatmul.mubr.bf16.gmra.mrb[0].mxu0 %v2454
          %v2673 = vpop.f32.mrb[0].mxu0
          %v2674 = vadd.f32 %v2517, %v2673
          %v2675 = vpop.f32.mrb[0].mxu0
          %v2676 = vpop.f32.mrb[0].mxu0
          %v2677 = vadd.f32 %v2517, %v2676
          %v2678 = vpop.f32.mrb[0].mxu0
          %2679 = vmatprep.mubr.bf16.mxu0 %v2457
          %2680 = vmatmul.mubr.bf16.gmra.mrb[0].mxu0 %v2456
          %v2681 = vpop.f32.mrb[0].mxu0
          %v2682 = vadd.f32 %v2517, %v2681
          %v2683 = vpop.f32.mrb[0].mxu0
          %v2684 = vpop.f32.mrb[0].mxu0
          %v2685 = vadd.f32 %v2517, %v2684
          %v2686 = vpop.f32.mrb[0].mxu0
          %2687 = vmatprep.mubr.bf16.mxu0 %v2459
          %2688 = vmatmul.mubr.bf16.gmra.mrb[0].mxu0 %v2458
          %v2689 = vpop.f32.mrb[0].mxu0
          %v2690 = vadd.f32 %v2517, %v2689
          %v2691 = vpop.f32.mrb[0].mxu0
          %v2692 = vpop.f32.mrb[0].mxu0
          %v2693 = vadd.f32 %v2517, %v2692
          %v2694 = vpop.f32.mrb[0].mxu0
          %2695 = vmatprep.mubr.bf16.mxu0 %v2461
          %2696 = vmatmul.mubr.bf16.gmra.mrb[0].mxu0 %v2460
          %v2697 = vpop.f32.mrb[0].mxu0
          %v2698 = vadd.f32 %v2517, %v2697
          %v2699 = vpop.f32.mrb[0].mxu0
          %v2700 = vpop.f32.mrb[0].mxu0
          %v2701 = vadd.f32 %v2517, %v2700
          %v2702 = vpop.f32.mrb[0].mxu0
          %2703 = vmatprep.mubr.bf16.mxu0 %v2463
          %2704 = vmatmul.mubr.bf16.gmra.mrb[0].mxu0 %v2462
          %v2705 = vpop.f32.mrb[0].mxu0
          %v2706 = vadd.f32 %v2517, %v2705
          %v2707 = vpop.f32.mrb[0].mxu0
          %v2708 = vpop.f32.mrb[0].mxu0
          %v2709 = vadd.f32 %v2517, %v2708
          %v2710 = vpop.f32.mrb[0].mxu0
          %2711 = vmatprep.mubr.bf16.mxu0 %v2465
          %2712 = vmatmul.mubr.bf16.gmra.mrb[0].mxu0 %v2464
          %v2713 = vpop.f32.mrb[0].mxu0
          %v2714 = vadd.f32 %v2517, %v2713
          %v2715 = vpop.f32.mrb[0].mxu0
          %v2716 = vpop.f32.mrb[0].mxu0
          %v2717 = vadd.f32 %v2517, %v2716
          %v2718 = vpop.f32.mrb[0].mxu0
          %2719 = vmatprep.mubr.bf16.mxu0 %v2467
          %2720 = vmatmul.mubr.bf16.gmra.mrb[0].mxu0 %v2466
          %v2721 = vpop.f32.mrb[0].mxu0
          %v2722 = vadd.f32 %v2517, %v2721
          %v2723 = vpop.f32.mrb[0].mxu0
          %v2724 = vpop.f32.mrb[0].mxu0
          %v2725 = vadd.f32 %v2517, %v2724
          %v2726 = vpop.f32.mrb[0].mxu0
          %2727 = vmatprep.mubr.bf16.mxu0 %v2469
          %2728 = vmatmul.mubr.bf16.gmra.mrb[0].mxu0 %v2468
          %v2729 = vpop.f32.mrb[0].mxu0
          %v2730 = vadd.f32 %v2517, %v2729
          %v2731 = vpop.f32.mrb[0].mxu0
          %v2732 = vpop.f32.mrb[0].mxu0
          %v2733 = vadd.f32 %v2517, %v2732
          %v2734 = vpop.f32.mrb[0].mxu0
          %2735 = vmatprep.mubr.bf16.mxu0 %v2471
          %2736 = vmatmul.mubr.bf16.gmra.mrb[0].mxu0 %v2470
          %v2737 = vpop.f32.mrb[0].mxu0
          %v2738 = vadd.f32 %v2517, %v2737
          %v2739 = vpop.f32.mrb[0].mxu0
          %v2740 = vpop.f32.mrb[0].mxu0
          %v2741 = vadd.f32 %v2517, %v2740
          %v2742 = vpop.f32.mrb[0].mxu0
          %2743 = vmatprep.mubr.bf16.mxu0 %v2473
          %2744 = vmatmul.mubr.bf16.gmra.mrb[0].mxu0 %v2472
          %v2745 = vpop.f32.mrb[0].mxu0
          %v2746 = vadd.f32 %v2517, %v2745
          %v2747 = vpop.f32.mrb[0].mxu0
          %v2748 = vpop.f32.mrb[0].mxu0
          %v2749 = vadd.f32 %v2517, %v2748
          %v2750 = vpop.f32.mrb[0].mxu0
          %2751 = vmatprep.mubr.bf16.mxu0 %v2475
          %2752 = vmatmul.mubr.bf16.gmra.mrb[0].mxu0 %v2474
          %v2753 = vpop.f32.mrb[0].mxu0
          %v2754 = vadd.f32 %v2517, %v2753
          %v2755 = vpop.f32.mrb[0].mxu0
          %v2756 = vpop.f32.mrb[0].mxu0
          %v2757 = vadd.f32 %v2517, %v2756
          %v2758 = vpop.f32.mrb[0].mxu0
          %2759 = vmatprep.mubr.bf16.mxu0 %v2477
          %2760 = vmatmul.mubr.bf16.gmra.mrb[0].mxu0 %v2476
          %v2761 = vpop.f32.mrb[0].mxu0
          %v2762 = vadd.f32 %v2517, %v2761
          %v2763 = vpop.f32.mrb[0].mxu0
          %v2764 = vpop.f32.mrb[0].mxu0
          %v2765 = vadd.f32 %v2517, %v2764
          %v2766 = vpop.f32.mrb[0].mxu0
          %2767 = vmatprep.mubr.bf16.mxu0 %v2479
          %2768 = vmatmul.mubr.bf16.gmra.mrb[0].mxu0 %v2478
          %v2769 = vpop.f32.mrb[0].mxu0
          %v2770 = vadd.f32 %v2517, %v2769
          %v2771 = vpop.f32.mrb[0].mxu0
          %v2772 = vpop.f32.mrb[0].mxu0
          %v2773 = vadd.f32 %v2517, %v2772
          %v2774 = vpop.f32.mrb[0].mxu0
          %2775 = vdwg.mxu0
          %v2776 = vmax.f32 %v2650, 0.0
          %v2777 = vmax.f32 %v2653, 0.0
          %v2778 = vmax.f32 %v2658, 0.0
          %v2779 = vmax.f32 %v2661, 0.0
          %v2780 = vmax.f32 %v2666, 0.0
          %v2781 = vmax.f32 %v2669, 0.0
          %v2782 = vmax.f32 %v2674, 0.0
          %v2783 = vmax.f32 %v2677, 0.0
          %v2784 = vmax.f32 %v2682, 0.0
          %v2785 = vmax.f32 %v2685, 0.0
          %v2786 = vmax.f32 %v2690, 0.0
          %v2787 = vmax.f32 %v2693, 0.0
          %v2788 = vmax.f32 %v2698, 0.0
          %v2789 = vmax.f32 %v2701, 0.0
          %v2790 = vmax.f32 %v2706, 0.0
          %v2791 = vmax.f32 %v2709, 0.0
          %v2792 = vmax.f32 %v2714, 0.0
          %v2793 = vmax.f32 %v2717, 0.0
          %v2794 = vmax.f32 %v2722, 0.0
          %v2795 = vmax.f32 %v2725, 0.0
          %v2796 = vmax.f32 %v2730, 0.0
          %v2797 = vmax.f32 %v2733, 0.0
          %v2798 = vmax.f32 %v2738, 0.0
          %v2799 = vmax.f32 %v2741, 0.0
          %v2800 = vmax.f32 %v2746, 0.0
          %v2801 = vmax.f32 %v2749, 0.0
          %v2802 = vmax.f32 %v2754, 0.0
          %v2803 = vmax.f32 %v2757, 0.0
          %v2804 = vmax.f32 %v2762, 0.0
          %v2805 = vmax.f32 %v2765, 0.0
          %v2806 = vmax.f32 %v2770, 0.0
          %v2807 = vmax.f32 %v2773, 0.0
          %2808 = vst [vmem:[#allocation2] sm:$0xff] %v2448
          %2809 = vst [vmem:[#allocation2 + $0x8] sm:$0xff] %v2449
          %2810 = vst [vmem:[#allocation2 + $0x18] sm:$0xff] %v2450
          %2811 = vst [vmem:[#allocation2 + $0x20] sm:$0xff] %v2451
          %2812 = vst [vmem:[#allocation2 + $0x30] sm:$0xff] %v2452
          %2813 = vst [vmem:[#allocation2 + $0x38] sm:$0xff] %v2453
          %2814 = vst [vmem:[#allocation2 + $0x48] sm:$0xff] %v2454
          %2815 = vst [vmem:[#allocation2 + $0x50] sm:$0xff] %v2455
          %2816 = vst [vmem:[#allocation2 + $0x60] sm:$0xff] %v2456
          %2817 = vst [vmem:[#allocation2 + $0x68] sm:$0xff] %v2457
          %2818 = vst [vmem:[#allocation2 + $0x78] sm:$0xff] %v2458
          %2819 = vst [vmem:[#allocation2 + $0x80] sm:$0xff] %v2459
          %2820 = vst [vmem:[#allocation2 + $0x90] sm:$0xff] %v2460
          %2821 = vst [vmem:[#allocation2 + $0x98] sm:$0xff] %v2461
          %2822 = vst [vmem:[#allocation2 + $0xa8] sm:$0xff] %v2462
          %2823 = vst [vmem:[#allocation2 + $0xb0] sm:$0xff] %v2463
          %2824 = vst [vmem:[#allocation2 + $0xc0] sm:$0xff] %v2464
          %2825 = vst [vmem:[#allocation2 + $0xc8] sm:$0xff] %v2465
          %2826 = vst [vmem:[#allocation2 + $0xd8] sm:$0xff] %v2466
          %2827 = vst [vmem:[#allocation2 + $0xe0] sm:$0xff] %v2467
          %2828 = vst [vmem:[#allocation2 + $0xf0] sm:$0xff] %v2468
          %2829 = vst [vmem:[#allocation2 + $0xf8] sm:$0xff] %v2469
          %2830 = vst [vmem:[#allocation2 + $0x108] sm:$0xff] %v2470
          %2831 = vst [vmem:[#allocation2 + $0x110] sm:$0xff] %v2471
          %2832 = vst [vmem:[#allocation2 + $0x120] sm:$0xff] %v2472
          %2833 = vst [vmem:[#allocation2 + $0x128] sm:$0xff] %v2473
          %2834 = vst [vmem:[#allocation2 + $0x138] sm:$0xff] %v2474
          %2835 = vst [vmem:[#allocation2 + $0x140] sm:$0xff] %v2475
          %2836 = vst [vmem:[#allocation2 + $0x150] sm:$0xff] %v2476
          %2837 = vst [vmem:[#allocation2 + $0x158] sm:$0xff] %v2477
          %2838 = vst [vmem:[#allocation2 + $0x168] sm:$0xff] %v2478
          %2839 = vst [vmem:[#allocation2 + $0x170] sm:$0xff] %v2479
          %v2840 = vpack.c.bf16 %v2777, %v2776
          %v2841 = vpack.c.bf16 %v2779, %v2778
          %v2842 = vpack.c.bf16 %v2781, %v2780
          %v2843 = vpack.c.bf16 %v2783, %v2782
          %v2844 = vpack.c.bf16 %v2785, %v2784
          %v2845 = vpack.c.bf16 %v2787, %v2786
          %v2846 = vpack.c.bf16 %v2789, %v2788
          %v2847 = vpack.c.bf16 %v2791, %v2790
          %v2848 = vpack.c.bf16 %v2793, %v2792
          %v2849 = vpack.c.bf16 %v2795, %v2794
          %v2850 = vpack.c.bf16 %v2797, %v2796
          %v2851 = vpack.c.bf16 %v2799, %v2798
          %v2852 = vpack.c.bf16 %v2801, %v2800
          %v2853 = vpack.c.bf16 %v2803, %v2802
          %v2854 = vpack.c.bf16 %v2805, %v2804
          %v2855 = vpack.c.bf16 %v2807, %v2806
          %2856 = vst [vmem:[#allocation2 + $0x10] sm:$0xff] %v2840
          %2857 = vst [vmem:[#allocation2 + $0x28] sm:$0xff] %v2841
          %2858 = vst [vmem:[#allocation2 + $0x40] sm:$0xff] %v2842
          %2859 = vst [vmem:[#allocation2 + $0x58] sm:$0xff] %v2843
          %2860 = vst [vmem:[#allocation2 + $0x70] sm:$0xff] %v2844
          %2861 = vst [vmem:[#allocation2 + $0x88] sm:$0xff] %v2845
          %2862 = vst [vmem:[#allocation2 + $0xa0] sm:$0xff] %v2846
          %2863 = vst [vmem:[#allocation2 + $0xb8] sm:$0xff] %v2847
          %2864 = vst [vmem:[#allocation2 + $0xd0] sm:$0xff] %v2848
          %2865 = vst [vmem:[#allocation2 + $0xe8] sm:$0xff] %v2849
          %2866 = vst [vmem:[#allocation2 + $0x100] sm:$0xff] %v2850
          %2867 = vst [vmem:[#allocation2 + $0x118] sm:$0xff] %v2851
          %2868 = vst [vmem:[#allocation2 + $0x130] sm:$0xff] %v2852
          %2869 = vst [vmem:[#allocation2 + $0x148] sm:$0xff] %v2853
          %2870 = vst [vmem:[#allocation2 + $0x160] sm:$0xff] %v2854
          %2871 = vst [vmem:[#allocation2 + $0x178] sm:$0xff] %v2855
          %v2872 = vld [vmem:[%s9] sm:$0x1]
          %v2874 = vlaneseq
          %v2875 = vshrl.u32 %v2874, 7
          %v2876 = vsub.s32 0, %v2875
          %v2877 = vrot.slane %v2872, %v2876
          %2879 = vst [vmem:[%s655] sm:$0xff] %v2877
          %2880 = vst [vmem:[%s655 + $0x8] sm:$0xff] %v2877
          %2881 = vst [vmem:[%s655 + $0x10] sm:$0xff] %v2877
          %2882 = vst [vmem:[%s655 + $0x18] sm:$0xff] %v2877
          %2883 = vst [vmem:[%s655 + $0x20] sm:$0xff] %v2877
          %2884 = vst [vmem:[%s655 + $0x28] sm:$0xff] %v2877
          %2885 = vst [vmem:[%s655 + $0x30] sm:$0xff] %v2877
          %2886 = vst [vmem:[%s655 + $0x38] sm:$0xff] %v2877
          %2887 = vst [vmem:[%s655 + $0x40] sm:$0xff] %v2877
          %2888 = vst [vmem:[%s655 + $0x48] sm:$0xff] %v2877
          %2889 = vst [vmem:[%s655 + $0x50] sm:$0xff] %v2877
          %2890 = vst [vmem:[%s655 + $0x58] sm:$0xff] %v2877
          %2891 = vst [vmem:[%s655 + $0x60] sm:$0xff] %v2877
          %2892 = vst [vmem:[%s655 + $0x68] sm:$0xff] %v2877
          %2893 = vst [vmem:[%s655 + $0x70] sm:$0xff] %v2877
          %2894 = vst [vmem:[%s655 + $0x78] sm:$0xff] %v2877
          %2895 = vst [vmem:[%s655 + $0x80] sm:$0xff] %v2877
          %2896 = vst [vmem:[%s655 + $0x88] sm:$0xff] %v2877
          %2897 = vst [vmem:[%s655 + $0x90] sm:$0xff] %v2877
          %2898 = vst [vmem:[%s655 + $0x98] sm:$0xff] %v2877
          %2899 = vst [vmem:[%s655 + $0xa0] sm:$0xff] %v2877
          %2900 = vst [vmem:[%s655 + $0xa8] sm:$0xff] %v2877
          %2901 = vst [vmem:[%s655 + $0xb0] sm:$0xff] %v2877
          %2902 = vst [vmem:[%s655 + $0xb8] sm:$0xff] %v2877
          %2903 = vst [vmem:[%s655 + $0xc0] sm:$0xff] %v2877
          %2904 = vst [vmem:[%s655 + $0xc8] sm:$0xff] %v2877
          %2905 = vst [vmem:[%s655 + $0xd0] sm:$0xff] %v2877
          %2906 = vst [vmem:[%s655 + $0xd8] sm:$0xff] %v2877
          %2907 = vst [vmem:[%s655 + $0xe0] sm:$0xff] %v2877
          %2908 = vst [vmem:[%s655 + $0xe8] sm:$0xff] %v2877
          %2909 = vst [vmem:[%s655 + $0xf0] sm:$0xff] %v2877
          %2910 = vst [vmem:[%s655 + $0xf8] sm:$0xff] %v2877
        $region112: #{tpu_custom_call.1} parent=79 // pred_fallthru
          _
        %v2911 = vld [vmem:[#allocation2] sm:$0xff]
        %v2912 = vld [vmem:[#allocation2 + $0x8] sm:$0xff]
        %v2913 = vld [vmem:[#allocation2 + $0x10] sm:$0xff]
        %v2914 = vld [vmem:[#allocation2 + $0x18] sm:$0xff]
        %v2915 = vld [vmem:[#allocation2 + $0x20] sm:$0xff]
        %v2916 = vld [vmem:[#allocation2 + $0x28] sm:$0xff]
        %v2917 = vld [vmem:[#allocation2 + $0x30] sm:$0xff]
        %v2918 = vld [vmem:[#allocation2 + $0x38] sm:$0xff]
        %v2919 = vld [vmem:[#allocation2 + $0x40] sm:$0xff]
        %v2920 = vld [vmem:[#allocation2 + $0x48] sm:$0xff]
        %v2921 = vld [vmem:[#allocation2 + $0x50] sm:$0xff]
        %v2922 = vld [vmem:[#allocation2 + $0x58] sm:$0xff]
        %v2923 = vld [vmem:[#allocation2 + $0x60] sm:$0xff]
        %v2924 = vld [vmem:[#allocation2 + $0x68] sm:$0xff]
        %v2925 = vld [vmem:[#allocation2 + $0x70] sm:$0xff]
        %v2926 = vld [vmem:[#allocation2 + $0x78] sm:$0xff]
        %v2927 = vld [vmem:[#allocation2 + $0x80] sm:$0xff]
        %v2928 = vld [vmem:[#allocation2 + $0x88] sm:$0xff]
        %v2929 = vld [vmem:[#allocation2 + $0x90] sm:$0xff]
        %v2930 = vld [vmem:[#allocation2 + $0x98] sm:$0xff]
        %v2931 = vld [vmem:[#allocation2 + $0xa0] sm:$0xff]
        %v2932 = vld [vmem:[#allocation2 + $0xa8] sm:$0xff]
        %v2933 = vld [vmem:[#allocation2 + $0xb0] sm:$0xff]
        %v2934 = vld [vmem:[#allocation2 + $0xb8] sm:$0xff]
        %v2935 = vld [vmem:[#allocation2 + $0xc0] sm:$0xff]
        %v2936 = vld [vmem:[#allocation2 + $0xc8] sm:$0xff]
        %v2937 = vld [vmem:[#allocation2 + $0xd0] sm:$0xff]
        %v2938 = vld [vmem:[#allocation2 + $0xd8] sm:$0xff]
        %v2939 = vld [vmem:[#allocation2 + $0xe0] sm:$0xff]
        %v2940 = vld [vmem:[#allocation2 + $0xe8] sm:$0xff]
        %v2941 = vld [vmem:[#allocation2 + $0xf0] sm:$0xff]
        %v2942 = vld [vmem:[#allocation2 + $0xf8] sm:$0xff]
        %v2943 = vld [vmem:[#allocation2 + $0x100] sm:$0xff]
        %v2944 = vld [vmem:[#allocation2 + $0x108] sm:$0xff]
        %v2945 = vld [vmem:[#allocation2 + $0x110] sm:$0xff]
        %v2946 = vld [vmem:[#allocation2 + $0x118] sm:$0xff]
        %v2947 = vld [vmem:[#allocation2 + $0x120] sm:$0xff]
        %v2948 = vld [vmem:[#allocation2 + $0x128] sm:$0xff]
        %v2949 = vld [vmem:[#allocation2 + $0x130] sm:$0xff]
        %v2950 = vld [vmem:[#allocation2 + $0x138] sm:$0xff]
        %v2951 = vld [vmem:[#allocation2 + $0x140] sm:$0xff]
        %v2952 = vld [vmem:[#allocation2 + $0x148] sm:$0xff]
        %v2953 = vld [vmem:[#allocation2 + $0x150] sm:$0xff]
        %v2954 = vld [vmem:[#allocation2 + $0x158] sm:$0xff]
        %v2955 = vld [vmem:[#allocation2 + $0x160] sm:$0xff]
        %v2956 = vld [vmem:[#allocation2 + $0x168] sm:$0xff]
        %v2957 = vld [vmem:[#allocation2 + $0x170] sm:$0xff]
        %v2958 = vld [vmem:[#allocation2 + $0x178] sm:$0xff]
        %v2959 = vld [vmem:[#allocation11] sm:$0xf]
        %v2960 = vld [vmem:[#allocation11 + $0x4] sm:$0xf]
        %v2961 = vld [vmem:[#allocation11 + $0x8] sm:$0xf]
        %v2962 = vld [vmem:[#allocation11 + $0xc] sm:$0xf]
        %v2963 = vld [vmem:[#allocation11 + $0x10] sm:$0xf]
        %v2964 = vld [vmem:[#allocation11 + $0x14] sm:$0xf]
        %v2965 = vld [vmem:[#allocation11 + $0x18] sm:$0xf]
        %v2966 = vld [vmem:[#allocation11 + $0x1c] sm:$0xf]
        %v2967 = vld [vmem:[#allocation11 + $0x20] sm:$0xf]
        %v2968 = vld [vmem:[#allocation11 + $0x24] sm:$0xf]
        %v2969 = vld [vmem:[#allocation11 + $0x28] sm:$0xf]
        %v2970 = vld [vmem:[#allocation11 + $0x2c] sm:$0xf]
        %v2971 = vld [vmem:[#allocation11 + $0x30] sm:$0xf]
        %v2972 = vld [vmem:[#allocation11 + $0x34] sm:$0xf]
        %v2973 = vld [vmem:[#allocation11 + $0x38] sm:$0xf]
        %v2974 = vld [vmem:[#allocation11 + $0x3c] sm:$0xf]
        %v2975 = vld [vmem:[#allocation11 + $0x40] sm:$0xf]
        %v2976 = vld [vmem:[#allocation11 + $0x44] sm:$0xf]
        %v2977 = vld [vmem:[#allocation11 + $0x48] sm:$0xf]
        %v2978 = vld [vmem:[#allocation11 + $0x4c] sm:$0xf]
        %v2979 = vld [vmem:[#allocation11 + $0x50] sm:$0xf]
        %v2980 = vld [vmem:[#allocation11 + $0x54] sm:$0xf]
        %v2981 = vld [vmem:[#allocation11 + $0x58] sm:$0xf]
        %v2982 = vld [vmem:[#allocation11 + $0x5c] sm:$0xf]
        %v2983 = vld [vmem:[#allocation11 + $0x60] sm:$0xf]
        %v2984 = vld [vmem:[#allocation11 + $0x64] sm:$0xf]
        %v2985 = vld [vmem:[#allocation11 + $0x68] sm:$0xf]
        %v2986 = vld [vmem:[#allocation11 + $0x6c] sm:$0xf]
        %v2987 = vld [vmem:[#allocation11 + $0x70] sm:$0xf]
        %v2988 = vld [vmem:[#allocation11 + $0x74] sm:$0xf]
        %v2989 = vld [vmem:[#allocation11 + $0x78] sm:$0xf]
        %v2990 = vld [vmem:[#allocation11 + $0x7c] sm:$0xf]
        %v2991 = vld [vmem:[#allocation11 + $0x80] sm:$0xf]
        %v2992 = vld [vmem:[#allocation11 + $0x84] sm:$0xf]
        %v2993 = vld [vmem:[#allocation11 + $0x88] sm:$0xf]
        %v2994 = vld [vmem:[#allocation11 + $0x8c] sm:$0xf]
        %v2995 = vld [vmem:[#allocation11 + $0x90] sm:$0xf]
        %v2996 = vld [vmem:[#allocation11 + $0x94] sm:$0xf]
        %v2997 = vld [vmem:[#allocation11 + $0x98] sm:$0xf]
        %v2998 = vld [vmem:[#allocation11 + $0x9c] sm:$0xf]
        %v2999 = vld [vmem:[#allocation11 + $0xa0] sm:$0xf]
        %v3000 = vld [vmem:[#allocation11 + $0xa4] sm:$0xf]
        %v3001 = vld [vmem:[#allocation11 + $0xa8] sm:$0xf]
        %v3002 = vld [vmem:[#allocation11 + $0xac] sm:$0xf]
        %v3003 = vld [vmem:[#allocation11 + $0xb0] sm:$0xf]
        %v3004 = vld [vmem:[#allocation11 + $0xb4] sm:$0xf]
        %v3005 = vld [vmem:[#allocation11 + $0xb8] sm:$0xf]
        %v3006 = vld [vmem:[#allocation11 + $0xbc] sm:$0xf]
        %v3007 = vld [vmem:[%s659] sm:$0x1]
        %v3009 = vlaneseq
        %v3010 = vshrl.u32 %v3009, 7
        %v3011 = vsub.s32 0, %v3010
        %v3012 = vrot.slane %v3007, %v3011
        %v3062 = vunpack.c.l.b16 %v2959
        %v3063 = vunpack.c.l.b16 %v2960
        %v3064 = vunpack.c.l.b16 %v2961
        %v3065 = vunpack.c.l.b16 %v2962
        %v3066 = vunpack.c.l.b16 %v2963
        %v3067 = vunpack.c.l.b16 %v2964
        %v3068 = vunpack.c.l.b16 %v2965
        %v3069 = vunpack.c.l.b16 %v2966
        %v3070 = vunpack.c.l.b16 %v2967
        %v3071 = vunpack.c.l.b16 %v2968
        %v3072 = vunpack.c.l.b16 %v2969
        %v3073 = vunpack.c.l.b16 %v2970
        %v3074 = vunpack.c.l.b16 %v2971
        %v3075 = vunpack.c.l.b16 %v2972
        %v3076 = vunpack.c.l.b16 %v2973
        %v3077 = vunpack.c.l.b16 %v2974
        %v3078 = vunpack.c.l.b16 %v2975
        %v3079 = vunpack.c.l.b16 %v2976
        %v3080 = vunpack.c.l.b16 %v2977
        %v3081 = vunpack.c.l.b16 %v2978
        %v3082 = vunpack.c.l.b16 %v2979
        %v3083 = vunpack.c.l.b16 %v2980
        %v3084 = vunpack.c.l.b16 %v2981
        %v3085 = vunpack.c.l.b16 %v2982
        %v3086 = vunpack.c.l.b16 %v2983
        %v3087 = vunpack.c.l.b16 %v2984
        %v3088 = vunpack.c.l.b16 %v2985
        %v3089 = vunpack.c.l.b16 %v2986
        %v3090 = vunpack.c.l.b16 %v2987
        %v3091 = vunpack.c.l.b16 %v2988
        %v3092 = vunpack.c.l.b16 %v2989
        %v3093 = vunpack.c.l.b16 %v2990
        %v3094 = vunpack.c.l.b16 %v2991
        %v3095 = vunpack.c.l.b16 %v2992
        %v3096 = vunpack.c.l.b16 %v2993
        %v3097 = vunpack.c.l.b16 %v2994
        %v3098 = vunpack.c.l.b16 %v2995
        %v3099 = vunpack.c.l.b16 %v2996
        %v3100 = vunpack.c.l.b16 %v2997
        %v3101 = vunpack.c.l.b16 %v2998
        %v3102 = vunpack.c.l.b16 %v2999
        %v3103 = vunpack.c.l.b16 %v3000
        %v3104 = vunpack.c.l.b16 %v3001
        %v3105 = vunpack.c.l.b16 %v3002
        %v3106 = vunpack.c.l.b16 %v3003
        %v3107 = vunpack.c.l.b16 %v3004
        %v3108 = vunpack.c.l.b16 %v3005
        %v3109 = vunpack.c.l.b16 %v3006
        %v3110 = vpack.c.b16 %v3063, %v3062
        %v3111 = vpack.c.b16 %v3065, %v3064
        %v3112 = vpack.c.b16 %v3067, %v3066
        %v3113 = vpack.c.b16 %v3069, %v3068
        %v3114 = vpack.c.b16 %v3071, %v3070
        %v3115 = vpack.c.b16 %v3073, %v3072
        %v3116 = vpack.c.b16 %v3075, %v3074
        %v3117 = vpack.c.b16 %v3077, %v3076
        %v3118 = vpack.c.b16 %v3079, %v3078
        %v3119 = vpack.c.b16 %v3081, %v3080
        %v3120 = vpack.c.b16 %v3083, %v3082
        %v3121 = vpack.c.b16 %v3085, %v3084
        %v3122 = vpack.c.b16 %v3087, %v3086
        %v3123 = vpack.c.b16 %v3089, %v3088
        %v3124 = vpack.c.b16 %v3091, %v3090
        %v3125 = vpack.c.b16 %v3093, %v3092
        %v3126 = vpack.c.b16 %v3095, %v3094
        %v3127 = vpack.c.b16 %v3097, %v3096
        %v3128 = vpack.c.b16 %v3099, %v3098
        %v3129 = vpack.c.b16 %v3101, %v3100
        %v3130 = vpack.c.b16 %v3103, %v3102
        %v3131 = vpack.c.b16 %v3105, %v3104
        %v3132 = vpack.c.b16 %v3107, %v3106
        %v3133 = vpack.c.b16 %v3109, %v3108
        %3158 = vmatprep.subr.bf16.mxu0 0
        %3159 = vmatpush1.bf16.msra.mxu0 %v3110
        %3160 = vmatprep.subr.bf16.mxu0 0
        %3161 = vmatpush1.bf16.msra.mxu0 %v3111
        %3162 = vmatprep.subr.bf16.mxu0 0
        %3163 = vmatpush1.bf16.msra.mxu0 %v3112
        %3164 = vmatprep.subr.bf16.mxu0 0
        %3165 = vmatpush1.bf16.msra.mxu0 %v3113
        %3166 = vmatprep.subr.bf16.mxu0 0
        %3167 = vmatpush1.bf16.msra.mxu0 %v3114
        %3168 = vmatprep.subr.bf16.mxu0 0
        %3169 = vmatpush1.bf16.msra.mxu0 %v3115
        %3170 = vmatprep.subr.bf16.mxu0 0
        %3171 = vmatpush1.bf16.msra.mxu0 %v3116
        %3172 = vmatprep.subr.bf16.mxu0 0
        %3173 = vmatpush1.bf16.msra.mxu0 %v3117
        %3174 = vmatprep.subr.bf16.mxu0 0
        %3175 = vmatpush1.bf16.msra.mxu0 %v3118
        %3176 = vmatprep.subr.bf16.mxu0 0
        %3177 = vmatpush1.bf16.msra.mxu0 %v3119
        %3178 = vmatprep.subr.bf16.mxu0 0
        %3179 = vmatpush1.bf16.msra.mxu0 %v3120
        %3180 = vmatprep.subr.bf16.mxu0 0
        %3181 = vmatpush1.bf16.msra.mxu0 %v3121
        %3182 = vmatprep.subr.bf16.mxu0 0
        %3183 = vmatpush1.bf16.msra.mxu0 %v3122
        %3184 = vmatprep.subr.bf16.mxu0 0
        %3185 = vmatpush1.bf16.msra.mxu0 %v3123
        %3186 = vmatprep.subr.bf16.mxu0 0
        %3187 = vmatpush1.bf16.msra.mxu0 %v3124
        %3188 = vmatprep.subr.bf16.mxu0 0
        %3189 = vmatpush1.bf16.msra.mxu0 %v3125
        %3190 = vmatprep.mubr.bf16.mxu0 %v2912
        %3191 = vmatmul.mubr.bf16.gmra.mrb[0].mxu0 %v2911
        %v3192 = vpop.f32.mrb[0].mxu0
        %v3193 = vadd.f32 %v3012, %v3192
        %v3194 = vpop.f32.mrb[0].mxu0
        %v3195 = vpop.f32.mrb[0].mxu0
        %v3196 = vadd.f32 %v3012, %v3195
        %v3197 = vpop.f32.mrb[0].mxu0
        %3198 = vmatprep.mubr.bf16.mxu0 %v2915
        %3199 = vmatmul.mubr.bf16.gmra.mrb[0].mxu0 %v2914
        %v3200 = vpop.f32.mrb[0].mxu0
        %v3201 = vadd.f32 %v3012, %v3200
        %v3202 = vpop.f32.mrb[0].mxu0
        %v3203 = vpop.f32.mrb[0].mxu0
        %v3204 = vadd.f32 %v3012, %v3203
        %v3205 = vpop.f32.mrb[0].mxu0
        %3206 = vmatprep.mubr.bf16.mxu0 %v2918
        %3207 = vmatmul.mubr.bf16.gmra.mrb[0].mxu0 %v2917
        %v3208 = vpop.f32.mrb[0].mxu0
        %v3209 = vadd.f32 %v3012, %v3208
        %v3210 = vpop.f32.mrb[0].mxu0
        %v3211 = vpop.f32.mrb[0].mxu0
        %v3212 = vadd.f32 %v3012, %v3211
        %v3213 = vpop.f32.mrb[0].mxu0
        %3214 = vmatprep.mubr.bf16.mxu0 %v2921
        %3215 = vmatmul.mubr.bf16.gmra.mrb[0].mxu0 %v2920
        %v3216 = vpop.f32.mrb[0].mxu0
        %v3217 = vadd.f32 %v3012, %v3216
        %v3218 = vpop.f32.mrb[0].mxu0
        %v3219 = vpop.f32.mrb[0].mxu0
        %v3220 = vadd.f32 %v3012, %v3219
        %v3221 = vpop.f32.mrb[0].mxu0
        %3222 = vmatprep.mubr.bf16.mxu0 %v2924
        %3223 = vmatmul.mubr.bf16.gmra.mrb[0].mxu0 %v2923
        %v3224 = vpop.f32.mrb[0].mxu0
        %v3225 = vadd.f32 %v3012, %v3224
        %v3226 = vpop.f32.mrb[0].mxu0
        %v3227 = vpop.f32.mrb[0].mxu0
        %v3228 = vadd.f32 %v3012, %v3227
        %v3229 = vpop.f32.mrb[0].mxu0
        %3230 = vmatprep.mubr.bf16.mxu0 %v2927
        %3231 = vmatmul.mubr.bf16.gmra.mrb[0].mxu0 %v2926
        %v3232 = vpop.f32.mrb[0].mxu0
        %v3233 = vadd.f32 %v3012, %v3232
        %v3234 = vpop.f32.mrb[0].mxu0
        %v3235 = vpop.f32.mrb[0].mxu0
        %v3236 = vadd.f32 %v3012, %v3235
        %v3237 = vpop.f32.mrb[0].mxu0
        %3238 = vmatprep.mubr.bf16.mxu0 %v2930
        %3239 = vmatmul.mubr.bf16.gmra.mrb[0].mxu0 %v2929
        %v3240 = vpop.f32.mrb[0].mxu0
        %v3241 = vadd.f32 %v3012, %v3240
        %v3242 = vpop.f32.mrb[0].mxu0
        %v3243 = vpop.f32.mrb[0].mxu0
        %v3244 = vadd.f32 %v3012, %v3243
        %v3245 = vpop.f32.mrb[0].mxu0
        %3246 = vmatprep.mubr.bf16.mxu0 %v2933
        %3247 = vmatmul.mubr.bf16.gmra.mrb[0].mxu0 %v2932
        %v3248 = vpop.f32.mrb[0].mxu0
        %v3249 = vadd.f32 %v3012, %v3248
        %v3250 = vpop.f32.mrb[0].mxu0
        %v3251 = vpop.f32.mrb[0].mxu0
        %v3252 = vadd.f32 %v3012, %v3251
        %v3253 = vpop.f32.mrb[0].mxu0
        %3254 = vmatprep.mubr.bf16.mxu0 %v2936
        %3255 = vmatmul.mubr.bf16.gmra.mrb[0].mxu0 %v2935
        %v3256 = vpop.f32.mrb[0].mxu0
        %v3257 = vadd.f32 %v3012, %v3256
        %v3258 = vpop.f32.mrb[0].mxu0
        %v3259 = vpop.f32.mrb[0].mxu0
        %v3260 = vadd.f32 %v3012, %v3259
        %v3261 = vpop.f32.mrb[0].mxu0
        %3262 = vmatprep.mubr.bf16.mxu0 %v2939
        %3263 = vmatmul.mubr.bf16.gmra.mrb[0].mxu0 %v2938
        %v3264 = vpop.f32.mrb[0].mxu0
        %v3265 = vadd.f32 %v3012, %v3264
        %v3266 = vpop.f32.mrb[0].mxu0
        %v3267 = vpop.f32.mrb[0].mxu0
        %v3268 = vadd.f32 %v3012, %v3267
        %v3269 = vpop.f32.mrb[0].mxu0
        %3270 = vmatprep.mubr.bf16.mxu0 %v2942
        %3271 = vmatmul.mubr.bf16.gmra.mrb[0].mxu0 %v2941
        %v3272 = vpop.f32.mrb[0].mxu0
        %v3273 = vadd.f32 %v3012, %v3272
        %v3274 = vpop.f32.mrb[0].mxu0
        %v3275 = vpop.f32.mrb[0].mxu0
        %v3276 = vadd.f32 %v3012, %v3275
        %v3277 = vpop.f32.mrb[0].mxu0
        %3278 = vmatprep.mubr.bf16.mxu0 %v2945
        %3279 = vmatmul.mubr.bf16.gmra.mrb[0].mxu0 %v2944
        %v3280 = vpop.f32.mrb[0].mxu0
        %v3281 = vadd.f32 %v3012, %v3280
        %v3282 = vpop.f32.mrb[0].mxu0
        %v3283 = vpop.f32.mrb[0].mxu0
        %v3284 = vadd.f32 %v3012, %v3283
        %v3285 = vpop.f32.mrb[0].mxu0
        %3286 = vmatprep.mubr.bf16.mxu0 %v2948
        %3287 = vmatmul.mubr.bf16.gmra.mrb[0].mxu0 %v2947
        %v3288 = vpop.f32.mrb[0].mxu0
        %v3289 = vadd.f32 %v3012, %v3288
        %v3290 = vpop.f32.mrb[0].mxu0
        %v3291 = vpop.f32.mrb[0].mxu0
        %v3292 = vadd.f32 %v3012, %v3291
        %v3293 = vpop.f32.mrb[0].mxu0
        %3294 = vmatprep.mubr.bf16.mxu0 %v2951
        %3295 = vmatmul.mubr.bf16.gmra.mrb[0].mxu0 %v2950
        %v3296 = vpop.f32.mrb[0].mxu0
        %v3297 = vadd.f32 %v3012, %v3296
        %v3298 = vpop.f32.mrb[0].mxu0
        %v3299 = vpop.f32.mrb[0].mxu0
        %v3300 = vadd.f32 %v3012, %v3299
        %v3301 = vpop.f32.mrb[0].mxu0
        %3302 = vmatprep.mubr.bf16.mxu0 %v2954
        %3303 = vmatmul.mubr.bf16.gmra.mrb[0].mxu0 %v2953
        %v3304 = vpop.f32.mrb[0].mxu0
        %v3305 = vadd.f32 %v3012, %v3304
        %v3306 = vpop.f32.mrb[0].mxu0
        %v3307 = vpop.f32.mrb[0].mxu0
        %v3308 = vadd.f32 %v3012, %v3307
        %v3309 = vpop.f32.mrb[0].mxu0
        %3310 = vmatprep.mubr.bf16.mxu0 %v2957
        %3311 = vmatmul.mubr.bf16.gmra.mrb[0].mxu0 %v2956
        %v3312 = vpop.f32.mrb[0].mxu0
        %v3313 = vadd.f32 %v3012, %v3312
        %v3314 = vpop.f32.mrb[0].mxu0
        %v3315 = vpop.f32.mrb[0].mxu0
        %v3316 = vadd.f32 %v3012, %v3315
        %v3317 = vpop.f32.mrb[0].mxu0
        %3318 = vdwg.mxu0
        %3319 = vmatprep.subr.bf16.mxu0 0
        %3320 = vmatpush1.bf16.msra.mxu0 %v3126
        %3321 = vmatprep.subr.bf16.mxu0 0
        %3322 = vmatpush1.bf16.msra.mxu0 %v3127
        %3323 = vmatprep.subr.bf16.mxu0 0
        %3324 = vmatpush1.bf16.msra.mxu0 %v3128
        %3325 = vmatprep.subr.bf16.mxu0 0
        %3326 = vmatpush1.bf16.msra.mxu0 %v3129
        %3327 = vmatprep.subr.bf16.mxu0 0
        %3328 = vmatpush1.bf16.msra.mxu0 %v3130
        %3329 = vmatprep.subr.bf16.mxu0 0
        %3330 = vmatpush1.bf16.msra.mxu0 %v3131
        %3331 = vmatprep.subr.bf16.mxu0 0
        %3332 = vmatpush1.bf16.msra.mxu0 %v3132
        %3333 = vmatprep.subr.bf16.mxu0 0
        %3334 = vmatpush1.bf16.msra.mxu0 %v3133
        %3335 = vmatprep.subr.bf16.mxu0 0
        %3336 = vmatpush1.bf16.msra.mxu0 0
        %3337 = vmatprep.subr.bf16.mxu0 0
        %3338 = vmatpush1.bf16.msra.mxu0 0
        %3339 = vmatprep.subr.bf16.mxu0 0
        %3340 = vmatpush1.bf16.msra.mxu0 0
        %3341 = vmatprep.subr.bf16.mxu0 0
        %3342 = vmatpush1.bf16.msra.mxu0 0
        %3343 = vmatprep.subr.bf16.mxu0 0
        %3344 = vmatpush1.bf16.msra.mxu0 0
        %3345 = vmatprep.subr.bf16.mxu0 0
        %3346 = vmatpush1.bf16.msra.mxu0 0
        %3347 = vmatprep.subr.bf16.mxu0 0
        %3348 = vmatpush1.bf16.msra.mxu0 0
        %3349 = vmatprep.subr.bf16.mxu0 0
        %3350 = vmatpush1.bf16.msra.mxu0 0
        %3351 = vmatprep.mubr.bf16.mxu0 0
        %3352 = vmatmul.mubr.bf16.gmra.mrb[0].mxu0 %v2913
        %v3353 = vpop.f32.mrb[0].mxu0
        %v3354 = vadd.f32 %v3193, %v3353
        %v3355 = vpop.f32.mrb[0].mxu0
        %v3356 = vpop.f32.mrb[0].mxu0
        %v3357 = vadd.f32 %v3196, %v3356
        %v3358 = vpop.f32.mrb[0].mxu0
        %3359 = vmatprep.mubr.bf16.mxu0 0
        %3360 = vmatmul.mubr.bf16.gmra.mrb[0].mxu0 %v2916
        %v3361 = vpop.f32.mrb[0].mxu0
        %v3362 = vadd.f32 %v3201, %v3361
        %v3363 = vpop.f32.mrb[0].mxu0
        %v3364 = vpop.f32.mrb[0].mxu0
        %v3365 = vadd.f32 %v3204, %v3364
        %v3366 = vpop.f32.mrb[0].mxu0
        %3367 = vmatprep.mubr.bf16.mxu0 0
        %3368 = vmatmul.mubr.bf16.gmra.mrb[0].mxu0 %v2919
        %v3369 = vpop.f32.mrb[0].mxu0
        %v3370 = vadd.f32 %v3209, %v3369
        %v3371 = vpop.f32.mrb[0].mxu0
        %v3372 = vpop.f32.mrb[0].mxu0
        %v3373 = vadd.f32 %v3212, %v3372
        %v3374 = vpop.f32.mrb[0].mxu0
        %3375 = vmatprep.mubr.bf16.mxu0 0
        %3376 = vmatmul.mubr.bf16.gmra.mrb[0].mxu0 %v2922
        %v3377 = vpop.f32.mrb[0].mxu0
        %v3378 = vadd.f32 %v3217, %v3377
        %v3379 = vpop.f32.mrb[0].mxu0
        %v3380 = vpop.f32.mrb[0].mxu0
        %v3381 = vadd.f32 %v3220, %v3380
        %v3382 = vpop.f32.mrb[0].mxu0
        %3383 = vmatprep.mubr.bf16.mxu0 0
        %3384 = vmatmul.mubr.bf16.gmra.mrb[0].mxu0 %v2925
        %v3385 = vpop.f32.mrb[0].mxu0
        %v3386 = vadd.f32 %v3225, %v3385
        %v3387 = vpop.f32.mrb[0].mxu0
        %v3388 = vpop.f32.mrb[0].mxu0
        %v3389 = vadd.f32 %v3228, %v3388
        %v3390 = vpop.f32.mrb[0].mxu0
        %3391 = vmatprep.mubr.bf16.mxu0 0
        %3392 = vmatmul.mubr.bf16.gmra.mrb[0].mxu0 %v2928
        %v3393 = vpop.f32.mrb[0].mxu0
        %v3394 = vadd.f32 %v3233, %v3393
        %v3395 = vpop.f32.mrb[0].mxu0
        %v3396 = vpop.f32.mrb[0].mxu0
        %v3397 = vadd.f32 %v3236, %v3396
        %v3398 = vpop.f32.mrb[0].mxu0
        %3399 = vmatprep.mubr.bf16.mxu0 0
        %3400 = vmatmul.mubr.bf16.gmra.mrb[0].mxu0 %v2931
        %v3401 = vpop.f32.mrb[0].mxu0
        %v3402 = vadd.f32 %v3241, %v3401
        %v3403 = vpop.f32.mrb[0].mxu0
        %v3404 = vpop.f32.mrb[0].mxu0
        %v3405 = vadd.f32 %v3244, %v3404
        %v3406 = vpop.f32.mrb[0].mxu0
        %3407 = vmatprep.mubr.bf16.mxu0 0
        %3408 = vmatmul.mubr.bf16.gmra.mrb[0].mxu0 %v2934
        %v3409 = vpop.f32.mrb[0].mxu0
        %v3410 = vadd.f32 %v3249, %v3409
        %v3411 = vpop.f32.mrb[0].mxu0
        %v3412 = vpop.f32.mrb[0].mxu0
        %v3413 = vadd.f32 %v3252, %v3412
        %v3414 = vpop.f32.mrb[0].mxu0
        %3415 = vmatprep.mubr.bf16.mxu0 0
        %3416 = vmatmul.mubr.bf16.gmra.mrb[0].mxu0 %v2937
        %v3417 = vpop.f32.mrb[0].mxu0
        %v3418 = vadd.f32 %v3257, %v3417
        %v3419 = vpop.f32.mrb[0].mxu0
        %v3420 = vpop.f32.mrb[0].mxu0
        %v3421 = vadd.f32 %v3260, %v3420
        %v3422 = vpop.f32.mrb[0].mxu0
        %3423 = vmatprep.mubr.bf16.mxu0 0
        %3424 = vmatmul.mubr.bf16.gmra.mrb[0].mxu0 %v2940
        %v3425 = vpop.f32.mrb[0].mxu0
        %v3426 = vadd.f32 %v3265, %v3425
        %v3427 = vpop.f32.mrb[0].mxu0
        %v3428 = vpop.f32.mrb[0].mxu0
        %v3429 = vadd.f32 %v3268, %v3428
        %v3430 = vpop.f32.mrb[0].mxu0
        %3431 = vmatprep.mubr.bf16.mxu0 0
        %3432 = vmatmul.mubr.bf16.gmra.mrb[0].mxu0 %v2943
        %v3433 = vpop.f32.mrb[0].mxu0
        %v3434 = vadd.f32 %v3273, %v3433
        %v3435 = vpop.f32.mrb[0].mxu0
        %v3436 = vpop.f32.mrb[0].mxu0
        %v3437 = vadd.f32 %v3276, %v3436
        %v3438 = vpop.f32.mrb[0].mxu0
        %3439 = vmatprep.mubr.bf16.mxu0 0
        %3440 = vmatmul.mubr.bf16.gmra.mrb[0].mxu0 %v2946
        %v3441 = vpop.f32.mrb[0].mxu0
        %v3442 = vadd.f32 %v3281, %v3441
        %v3443 = vpop.f32.mrb[0].mxu0
        %v3444 = vpop.f32.mrb[0].mxu0
        %v3445 = vadd.f32 %v3284, %v3444
        %v3446 = vpop.f32.mrb[0].mxu0
        %3447 = vmatprep.mubr.bf16.mxu0 0
        %3448 = vmatmul.mubr.bf16.gmra.mrb[0].mxu0 %v2949
        %v3449 = vpop.f32.mrb[0].mxu0
        %v3450 = vadd.f32 %v3289, %v3449
        %v3451 = vpop.f32.mrb[0].mxu0
        %v3452 = vpop.f32.mrb[0].mxu0
        %v3453 = vadd.f32 %v3292, %v3452
        %v3454 = vpop.f32.mrb[0].mxu0
        %3455 = vmatprep.mubr.bf16.mxu0 0
        %3456 = vmatmul.mubr.bf16.gmra.mrb[0].mxu0 %v2952
        %v3457 = vpop.f32.mrb[0].mxu0
        %v3458 = vadd.f32 %v3297, %v3457
        %v3459 = vpop.f32.mrb[0].mxu0
        %v3460 = vpop.f32.mrb[0].mxu0
        %v3461 = vadd.f32 %v3300, %v3460
        %v3462 = vpop.f32.mrb[0].mxu0
        %3463 = vmatprep.mubr.bf16.mxu0 0
        %3464 = vmatmul.mubr.bf16.gmra.mrb[0].mxu0 %v2955
        %v3465 = vpop.f32.mrb[0].mxu0
        %v3466 = vadd.f32 %v3305, %v3465
        %v3467 = vpop.f32.mrb[0].mxu0
        %v3468 = vpop.f32.mrb[0].mxu0
        %v3469 = vadd.f32 %v3308, %v3468
        %v3470 = vpop.f32.mrb[0].mxu0
        %3471 = vmatprep.mubr.bf16.mxu0 0
        %3472 = vmatmul.mubr.bf16.gmra.mrb[0].mxu0 %v2958
        %v3473 = vpop.f32.mrb[0].mxu0
        %v3474 = vadd.f32 %v3313, %v3473
        %v3475 = vpop.f32.mrb[0].mxu0
        %v3476 = vpop.f32.mrb[0].mxu0
        %v3477 = vadd.f32 %v3316, %v3476
        %v3478 = vpop.f32.mrb[0].mxu0
        %3479 = vdwg.mxu0
        %v3480 = vld [vmem:[#allocation12] sm:$0xf]
        %v3481 = vld [vmem:[#allocation12 + $0x4] sm:$0xf]
        %v3482 = vld [vmem:[#allocation12 + $0x8] sm:$0xf]
        %v3483 = vld [vmem:[#allocation12 + $0xc] sm:$0xf]
        %v3484 = vld [vmem:[#allocation12 + $0x10] sm:$0xf]
        %v3485 = vld [vmem:[#allocation12 + $0x14] sm:$0xf]
        %v3486 = vld [vmem:[#allocation12 + $0x18] sm:$0xf]
        %v3487 = vld [vmem:[#allocation12 + $0x1c] sm:$0xf]
        %v3488 = vld [vmem:[#allocation12 + $0x20] sm:$0xf]
        %v3489 = vld [vmem:[#allocation12 + $0x24] sm:$0xf]
        %v3490 = vld [vmem:[#allocation12 + $0x28] sm:$0xf]
        %v3491 = vld [vmem:[#allocation12 + $0x2c] sm:$0xf]
        %v3492 = vld [vmem:[#allocation12 + $0x30] sm:$0xf]
        %v3493 = vld [vmem:[#allocation12 + $0x34] sm:$0xf]
        %v3494 = vld [vmem:[#allocation12 + $0x38] sm:$0xf]
        %v3495 = vld [vmem:[#allocation12 + $0x3c] sm:$0xf]
        %v3496 = vld [vmem:[%s662] sm:$0x1]
        %v3498 = vlaneseq
        %v3499 = vshrl.u32 %v3498, 7
        %v3500 = vsub.s32 0, %v3499
        %v3501 = vrot.slane %v3496, %v3500
        %v3519 = vunpack.c.l.b16 %v3480
        %v3520 = vunpack.c.l.b16 %v3481
        %v3521 = vunpack.c.l.b16 %v3482
        %v3522 = vunpack.c.l.b16 %v3483
        %v3523 = vunpack.c.l.b16 %v3484
        %v3524 = vunpack.c.l.b16 %v3485
        %v3525 = vunpack.c.l.b16 %v3486
        %v3526 = vunpack.c.l.b16 %v3487
        %v3527 = vunpack.c.l.b16 %v3488
        %v3528 = vunpack.c.l.b16 %v3489
        %v3529 = vunpack.c.l.b16 %v3490
        %v3530 = vunpack.c.l.b16 %v3491
        %v3531 = vunpack.c.l.b16 %v3492
        %v3532 = vunpack.c.l.b16 %v3493
        %v3533 = vunpack.c.l.b16 %v3494
        %v3534 = vunpack.c.l.b16 %v3495
        %v3535 = vpack.c.b16 %v3520, %v3519
        %v3536 = vpack.c.b16 %v3522, %v3521
        %v3537 = vpack.c.b16 %v3524, %v3523
        %v3538 = vpack.c.b16 %v3526, %v3525
        %v3539 = vpack.c.b16 %v3528, %v3527
        %v3540 = vpack.c.b16 %v3530, %v3529
        %v3541 = vpack.c.b16 %v3532, %v3531
        %v3542 = vpack.c.b16 %v3534, %v3533
        %3551 = vmatprep.subr.bf16.mxu0 0
        %3552 = vmatpush1.bf16.msra.mxu0 %v3535
        %3553 = vmatprep.subr.bf16.mxu0 0
        %3554 = vmatpush1.bf16.msra.mxu0 %v3536
        %3555 = vmatprep.subr.bf16.mxu0 0
        %3556 = vmatpush1.bf16.msra.mxu0 %v3537
        %3557 = vmatprep.subr.bf16.mxu0 0
        %3558 = vmatpush1.bf16.msra.mxu0 %v3538
        %3559 = vmatprep.subr.bf16.mxu0 0
        %3560 = vmatpush1.bf16.msra.mxu0 %v3539
        %3561 = vmatprep.subr.bf16.mxu0 0
        %3562 = vmatpush1.bf16.msra.mxu0 %v3540
        %3563 = vmatprep.subr.bf16.mxu0 0
        %3564 = vmatpush1.bf16.msra.mxu0 %v3541
        %3565 = vmatprep.subr.bf16.mxu0 0
        %3566 = vmatpush1.bf16.msra.mxu0 %v3542
        %3567 = vmatprep.subr.bf16.mxu0 0
        %3568 = vmatpush1.bf16.msra.mxu0 0
        %3569 = vmatprep.subr.bf16.mxu0 0
        %3570 = vmatpush1.bf16.msra.mxu0 0
        %3571 = vmatprep.subr.bf16.mxu0 0
        %3572 = vmatpush1.bf16.msra.mxu0 0
        %3573 = vmatprep.subr.bf16.mxu0 0
        %3574 = vmatpush1.bf16.msra.mxu0 0
        %3575 = vmatprep.subr.bf16.mxu0 0
        %3576 = vmatpush1.bf16.msra.mxu0 0
        %3577 = vmatprep.subr.bf16.mxu0 0
        %3578 = vmatpush1.bf16.msra.mxu0 0
        %3579 = vmatprep.subr.bf16.mxu0 0
        %3580 = vmatpush1.bf16.msra.mxu0 0
        %3581 = vmatprep.subr.bf16.mxu0 0
        %3582 = vmatpush1.bf16.msra.mxu0 0
        %3583 = vmatprep.mubr.bf16.mxu0 0
        %3584 = vmatmul.mubr.bf16.gmra.mrb[0].mxu0 %v2913
        %v3585 = vpop.f32.mrb[0].mxu0
        %v3586 = vadd.f32 %v3501, %v3585
        %v3587 = vpop.f32.mrb[0].mxu0
        %v3588 = vpop.f32.mrb[0].mxu0
        %v3589 = vadd.f32 %v3501, %v3588
        %v3590 = vpop.f32.mrb[0].mxu0
        %3591 = vmatprep.mubr.bf16.mxu0 0
        %3592 = vmatmul.mubr.bf16.gmra.mrb[0].mxu0 %v2916
        %v3593 = vpop.f32.mrb[0].mxu0
        %v3594 = vadd.f32 %v3501, %v3593
        %v3595 = vpop.f32.mrb[0].mxu0
        %v3596 = vpop.f32.mrb[0].mxu0
        %v3597 = vadd.f32 %v3501, %v3596
        %v3598 = vpop.f32.mrb[0].mxu0
        %3599 = vmatprep.mubr.bf16.mxu0 0
        %3600 = vmatmul.mubr.bf16.gmra.mrb[0].mxu0 %v2919
        %v3601 = vpop.f32.mrb[0].mxu0
        %v3602 = vadd.f32 %v3501, %v3601
        %v3603 = vpop.f32.mrb[0].mxu0
        %v3604 = vpop.f32.mrb[0].mxu0
        %v3605 = vadd.f32 %v3501, %v3604
        %v3606 = vpop.f32.mrb[0].mxu0
        %3607 = vmatprep.mubr.bf16.mxu0 0
        %3608 = vmatmul.mubr.bf16.gmra.mrb[0].mxu0 %v2922
        %v3609 = vpop.f32.mrb[0].mxu0
        %v3610 = vadd.f32 %v3501, %v3609
        %v3611 = vpop.f32.mrb[0].mxu0
        %v3612 = vpop.f32.mrb[0].mxu0
        %v3613 = vadd.f32 %v3501, %v3612
        %v3614 = vpop.f32.mrb[0].mxu0
        %3615 = vmatprep.mubr.bf16.mxu0 0
        %3616 = vmatmul.mubr.bf16.gmra.mrb[0].mxu0 %v2925
        %v3617 = vpop.f32.mrb[0].mxu0
        %v3618 = vadd.f32 %v3501, %v3617
        %v3619 = vpop.f32.mrb[0].mxu0
        %v3620 = vpop.f32.mrb[0].mxu0
        %v3621 = vadd.f32 %v3501, %v3620
        %v3622 = vpop.f32.mrb[0].mxu0
        %3623 = vmatprep.mubr.bf16.mxu0 0
        %3624 = vmatmul.mubr.bf16.gmra.mrb[0].mxu0 %v2928
        %v3625 = vpop.f32.mrb[0].mxu0
        %v3626 = vadd.f32 %v3501, %v3625
        %v3627 = vpop.f32.mrb[0].mxu0
        %v3628 = vpop.f32.mrb[0].mxu0
        %v3629 = vadd.f32 %v3501, %v3628
        %v3630 = vpop.f32.mrb[0].mxu0
        %3631 = vmatprep.mubr.bf16.mxu0 0
        %3632 = vmatmul.mubr.bf16.gmra.mrb[0].mxu0 %v2931
        %v3633 = vpop.f32.mrb[0].mxu0
        %v3634 = vadd.f32 %v3501, %v3633
        %v3635 = vpop.f32.mrb[0].mxu0
        %v3636 = vpop.f32.mrb[0].mxu0
        %v3637 = vadd.f32 %v3501, %v3636
        %v3638 = vpop.f32.mrb[0].mxu0
        %3639 = vmatprep.mubr.bf16.mxu0 0
        %3640 = vmatmul.mubr.bf16.gmra.mrb[0].mxu0 %v2934
        %v3641 = vpop.f32.mrb[0].mxu0
        %v3642 = vadd.f32 %v3501, %v3641
        %v3643 = vpop.f32.mrb[0].mxu0
        %v3644 = vpop.f32.mrb[0].mxu0
        %v3645 = vadd.f32 %v3501, %v3644
        %v3646 = vpop.f32.mrb[0].mxu0
        %3647 = vmatprep.mubr.bf16.mxu0 0
        %3648 = vmatmul.mubr.bf16.gmra.mrb[0].mxu0 %v2937
        %v3649 = vpop.f32.mrb[0].mxu0
        %v3650 = vadd.f32 %v3501, %v3649
        %v3651 = vpop.f32.mrb[0].mxu0
        %v3652 = vpop.f32.mrb[0].mxu0
        %v3653 = vadd.f32 %v3501, %v3652
        %v3654 = vpop.f32.mrb[0].mxu0
        %3655 = vmatprep.mubr.bf16.mxu0 0
        %3656 = vmatmul.mubr.bf16.gmra.mrb[0].mxu0 %v2940
        %v3657 = vpop.f32.mrb[0].mxu0
        %v3658 = vadd.f32 %v3501, %v3657
        %v3659 = vpop.f32.mrb[0].mxu0
        %v3660 = vpop.f32.mrb[0].mxu0
        %v3661 = vadd.f32 %v3501, %v3660
        %v3662 = vpop.f32.mrb[0].mxu0
        %3663 = vmatprep.mubr.bf16.mxu0 0
        %3664 = vmatmul.mubr.bf16.gmra.mrb[0].mxu0 %v2943
        %v3665 = vpop.f32.mrb[0].mxu0
        %v3666 = vadd.f32 %v3501, %v3665
        %v3667 = vpop.f32.mrb[0].mxu0
        %v3668 = vpop.f32.mrb[0].mxu0
        %v3669 = vadd.f32 %v3501, %v3668
        %v3670 = vpop.f32.mrb[0].mxu0
        %3671 = vmatprep.mubr.bf16.mxu0 0
        %3672 = vmatmul.mubr.bf16.gmra.mrb[0].mxu0 %v2946
        %v3673 = vpop.f32.mrb[0].mxu0
        %v3674 = vadd.f32 %v3501, %v3673
        %v3675 = vpop.f32.mrb[0].mxu0
        %v3676 = vpop.f32.mrb[0].mxu0
        %v3677 = vadd.f32 %v3501, %v3676
        %v3678 = vpop.f32.mrb[0].mxu0
        %3679 = vmatprep.mubr.bf16.mxu0 0
        %3680 = vmatmul.mubr.bf16.gmra.mrb[0].mxu0 %v2949
        %v3681 = vpop.f32.mrb[0].mxu0
        %v3682 = vadd.f32 %v3501, %v3681
        %v3683 = vpop.f32.mrb[0].mxu0
        %v3684 = vpop.f32.mrb[0].mxu0
        %v3685 = vadd.f32 %v3501, %v3684
        %v3686 = vpop.f32.mrb[0].mxu0
        %3687 = vmatprep.mubr.bf16.mxu0 0
        %3688 = vmatmul.mubr.bf16.gmra.mrb[0].mxu0 %v2952
        %v3689 = vpop.f32.mrb[0].mxu0
        %v3690 = vadd.f32 %v3501, %v3689
        %v3691 = vpop.f32.mrb[0].mxu0
        %v3692 = vpop.f32.mrb[0].mxu0
        %v3693 = vadd.f32 %v3501, %v3692
        %v3694 = vpop.f32.mrb[0].mxu0
        %3695 = vmatprep.mubr.bf16.mxu0 0
        %3696 = vmatmul.mubr.bf16.gmra.mrb[0].mxu0 %v2955
        %v3697 = vpop.f32.mrb[0].mxu0
        %v3698 = vadd.f32 %v3501, %v3697
        %v3699 = vpop.f32.mrb[0].mxu0
        %v3700 = vpop.f32.mrb[0].mxu0
        %v3701 = vadd.f32 %v3501, %v3700
        %v3702 = vpop.f32.mrb[0].mxu0
        %3703 = vmatprep.mubr.bf16.mxu0 0
        %3704 = vmatmul.mubr.bf16.gmra.mrb[0].mxu0 %v2958
        %v3705 = vpop.f32.mrb[0].mxu0
        %v3706 = vadd.f32 %v3501, %v3705
        %v3707 = vpop.f32.mrb[0].mxu0
        %v3708 = vpop.f32.mrb[0].mxu0
        %v3709 = vadd.f32 %v3501, %v3708
        %v3710 = vpop.f32.mrb[0].mxu0
        %3711 = vdwg.mxu0
        %v3712 = vxor.u32 %v3354, 2147483648
        %v3713 = vxor.u32 %v3357, 2147483648
        %v3714 = vxor.u32 %v3362, 2147483648
        %v3715 = vxor.u32 %v3365, 2147483648
        %v3716 = vxor.u32 %v3370, 2147483648
        %v3717 = vxor.u32 %v3373, 2147483648
        %v3718 = vxor.u32 %v3378, 2147483648
        %v3719 = vxor.u32 %v3381, 2147483648
        %v3720 = vxor.u32 %v3386, 2147483648
        %v3721 = vxor.u32 %v3389, 2147483648
        %v3722 = vxor.u32 %v3394, 2147483648
        %v3723 = vxor.u32 %v3397, 2147483648
        %v3724 = vxor.u32 %v3402, 2147483648
        %v3725 = vxor.u32 %v3405, 2147483648
        %v3726 = vxor.u32 %v3410, 2147483648
        %v3727 = vxor.u32 %v3413, 2147483648
        %v3728 = vxor.u32 %v3418, 2147483648
        %v3729 = vxor.u32 %v3421, 2147483648
        %v3730 = vxor.u32 %v3426, 2147483648
        %v3731 = vxor.u32 %v3429, 2147483648
        %v3732 = vxor.u32 %v3434, 2147483648
        %v3733 = vxor.u32 %v3437, 2147483648
        %v3734 = vxor.u32 %v3442, 2147483648
        %v3735 = vxor.u32 %v3445, 2147483648
        %v3736 = vxor.u32 %v3450, 2147483648
        %v3737 = vxor.u32 %v3453, 2147483648
        %v3738 = vxor.u32 %v3458, 2147483648
        %v3739 = vxor.u32 %v3461, 2147483648
        %v3740 = vxor.u32 %v3466, 2147483648
        %v3741 = vxor.u32 %v3469, 2147483648
        %v3742 = vxor.u32 %v3474, 2147483648
        %v3743 = vxor.u32 %v3477, 2147483648
        %v3744 = vmul.f32 %v3712, 1.442695
        %v3745 = vpow.pop %v3744
        %v3746 = vmul.f32 %v3713, 1.442695
        %v3747 = vpow.pop %v3746
        %v3748 = vmul.f32 %v3714, 1.442695
        %v3749 = vpow.pop %v3748
        %v3750 = vmul.f32 %v3715, 1.442695
        %v3751 = vpow.pop %v3750
        %v3752 = vmul.f32 %v3716, 1.442695
        %v3753 = vpow.pop %v3752
        %v3754 = vmul.f32 %v3717, 1.442695
        %v3755 = vpow.pop %v3754
        %v3756 = vmul.f32 %v3718, 1.442695
        %v3757 = vpow.pop %v3756
        %v3758 = vmul.f32 %v3719, 1.442695
        %v3759 = vpow.pop %v3758
        %v3760 = vmul.f32 %v3720, 1.442695
        %v3761 = vpow.pop %v3760
        %v3762 = vmul.f32 %v3721, 1.442695
        %v3763 = vpow.pop %v3762
        %v3764 = vmul.f32 %v3722, 1.442695
        %v3765 = vpow.pop %v3764
        %v3766 = vmul.f32 %v3723, 1.442695
        %v3767 = vpow.pop %v3766
        %v3768 = vmul.f32 %v3724, 1.442695
        %v3769 = vpow.pop %v3768
        %v3770 = vmul.f32 %v3725, 1.442695
        %v3771 = vpow.pop %v3770
        %v3772 = vmul.f32 %v3726, 1.442695
        %v3773 = vpow.pop %v3772
        %v3774 = vmul.f32 %v3727, 1.442695
        %v3775 = vpow.pop %v3774
        %v3776 = vmul.f32 %v3728, 1.442695
        %v3777 = vpow.pop %v3776
        %v3778 = vmul.f32 %v3729, 1.442695
        %v3779 = vpow.pop %v3778
        %v3780 = vmul.f32 %v3730, 1.442695
        %v3781 = vpow.pop %v3780
        %v3782 = vmul.f32 %v3731, 1.442695
        %v3783 = vpow.pop %v3782
        %v3784 = vmul.f32 %v3732, 1.442695
        %v3785 = vpow.pop %v3784
        %v3786 = vmul.f32 %v3733, 1.442695
        %v3787 = vpow.pop %v3786
        %v3788 = vmul.f32 %v3734, 1.442695
        %v3789 = vpow.pop %v3788
        %v3790 = vmul.f32 %v3735, 1.442695
        %v3791 = vpow.pop %v3790
        %v3792 = vmul.f32 %v3736, 1.442695
        %v3793 = vpow.pop %v3792
        %v3794 = vmul.f32 %v3737, 1.442695
        %v3795 = vpow.pop %v3794
        %v3796 = vmul.f32 %v3738, 1.442695
        %v3797 = vpow.pop %v3796
        %v3798 = vmul.f32 %v3739, 1.442695
        %v3799 = vpow.pop %v3798
        %v3800 = vmul.f32 %v3740, 1.442695
        %v3801 = vpow.pop %v3800
        %v3802 = vmul.f32 %v3741, 1.442695
        %v3803 = vpow.pop %v3802
        %v3804 = vmul.f32 %v3742, 1.442695
        %v3805 = vpow.pop %v3804
        %v3806 = vmul.f32 %v3743, 1.442695
        %v3807 = vpow.pop %v3806
        %v3808 = vadd.f32 %v3745, 1.0
        %v3809 = vadd.f32 %v3747, 1.0
        %v3810 = vadd.f32 %v3749, 1.0
        %v3811 = vadd.f32 %v3751, 1.0
        %v3812 = vadd.f32 %v3753, 1.0
        %v3813 = vadd.f32 %v3755, 1.0
        %v3814 = vadd.f32 %v3757, 1.0
        %v3815 = vadd.f32 %v3759, 1.0
        %v3816 = vadd.f32 %v3761, 1.0
        %v3817 = vadd.f32 %v3763, 1.0
        %v3818 = vadd.f32 %v3765, 1.0
        %v3819 = vadd.f32 %v3767, 1.0
        %v3820 = vadd.f32 %v3769, 1.0
        %v3821 = vadd.f32 %v3771, 1.0
        %v3822 = vadd.f32 %v3773, 1.0
        %v3823 = vadd.f32 %v3775, 1.0
        %v3824 = vadd.f32 %v3777, 1.0
        %v3825 = vadd.f32 %v3779, 1.0
        %v3826 = vadd.f32 %v3781, 1.0
        %v3827 = vadd.f32 %v3783, 1.0
        %v3828 = vadd.f32 %v3785, 1.0
        %v3829 = vadd.f32 %v3787, 1.0
        %v3830 = vadd.f32 %v3789, 1.0
        %v3831 = vadd.f32 %v3791, 1.0
        %v3832 = vadd.f32 %v3793, 1.0
        %v3833 = vadd.f32 %v3795, 1.0
        %v3834 = vadd.f32 %v3797, 1.0
        %v3835 = vadd.f32 %v3799, 1.0
        %v3836 = vadd.f32 %v3801, 1.0
        %v3837 = vadd.f32 %v3803, 1.0
        %v3838 = vadd.f32 %v3805, 1.0
        %v3839 = vadd.f32 %v3807, 1.0
        %v3840 = vrcp.pop %v3808
        %v3841 = vmul.f32 1.0, %v3840
        %v3842 = vrcp.pop %v3809
        %v3843 = vmul.f32 1.0, %v3842
        %v3844 = vrcp.pop %v3810
        %v3845 = vmul.f32 1.0, %v3844
        %v3846 = vrcp.pop %v3811
        %v3847 = vmul.f32 1.0, %v3846
        %v3848 = vrcp.pop %v3812
        %v3849 = vmul.f32 1.0, %v3848
        %v3850 = vrcp.pop %v3813
        %v3851 = vmul.f32 1.0, %v3850
        %v3852 = vrcp.pop %v3814
        %v3853 = vmul.f32 1.0, %v3852
        %v3854 = vrcp.pop %v3815
        %v3855 = vmul.f32 1.0, %v3854
        %v3856 = vrcp.pop %v3816
        %v3857 = vmul.f32 1.0, %v3856
        %v3858 = vrcp.pop %v3817
        %v3859 = vmul.f32 1.0, %v3858
        %v3860 = vrcp.pop %v3818
        %v3861 = vmul.f32 1.0, %v3860
        %v3862 = vrcp.pop %v3819
        %v3863 = vmul.f32 1.0, %v3862
        %v3864 = vrcp.pop %v3820
        %v3865 = vmul.f32 1.0, %v3864
        %v3866 = vrcp.pop %v3821
        %v3867 = vmul.f32 1.0, %v3866
        %v3868 = vrcp.pop %v3822
        %v3869 = vmul.f32 1.0, %v3868
        %v3870 = vrcp.pop %v3823
        %v3871 = vmul.f32 1.0, %v3870
        %v3872 = vrcp.pop %v3824
        %v3873 = vmul.f32 1.0, %v3872
        %v3874 = vrcp.pop %v3825
        %v3875 = vmul.f32 1.0, %v3874
        %v3876 = vrcp.pop %v3826
        %v3877 = vmul.f32 1.0, %v3876
        %v3878 = vrcp.pop %v3827
        %v3879 = vmul.f32 1.0, %v3878
        %v3880 = vrcp.pop %v3828
        %v3881 = vmul.f32 1.0, %v3880
        %v3882 = vrcp.pop %v3829
        %v3883 = vmul.f32 1.0, %v3882
        %v3884 = vrcp.pop %v3830
        %v3885 = vmul.f32 1.0, %v3884
        %v3886 = vrcp.pop %v3831
        %v3887 = vmul.f32 1.0, %v3886
        %v3888 = vrcp.pop %v3832
        %v3889 = vmul.f32 1.0, %v3888
        %v3890 = vrcp.pop %v3833
        %v3891 = vmul.f32 1.0, %v3890
        %v3892 = vrcp.pop %v3834
        %v3893 = vmul.f32 1.0, %v3892
        %v3894 = vrcp.pop %v3835
        %v3895 = vmul.f32 1.0, %v3894
        %v3896 = vrcp.pop %v3836
        %v3897 = vmul.f32 1.0, %v3896
        %v3898 = vrcp.pop %v3837
        %v3899 = vmul.f32 1.0, %v3898
        %v3900 = vrcp.pop %v3838
        %v3901 = vmul.f32 1.0, %v3900
        %v3902 = vrcp.pop %v3839
        %v3903 = vmul.f32 1.0, %v3902
        %v3904 = vmul.f32 %v3586, %v3841
        %v3905 = vmul.f32 %v3589, %v3843
        %v3906 = vmul.f32 %v3594, %v3845
        %v3907 = vmul.f32 %v3597, %v3847
        %v3908 = vmul.f32 %v3602, %v3849
        %v3909 = vmul.f32 %v3605, %v3851
        %v3910 = vmul.f32 %v3610, %v3853
        %v3911 = vmul.f32 %v3613, %v3855
        %v3912 = vmul.f32 %v3618, %v3857
        %v3913 = vmul.f32 %v3621, %v3859
        %v3914 = vmul.f32 %v3626, %v3861
        %v3915 = vmul.f32 %v3629, %v3863
        %v3916 = vmul.f32 %v3634, %v3865
        %v3917 = vmul.f32 %v3637, %v3867
        %v3918 = vmul.f32 %v3642, %v3869
        %v3919 = vmul.f32 %v3645, %v3871
        %v3920 = vmul.f32 %v3650, %v3873
        %v3921 = vmul.f32 %v3653, %v3875
        %v3922 = vmul.f32 %v3658, %v3877
        %v3923 = vmul.f32 %v3661, %v3879
        %v3924 = vmul.f32 %v3666, %v3881
        %v3925 = vmul.f32 %v3669, %v3883
        %v3926 = vmul.f32 %v3674, %v3885
        %v3927 = vmul.f32 %v3677, %v3887
        %v3928 = vmul.f32 %v3682, %v3889
        %v3929 = vmul.f32 %v3685, %v3891
        %v3930 = vmul.f32 %v3690, %v3893
        %v3931 = vmul.f32 %v3693, %v3895
        %v3932 = vmul.f32 %v3698, %v3897
        %v3933 = vmul.f32 %v3701, %v3899
        %v3934 = vmul.f32 %v3706, %v3901
        %v3935 = vmul.f32 %v3709, %v3903
        %v3936 = vld [vmem:[%s655] sm:$0xff]
        %v3937 = vld [vmem:[%s655 + $0x8] sm:$0xff]
        %v3938 = vld [vmem:[%s655 + $0x10] sm:$0xff]
        %v3939 = vld [vmem:[%s655 + $0x18] sm:$0xff]
        %v3940 = vld [vmem:[%s655 + $0x20] sm:$0xff]
        %v3941 = vld [vmem:[%s655 + $0x28] sm:$0xff]
        %v3942 = vld [vmem:[%s655 + $0x30] sm:$0xff]
        %v3943 = vld [vmem:[%s655 + $0x38] sm:$0xff]
        %v3944 = vld [vmem:[%s655 + $0x40] sm:$0xff]
        %v3945 = vld [vmem:[%s655 + $0x48] sm:$0xff]
        %v3946 = vld [vmem:[%s655 + $0x50] sm:$0xff]
        %v3947 = vld [vmem:[%s655 + $0x58] sm:$0xff]
        %v3948 = vld [vmem:[%s655 + $0x60] sm:$0xff]
        %v3949 = vld [vmem:[%s655 + $0x68] sm:$0xff]
        %v3950 = vld [vmem:[%s655 + $0x70] sm:$0xff]
        %v3951 = vld [vmem:[%s655 + $0x78] sm:$0xff]
        %v3952 = vld [vmem:[%s655 + $0x80] sm:$0xff]
        %v3953 = vld [vmem:[%s655 + $0x88] sm:$0xff]
        %v3954 = vld [vmem:[%s655 + $0x90] sm:$0xff]
        %v3955 = vld [vmem:[%s655 + $0x98] sm:$0xff]
        %v3956 = vld [vmem:[%s655 + $0xa0] sm:$0xff]
        %v3957 = vld [vmem:[%s655 + $0xa8] sm:$0xff]
        %v3958 = vld [vmem:[%s655 + $0xb0] sm:$0xff]
        %v3959 = vld [vmem:[%s655 + $0xb8] sm:$0xff]
        %v3960 = vld [vmem:[%s655 + $0xc0] sm:$0xff]
        %v3961 = vld [vmem:[%s655 + $0xc8] sm:$0xff]
        %v3962 = vld [vmem:[%s655 + $0xd0] sm:$0xff]
        %v3963 = vld [vmem:[%s655 + $0xd8] sm:$0xff]
        %v3964 = vld [vmem:[%s655 + $0xe0] sm:$0xff]
        %v3965 = vld [vmem:[%s655 + $0xe8] sm:$0xff]
        %v3966 = vld [vmem:[%s655 + $0xf0] sm:$0xff]
        %v3967 = vld [vmem:[%s655 + $0xf8] sm:$0xff]
        %v3968 = vpack.c.bf16 %v3905, %v3904
        %v3969 = vpack.c.bf16 %v3907, %v3906
        %v3970 = vpack.c.bf16 %v3909, %v3908
        %v3971 = vpack.c.bf16 %v3911, %v3910
        %v3972 = vpack.c.bf16 %v3913, %v3912
        %v3973 = vpack.c.bf16 %v3915, %v3914
        %v3974 = vpack.c.bf16 %v3917, %v3916
        %v3975 = vpack.c.bf16 %v3919, %v3918
        %v3976 = vpack.c.bf16 %v3921, %v3920
        %v3977 = vpack.c.bf16 %v3923, %v3922
        %v3978 = vpack.c.bf16 %v3925, %v3924
        %v3979 = vpack.c.bf16 %v3927, %v3926
        %v3980 = vpack.c.bf16 %v3929, %v3928
        %v3981 = vpack.c.bf16 %v3931, %v3930
        %v3982 = vpack.c.bf16 %v3933, %v3932
        %v3983 = vpack.c.bf16 %v3935, %v3934
        %v3984 = vld [vmem:[#allocation14] sm:$0xf]
        %v3985 = vld [vmem:[#allocation14 + $0x4] sm:$0xf]
        %v3986 = vld [vmem:[#allocation14 + $0x8] sm:$0xf]
        %v3987 = vld [vmem:[#allocation14 + $0xc] sm:$0xf]
        %v3988 = vld [vmem:[#allocation14 + $0x10] sm:$0xf]
        %v3989 = vld [vmem:[#allocation14 + $0x14] sm:$0xf]
        %v3990 = vld [vmem:[#allocation14 + $0x18] sm:$0xf]
        %v3991 = vld [vmem:[#allocation14 + $0x1c] sm:$0xf]
        %v3992 = vld [vmem:[#allocation14 + $0x20] sm:$0xf]
        %v3993 = vld [vmem:[#allocation14 + $0x24] sm:$0xf]
        %v3994 = vld [vmem:[#allocation14 + $0x28] sm:$0xf]
        %v3995 = vld [vmem:[#allocation14 + $0x2c] sm:$0xf]
        %v3996 = vld [vmem:[#allocation14 + $0x30] sm:$0xf]
        %v3997 = vld [vmem:[#allocation14 + $0x34] sm:$0xf]
        %v3998 = vld [vmem:[#allocation14 + $0x38] sm:$0xf]
        %v3999 = vld [vmem:[#allocation14 + $0x3c] sm:$0xf]
        %v4016 = vunpack.c.l.b16 %v3984
        %v4017 = vunpack.c.l.b16 %v3985
        %v4018 = vunpack.c.l.b16 %v3986
        %v4019 = vunpack.c.l.b16 %v3987
        %v4020 = vunpack.c.l.b16 %v3988
        %v4021 = vunpack.c.l.b16 %v3989
        %v4022 = vunpack.c.l.b16 %v3990
        %v4023 = vunpack.c.l.b16 %v3991
        %v4024 = vunpack.c.l.b16 %v3992
        %v4025 = vunpack.c.l.b16 %v3993
        %v4026 = vunpack.c.l.b16 %v3994
        %v4027 = vunpack.c.l.b16 %v3995
        %v4028 = vunpack.c.l.b16 %v3996
        %v4029 = vunpack.c.l.b16 %v3997
        %v4030 = vunpack.c.l.b16 %v3998
        %v4031 = vunpack.c.l.b16 %v3999
        %v4032 = vpack.c.b16 %v4017, %v4016
        %v4033 = vpack.c.b16 %v4019, %v4018
        %v4034 = vpack.c.b16 %v4021, %v4020
        %v4035 = vpack.c.b16 %v4023, %v4022
        %v4036 = vpack.c.b16 %v4025, %v4024
        %v4037 = vpack.c.b16 %v4027, %v4026
        %v4038 = vpack.c.b16 %v4029, %v4028
        %v4039 = vpack.c.b16 %v4031, %v4030
        %4048 = vmatprep.subr.bf16.mxu0 0
        %4049 = vmatpush1.bf16.msra.mxu0 %v4032
        %4050 = vmatprep.subr.bf16.mxu0 0
        %4051 = vmatpush1.bf16.msra.mxu0 %v4033
        %4052 = vmatprep.subr.bf16.mxu0 0
        %4053 = vmatpush1.bf16.msra.mxu0 %v4034
        %4054 = vmatprep.subr.bf16.mxu0 0
        %4055 = vmatpush1.bf16.msra.mxu0 %v4035
        %4056 = vmatprep.subr.bf16.mxu0 0
        %4057 = vmatpush1.bf16.msra.mxu0 %v4036
        %4058 = vmatprep.subr.bf16.mxu0 0
        %4059 = vmatpush1.bf16.msra.mxu0 %v4037
        %4060 = vmatprep.subr.bf16.mxu0 0
        %4061 = vmatpush1.bf16.msra.mxu0 %v4038
        %4062 = vmatprep.subr.bf16.mxu0 0
        %4063 = vmatpush1.bf16.msra.mxu0 %v4039
        %4064 = vmatprep.subr.bf16.mxu0 0
        %4065 = vmatpush1.bf16.msra.mxu0 0
        %4066 = vmatprep.subr.bf16.mxu0 0
        %4067 = vmatpush1.bf16.msra.mxu0 0
        %4068 = vmatprep.subr.bf16.mxu0 0
        %4069 = vmatpush1.bf16.msra.mxu0 0
        %4070 = vmatprep.subr.bf16.mxu0 0
        %4071 = vmatpush1.bf16.msra.mxu0 0
        %4072 = vmatprep.subr.bf16.mxu0 0
        %4073 = vmatpush1.bf16.msra.mxu0 0
        %4074 = vmatprep.subr.bf16.mxu0 0
        %4075 = vmatpush1.bf16.msra.mxu0 0
        %4076 = vmatprep.subr.bf16.mxu0 0
        %4077 = vmatpush1.bf16.msra.mxu0 0
        %4078 = vmatprep.subr.bf16.mxu0 0
        %4079 = vmatpush1.bf16.msra.mxu0 0
        %4080 = vmatprep.mubr.bf16.mxu0 0
        %4081 = vmatmul.mubr.bf16.gmra.mrb[0].mxu0 %v3968
        %v4082 = vpop.f32.mrb[0].mxu0
        %v4083 = vadd.f32 0.0, %v4082
        %v4084 = vpop.f32.mrb[0].mxu0
        %v4085 = vpop.f32.mrb[0].mxu0
        %v4086 = vadd.f32 0.0, %v4085
        %v4087 = vpop.f32.mrb[0].mxu0
        %4088 = vmatprep.mubr.bf16.mxu0 0
        %4089 = vmatmul.mubr.bf16.gmra.mrb[0].mxu0 %v3969
        %v4090 = vpop.f32.mrb[0].mxu0
        %v4091 = vadd.f32 0.0, %v4090
        %v4092 = vpop.f32.mrb[0].mxu0
        %v4093 = vpop.f32.mrb[0].mxu0
        %v4094 = vadd.f32 0.0, %v4093
        %v4095 = vpop.f32.mrb[0].mxu0
        %4096 = vmatprep.mubr.bf16.mxu0 0
        %4097 = vmatmul.mubr.bf16.gmra.mrb[0].mxu0 %v3970
        %v4098 = vpop.f32.mrb[0].mxu0
        %v4099 = vadd.f32 0.0, %v4098
        %v4100 = vpop.f32.mrb[0].mxu0
        %v4101 = vpop.f32.mrb[0].mxu0
        %v4102 = vadd.f32 0.0, %v4101
        %v4103 = vpop.f32.mrb[0].mxu0
        %4104 = vmatprep.mubr.bf16.mxu0 0
        %4105 = vmatmul.mubr.bf16.gmra.mrb[0].mxu0 %v3971
        %v4106 = vpop.f32.mrb[0].mxu0
        %v4107 = vadd.f32 0.0, %v4106
        %v4108 = vpop.f32.mrb[0].mxu0
        %v4109 = vpop.f32.mrb[0].mxu0
        %v4110 = vadd.f32 0.0, %v4109
        %v4111 = vpop.f32.mrb[0].mxu0
        %4112 = vmatprep.mubr.bf16.mxu0 0
        %4113 = vmatmul.mubr.bf16.gmra.mrb[0].mxu0 %v3972
        %v4114 = vpop.f32.mrb[0].mxu0
        %v4115 = vadd.f32 0.0, %v4114
        %v4116 = vpop.f32.mrb[0].mxu0
        %v4117 = vpop.f32.mrb[0].mxu0
        %v4118 = vadd.f32 0.0, %v4117
        %v4119 = vpop.f32.mrb[0].mxu0
        %4120 = vmatprep.mubr.bf16.mxu0 0
        %4121 = vmatmul.mubr.bf16.gmra.mrb[0].mxu0 %v3973
        %v4122 = vpop.f32.mrb[0].mxu0
        %v4123 = vadd.f32 0.0, %v4122
        %v4124 = vpop.f32.mrb[0].mxu0
        %v4125 = vpop.f32.mrb[0].mxu0
        %v4126 = vadd.f32 0.0, %v4125
        %v4127 = vpop.f32.mrb[0].mxu0
        %4128 = vmatprep.mubr.bf16.mxu0 0
        %4129 = vmatmul.mubr.bf16.gmra.mrb[0].mxu0 %v3974
        %v4130 = vpop.f32.mrb[0].mxu0
        %v4131 = vadd.f32 0.0, %v4130
        %v4132 = vpop.f32.mrb[0].mxu0
        %v4133 = vpop.f32.mrb[0].mxu0
        %v4134 = vadd.f32 0.0, %v4133
        %v4135 = vpop.f32.mrb[0].mxu0
        %4136 = vmatprep.mubr.bf16.mxu0 0
        %4137 = vmatmul.mubr.bf16.gmra.mrb[0].mxu0 %v3975
        %v4138 = vpop.f32.mrb[0].mxu0
        %v4139 = vadd.f32 0.0, %v4138
        %v4140 = vpop.f32.mrb[0].mxu0
        %v4141 = vpop.f32.mrb[0].mxu0
        %v4142 = vadd.f32 0.0, %v4141
        %v4143 = vpop.f32.mrb[0].mxu0
        %4144 = vmatprep.mubr.bf16.mxu0 0
        %4145 = vmatmul.mubr.bf16.gmra.mrb[0].mxu0 %v3976
        %v4146 = vpop.f32.mrb[0].mxu0
        %v4147 = vadd.f32 0.0, %v4146
        %v4148 = vpop.f32.mrb[0].mxu0
        %v4149 = vpop.f32.mrb[0].mxu0
        %v4150 = vadd.f32 0.0, %v4149
        %v4151 = vpop.f32.mrb[0].mxu0
        %4152 = vmatprep.mubr.bf16.mxu0 0
        %4153 = vmatmul.mubr.bf16.gmra.mrb[0].mxu0 %v3977
        %v4154 = vpop.f32.mrb[0].mxu0
        %v4155 = vadd.f32 0.0, %v4154
        %v4156 = vpop.f32.mrb[0].mxu0
        %v4157 = vpop.f32.mrb[0].mxu0
        %v4158 = vadd.f32 0.0, %v4157
        %v4159 = vpop.f32.mrb[0].mxu0
        %4160 = vmatprep.mubr.bf16.mxu0 0
        %4161 = vmatmul.mubr.bf16.gmra.mrb[0].mxu0 %v3978
        %v4162 = vpop.f32.mrb[0].mxu0
        %v4163 = vadd.f32 0.0, %v4162
        %v4164 = vpop.f32.mrb[0].mxu0
        %v4165 = vpop.f32.mrb[0].mxu0
        %v4166 = vadd.f32 0.0, %v4165
        %v4167 = vpop.f32.mrb[0].mxu0
        %4168 = vmatprep.mubr.bf16.mxu0 0
        %4169 = vmatmul.mubr.bf16.gmra.mrb[0].mxu0 %v3979
        %v4170 = vpop.f32.mrb[0].mxu0
        %v4171 = vadd.f32 0.0, %v4170
        %v4172 = vpop.f32.mrb[0].mxu0
        %v4173 = vpop.f32.mrb[0].mxu0
        %v4174 = vadd.f32 0.0, %v4173
        %v4175 = vpop.f32.mrb[0].mxu0
        %4176 = vmatprep.mubr.bf16.mxu0 0
        %4177 = vmatmul.mubr.bf16.gmra.mrb[0].mxu0 %v3980
        %v4178 = vpop.f32.mrb[0].mxu0
        %v4179 = vadd.f32 0.0, %v4178
        %v4180 = vpop.f32.mrb[0].mxu0
        %v4181 = vpop.f32.mrb[0].mxu0
        %v4182 = vadd.f32 0.0, %v4181
        %v4183 = vpop.f32.mrb[0].mxu0
        %4184 = vmatprep.mubr.bf16.mxu0 0
        %4185 = vmatmul.mubr.bf16.gmra.mrb[0].mxu0 %v3981
        %v4186 = vpop.f32.mrb[0].mxu0
        %v4187 = vadd.f32 0.0, %v4186
        %v4188 = vpop.f32.mrb[0].mxu0
        %v4189 = vpop.f32.mrb[0].mxu0
        %v4190 = vadd.f32 0.0, %v4189
        %v4191 = vpop.f32.mrb[0].mxu0
        %4192 = vmatprep.mubr.bf16.mxu0 0
        %4193 = vmatmul.mubr.bf16.gmra.mrb[0].mxu0 %v3982
        %v4194 = vpop.f32.mrb[0].mxu0
        %v4195 = vadd.f32 0.0, %v4194
        %v4196 = vpop.f32.mrb[0].mxu0
        %v4197 = vpop.f32.mrb[0].mxu0
        %v4198 = vadd.f32 0.0, %v4197
        %v4199 = vpop.f32.mrb[0].mxu0
        %4200 = vmatprep.mubr.bf16.mxu0 0
        %4201 = vmatmul.mubr.bf16.gmra.mrb[0].mxu0 %v3983
        %v4202 = vpop.f32.mrb[0].mxu0
        %v4203 = vadd.f32 0.0, %v4202
        %v4204 = vpop.f32.mrb[0].mxu0
        %v4205 = vpop.f32.mrb[0].mxu0
        %v4206 = vadd.f32 0.0, %v4205
        %v4207 = vpop.f32.mrb[0].mxu0
        %4208 = vdwg.mxu0
        %v4209 = vadd.f32 %v3936, %v4083
        %v4210 = vadd.f32 %v3937, %v4086
        %v4211 = vadd.f32 %v3938, %v4091
        %v4212 = vadd.f32 %v3939, %v4094
        %v4213 = vadd.f32 %v3940, %v4099
        %v4214 = vadd.f32 %v3941, %v4102
        %v4215 = vadd.f32 %v3942, %v4107
        %v4216 = vadd.f32 %v3943, %v4110
        %v4217 = vadd.f32 %v3944, %v4115
        %v4218 = vadd.f32 %v3945, %v4118
        %v4219 = vadd.f32 %v3946, %v4123
        %v4220 = vadd.f32 %v3947, %v4126
        %v4221 = vadd.f32 %v3948, %v4131
        %v4222 = vadd.f32 %v3949, %v4134
        %v4223 = vadd.f32 %v3950, %v4139
        %v4224 = vadd.f32 %v3951, %v4142
        %v4225 = vadd.f32 %v3952, %v4147
        %v4226 = vadd.f32 %v3953, %v4150
        %v4227 = vadd.f32 %v3954, %v4155
        %v4228 = vadd.f32 %v3955, %v4158
        %v4229 = vadd.f32 %v3956, %v4163
        %v4230 = vadd.f32 %v3957, %v4166
        %v4231 = vadd.f32 %v3958, %v4171
        %v4232 = vadd.f32 %v3959, %v4174
        %v4233 = vadd.f32 %v3960, %v4179
        %v4234 = vadd.f32 %v3961, %v4182
        %v4235 = vadd.f32 %v3962, %v4187
        %v4236 = vadd.f32 %v3963, %v4190
        %v4237 = vadd.f32 %v3964, %v4195
        %v4238 = vadd.f32 %v3965, %v4198
        %v4239 = vadd.f32 %v3966, %v4203
        %v4240 = vadd.f32 %v3967, %v4206
        %4241 = vst [vmem:[%s655] sm:$0xff] %v4209
        %4242 = vst [vmem:[%s655 + $0x8] sm:$0xff] %v4210
        %4243 = vst [vmem:[%s655 + $0x10] sm:$0xff] %v4211
        %4244 = vst [vmem:[%s655 + $0x18] sm:$0xff] %v4212
        %4245 = vst [vmem:[%s655 + $0x20] sm:$0xff] %v4213
        %4246 = vst [vmem:[%s655 + $0x28] sm:$0xff] %v4214
        %4247 = vst [vmem:[%s655 + $0x30] sm:$0xff] %v4215
        %4248 = vst [vmem:[%s655 + $0x38] sm:$0xff] %v4216
        %4249 = vst [vmem:[%s655 + $0x40] sm:$0xff] %v4217
        %4250 = vst [vmem:[%s655 + $0x48] sm:$0xff] %v4218
        %4251 = vst [vmem:[%s655 + $0x50] sm:$0xff] %v4219
        %4252 = vst [vmem:[%s655 + $0x58] sm:$0xff] %v4220
        %4253 = vst [vmem:[%s655 + $0x60] sm:$0xff] %v4221
        %4254 = vst [vmem:[%s655 + $0x68] sm:$0xff] %v4222
        %4255 = vst [vmem:[%s655 + $0x70] sm:$0xff] %v4223
        %4256 = vst [vmem:[%s655 + $0x78] sm:$0xff] %v4224
        %4257 = vst [vmem:[%s655 + $0x80] sm:$0xff] %v4225
        %4258 = vst [vmem:[%s655 + $0x88] sm:$0xff] %v4226
        %4259 = vst [vmem:[%s655 + $0x90] sm:$0xff] %v4227
        %4260 = vst [vmem:[%s655 + $0x98] sm:$0xff] %v4228
        %4261 = vst [vmem:[%s655 + $0xa0] sm:$0xff] %v4229
        %4262 = vst [vmem:[%s655 + $0xa8] sm:$0xff] %v4230
        %4263 = vst [vmem:[%s655 + $0xb0] sm:$0xff] %v4231
        %4264 = vst [vmem:[%s655 + $0xb8] sm:$0xff] %v4232
        %4265 = vst [vmem:[%s655 + $0xc0] sm:$0xff] %v4233
        %4266 = vst [vmem:[%s655 + $0xc8] sm:$0xff] %v4234
        %4267 = vst [vmem:[%s655 + $0xd0] sm:$0xff] %v4235
        %4268 = vst [vmem:[%s655 + $0xd8] sm:$0xff] %v4236
        %4269 = vst [vmem:[%s655 + $0xe0] sm:$0xff] %v4237
        %4270 = vst [vmem:[%s655 + $0xe8] sm:$0xff] %v4238
        %4271 = vst [vmem:[%s655 + $0xf0] sm:$0xff] %v4239
        %4272 = vst [vmem:[%s655 + $0xf8] sm:$0xff] %v4240
        %s4273 = sand.u32 %s400, 1
        %s4274 = scalar_lea.sflag [#allocation5], %s4273
        %s4275 = sand.u32 %s400, 1
        %s4276 = smul.addr %s4275, 256
        %s4277 = scalar_lea.vmem [#allocation15], %s4276
        // Predicated region
        $region113: #{tpu_custom_call.1} parent=79 // pred_check
          %p4278 = pneg %p410
        $region114: #{tpu_custom_call.1} parent=79 // pred_check_branch
          %4280 = sbr.rel (%p4278) target = $region116
        $region115: #{tpu_custom_call.1} parent=79 // pred_region
          %s4281 = smul.u32 32, %s39
          %s4283 = ssub.s32 4096, 4096
          %4284 = vsyncadd %s4274, %s4283
          %s4285 = smul.addr %s4281, 128
          %s4286 = scalar_lea.hbm %s15, %s4285
          %s4287 = sshll.u32 %s4277, 4
          %s4288 = int_to_ptr.vmem [resolvable:$true] %s4287
          %4293 = dma.vmem_to_hbm [thread:$0]  %s4288, 4096, %s4286, %s4274, 128, 128, 8
        $region116: #{tpu_custom_call.1} parent=79 // pred_fallthru
          _
      $region80: #{tpu_custom_call.1} parent=5 // pred_fallthru
        _
      %p4294 = scmp.le.s32.totalorder 2, %s30
      // Predicated region
      $region117: #{tpu_custom_call.1} parent=5 // pred_check
        %p4295 = pneg %p4294
      $region118: #{tpu_custom_call.1} parent=5 // pred_check_branch
        %4297 = sbr.rel (%p4295) target = $region120
      $region119: #{tpu_custom_call.1} parent=5 // pred_region
        %s4298 = ssub.s32 %s30, 2
        // Predicated region
        $region121: #{tpu_custom_call.1} parent=119 // pred_check
          %p4299 = pneg %p416
        $region122: #{tpu_custom_call.1} parent=119 // pred_check_branch
          %4301 = sbr.rel (%p4299) target = $region124
        $region123: #{tpu_custom_call.1} parent=119 // pred_region
          %s4302 = sand.u32 %s401, 1
          %s4303 = scalar_lea.sflag [#allocation5], %s4302
          %s4304 = sand.u32 %s401, 1
          %s4305 = smul.addr %s4304, 256
          %s4306 = scalar_lea.vmem [#allocation15], %s4305
          %4307 = dma.done %s4303, 4096
        $region124: #{tpu_custom_call.1} parent=119 // pred_fallthru
          _
      $region120: #{tpu_custom_call.1} parent=5 // pred_fallthru
        _
    $region6: #{tpu_custom_call.1} parent=1 // loop_footer
      %s34 = sadd.s32 1, %s30
    $region7: #{tpu_custom_call.1} parent=1 // loop_footer_branch
      %29 = sbr.rel target = $region3
    $region8: #{tpu_custom_call.1} parent=1 // loop_exit
      _
    %4308 = vsyncpa [#allocation4], 1
    %s4309 = scalar_lea.sflag [#allocation4], 1
    %4310 = vsyncpa %s4309, 1
    %4311 = vsyncpa [#allocation7], 1
    %4312 = vsyncpa [#allocation10], 1
    %4313 = vsyncpa [#allocation13], 1
    %4314 = vsyncpa [#allocation5], 1
    %s4315 = scalar_lea.sflag [#allocation5], 1
    %4316 = vsyncpa %s4315, 1

</llo_original>
